<compile_context>
chip_gen: v6e
topology: v6e:2x2x1
jax: 0.10.0
libtpu: 0.0.40
codegen_flags: <defaults>
</compile_context>

<pallas_src>
import jax
import jax.numpy as jnp
from jax import lax
from jax.experimental import pallas as pl
from jax.experimental.pallas import tpu as pltpu

_EPS = 1e-3


# ----------------------------------------------------------------------------------------------
# Kernel
# ----------------------------------------------------------------------------------------------
def _make_kernel(H, TH, W):
    """Kernel closure over the static tiling parameters (H, rows-per-tile TH, width W)."""

    def kernel(x1_ref, x2_ref, wsem_ref, bsem_ref, wtex_ref, btex_ref, q_ref, o_ref):
        # x1_ref : (1, Cs, S)    semantic features, NCHW with flat spatial (f32 or bf16)
        # x2_ref : (1, Ct, 4*S)  texture features,  NCHW with flat spatial (f32 or bf16)
        # w*_ref : (A, C) bf16 BN-folded 1x1-conv weights ; b*_ref : (A, 1) f32 folded bias
        # q_ref  : (4*S, S) bf16 0/0.25 pooling matrix (AvgPool2d(2,2) in the flat layout)
        # o_ref  : (1, A, S) bf16

        # --- semantic branch: 1x1 conv == (A, Cs) x (Cs, S) channel matmul on the MXU -------
        x1 = x1_ref[0].astype(jnp.bfloat16)
        sem = jnp.dot(wsem_ref[...], x1, preferred_element_type=jnp.float32)
        sem = jnp.maximum(sem + bsem_ref[...], 0.0)                        # (A, S) f32

        # --- texture branch at full 2H x 2W resolution (same FLOPs as phase matmuls) --------
        x2 = x2_ref[0].astype(jnp.bfloat16)
        tex = jnp.dot(wtex_ref[...], x2, preferred_element_type=jnp.float32)
        tex = jnp.maximum(tex + btex_ref[...], 0.0)                        # (A, 4*S) f32

        if H % TH != 0:
            # cdiv grid: zero the padded tail so stale Inf/NaN cannot leak into valid output
            # columns through the pooling matmul's zero entries (0 * Inf = NaN on the MXU).
            valid = jnp.minimum(TH, H - pl.program_id(1) * TH) * (4 * W)
            lane = lax.broadcasted_iota(jnp.int32, tex.shape, 1)
            tex = jnp.where(lane < valid, tex, 0.0)

        # --- AvgPool2d(2,2) after ReLU: one small matmul against the 0/0.25 matrix ----------
        pooled = jnp.dot(tex.astype(jnp.bfloat16), q_ref[...],
                         preferred_element_type=jnp.float32)               # (A, S) f32

        o_ref[0] = (sem + pooled).astype(o_ref.dtype)

    return kernel


# ----------------------------------------------------------------------------------------------
# Host-side helpers
# ----------------------------------------------------------------------------------------------
def _fold_bn(w_ac, gamma, beta, mean, var, eps=_EPS):
    """Fold inference BatchNorm into a 1x1-conv weight in (A, C) lhs layout.
    Returns (A, C) bf16 effective weight and (A, 1) f32 effective bias."""
    scale = gamma / jnp.sqrt(var + eps)                                    # (A,)
    w_eff = (w_ac * scale[:, None]).astype(jnp.bfloat16)                   # (A, C) bf16
    b_eff = (beta - mean * scale)[:, None].astype(jnp.float32)             # (A, 1) f32
    return w_eff, b_eff


def _make_pool_matrix(TH, W, dtype=jnp.bfloat16):
    """(4*TH*W, TH*W) matrix: 0.25 at [j, i] iff flat texture column j (row-band-local NCHW
    flat index over (TH, 2, W, 2) = (row, dy, col, dx)) lies in the 2x2 window of output i."""
    S = TH * W
    j = jnp.arange(4 * S)
    r = j // (4 * W)                       # output row within the band
    w = (j % (2 * W)) // 2                 # output column
    tgt = r * W + w
    hit = tgt[:, None] == jnp.arange(S)[None, :]
    return jnp.where(hit, 0.25, 0.0).astype(dtype)


def _vmem_capacity_bytes():
    try:
        return int(pltpu.get_tpu_info().vmem_capacity_bytes)
    except Exception:
        return 64 * 1024 * 1024            # conservative (v7x-sized) fallback


def _pick_tile_rows(N, H, W, Cs, Ct, A, in_bytes, budget_bytes, min_total_steps=8):
    """Rows-per-tile for the flat-spatial row-band blocking.

    Legal tiles have TH*W % 128 == 0 (lane tiling) or TH == H.  Among tiles fitting the VMEM
    budget, pick the largest one that still gives >= min_total_steps grid steps (pipeline depth
    and dual-TC utilization on v7x); if the problem is too small for that, pick the smallest
    legal tile (maximize steps).  Exact divisors of H are preferred to avoid padded tails."""

    def vmem_est(th):
        s = th * W
        est = 2 * (Cs + 4 * Ct) * s * in_bytes            # x1/x2 blocks, double-buffered
        est += 2 * A * s * 2                               # bf16 output block, double-buffered
        est += 2 * (4 * s) * s * 2                         # pooling matrix, double-buffered
        est += 2 * (A * (Cs + Ct) * 2 + 2 * A * 4)         # folded weights + biases, 2 bufs
        est += (Cs + 4 * Ct) * s * 2                       # in-kernel bf16 casts of the inputs
        est += (2 * 4 + 3) * A * s * 4 + A * 4 * s * 2     # f32/bf16 matmul temporaries
        return est

    legal = [th for th in range(1, H + 1) if (th * W) % 128 == 0 or th == H]
    fit = [th for th in legal if vmem_est(th) <= budget_bytes] or [min(legal, key=vmem_est)]
    steps = lambda th: N * (-(-H // th))
    deep = [th for th in fit if steps(th) >= min_total_steps]
    cands = deep if deep else fit
    divs = [th for th in cands if H % th == 0]
    cands = divs if divs else cands
    return max(cands) if deep else min(cands)


# ----------------------------------------------------------------------------------------------
# Wrapper
# ----------------------------------------------------------------------------------------------
def multi_stage_attention(x2_nchw, x1_nchw, w_tex_ac, w_sem_ac, bn_tex, bn_sem):
    """x2_nchw: (N, 1024, 2H, 2W) texture features; x1_nchw: (N, 2048, H, W) semantic features.
    Returns (N, A, H, W) bf16, matching the PyTorch module's output layout."""
    N, Cs, H, W = x1_nchw.shape
    _, Ct, H2, W2 = x2_nchw.shape
    assert H2 == 2 * H and W2 == 2 * W
    A = w_sem_ac.shape[0]

    w_sem_eff, b_sem_eff = _fold_bn(w_sem_ac, *bn_sem)
    w_tex_eff, b_tex_eff = _fold_bn(w_tex_ac, *bn_tex)

    # NCHW stays NCHW: only free reshapes (merge trailing contiguous dims).  No wrapper cast,
    # no transpose, no output transpose.  The kernel accepts bf16 inputs as-is if the
    # surrounding model is already bf16.
    x1_flat = x1_nchw.reshape(N, Cs, H * W)
    x2_flat = x2_nchw.reshape(N, Ct, 4 * H * W)

    vmem_cap = _vmem_capacity_bytes()
    in_bytes = jnp.dtype(x1_nchw.dtype).itemsize
    TH = _pick_tile_rows(N, H, W, Cs, Ct, A, in_bytes, budget_bytes=vmem_cap // 3)
    S = TH * W
    n_h = -(-H // TH)                       # cdiv: awkward H handled via the in-kernel mask

    q_pool = _make_pool_matrix(TH, W)

    out_flat = pl.pallas_call(
        _make_kernel(H, TH, W),
        out_shape=jax.ShapeDtypeStruct((N, A, H * W), jnp.bfloat16),
        grid_spec=pltpu.PrefetchScalarGridSpec(
            num_scalar_prefetch=0,
            grid=(N, n_h),
            in_specs=[
                pl.BlockSpec((1, Cs, S), lambda n, h: (n, 0, h)),
                pl.BlockSpec((1, Ct, 4 * S), lambda n, h: (n, 0, h)),
                pl.BlockSpec((A, Cs), lambda n, h: (0, 0)),
                pl.BlockSpec((A, 1), lambda n, h: (0, 0)),
                pl.BlockSpec((A, Ct), lambda n, h: (0, 0)),
                pl.BlockSpec((A, 1), lambda n, h: (0, 0)),
                pl.BlockSpec((4 * S, S), lambda n, h: (0, 0)),
            ],
            out_specs=pl.BlockSpec((1, A, S), lambda n, h: (n, 0, h)),
        ),
        compiler_params=pltpu.CompilerParams(
            dimension_semantics=("parallel", "parallel"),
            vmem_limit_bytes=vmem_cap // 2,
        ),
    )(x1_flat, x2_flat, w_sem_eff, b_sem_eff, w_tex_eff, b_tex_eff, q_pool)

    return out_flat.reshape(N, A, H, W)     # free reshape back to NCHW


# ----------------------------------------------------------------------------------------------
# Pure-JAX reference (mirrors the PyTorch module)
# ----------------------------------------------------------------------------------------------
def _reference(x2_nchw, x1_nchw, w_tex_ac, w_sem_ac, bn_tex, bn_sem, eps=_EPS):
    def branch(x, w_ac, bn):
        gamma, beta, mean, var = bn
        y = jnp.einsum("nchw,ac->nahw", x, w_ac)
        scale = gamma / jnp.sqrt(var + eps)
        y = y * scale[None, :, None, None] + (beta - mean * scale)[None, :, None, None]
        return jnp.maximum(y, 0.0)

    sem = branch(x1_nchw, w_sem_ac, bn_sem)
    tex = branch(x2_nchw, w_tex_ac, bn_tex)
    n, a, h2, w2 = tex.shape
    tex = tex.reshape(n, a, h2 // 2, 2, w2 // 2, 2).mean(axis=(3, 5))
    return sem + tex


if __name__ == "__main__":
    # Small shapes consistent with the module: conv in-channels are fixed at 1024 / 2048.
    N = 2
    ATTN_MAPS = 128          # config.attention_map_num
    C_TEX, C_SEM = 1024, 2048
    H, W = 16, 16            # semantic spatial; texture spatial is 2H x 2W

    key = jax.random.PRNGKey(0)
    k_x1, k_x2, k_ws, k_wt = jax.random.split(key, 4)

    x1 = jax.random.normal(k_x1, (N, C_SEM, H, W), dtype=jnp.float32)          # semantic input
    x2 = jax.random.normal(k_x2, (N, C_TEX, 2 * H, 2 * W), dtype=jnp.float32)  # texture input

    # trunc_normal_(std=0.02) init for the 1x1 conv weights, stored as (A, C).
    w_sem = 0.02 * jax.random.truncated_normal(k_ws, -2.0, 2.0, (ATTN_MAPS, C_SEM), jnp.float32)
    w_tex = 0.02 * jax.random.truncated_normal(k_wt, -2.0, 2.0, (ATTN_MAPS, C_TEX), jnp.float32)

    # BatchNorm params exactly as after _init_weights: gamma=1, beta=0, mean=0, var=1.
    bn_sem = (jnp.ones(ATTN_MAPS), jnp.zeros(ATTN_MAPS), jnp.zeros(ATTN_MAPS), jnp.ones(ATTN_MAPS))
    bn_tex = (jnp.ones(ATTN_MAPS), jnp.zeros(ATTN_MAPS), jnp.zeros(ATTN_MAPS), jnp.ones(ATTN_MAPS))

    fwd = jax.jit(multi_stage_attention)
    out = jax.block_until_ready(fwd(x2, x1, w_tex, w_sem, bn_tex, bn_sem))

    ref = _reference(x2, x1, w_tex, w_sem, bn_tex, bn_sem)
    assert out.shape == (N, ATTN_MAPS, H, W)
    assert out.dtype == jnp.bfloat16
    out_f32 = out.astype(jnp.float32)
    assert bool(jnp.all(jnp.isfinite(out_f32)))
    max_err = float(jnp.max(jnp.abs(out_f32 - ref)))
    assert jnp.allclose(out_f32, ref, rtol=3e-2, atol=3e-2), f"mismatch vs reference (max abs err {max_err})"

    print("KERNEL_OK")
</pallas_src>

<mosaic_0001>
module attributes {stable_mosaic.version = 11 : i64} {
  func.func @kernel(%arg0: i32, %arg1: i32, %arg2: memref<1x2048x128xf32, #tpu.memory_space<vmem>>, %arg3: memref<1x1024x512xf32, #tpu.memory_space<vmem>>, %arg4: memref<128x2048xbf16, #tpu.memory_space<vmem>>, %arg5: memref<128x1xf32, #tpu.memory_space<vmem>>, %arg6: memref<128x1024xbf16, #tpu.memory_space<vmem>>, %arg7: memref<128x1xf32, #tpu.memory_space<vmem>>, %arg8: memref<512x128xbf16, #tpu.memory_space<vmem>>, %arg9: memref<1x128x128xbf16, #tpu.memory_space<vmem>>) attributes {dimension_semantics = [#tpu.dimension_semantics<parallel>, #tpu.dimension_semantics<parallel>], iteration_bounds = array<i64: 2, 2>, scalar_prefetch = 0 : i64, scratch_operands = 0 : i64, tpu.core_type = #tpu.core_type<tc>, window_params = [{transform_indices = @transform_0, window_bounds = array<i64: 1, 2048, 128>}, {transform_indices = @transform_1, window_bounds = array<i64: 1, 1024, 512>}, {pipeline_mode = #tpu.pipeline_mode<synchronous>, transform_indices = @transform_2, window_bounds = array<i64: 128, 2048>}, {pipeline_mode = #tpu.pipeline_mode<synchronous>, transform_indices = @transform_3, window_bounds = array<i64: 128, 1>}, {pipeline_mode = #tpu.pipeline_mode<synchronous>, transform_indices = @transform_4, window_bounds = array<i64: 128, 1024>}, {pipeline_mode = #tpu.pipeline_mode<synchronous>, transform_indices = @transform_5, window_bounds = array<i64: 128, 1>}, {pipeline_mode = #tpu.pipeline_mode<synchronous>, transform_indices = @transform_6, window_bounds = array<i64: 512, 128>}, {transform_indices = @transform_7, window_bounds = array<i64: 1, 128, 128>}]} {
    %c0 = arith.constant 0 : index
    %c0_0 = arith.constant 0 : index
    %c0_1 = arith.constant 0 : index
    %0 = vector.load %arg2[%c0, %c0_0, %c0_1] : memref<1x2048x128xf32, #tpu.memory_space<vmem>>, vector<1x2048x128xf32>
    %1 = vector.shape_cast %0 : vector<1x2048x128xf32> to vector<2048x128xf32>
    %2 = arith.truncf %1 : vector<2048x128xf32> to vector<2048x128xbf16>
    %c0_2 = arith.constant 0 : index
    %c0_3 = arith.constant 0 : index
    %3 = vector.load %arg4[%c0_2, %c0_3] : memref<128x2048xbf16, #tpu.memory_space<vmem>>, vector<128x2048xbf16>
    %cst = arith.constant dense<0.000000e+00> : vector<128x128xf32>
    %4 = tpu.matmul %3, %2, %cst {dimension_numbers = #tpu.dot_dimension_numbers<[1], [0], [0], [1], [0, 0, 1, 1], [], []>} : vector<128x2048xbf16>, vector<2048x128xbf16>, vector<128x128xf32> -> vector<128x128xf32>
    %c0_4 = arith.constant 0 : index
    %c0_5 = arith.constant 0 : index
    %5 = vector.load %arg5[%c0_4, %c0_5] : memref<128x1xf32, #tpu.memory_space<vmem>>, vector<128x1xf32>
    %6 = vector.broadcast %5 : vector<128x1xf32> to vector<128x128xf32>
    %7 = arith.addf %4, %6 : vector<128x128xf32>
    %cst_6 = arith.constant 0.000000e+00 : f32
    %8 = vector.broadcast %cst_6 : f32 to vector<128x128xf32>
    %9 = arith.maximumf %7, %8 : vector<128x128xf32>
    %c0_7 = arith.constant 0 : index
    %c0_8 = arith.constant 0 : index
    %c0_9 = arith.constant 0 : index
    %10 = vector.load %arg3[%c0_7, %c0_8, %c0_9] : memref<1x1024x512xf32, #tpu.memory_space<vmem>>, vector<1x1024x512xf32>
    %11 = vector.shape_cast %10 : vector<1x1024x512xf32> to vector<1024x512xf32>
    %12 = arith.truncf %11 : vector<1024x512xf32> to vector<1024x512xbf16>
    %c0_10 = arith.constant 0 : index
    %c0_11 = arith.constant 0 : index
    %13 = vector.load %arg6[%c0_10, %c0_11] : memref<128x1024xbf16, #tpu.memory_space<vmem>>, vector<128x1024xbf16>
    %cst_12 = arith.constant dense<0.000000e+00> : vector<128x512xf32>
    %14 = tpu.matmul %13, %12, %cst_12 {dimension_numbers = #tpu.dot_dimension_numbers<[1], [0], [0], [1], [0, 0, 1, 1], [], []>} : vector<128x1024xbf16>, vector<1024x512xbf16>, vector<128x512xf32> -> vector<128x512xf32>
    %c0_13 = arith.constant 0 : index
    %c0_14 = arith.constant 0 : index
    %15 = vector.load %arg7[%c0_13, %c0_14] : memref<128x1xf32, #tpu.memory_space<vmem>>, vector<128x1xf32>
    %16 = vector.broadcast %15 : vector<128x1xf32> to vector<128x512xf32>
    %17 = arith.addf %14, %16 : vector<128x512xf32>
    %cst_15 = arith.constant 0.000000e+00 : f32
    %18 = vector.broadcast %cst_15 : f32 to vector<128x512xf32>
    %19 = arith.maximumf %17, %18 : vector<128x512xf32>
    %20 = arith.truncf %19 : vector<128x512xf32> to vector<128x512xbf16>
    %c0_16 = arith.constant 0 : index
    %c0_17 = arith.constant 0 : index
    %21 = vector.load %arg8[%c0_16, %c0_17] : memref<512x128xbf16, #tpu.memory_space<vmem>>, vector<512x128xbf16>
    %cst_18 = arith.constant dense<0.000000e+00> : vector<128x128xf32>
    %22 = tpu.matmul %20, %21, %cst_18 {dimension_numbers = #tpu.dot_dimension_numbers<[1], [0], [0], [1], [0, 0, 1, 1], [], []>} : vector<128x512xbf16>, vector<512x128xbf16>, vector<128x128xf32> -> vector<128x128xf32>
    %23 = arith.addf %9, %22 : vector<128x128xf32>
    %24 = arith.truncf %23 : vector<128x128xf32> to vector<128x128xbf16>
    %c0_19 = arith.constant 0 : index
    %c0_20 = arith.constant 0 : index
    %c0_21 = arith.constant 0 : index
    %25 = vector.load %arg9[%c0_19, %c0_20, %c0_21] : memref<1x128x128xbf16, #tpu.memory_space<vmem>>, vector<1x128x128xbf16>
    %26 = vector.shape_cast %25 : vector<1x128x128xbf16> to vector<128x128xbf16>
    %27 = vector.shape_cast %24 : vector<128x128xbf16> to vector<1x128x128xbf16>
    tpu.vector_store %arg9[%c0_19, %c0_20, %c0_21], %27 {strides = array<i32>} : memref<1x128x128xbf16, #tpu.memory_space<vmem>>, vector<1x128x128xbf16>,
    return
  }
  func.func @transform_0(%arg0: i32, %arg1: i32) -> (i32, i32, i32) {
    %c0_i32 = arith.constant 0 : i32
    %c0_i32_0 = arith.constant 0 : i32
    return %arg0, %c0_i32, %arg1 : i32, i32, i32
  }
  func.func @transform_1(%arg0: i32, %arg1: i32) -> (i32, i32, i32) {
    %c0_i32 = arith.constant 0 : i32
    %c0_i32_0 = arith.constant 0 : i32
    return %arg0, %c0_i32, %arg1 : i32, i32, i32
  }
  func.func @transform_2(%arg0: i32, %arg1: i32) -> (i32, i32) {
    %c0_i32 = arith.constant 0 : i32
    %c0_i32_0 = arith.constant 0 : i32
    %c0_i32_1 = arith.constant 0 : i32
    return %c0_i32, %c0_i32_0 : i32, i32
  }
  func.func @transform_3(%arg0: i32, %arg1: i32) -> (i32, i32) {
    %c0_i32 = arith.constant 0 : i32
    %c0_i32_0 = arith.constant 0 : i32
    %c0_i32_1 = arith.constant 0 : i32
    return %c0_i32, %c0_i32_0 : i32, i32
  }
  func.func @transform_4(%arg0: i32, %arg1: i32) -> (i32, i32) {
    %c0_i32 = arith.constant 0 : i32
    %c0_i32_0 = arith.constant 0 : i32
    %c0_i32_1 = arith.constant 0 : i32
    return %c0_i32, %c0_i32_0 : i32, i32
  }
  func.func @transform_5(%arg0: i32, %arg1: i32) -> (i32, i32) {
    %c0_i32 = arith.constant 0 : i32
    %c0_i32_0 = arith.constant 0 : i32
    %c0_i32_1 = arith.constant 0 : i32
    return %c0_i32, %c0_i32_0 : i32, i32
  }
  func.func @transform_6(%arg0: i32, %arg1: i32) -> (i32, i32) {
    %c0_i32 = arith.constant 0 : i32
    %c0_i32_0 = arith.constant 0 : i32
    %c0_i32_1 = arith.constant 0 : i32
    return %c0_i32, %c0_i32_0 : i32, i32
  }
  func.func @transform_7(%arg0: i32, %arg1: i32) -> (i32, i32, i32) {
    %c0_i32 = arith.constant 0 : i32
    %c0_i32_0 = arith.constant 0 : i32
    return %arg0, %c0_i32, %arg1 : i32, i32, i32
  }
}

</mosaic_0001>

<llo_original>
// kernel: multi_stage_attention.1
$region0: #{multi_stage_attention.1}
  #allocation0 [shape = 'u32[]', space=smem, size = 0x4, offset = 0x4, fixed_abs, tag = 'smem constant byte address 0x4 - core index']
  #allocation1 [shape = 'u32[144,128]{1,0:T(1,128)}', space=vmem, size = 0x12000, scoped, tag = 'internal scratch']
  %s0 = inlined_call_operand.vmem [shape: f32[2,2048,256], index: 0, kind: input, shape index: {}]
  %s1 = inlined_call_operand.vmem [shape: f32[2,1024,1024], index: 1, kind: input, shape index: {}]
  %s2 = inlined_call_operand.vmem [shape: bf16[128,2048], index: 2, kind: input, shape index: {}]
  %s3 = inlined_call_operand.vmem [shape: f32[128,1], index: 3, kind: input, shape index: {}]
  %s4 = inlined_call_operand.vmem [shape: bf16[128,1024], index: 4, kind: input, shape index: {}]
  %s5 = inlined_call_operand.vmem [shape: f32[128,1], index: 5, kind: input, shape index: {}]
  %s6 = inlined_call_operand.vmem [shape: bf16[512,128], index: 6, kind: input, shape index: {}]
  %s7 = inlined_call_operand.vmem [shape: bf16[2,128,256], index: 7, kind: output, shape index: {}]
  %s8 = sld [smem:[#allocation0]]
  $region159: #{multi_stage_attention.1} parent=0
    _
  %s10 = ssub.s32 1, %s8
  %s11 = scalar_select 0, %s10, %s8
  $region1: #{multi_stage_attention.1} parent=0
    #allocation2 [shape = 'u8[2097152]{0}', space=vmem, size = 0x200000, scoped, tag = 'input window, operand 0']
    #allocation3 [shape = 'u8[4194304]{0}', space=vmem, size = 0x400000, scoped, tag = 'input window, operand 1']
    #allocation4 [shape = 'u8[65536]{0}', space=vmem, size = 0x10000, scoped, tag = 'output window, operand 0']
    loop: start=0, step=1, limit=6
    $region2: #{multi_stage_attention.1} parent=1 // loop_pre_header
      _
    $region3: #{multi_stage_attention.1} parent=1 // loop_header
      %s13 = sphi 0, %s17
      %p14 = scmp.ge.s32.totalorder %s13, 6
      %s20 = sphi 0, %s32
      %s21 = sphi 0, %s28
      %s22 = sphi 0, %s20
      %s23 = sphi 0, %s21
      %s24 = sphi 0, %s22
      %s25 = sphi 0, %s23
      %s37 = sphi 0, %s39
      %s40 = sphi 0, %s37
      %s41 = sphi 0, %s40
      %s57 = sphi 0, %s41
      %s65 = sphi 0, %s67
      %s68 = sphi 0, %s65
      %s69 = sphi 0, %s68
      %s85 = sphi 0, %s69
      %s89 = sphi 0, %s89
      %s91 = sphi 0, %s89
      %s92 = sphi 0, %s91
      %s106 = sphi 0, %s92
      %s110 = sphi 0, %s110
      %s112 = sphi 0, %s110
      %s113 = sphi 0, %s112
      %s127 = sphi 0, %s113
      %s131 = sphi 0, %s131
      %s133 = sphi 0, %s131
      %s134 = sphi 0, %s133
      %s148 = sphi 0, %s134
      %s152 = sphi 0, %s152
      %s154 = sphi 0, %s152
      %s155 = sphi 0, %s154
      %s169 = sphi 0, %s155
      %s173 = sphi 0, %s173
      %s175 = sphi 0, %s173
      %s176 = sphi 0, %s175
      %s190 = sphi 0, %s176
      %s198 = sphi 0, %s200
      %s201 = sphi 0, %s198
      %s202 = sphi 0, %s201
      %s218 = sphi 0, %s202
    $region4: #{multi_stage_attention.1} parent=1 // loop_header_branch
      %16 = sbr.rel (%p14) target = $region8
    $region5: #{multi_stage_attention.1} parent=1 // loop_body
      %s18 = ssub.s32 %s13, 1
      %s19 = ssub.s32 %s13, 2
      %s26 = sadd.s32 1, %s21
      %p27 = scmp.ge.s32.totalorder %s26, 2
      %s28 = scalar_select %p27, 0, %s26
      %s29 = sadd.s32 1, %s20
      %s30 = scalar_select %p27, %s29, %s20
      %p31 = scmp.ge.s32.totalorder %s30, 2
      %s32 = scalar_select %p31, 0, %s30
      %s33 = ssub.s32 %s20, %s32
      %s34 = ssub.s32 %s21, %s28
      %s35 = sor.u32 %s33, %s34
      %p36 = scmp.eq.s32.totalorder %s35, 0
      %s38 = sadd.s32 %s37, 1
      %s39 = scalar_select %p36, %s37, %s38
      %p42 = pneg %p36
      %p43 = scmp.eq.s32.totalorder %s13, 3
      %p44 = por %p42, %p43
      %p45 = scmp.ne.s32.totalorder %s37, %s40
      %p46 = scmp.eq.s32.totalorder %s13, 0
      %p47 = por %p45, %p46
      %p48 = scmp.ne.s32.totalorder %s37, %s40
      %p49 = scmp.eq.s32.totalorder %s18, 3
      %p50 = por %p48, %p49
      %p51 = scmp.ne.s32.totalorder %s40, %s41
      %p52 = scmp.eq.s32.totalorder %s18, 0
      %p53 = por %p51, %p52
      %p54 = scmp.ne.s32.totalorder %s40, %s41
      %p55 = scmp.eq.s32.totalorder %s19, 3
      %p56 = por %p54, %p55
      %p58 = scmp.ne.s32.totalorder %s41, %s57
      %p59 = scmp.eq.s32.totalorder %s19, 0
      %p60 = por %p58, %p59
      %s61 = ssub.s32 %s20, %s32
      %s62 = ssub.s32 %s21, %s28
      %s63 = sor.u32 %s61, %s62
      %p64 = scmp.eq.s32.totalorder %s63, 0
      %s66 = sadd.s32 %s65, 1
      %s67 = scalar_select %p64, %s65, %s66
      %p70 = pneg %p64
      %p71 = scmp.eq.s32.totalorder %s13, 3
      %p72 = por %p70, %p71
      %p73 = scmp.ne.s32.totalorder %s65, %s68
      %p74 = scmp.eq.s32.totalorder %s13, 0
      %p75 = por %p73, %p74
      %p76 = scmp.ne.s32.totalorder %s65, %s68
      %p77 = scmp.eq.s32.totalorder %s18, 3
      %p78 = por %p76, %p77
      %p79 = scmp.ne.s32.totalorder %s68, %s69
      %p80 = scmp.eq.s32.totalorder %s18, 0
      %p81 = por %p79, %p80
      %p82 = scmp.ne.s32.totalorder %s68, %s69
      %p83 = scmp.eq.s32.totalorder %s19, 3
      %p84 = por %p82, %p83
      %p86 = scmp.ne.s32.totalorder %s69, %s85
      %p87 = scmp.eq.s32.totalorder %s19, 0
      %p88 = por %p86, %p87
      %s90 = sadd.s32 %s89, 1
      %p93 = scmp.eq.s32.totalorder %s13, 3
      %p94 = scmp.ne.s32.totalorder %s89, %s91
      %p95 = scmp.eq.s32.totalorder %s13, 0
      %p96 = por %p94, %p95
      %p97 = scmp.ne.s32.totalorder %s89, %s91
      %p98 = scmp.eq.s32.totalorder %s18, 3
      %p99 = por %p97, %p98
      %p100 = scmp.ne.s32.totalorder %s91, %s92
      %p101 = scmp.eq.s32.totalorder %s18, 0
      %p102 = por %p100, %p101
      %p103 = scmp.ne.s32.totalorder %s91, %s92
      %p104 = scmp.eq.s32.totalorder %s19, 3
      %p105 = por %p103, %p104
      %p107 = scmp.ne.s32.totalorder %s92, %s106
      %p108 = scmp.eq.s32.totalorder %s19, 0
      %p109 = por %p107, %p108
      %s111 = sadd.s32 %s110, 1
      %p114 = scmp.eq.s32.totalorder %s13, 3
      %p115 = scmp.ne.s32.totalorder %s110, %s112
      %p116 = scmp.eq.s32.totalorder %s13, 0
      %p117 = por %p115, %p116
      %p118 = scmp.ne.s32.totalorder %s110, %s112
      %p119 = scmp.eq.s32.totalorder %s18, 3
      %p120 = por %p118, %p119
      %p121 = scmp.ne.s32.totalorder %s112, %s113
      %p122 = scmp.eq.s32.totalorder %s18, 0
      %p123 = por %p121, %p122
      %p124 = scmp.ne.s32.totalorder %s112, %s113
      %p125 = scmp.eq.s32.totalorder %s19, 3
      %p126 = por %p124, %p125
      %p128 = scmp.ne.s32.totalorder %s113, %s127
      %p129 = scmp.eq.s32.totalorder %s19, 0
      %p130 = por %p128, %p129
      %s132 = sadd.s32 %s131, 1
      %p135 = scmp.eq.s32.totalorder %s13, 3
      %p136 = scmp.ne.s32.totalorder %s131, %s133
      %p137 = scmp.eq.s32.totalorder %s13, 0
      %p138 = por %p136, %p137
      %p139 = scmp.ne.s32.totalorder %s131, %s133
      %p140 = scmp.eq.s32.totalorder %s18, 3
      %p141 = por %p139, %p140
      %p142 = scmp.ne.s32.totalorder %s133, %s134
      %p143 = scmp.eq.s32.totalorder %s18, 0
      %p144 = por %p142, %p143
      %p145 = scmp.ne.s32.totalorder %s133, %s134
      %p146 = scmp.eq.s32.totalorder %s19, 3
      %p147 = por %p145, %p146
      %p149 = scmp.ne.s32.totalorder %s134, %s148
      %p150 = scmp.eq.s32.totalorder %s19, 0
      %p151 = por %p149, %p150
      %s153 = sadd.s32 %s152, 1
      %p156 = scmp.eq.s32.totalorder %s13, 3
      %p157 = scmp.ne.s32.totalorder %s152, %s154
      %p158 = scmp.eq.s32.totalorder %s13, 0
      %p159 = por %p157, %p158
      %p160 = scmp.ne.s32.totalorder %s152, %s154
      %p161 = scmp.eq.s32.totalorder %s18, 3
      %p162 = por %p160, %p161
      %p163 = scmp.ne.s32.totalorder %s154, %s155
      %p164 = scmp.eq.s32.totalorder %s18, 0
      %p165 = por %p163, %p164
      %p166 = scmp.ne.s32.totalorder %s154, %s155
      %p167 = scmp.eq.s32.totalorder %s19, 3
      %p168 = por %p166, %p167
      %p170 = scmp.ne.s32.totalorder %s155, %s169
      %p171 = scmp.eq.s32.totalorder %s19, 0
      %p172 = por %p170, %p171
      %s174 = sadd.s32 %s173, 1
      %p177 = scmp.eq.s32.totalorder %s13, 3
      %p178 = scmp.ne.s32.totalorder %s173, %s175
      %p179 = scmp.eq.s32.totalorder %s13, 0
      %p180 = por %p178, %p179
      %p181 = scmp.ne.s32.totalorder %s173, %s175
      %p182 = scmp.eq.s32.totalorder %s18, 3
      %p183 = por %p181, %p182
      %p184 = scmp.ne.s32.totalorder %s175, %s176
      %p185 = scmp.eq.s32.totalorder %s18, 0
      %p186 = por %p184, %p185
      %p187 = scmp.ne.s32.totalorder %s175, %s176
      %p188 = scmp.eq.s32.totalorder %s19, 3
      %p189 = por %p187, %p188
      %p191 = scmp.ne.s32.totalorder %s176, %s190
      %p192 = scmp.eq.s32.totalorder %s19, 0
      %p193 = por %p191, %p192
      %s194 = ssub.s32 %s20, %s32
      %s195 = ssub.s32 %s21, %s28
      %s196 = sor.u32 %s194, %s195
      %p197 = scmp.eq.s32.totalorder %s196, 0
      %s199 = sadd.s32 %s198, 1
      %s200 = scalar_select %p197, %s198, %s199
      %p203 = pneg %p197
      %p204 = scmp.eq.s32.totalorder %s13, 3
      %p205 = por %p203, %p204
      %p206 = scmp.ne.s32.totalorder %s198, %s201
      %p207 = scmp.eq.s32.totalorder %s13, 0
      %p208 = por %p206, %p207
      %p209 = scmp.ne.s32.totalorder %s198, %s201
      %p210 = scmp.eq.s32.totalorder %s18, 3
      %p211 = por %p209, %p210
      %p212 = scmp.ne.s32.totalorder %s201, %s202
      %p213 = scmp.eq.s32.totalorder %s18, 0
      %p214 = por %p212, %p213
      %p215 = scmp.ne.s32.totalorder %s201, %s202
      %p216 = scmp.eq.s32.totalorder %s19, 3
      %p217 = por %p215, %p216
      %p219 = scmp.ne.s32.totalorder %s202, %s218
      %p220 = scmp.eq.s32.totalorder %s19, 0
      %p221 = por %p219, %p220
      %p222 = scmp.le.s32.totalorder 1, %s13
      %p223 = scmp.lt.s32.totalorder %s13, 5
      %p224 = pnand %p222, %p223
      %p225 = pneg %p224
      // Predicated region
      $region9: #{multi_stage_attention.1} parent=5 // pred_check
        _
      $region10: #{multi_stage_attention.1} parent=5 // pred_check_branch
        %227 = sbr.rel (%p224) target = $region12
      $region11: #{multi_stage_attention.1} parent=5 // pred_region
        %s228 = ssub.s32 %s13, 1
        // Predicated region
        $region13: #{multi_stage_attention.1} parent=11 // pred_check
          %p229 = pneg %p102
        $region14: #{multi_stage_attention.1} parent=11 // pred_check_branch
          %231 = sbr.rel (%p229) target = $region16
        $region15: #{multi_stage_attention.1} parent=11 // pred_region
          _
        $region16: #{multi_stage_attention.1} parent=11 // pred_fallthru
          _
        // Predicated region
        $region17: #{multi_stage_attention.1} parent=11 // pred_check
          %p232 = pneg %p123
        $region18: #{multi_stage_attention.1} parent=11 // pred_check_branch
          %234 = sbr.rel (%p232) target = $region20
        $region19: #{multi_stage_attention.1} parent=11 // pred_region
          _
        $region20: #{multi_stage_attention.1} parent=11 // pred_fallthru
          _
        // Predicated region
        $region21: #{multi_stage_attention.1} parent=11 // pred_check
          %p235 = pneg %p144
        $region22: #{multi_stage_attention.1} parent=11 // pred_check_branch
          %237 = sbr.rel (%p235) target = $region24
        $region23: #{multi_stage_attention.1} parent=11 // pred_region
          _
        $region24: #{multi_stage_attention.1} parent=11 // pred_fallthru
          _
        // Predicated region
        $region25: #{multi_stage_attention.1} parent=11 // pred_check
          %p238 = pneg %p165
        $region26: #{multi_stage_attention.1} parent=11 // pred_check_branch
          %240 = sbr.rel (%p238) target = $region28
        $region27: #{multi_stage_attention.1} parent=11 // pred_region
          _
        $region28: #{multi_stage_attention.1} parent=11 // pred_fallthru
          _
        // Predicated region
        $region29: #{multi_stage_attention.1} parent=11 // pred_check
          %p241 = pneg %p186
        $region30: #{multi_stage_attention.1} parent=11 // pred_check_branch
          %243 = sbr.rel (%p241) target = $region32
        $region31: #{multi_stage_attention.1} parent=11 // pred_region
          _
        $region32: #{multi_stage_attention.1} parent=11 // pred_fallthru
          _
      $region12: #{multi_stage_attention.1} parent=5 // pred_fallthru
        _
      %p244 = scmp.lt.s32.totalorder %s13, 4
      // Predicated region
      $region33: #{multi_stage_attention.1} parent=5 // pred_check
        %p245 = pneg %p244
      $region34: #{multi_stage_attention.1} parent=5 // pred_check_branch
        %247 = sbr.rel (%p245) target = $region36
      $region35: #{multi_stage_attention.1} parent=5 // pred_region
        // Predicated region
        $region37: #{multi_stage_attention.1} parent=35 // pred_check
          %p248 = pneg %p47
        $region38: #{multi_stage_attention.1} parent=35 // pred_check_branch
          %250 = sbr.rel (%p248) target = $region40
        $region39: #{multi_stage_attention.1} parent=35 // pred_region
          %s251 = sand.u32 %s37, 1
          %s252 = sand.u32 %s37, 1
          %s253 = smul.addr %s252, 2048
          %s254 = scalar_lea.vmem [#allocation2], %s253
          %s255 = smul.addr %s20, 512
          %s256 = sadd.s32 %s21, %s255
          %s257 = smul.addr %s256, 8
          %s258 = scalar_lea.vmem %s0, %s257
          // Predicated region
          $region41: #{multi_stage_attention.1} parent=39 // pred_check
            _
          $region42: #{multi_stage_attention.1} parent=39 // pred_check_branch
            %260 = sbr.rel (0) target = $region44
          $region43: #{multi_stage_attention.1} parent=39 // pred_region
            // Predicated region
            $region45: #{multi_stage_attention.1} parent=43 // pred_check
              _
            $region46: #{multi_stage_attention.1} parent=43 // pred_check_branch
              %262 = sbr.rel (0) target = $region48
            $region47: #{multi_stage_attention.1} parent=43 // pred_region
              // Predicated region
              $region60: #{multi_stage_attention.1} parent=47 // pred_check
                _
              $region61: #{multi_stage_attention.1} parent=47 // pred_check_branch
                %788 = sbr.rel (0) target = $region63
              $region62: #{multi_stage_attention.1} parent=47 // pred_region
                loop: start=0, step=1, limit=1
                $region64: #{multi_stage_attention.1} parent=62 // loop_pre_header
                  _
                $region65: #{multi_stage_attention.1} parent=62 // loop_header
                  %s790 = sphi 0, %s794
                  %p791 = scmp.ge.s32.totalorder %s790, 1
                  %s795 = sphi %s258, %s258
                  %s796 = sphi %s254, %s254
                $region66: #{multi_stage_attention.1} parent=62 // loop_header_branch
                  %793 = sbr.rel (%p791) target = $region70
                $region67: #{multi_stage_attention.1} parent=62 // loop_body
                  %v797 = vld [vmem:[%s795] sm:$0xff]
                  %798 = vst [vmem:[%s796] sm:$0xff] %v797
                  %v799 = vld [vmem:[%s795 + $0x10] sm:$0xff]
                  %800 = vst [vmem:[%s796 + $0x8] sm:$0xff] %v799
                  %v801 = vld [vmem:[%s795 + $0x20] sm:$0xff]
                  %802 = vst [vmem:[%s796 + $0x10] sm:$0xff] %v801
                  %v803 = vld [vmem:[%s795 + $0x30] sm:$0xff]
                  %804 = vst [vmem:[%s796 + $0x18] sm:$0xff] %v803
                  %v805 = vld [vmem:[%s795 + $0x40] sm:$0xff]
                  %806 = vst [vmem:[%s796 + $0x20] sm:$0xff] %v805
                  %v807 = vld [vmem:[%s795 + $0x50] sm:$0xff]
                  %808 = vst [vmem:[%s796 + $0x28] sm:$0xff] %v807
                  %v809 = vld [vmem:[%s795 + $0x60] sm:$0xff]
                  %810 = vst [vmem:[%s796 + $0x30] sm:$0xff] %v809
                  %v811 = vld [vmem:[%s795 + $0x70] sm:$0xff]
                  %812 = vst [vmem:[%s796 + $0x38] sm:$0xff] %v811
                  %v813 = vld [vmem:[%s795 + $0x80] sm:$0xff]
                  %814 = vst [vmem:[%s796 + $0x40] sm:$0xff] %v813
                  %v815 = vld [vmem:[%s795 + $0x90] sm:$0xff]
                  %816 = vst [vmem:[%s796 + $0x48] sm:$0xff] %v815
                  %v817 = vld [vmem:[%s795 + $0xa0] sm:$0xff]
                  %818 = vst [vmem:[%s796 + $0x50] sm:$0xff] %v817
                  %v819 = vld [vmem:[%s795 + $0xb0] sm:$0xff]
                  %820 = vst [vmem:[%s796 + $0x58] sm:$0xff] %v819
                  %v821 = vld [vmem:[%s795 + $0xc0] sm:$0xff]
                  %822 = vst [vmem:[%s796 + $0x60] sm:$0xff] %v821
                  %v823 = vld [vmem:[%s795 + $0xd0] sm:$0xff]
                  %824 = vst [vmem:[%s796 + $0x68] sm:$0xff] %v823
                  %v825 = vld [vmem:[%s795 + $0xe0] sm:$0xff]
                  %826 = vst [vmem:[%s796 + $0x70] sm:$0xff] %v825
                  %v827 = vld [vmem:[%s795 + $0xf0] sm:$0xff]
                  %828 = vst [vmem:[%s796 + $0x78] sm:$0xff] %v827
                  %v829 = vld [vmem:[%s795 + $0x100] sm:$0xff]
                  %830 = vst [vmem:[%s796 + $0x80] sm:$0xff] %v829
                  %v831 = vld [vmem:[%s795 + $0x110] sm:$0xff]
                  %832 = vst [vmem:[%s796 + $0x88] sm:$0xff] %v831
                  %v833 = vld [vmem:[%s795 + $0x120] sm:$0xff]
                  %834 = vst [vmem:[%s796 + $0x90] sm:$0xff] %v833
                  %v835 = vld [vmem:[%s795 + $0x130] sm:$0xff]
                  %836 = vst [vmem:[%s796 + $0x98] sm:$0xff] %v835
                  %v837 = vld [vmem:[%s795 + $0x140] sm:$0xff]
                  %838 = vst [vmem:[%s796 + $0xa0] sm:$0xff] %v837
                  %v839 = vld [vmem:[%s795 + $0x150] sm:$0xff]
                  %840 = vst [vmem:[%s796 + $0xa8] sm:$0xff] %v839
                  %v841 = vld [vmem:[%s795 + $0x160] sm:$0xff]
                  %842 = vst [vmem:[%s796 + $0xb0] sm:$0xff] %v841
                  %v843 = vld [vmem:[%s795 + $0x170] sm:$0xff]
                  %844 = vst [vmem:[%s796 + $0xb8] sm:$0xff] %v843
                  %v845 = vld [vmem:[%s795 + $0x180] sm:$0xff]
                  %846 = vst [vmem:[%s796 + $0xc0] sm:$0xff] %v845
                  %v847 = vld [vmem:[%s795 + $0x190] sm:$0xff]
                  %848 = vst [vmem:[%s796 + $0xc8] sm:$0xff] %v847
                  %v849 = vld [vmem:[%s795 + $0x1a0] sm:$0xff]
                  %850 = vst [vmem:[%s796 + $0xd0] sm:$0xff] %v849
                  %v851 = vld [vmem:[%s795 + $0x1b0] sm:$0xff]
                  %852 = vst [vmem:[%s796 + $0xd8] sm:$0xff] %v851
                  %v853 = vld [vmem:[%s795 + $0x1c0] sm:$0xff]
                  %854 = vst [vmem:[%s796 + $0xe0] sm:$0xff] %v853
                  %v855 = vld [vmem:[%s795 + $0x1d0] sm:$0xff]
                  %856 = vst [vmem:[%s796 + $0xe8] sm:$0xff] %v855
                  %v857 = vld [vmem:[%s795 + $0x1e0] sm:$0xff]
                  %858 = vst [vmem:[%s796 + $0xf0] sm:$0xff] %v857
                  %v859 = vld [vmem:[%s795 + $0x1f0] sm:$0xff]
                  %860 = vst [vmem:[%s796 + $0xf8] sm:$0xff] %v859
                  %v861 = vld [vmem:[%s795 + $0x200] sm:$0xff]
                  %862 = vst [vmem:[%s796 + $0x100] sm:$0xff] %v861
                  %v863 = vld [vmem:[%s795 + $0x210] sm:$0xff]
                  %864 = vst [vmem:[%s796 + $0x108] sm:$0xff] %v863
                  %v865 = vld [vmem:[%s795 + $0x220] sm:$0xff]
                  %866 = vst [vmem:[%s796 + $0x110] sm:$0xff] %v865
                  %v867 = vld [vmem:[%s795 + $0x230] sm:$0xff]
                  %868 = vst [vmem:[%s796 + $0x118] sm:$0xff] %v867
                  %v869 = vld [vmem:[%s795 + $0x240] sm:$0xff]
                  %870 = vst [vmem:[%s796 + $0x120] sm:$0xff] %v869
                  %v871 = vld [vmem:[%s795 + $0x250] sm:$0xff]
                  %872 = vst [vmem:[%s796 + $0x128] sm:$0xff] %v871
                  %v873 = vld [vmem:[%s795 + $0x260] sm:$0xff]
                  %874 = vst [vmem:[%s796 + $0x130] sm:$0xff] %v873
                  %v875 = vld [vmem:[%s795 + $0x270] sm:$0xff]
                  %876 = vst [vmem:[%s796 + $0x138] sm:$0xff] %v875
                  %v877 = vld [vmem:[%s795 + $0x280] sm:$0xff]
                  %878 = vst [vmem:[%s796 + $0x140] sm:$0xff] %v877
                  %v879 = vld [vmem:[%s795 + $0x290] sm:$0xff]
                  %880 = vst [vmem:[%s796 + $0x148] sm:$0xff] %v879
                  %v881 = vld [vmem:[%s795 + $0x2a0] sm:$0xff]
                  %882 = vst [vmem:[%s796 + $0x150] sm:$0xff] %v881
                  %v883 = vld [vmem:[%s795 + $0x2b0] sm:$0xff]
                  %884 = vst [vmem:[%s796 + $0x158] sm:$0xff] %v883
                  %v885 = vld [vmem:[%s795 + $0x2c0] sm:$0xff]
                  %886 = vst [vmem:[%s796 + $0x160] sm:$0xff] %v885
                  %v887 = vld [vmem:[%s795 + $0x2d0] sm:$0xff]
                  %888 = vst [vmem:[%s796 + $0x168] sm:$0xff] %v887
                  %v889 = vld [vmem:[%s795 + $0x2e0] sm:$0xff]
                  %890 = vst [vmem:[%s796 + $0x170] sm:$0xff] %v889
                  %v891 = vld [vmem:[%s795 + $0x2f0] sm:$0xff]
                  %892 = vst [vmem:[%s796 + $0x178] sm:$0xff] %v891
                  %v893 = vld [vmem:[%s795 + $0x300] sm:$0xff]
                  %894 = vst [vmem:[%s796 + $0x180] sm:$0xff] %v893
                  %v895 = vld [vmem:[%s795 + $0x310] sm:$0xff]
                  %896 = vst [vmem:[%s796 + $0x188] sm:$0xff] %v895
                  %v897 = vld [vmem:[%s795 + $0x320] sm:$0xff]
                  %898 = vst [vmem:[%s796 + $0x190] sm:$0xff] %v897
                  %v899 = vld [vmem:[%s795 + $0x330] sm:$0xff]
                  %900 = vst [vmem:[%s796 + $0x198] sm:$0xff] %v899
                  %v901 = vld [vmem:[%s795 + $0x340] sm:$0xff]
                  %902 = vst [vmem:[%s796 + $0x1a0] sm:$0xff] %v901
                  %v903 = vld [vmem:[%s795 + $0x350] sm:$0xff]
                  %904 = vst [vmem:[%s796 + $0x1a8] sm:$0xff] %v903
                  %v905 = vld [vmem:[%s795 + $0x360] sm:$0xff]
                  %906 = vst [vmem:[%s796 + $0x1b0] sm:$0xff] %v905
                  %v907 = vld [vmem:[%s795 + $0x370] sm:$0xff]
                  %908 = vst [vmem:[%s796 + $0x1b8] sm:$0xff] %v907
                  %v909 = vld [vmem:[%s795 + $0x380] sm:$0xff]
                  %910 = vst [vmem:[%s796 + $0x1c0] sm:$0xff] %v909
                  %v911 = vld [vmem:[%s795 + $0x390] sm:$0xff]
                  %912 = vst [vmem:[%s796 + $0x1c8] sm:$0xff] %v911
                  %v913 = vld [vmem:[%s795 + $0x3a0] sm:$0xff]
                  %914 = vst [vmem:[%s796 + $0x1d0] sm:$0xff] %v913
                  %v915 = vld [vmem:[%s795 + $0x3b0] sm:$0xff]
                  %916 = vst [vmem:[%s796 + $0x1d8] sm:$0xff] %v915
                  %v917 = vld [vmem:[%s795 + $0x3c0] sm:$0xff]
                  %918 = vst [vmem:[%s796 + $0x1e0] sm:$0xff] %v917
                  %v919 = vld [vmem:[%s795 + $0x3d0] sm:$0xff]
                  %920 = vst [vmem:[%s796 + $0x1e8] sm:$0xff] %v919
                  %v921 = vld [vmem:[%s795 + $0x3e0] sm:$0xff]
                  %922 = vst [vmem:[%s796 + $0x1f0] sm:$0xff] %v921
                  %v923 = vld [vmem:[%s795 + $0x3f0] sm:$0xff]
                  %924 = vst [vmem:[%s796 + $0x1f8] sm:$0xff] %v923
                  %v925 = vld [vmem:[%s795 + $0x400] sm:$0xff]
                  %926 = vst [vmem:[%s796 + $0x200] sm:$0xff] %v925
                  %v927 = vld [vmem:[%s795 + $0x410] sm:$0xff]
                  %928 = vst [vmem:[%s796 + $0x208] sm:$0xff] %v927
                  %v929 = vld [vmem:[%s795 + $0x420] sm:$0xff]
                  %930 = vst [vmem:[%s796 + $0x210] sm:$0xff] %v929
                  %v931 = vld [vmem:[%s795 + $0x430] sm:$0xff]
                  %932 = vst [vmem:[%s796 + $0x218] sm:$0xff] %v931
                  %v933 = vld [vmem:[%s795 + $0x440] sm:$0xff]
                  %934 = vst [vmem:[%s796 + $0x220] sm:$0xff] %v933
                  %v935 = vld [vmem:[%s795 + $0x450] sm:$0xff]
                  %936 = vst [vmem:[%s796 + $0x228] sm:$0xff] %v935
                  %v937 = vld [vmem:[%s795 + $0x460] sm:$0xff]
                  %938 = vst [vmem:[%s796 + $0x230] sm:$0xff] %v937
                  %v939 = vld [vmem:[%s795 + $0x470] sm:$0xff]
                  %940 = vst [vmem:[%s796 + $0x238] sm:$0xff] %v939
                  %v941 = vld [vmem:[%s795 + $0x480] sm:$0xff]
                  %942 = vst [vmem:[%s796 + $0x240] sm:$0xff] %v941
                  %v943 = vld [vmem:[%s795 + $0x490] sm:$0xff]
                  %944 = vst [vmem:[%s796 + $0x248] sm:$0xff] %v943
                  %v945 = vld [vmem:[%s795 + $0x4a0] sm:$0xff]
                  %946 = vst [vmem:[%s796 + $0x250] sm:$0xff] %v945
                  %v947 = vld [vmem:[%s795 + $0x4b0] sm:$0xff]
                  %948 = vst [vmem:[%s796 + $0x258] sm:$0xff] %v947
                  %v949 = vld [vmem:[%s795 + $0x4c0] sm:$0xff]
                  %950 = vst [vmem:[%s796 + $0x260] sm:$0xff] %v949
                  %v951 = vld [vmem:[%s795 + $0x4d0] sm:$0xff]
                  %952 = vst [vmem:[%s796 + $0x268] sm:$0xff] %v951
                  %v953 = vld [vmem:[%s795 + $0x4e0] sm:$0xff]
                  %954 = vst [vmem:[%s796 + $0x270] sm:$0xff] %v953
                  %v955 = vld [vmem:[%s795 + $0x4f0] sm:$0xff]
                  %956 = vst [vmem:[%s796 + $0x278] sm:$0xff] %v955
                  %v957 = vld [vmem:[%s795 + $0x500] sm:$0xff]
                  %958 = vst [vmem:[%s796 + $0x280] sm:$0xff] %v957
                  %v959 = vld [vmem:[%s795 + $0x510] sm:$0xff]
                  %960 = vst [vmem:[%s796 + $0x288] sm:$0xff] %v959
                  %v961 = vld [vmem:[%s795 + $0x520] sm:$0xff]
                  %962 = vst [vmem:[%s796 + $0x290] sm:$0xff] %v961
                  %v963 = vld [vmem:[%s795 + $0x530] sm:$0xff]
                  %964 = vst [vmem:[%s796 + $0x298] sm:$0xff] %v963
                  %v965 = vld [vmem:[%s795 + $0x540] sm:$0xff]
                  %966 = vst [vmem:[%s796 + $0x2a0] sm:$0xff] %v965
                  %v967 = vld [vmem:[%s795 + $0x550] sm:$0xff]
                  %968 = vst [vmem:[%s796 + $0x2a8] sm:$0xff] %v967
                  %v969 = vld [vmem:[%s795 + $0x560] sm:$0xff]
                  %970 = vst [vmem:[%s796 + $0x2b0] sm:$0xff] %v969
                  %v971 = vld [vmem:[%s795 + $0x570] sm:$0xff]
                  %972 = vst [vmem:[%s796 + $0x2b8] sm:$0xff] %v971
                  %v973 = vld [vmem:[%s795 + $0x580] sm:$0xff]
                  %974 = vst [vmem:[%s796 + $0x2c0] sm:$0xff] %v973
                  %v975 = vld [vmem:[%s795 + $0x590] sm:$0xff]
                  %976 = vst [vmem:[%s796 + $0x2c8] sm:$0xff] %v975
                  %v977 = vld [vmem:[%s795 + $0x5a0] sm:$0xff]
                  %978 = vst [vmem:[%s796 + $0x2d0] sm:$0xff] %v977
                  %v979 = vld [vmem:[%s795 + $0x5b0] sm:$0xff]
                  %980 = vst [vmem:[%s796 + $0x2d8] sm:$0xff] %v979
                  %v981 = vld [vmem:[%s795 + $0x5c0] sm:$0xff]
                  %982 = vst [vmem:[%s796 + $0x2e0] sm:$0xff] %v981
                  %v983 = vld [vmem:[%s795 + $0x5d0] sm:$0xff]
                  %984 = vst [vmem:[%s796 + $0x2e8] sm:$0xff] %v983
                  %v985 = vld [vmem:[%s795 + $0x5e0] sm:$0xff]
                  %986 = vst [vmem:[%s796 + $0x2f0] sm:$0xff] %v985
                  %v987 = vld [vmem:[%s795 + $0x5f0] sm:$0xff]
                  %988 = vst [vmem:[%s796 + $0x2f8] sm:$0xff] %v987
                  %v989 = vld [vmem:[%s795 + $0x600] sm:$0xff]
                  %990 = vst [vmem:[%s796 + $0x300] sm:$0xff] %v989
                  %v991 = vld [vmem:[%s795 + $0x610] sm:$0xff]
                  %992 = vst [vmem:[%s796 + $0x308] sm:$0xff] %v991
                  %v993 = vld [vmem:[%s795 + $0x620] sm:$0xff]
                  %994 = vst [vmem:[%s796 + $0x310] sm:$0xff] %v993
                  %v995 = vld [vmem:[%s795 + $0x630] sm:$0xff]
                  %996 = vst [vmem:[%s796 + $0x318] sm:$0xff] %v995
                  %v997 = vld [vmem:[%s795 + $0x640] sm:$0xff]
                  %998 = vst [vmem:[%s796 + $0x320] sm:$0xff] %v997
                  %v999 = vld [vmem:[%s795 + $0x650] sm:$0xff]
                  %1000 = vst [vmem:[%s796 + $0x328] sm:$0xff] %v999
                  %v1001 = vld [vmem:[%s795 + $0x660] sm:$0xff]
                  %1002 = vst [vmem:[%s796 + $0x330] sm:$0xff] %v1001
                  %v1003 = vld [vmem:[%s795 + $0x670] sm:$0xff]
                  %1004 = vst [vmem:[%s796 + $0x338] sm:$0xff] %v1003
                  %v1005 = vld [vmem:[%s795 + $0x680] sm:$0xff]
                  %1006 = vst [vmem:[%s796 + $0x340] sm:$0xff] %v1005
                  %v1007 = vld [vmem:[%s795 + $0x690] sm:$0xff]
                  %1008 = vst [vmem:[%s796 + $0x348] sm:$0xff] %v1007
                  %v1009 = vld [vmem:[%s795 + $0x6a0] sm:$0xff]
                  %1010 = vst [vmem:[%s796 + $0x350] sm:$0xff] %v1009
                  %v1011 = vld [vmem:[%s795 + $0x6b0] sm:$0xff]
                  %1012 = vst [vmem:[%s796 + $0x358] sm:$0xff] %v1011
                  %v1013 = vld [vmem:[%s795 + $0x6c0] sm:$0xff]
                  %1014 = vst [vmem:[%s796 + $0x360] sm:$0xff] %v1013
                  %v1015 = vld [vmem:[%s795 + $0x6d0] sm:$0xff]
                  %1016 = vst [vmem:[%s796 + $0x368] sm:$0xff] %v1015
                  %v1017 = vld [vmem:[%s795 + $0x6e0] sm:$0xff]
                  %1018 = vst [vmem:[%s796 + $0x370] sm:$0xff] %v1017
                  %v1019 = vld [vmem:[%s795 + $0x6f0] sm:$0xff]
                  %1020 = vst [vmem:[%s796 + $0x378] sm:$0xff] %v1019
                  %v1021 = vld [vmem:[%s795 + $0x700] sm:$0xff]
                  %1022 = vst [vmem:[%s796 + $0x380] sm:$0xff] %v1021
                  %v1023 = vld [vmem:[%s795 + $0x710] sm:$0xff]
                  %1024 = vst [vmem:[%s796 + $0x388] sm:$0xff] %v1023
                  %v1025 = vld [vmem:[%s795 + $0x720] sm:$0xff]
                  %1026 = vst [vmem:[%s796 + $0x390] sm:$0xff] %v1025
                  %v1027 = vld [vmem:[%s795 + $0x730] sm:$0xff]
                  %1028 = vst [vmem:[%s796 + $0x398] sm:$0xff] %v1027
                  %v1029 = vld [vmem:[%s795 + $0x740] sm:$0xff]
                  %1030 = vst [vmem:[%s796 + $0x3a0] sm:$0xff] %v1029
                  %v1031 = vld [vmem:[%s795 + $0x750] sm:$0xff]
                  %1032 = vst [vmem:[%s796 + $0x3a8] sm:$0xff] %v1031
                  %v1033 = vld [vmem:[%s795 + $0x760] sm:$0xff]
                  %1034 = vst [vmem:[%s796 + $0x3b0] sm:$0xff] %v1033
                  %v1035 = vld [vmem:[%s795 + $0x770] sm:$0xff]
                  %1036 = vst [vmem:[%s796 + $0x3b8] sm:$0xff] %v1035
                  %v1037 = vld [vmem:[%s795 + $0x780] sm:$0xff]
                  %1038 = vst [vmem:[%s796 + $0x3c0] sm:$0xff] %v1037
                  %v1039 = vld [vmem:[%s795 + $0x790] sm:$0xff]
                  %1040 = vst [vmem:[%s796 + $0x3c8] sm:$0xff] %v1039
                  %v1041 = vld [vmem:[%s795 + $0x7a0] sm:$0xff]
                  %1042 = vst [vmem:[%s796 + $0x3d0] sm:$0xff] %v1041
                  %v1043 = vld [vmem:[%s795 + $0x7b0] sm:$0xff]
                  %1044 = vst [vmem:[%s796 + $0x3d8] sm:$0xff] %v1043
                  %v1045 = vld [vmem:[%s795 + $0x7c0] sm:$0xff]
                  %1046 = vst [vmem:[%s796 + $0x3e0] sm:$0xff] %v1045
                  %v1047 = vld [vmem:[%s795 + $0x7d0] sm:$0xff]
                  %1048 = vst [vmem:[%s796 + $0x3e8] sm:$0xff] %v1047
                  %v1049 = vld [vmem:[%s795 + $0x7e0] sm:$0xff]
                  %1050 = vst [vmem:[%s796 + $0x3f0] sm:$0xff] %v1049
                  %v1051 = vld [vmem:[%s795 + $0x7f0] sm:$0xff]
                  %1052 = vst [vmem:[%s796 + $0x3f8] sm:$0xff] %v1051
                  %v1053 = vld [vmem:[%s795 + $0x800] sm:$0xff]
                  %1054 = vst [vmem:[%s796 + $0x400] sm:$0xff] %v1053
                  %v1055 = vld [vmem:[%s795 + $0x810] sm:$0xff]
                  %1056 = vst [vmem:[%s796 + $0x408] sm:$0xff] %v1055
                  %v1057 = vld [vmem:[%s795 + $0x820] sm:$0xff]
                  %1058 = vst [vmem:[%s796 + $0x410] sm:$0xff] %v1057
                  %v1059 = vld [vmem:[%s795 + $0x830] sm:$0xff]
                  %1060 = vst [vmem:[%s796 + $0x418] sm:$0xff] %v1059
                  %v1061 = vld [vmem:[%s795 + $0x840] sm:$0xff]
                  %1062 = vst [vmem:[%s796 + $0x420] sm:$0xff] %v1061
                  %v1063 = vld [vmem:[%s795 + $0x850] sm:$0xff]
                  %1064 = vst [vmem:[%s796 + $0x428] sm:$0xff] %v1063
                  %v1065 = vld [vmem:[%s795 + $0x860] sm:$0xff]
                  %1066 = vst [vmem:[%s796 + $0x430] sm:$0xff] %v1065
                  %v1067 = vld [vmem:[%s795 + $0x870] sm:$0xff]
                  %1068 = vst [vmem:[%s796 + $0x438] sm:$0xff] %v1067
                  %v1069 = vld [vmem:[%s795 + $0x880] sm:$0xff]
                  %1070 = vst [vmem:[%s796 + $0x440] sm:$0xff] %v1069
                  %v1071 = vld [vmem:[%s795 + $0x890] sm:$0xff]
                  %1072 = vst [vmem:[%s796 + $0x448] sm:$0xff] %v1071
                  %v1073 = vld [vmem:[%s795 + $0x8a0] sm:$0xff]
                  %1074 = vst [vmem:[%s796 + $0x450] sm:$0xff] %v1073
                  %v1075 = vld [vmem:[%s795 + $0x8b0] sm:$0xff]
                  %1076 = vst [vmem:[%s796 + $0x458] sm:$0xff] %v1075
                  %v1077 = vld [vmem:[%s795 + $0x8c0] sm:$0xff]
                  %1078 = vst [vmem:[%s796 + $0x460] sm:$0xff] %v1077
                  %v1079 = vld [vmem:[%s795 + $0x8d0] sm:$0xff]
                  %1080 = vst [vmem:[%s796 + $0x468] sm:$0xff] %v1079
                  %v1081 = vld [vmem:[%s795 + $0x8e0] sm:$0xff]
                  %1082 = vst [vmem:[%s796 + $0x470] sm:$0xff] %v1081
                  %v1083 = vld [vmem:[%s795 + $0x8f0] sm:$0xff]
                  %1084 = vst [vmem:[%s796 + $0x478] sm:$0xff] %v1083
                  %v1085 = vld [vmem:[%s795 + $0x900] sm:$0xff]
                  %1086 = vst [vmem:[%s796 + $0x480] sm:$0xff] %v1085
                  %v1087 = vld [vmem:[%s795 + $0x910] sm:$0xff]
                  %1088 = vst [vmem:[%s796 + $0x488] sm:$0xff] %v1087
                  %v1089 = vld [vmem:[%s795 + $0x920] sm:$0xff]
                  %1090 = vst [vmem:[%s796 + $0x490] sm:$0xff] %v1089
                  %v1091 = vld [vmem:[%s795 + $0x930] sm:$0xff]
                  %1092 = vst [vmem:[%s796 + $0x498] sm:$0xff] %v1091
                  %v1093 = vld [vmem:[%s795 + $0x940] sm:$0xff]
                  %1094 = vst [vmem:[%s796 + $0x4a0] sm:$0xff] %v1093
                  %v1095 = vld [vmem:[%s795 + $0x950] sm:$0xff]
                  %1096 = vst [vmem:[%s796 + $0x4a8] sm:$0xff] %v1095
                  %v1097 = vld [vmem:[%s795 + $0x960] sm:$0xff]
                  %1098 = vst [vmem:[%s796 + $0x4b0] sm:$0xff] %v1097
                  %v1099 = vld [vmem:[%s795 + $0x970] sm:$0xff]
                  %1100 = vst [vmem:[%s796 + $0x4b8] sm:$0xff] %v1099
                  %v1101 = vld [vmem:[%s795 + $0x980] sm:$0xff]
                  %1102 = vst [vmem:[%s796 + $0x4c0] sm:$0xff] %v1101
                  %v1103 = vld [vmem:[%s795 + $0x990] sm:$0xff]
                  %1104 = vst [vmem:[%s796 + $0x4c8] sm:$0xff] %v1103
                  %v1105 = vld [vmem:[%s795 + $0x9a0] sm:$0xff]
                  %1106 = vst [vmem:[%s796 + $0x4d0] sm:$0xff] %v1105
                  %v1107 = vld [vmem:[%s795 + $0x9b0] sm:$0xff]
                  %1108 = vst [vmem:[%s796 + $0x4d8] sm:$0xff] %v1107
                  %v1109 = vld [vmem:[%s795 + $0x9c0] sm:$0xff]
                  %1110 = vst [vmem:[%s796 + $0x4e0] sm:$0xff] %v1109
                  %v1111 = vld [vmem:[%s795 + $0x9d0] sm:$0xff]
                  %1112 = vst [vmem:[%s796 + $0x4e8] sm:$0xff] %v1111
                  %v1113 = vld [vmem:[%s795 + $0x9e0] sm:$0xff]
                  %1114 = vst [vmem:[%s796 + $0x4f0] sm:$0xff] %v1113
                  %v1115 = vld [vmem:[%s795 + $0x9f0] sm:$0xff]
                  %1116 = vst [vmem:[%s796 + $0x4f8] sm:$0xff] %v1115
                  %v1117 = vld [vmem:[%s795 + $0xa00] sm:$0xff]
                  %1118 = vst [vmem:[%s796 + $0x500] sm:$0xff] %v1117
                  %v1119 = vld [vmem:[%s795 + $0xa10] sm:$0xff]
                  %1120 = vst [vmem:[%s796 + $0x508] sm:$0xff] %v1119
                  %v1121 = vld [vmem:[%s795 + $0xa20] sm:$0xff]
                  %1122 = vst [vmem:[%s796 + $0x510] sm:$0xff] %v1121
                  %v1123 = vld [vmem:[%s795 + $0xa30] sm:$0xff]
                  %1124 = vst [vmem:[%s796 + $0x518] sm:$0xff] %v1123
                  %v1125 = vld [vmem:[%s795 + $0xa40] sm:$0xff]
                  %1126 = vst [vmem:[%s796 + $0x520] sm:$0xff] %v1125
                  %v1127 = vld [vmem:[%s795 + $0xa50] sm:$0xff]
                  %1128 = vst [vmem:[%s796 + $0x528] sm:$0xff] %v1127
                  %v1129 = vld [vmem:[%s795 + $0xa60] sm:$0xff]
                  %1130 = vst [vmem:[%s796 + $0x530] sm:$0xff] %v1129
                  %v1131 = vld [vmem:[%s795 + $0xa70] sm:$0xff]
                  %1132 = vst [vmem:[%s796 + $0x538] sm:$0xff] %v1131
                  %v1133 = vld [vmem:[%s795 + $0xa80] sm:$0xff]
                  %1134 = vst [vmem:[%s796 + $0x540] sm:$0xff] %v1133
                  %v1135 = vld [vmem:[%s795 + $0xa90] sm:$0xff]
                  %1136 = vst [vmem:[%s796 + $0x548] sm:$0xff] %v1135
                  %v1137 = vld [vmem:[%s795 + $0xaa0] sm:$0xff]
                  %1138 = vst [vmem:[%s796 + $0x550] sm:$0xff] %v1137
                  %v1139 = vld [vmem:[%s795 + $0xab0] sm:$0xff]
                  %1140 = vst [vmem:[%s796 + $0x558] sm:$0xff] %v1139
                  %v1141 = vld [vmem:[%s795 + $0xac0] sm:$0xff]
                  %1142 = vst [vmem:[%s796 + $0x560] sm:$0xff] %v1141
                  %v1143 = vld [vmem:[%s795 + $0xad0] sm:$0xff]
                  %1144 = vst [vmem:[%s796 + $0x568] sm:$0xff] %v1143
                  %v1145 = vld [vmem:[%s795 + $0xae0] sm:$0xff]
                  %1146 = vst [vmem:[%s796 + $0x570] sm:$0xff] %v1145
                  %v1147 = vld [vmem:[%s795 + $0xaf0] sm:$0xff]
                  %1148 = vst [vmem:[%s796 + $0x578] sm:$0xff] %v1147
                  %v1149 = vld [vmem:[%s795 + $0xb00] sm:$0xff]
                  %1150 = vst [vmem:[%s796 + $0x580] sm:$0xff] %v1149
                  %v1151 = vld [vmem:[%s795 + $0xb10] sm:$0xff]
                  %1152 = vst [vmem:[%s796 + $0x588] sm:$0xff] %v1151
                  %v1153 = vld [vmem:[%s795 + $0xb20] sm:$0xff]
                  %1154 = vst [vmem:[%s796 + $0x590] sm:$0xff] %v1153
                  %v1155 = vld [vmem:[%s795 + $0xb30] sm:$0xff]
                  %1156 = vst [vmem:[%s796 + $0x598] sm:$0xff] %v1155
                  %v1157 = vld [vmem:[%s795 + $0xb40] sm:$0xff]
                  %1158 = vst [vmem:[%s796 + $0x5a0] sm:$0xff] %v1157
                  %v1159 = vld [vmem:[%s795 + $0xb50] sm:$0xff]
                  %1160 = vst [vmem:[%s796 + $0x5a8] sm:$0xff] %v1159
                  %v1161 = vld [vmem:[%s795 + $0xb60] sm:$0xff]
                  %1162 = vst [vmem:[%s796 + $0x5b0] sm:$0xff] %v1161
                  %v1163 = vld [vmem:[%s795 + $0xb70] sm:$0xff]
                  %1164 = vst [vmem:[%s796 + $0x5b8] sm:$0xff] %v1163
                  %v1165 = vld [vmem:[%s795 + $0xb80] sm:$0xff]
                  %1166 = vst [vmem:[%s796 + $0x5c0] sm:$0xff] %v1165
                  %v1167 = vld [vmem:[%s795 + $0xb90] sm:$0xff]
                  %1168 = vst [vmem:[%s796 + $0x5c8] sm:$0xff] %v1167
                  %v1169 = vld [vmem:[%s795 + $0xba0] sm:$0xff]
                  %1170 = vst [vmem:[%s796 + $0x5d0] sm:$0xff] %v1169
                  %v1171 = vld [vmem:[%s795 + $0xbb0] sm:$0xff]
                  %1172 = vst [vmem:[%s796 + $0x5d8] sm:$0xff] %v1171
                  %v1173 = vld [vmem:[%s795 + $0xbc0] sm:$0xff]
                  %1174 = vst [vmem:[%s796 + $0x5e0] sm:$0xff] %v1173
                  %v1175 = vld [vmem:[%s795 + $0xbd0] sm:$0xff]
                  %1176 = vst [vmem:[%s796 + $0x5e8] sm:$0xff] %v1175
                  %v1177 = vld [vmem:[%s795 + $0xbe0] sm:$0xff]
                  %1178 = vst [vmem:[%s796 + $0x5f0] sm:$0xff] %v1177
                  %v1179 = vld [vmem:[%s795 + $0xbf0] sm:$0xff]
                  %1180 = vst [vmem:[%s796 + $0x5f8] sm:$0xff] %v1179
                  %v1181 = vld [vmem:[%s795 + $0xc00] sm:$0xff]
                  %1182 = vst [vmem:[%s796 + $0x600] sm:$0xff] %v1181
                  %v1183 = vld [vmem:[%s795 + $0xc10] sm:$0xff]
                  %1184 = vst [vmem:[%s796 + $0x608] sm:$0xff] %v1183
                  %v1185 = vld [vmem:[%s795 + $0xc20] sm:$0xff]
                  %1186 = vst [vmem:[%s796 + $0x610] sm:$0xff] %v1185
                  %v1187 = vld [vmem:[%s795 + $0xc30] sm:$0xff]
                  %1188 = vst [vmem:[%s796 + $0x618] sm:$0xff] %v1187
                  %v1189 = vld [vmem:[%s795 + $0xc40] sm:$0xff]
                  %1190 = vst [vmem:[%s796 + $0x620] sm:$0xff] %v1189
                  %v1191 = vld [vmem:[%s795 + $0xc50] sm:$0xff]
                  %1192 = vst [vmem:[%s796 + $0x628] sm:$0xff] %v1191
                  %v1193 = vld [vmem:[%s795 + $0xc60] sm:$0xff]
                  %1194 = vst [vmem:[%s796 + $0x630] sm:$0xff] %v1193
                  %v1195 = vld [vmem:[%s795 + $0xc70] sm:$0xff]
                  %1196 = vst [vmem:[%s796 + $0x638] sm:$0xff] %v1195
                  %v1197 = vld [vmem:[%s795 + $0xc80] sm:$0xff]
                  %1198 = vst [vmem:[%s796 + $0x640] sm:$0xff] %v1197
                  %v1199 = vld [vmem:[%s795 + $0xc90] sm:$0xff]
                  %1200 = vst [vmem:[%s796 + $0x648] sm:$0xff] %v1199
                  %v1201 = vld [vmem:[%s795 + $0xca0] sm:$0xff]
                  %1202 = vst [vmem:[%s796 + $0x650] sm:$0xff] %v1201
                  %v1203 = vld [vmem:[%s795 + $0xcb0] sm:$0xff]
                  %1204 = vst [vmem:[%s796 + $0x658] sm:$0xff] %v1203
                  %v1205 = vld [vmem:[%s795 + $0xcc0] sm:$0xff]
                  %1206 = vst [vmem:[%s796 + $0x660] sm:$0xff] %v1205
                  %v1207 = vld [vmem:[%s795 + $0xcd0] sm:$0xff]
                  %1208 = vst [vmem:[%s796 + $0x668] sm:$0xff] %v1207
                  %v1209 = vld [vmem:[%s795 + $0xce0] sm:$0xff]
                  %1210 = vst [vmem:[%s796 + $0x670] sm:$0xff] %v1209
                  %v1211 = vld [vmem:[%s795 + $0xcf0] sm:$0xff]
                  %1212 = vst [vmem:[%s796 + $0x678] sm:$0xff] %v1211
                  %v1213 = vld [vmem:[%s795 + $0xd00] sm:$0xff]
                  %1214 = vst [vmem:[%s796 + $0x680] sm:$0xff] %v1213
                  %v1215 = vld [vmem:[%s795 + $0xd10] sm:$0xff]
                  %1216 = vst [vmem:[%s796 + $0x688] sm:$0xff] %v1215
                  %v1217 = vld [vmem:[%s795 + $0xd20] sm:$0xff]
                  %1218 = vst [vmem:[%s796 + $0x690] sm:$0xff] %v1217
                  %v1219 = vld [vmem:[%s795 + $0xd30] sm:$0xff]
                  %1220 = vst [vmem:[%s796 + $0x698] sm:$0xff] %v1219
                  %v1221 = vld [vmem:[%s795 + $0xd40] sm:$0xff]
                  %1222 = vst [vmem:[%s796 + $0x6a0] sm:$0xff] %v1221
                  %v1223 = vld [vmem:[%s795 + $0xd50] sm:$0xff]
                  %1224 = vst [vmem:[%s796 + $0x6a8] sm:$0xff] %v1223
                  %v1225 = vld [vmem:[%s795 + $0xd60] sm:$0xff]
                  %1226 = vst [vmem:[%s796 + $0x6b0] sm:$0xff] %v1225
                  %v1227 = vld [vmem:[%s795 + $0xd70] sm:$0xff]
                  %1228 = vst [vmem:[%s796 + $0x6b8] sm:$0xff] %v1227
                  %v1229 = vld [vmem:[%s795 + $0xd80] sm:$0xff]
                  %1230 = vst [vmem:[%s796 + $0x6c0] sm:$0xff] %v1229
                  %v1231 = vld [vmem:[%s795 + $0xd90] sm:$0xff]
                  %1232 = vst [vmem:[%s796 + $0x6c8] sm:$0xff] %v1231
                  %v1233 = vld [vmem:[%s795 + $0xda0] sm:$0xff]
                  %1234 = vst [vmem:[%s796 + $0x6d0] sm:$0xff] %v1233
                  %v1235 = vld [vmem:[%s795 + $0xdb0] sm:$0xff]
                  %1236 = vst [vmem:[%s796 + $0x6d8] sm:$0xff] %v1235
                  %v1237 = vld [vmem:[%s795 + $0xdc0] sm:$0xff]
                  %1238 = vst [vmem:[%s796 + $0x6e0] sm:$0xff] %v1237
                  %v1239 = vld [vmem:[%s795 + $0xdd0] sm:$0xff]
                  %1240 = vst [vmem:[%s796 + $0x6e8] sm:$0xff] %v1239
                  %v1241 = vld [vmem:[%s795 + $0xde0] sm:$0xff]
                  %1242 = vst [vmem:[%s796 + $0x6f0] sm:$0xff] %v1241
                  %v1243 = vld [vmem:[%s795 + $0xdf0] sm:$0xff]
                  %1244 = vst [vmem:[%s796 + $0x6f8] sm:$0xff] %v1243
                  %v1245 = vld [vmem:[%s795 + $0xe00] sm:$0xff]
                  %1246 = vst [vmem:[%s796 + $0x700] sm:$0xff] %v1245
                  %v1247 = vld [vmem:[%s795 + $0xe10] sm:$0xff]
                  %1248 = vst [vmem:[%s796 + $0x708] sm:$0xff] %v1247
                  %v1249 = vld [vmem:[%s795 + $0xe20] sm:$0xff]
                  %1250 = vst [vmem:[%s796 + $0x710] sm:$0xff] %v1249
                  %v1251 = vld [vmem:[%s795 + $0xe30] sm:$0xff]
                  %1252 = vst [vmem:[%s796 + $0x718] sm:$0xff] %v1251
                  %v1253 = vld [vmem:[%s795 + $0xe40] sm:$0xff]
                  %1254 = vst [vmem:[%s796 + $0x720] sm:$0xff] %v1253
                  %v1255 = vld [vmem:[%s795 + $0xe50] sm:$0xff]
                  %1256 = vst [vmem:[%s796 + $0x728] sm:$0xff] %v1255
                  %v1257 = vld [vmem:[%s795 + $0xe60] sm:$0xff]
                  %1258 = vst [vmem:[%s796 + $0x730] sm:$0xff] %v1257
                  %v1259 = vld [vmem:[%s795 + $0xe70] sm:$0xff]
                  %1260 = vst [vmem:[%s796 + $0x738] sm:$0xff] %v1259
                  %v1261 = vld [vmem:[%s795 + $0xe80] sm:$0xff]
                  %1262 = vst [vmem:[%s796 + $0x740] sm:$0xff] %v1261
                  %v1263 = vld [vmem:[%s795 + $0xe90] sm:$0xff]
                  %1264 = vst [vmem:[%s796 + $0x748] sm:$0xff] %v1263
                  %v1265 = vld [vmem:[%s795 + $0xea0] sm:$0xff]
                  %1266 = vst [vmem:[%s796 + $0x750] sm:$0xff] %v1265
                  %v1267 = vld [vmem:[%s795 + $0xeb0] sm:$0xff]
                  %1268 = vst [vmem:[%s796 + $0x758] sm:$0xff] %v1267
                  %v1269 = vld [vmem:[%s795 + $0xec0] sm:$0xff]
                  %1270 = vst [vmem:[%s796 + $0x760] sm:$0xff] %v1269
                  %v1271 = vld [vmem:[%s795 + $0xed0] sm:$0xff]
                  %1272 = vst [vmem:[%s796 + $0x768] sm:$0xff] %v1271
                  %v1273 = vld [vmem:[%s795 + $0xee0] sm:$0xff]
                  %1274 = vst [vmem:[%s796 + $0x770] sm:$0xff] %v1273
                  %v1275 = vld [vmem:[%s795 + $0xef0] sm:$0xff]
                  %1276 = vst [vmem:[%s796 + $0x778] sm:$0xff] %v1275
                  %v1277 = vld [vmem:[%s795 + $0xf00] sm:$0xff]
                  %1278 = vst [vmem:[%s796 + $0x780] sm:$0xff] %v1277
                  %v1279 = vld [vmem:[%s795 + $0xf10] sm:$0xff]
                  %1280 = vst [vmem:[%s796 + $0x788] sm:$0xff] %v1279
                  %v1281 = vld [vmem:[%s795 + $0xf20] sm:$0xff]
                  %1282 = vst [vmem:[%s796 + $0x790] sm:$0xff] %v1281
                  %v1283 = vld [vmem:[%s795 + $0xf30] sm:$0xff]
                  %1284 = vst [vmem:[%s796 + $0x798] sm:$0xff] %v1283
                  %v1285 = vld [vmem:[%s795 + $0xf40] sm:$0xff]
                  %1286 = vst [vmem:[%s796 + $0x7a0] sm:$0xff] %v1285
                  %v1287 = vld [vmem:[%s795 + $0xf50] sm:$0xff]
                  %1288 = vst [vmem:[%s796 + $0x7a8] sm:$0xff] %v1287
                  %v1289 = vld [vmem:[%s795 + $0xf60] sm:$0xff]
                  %1290 = vst [vmem:[%s796 + $0x7b0] sm:$0xff] %v1289
                  %v1291 = vld [vmem:[%s795 + $0xf70] sm:$0xff]
                  %1292 = vst [vmem:[%s796 + $0x7b8] sm:$0xff] %v1291
                  %v1293 = vld [vmem:[%s795 + $0xf80] sm:$0xff]
                  %1294 = vst [vmem:[%s796 + $0x7c0] sm:$0xff] %v1293
                  %v1295 = vld [vmem:[%s795 + $0xf90] sm:$0xff]
                  %1296 = vst [vmem:[%s796 + $0x7c8] sm:$0xff] %v1295
                  %v1297 = vld [vmem:[%s795 + $0xfa0] sm:$0xff]
                  %1298 = vst [vmem:[%s796 + $0x7d0] sm:$0xff] %v1297
                  %v1299 = vld [vmem:[%s795 + $0xfb0] sm:$0xff]
                  %1300 = vst [vmem:[%s796 + $0x7d8] sm:$0xff] %v1299
                  %v1301 = vld [vmem:[%s795 + $0xfc0] sm:$0xff]
                  %1302 = vst [vmem:[%s796 + $0x7e0] sm:$0xff] %v1301
                  %v1303 = vld [vmem:[%s795 + $0xfd0] sm:$0xff]
                  %1304 = vst [vmem:[%s796 + $0x7e8] sm:$0xff] %v1303
                  %v1305 = vld [vmem:[%s795 + $0xfe0] sm:$0xff]
                  %1306 = vst [vmem:[%s796 + $0x7f0] sm:$0xff] %v1305
                  %v1307 = vld [vmem:[%s795 + $0xff0] sm:$0xff]
                  %1308 = vst [vmem:[%s796 + $0x7f8] sm:$0xff] %v1307
                $region68: #{multi_stage_attention.1} parent=62 // loop_footer
                  %s794 = sadd.s32 1, %s790
                $region69: #{multi_stage_attention.1} parent=62 // loop_footer_branch
                  %789 = sbr.rel target = $region65
                $region70: #{multi_stage_attention.1} parent=62 // loop_exit
                  _
              $region63: #{multi_stage_attention.1} parent=47 // pred_fallthru
                _
              // Predicated region
              $region71: #{multi_stage_attention.1} parent=47 // pred_check
                _
              $region72: #{multi_stage_attention.1} parent=47 // pred_check_branch
                %1310 = sbr.rel target = $region74
              $region73: #{multi_stage_attention.1} parent=47 // pred_region
                _
              $region74: #{multi_stage_attention.1} parent=47 // pred_fallthru
                _
            $region48: #{multi_stage_attention.1} parent=43 // pred_fallthru
              _
            // Predicated region
            $region49: #{multi_stage_attention.1} parent=43 // pred_check
              _
            $region50: #{multi_stage_attention.1} parent=43 // pred_check_branch
              %264 = sbr.rel target = $region52
            $region51: #{multi_stage_attention.1} parent=43 // pred_region
              %s266 = ssub.s32 256, 1
              loop: start=0, step=1, limit=1
              $region53: #{multi_stage_attention.1} parent=51 // loop_pre_header
                _
              $region54: #{multi_stage_attention.1} parent=51 // loop_header
                %s268 = sphi 0, %s272
                %p269 = scmp.ge.s32.totalorder %s268, 1
                %s273 = sphi %s258, %s258
                %s274 = sphi %s254, %s254
              $region55: #{multi_stage_attention.1} parent=51 // loop_header_branch
                %271 = sbr.rel (%p269) target = $region59
              $region56: #{multi_stage_attention.1} parent=51 // loop_body
                %v275 = vld [vmem:[%s273] sm:%s266]
                %276 = vst [vmem:[%s274] sm:%s266] %v275
                %v277 = vld [vmem:[%s273 + $0x10] sm:%s266]
                %278 = vst [vmem:[%s274 + $0x8] sm:%s266] %v277
                %v279 = vld [vmem:[%s273 + $0x20] sm:%s266]
                %280 = vst [vmem:[%s274 + $0x10] sm:%s266] %v279
                %v281 = vld [vmem:[%s273 + $0x30] sm:%s266]
                %282 = vst [vmem:[%s274 + $0x18] sm:%s266] %v281
                %v283 = vld [vmem:[%s273 + $0x40] sm:%s266]
                %284 = vst [vmem:[%s274 + $0x20] sm:%s266] %v283
                %v285 = vld [vmem:[%s273 + $0x50] sm:%s266]
                %286 = vst [vmem:[%s274 + $0x28] sm:%s266] %v285
                %v287 = vld [vmem:[%s273 + $0x60] sm:%s266]
                %288 = vst [vmem:[%s274 + $0x30] sm:%s266] %v287
                %v289 = vld [vmem:[%s273 + $0x70] sm:%s266]
                %290 = vst [vmem:[%s274 + $0x38] sm:%s266] %v289
                %v291 = vld [vmem:[%s273 + $0x80] sm:%s266]
                %292 = vst [vmem:[%s274 + $0x40] sm:%s266] %v291
                %v293 = vld [vmem:[%s273 + $0x90] sm:%s266]
                %294 = vst [vmem:[%s274 + $0x48] sm:%s266] %v293
                %v295 = vld [vmem:[%s273 + $0xa0] sm:%s266]
                %296 = vst [vmem:[%s274 + $0x50] sm:%s266] %v295
                %v297 = vld [vmem:[%s273 + $0xb0] sm:%s266]
                %298 = vst [vmem:[%s274 + $0x58] sm:%s266] %v297
                %v299 = vld [vmem:[%s273 + $0xc0] sm:%s266]
                %300 = vst [vmem:[%s274 + $0x60] sm:%s266] %v299
                %v301 = vld [vmem:[%s273 + $0xd0] sm:%s266]
                %302 = vst [vmem:[%s274 + $0x68] sm:%s266] %v301
                %v303 = vld [vmem:[%s273 + $0xe0] sm:%s266]
                %304 = vst [vmem:[%s274 + $0x70] sm:%s266] %v303
                %v305 = vld [vmem:[%s273 + $0xf0] sm:%s266]
                %306 = vst [vmem:[%s274 + $0x78] sm:%s266] %v305
                %v307 = vld [vmem:[%s273 + $0x100] sm:%s266]
                %308 = vst [vmem:[%s274 + $0x80] sm:%s266] %v307
                %v309 = vld [vmem:[%s273 + $0x110] sm:%s266]
                %310 = vst [vmem:[%s274 + $0x88] sm:%s266] %v309
                %v311 = vld [vmem:[%s273 + $0x120] sm:%s266]
                %312 = vst [vmem:[%s274 + $0x90] sm:%s266] %v311
                %v313 = vld [vmem:[%s273 + $0x130] sm:%s266]
                %314 = vst [vmem:[%s274 + $0x98] sm:%s266] %v313
                %v315 = vld [vmem:[%s273 + $0x140] sm:%s266]
                %316 = vst [vmem:[%s274 + $0xa0] sm:%s266] %v315
                %v317 = vld [vmem:[%s273 + $0x150] sm:%s266]
                %318 = vst [vmem:[%s274 + $0xa8] sm:%s266] %v317
                %v319 = vld [vmem:[%s273 + $0x160] sm:%s266]
                %320 = vst [vmem:[%s274 + $0xb0] sm:%s266] %v319
                %v321 = vld [vmem:[%s273 + $0x170] sm:%s266]
                %322 = vst [vmem:[%s274 + $0xb8] sm:%s266] %v321
                %v323 = vld [vmem:[%s273 + $0x180] sm:%s266]
                %324 = vst [vmem:[%s274 + $0xc0] sm:%s266] %v323
                %v325 = vld [vmem:[%s273 + $0x190] sm:%s266]
                %326 = vst [vmem:[%s274 + $0xc8] sm:%s266] %v325
                %v327 = vld [vmem:[%s273 + $0x1a0] sm:%s266]
                %328 = vst [vmem:[%s274 + $0xd0] sm:%s266] %v327
                %v329 = vld [vmem:[%s273 + $0x1b0] sm:%s266]
                %330 = vst [vmem:[%s274 + $0xd8] sm:%s266] %v329
                %v331 = vld [vmem:[%s273 + $0x1c0] sm:%s266]
                %332 = vst [vmem:[%s274 + $0xe0] sm:%s266] %v331
                %v333 = vld [vmem:[%s273 + $0x1d0] sm:%s266]
                %334 = vst [vmem:[%s274 + $0xe8] sm:%s266] %v333
                %v335 = vld [vmem:[%s273 + $0x1e0] sm:%s266]
                %336 = vst [vmem:[%s274 + $0xf0] sm:%s266] %v335
                %v337 = vld [vmem:[%s273 + $0x1f0] sm:%s266]
                %338 = vst [vmem:[%s274 + $0xf8] sm:%s266] %v337
                %v339 = vld [vmem:[%s273 + $0x200] sm:%s266]
                %340 = vst [vmem:[%s274 + $0x100] sm:%s266] %v339
                %v341 = vld [vmem:[%s273 + $0x210] sm:%s266]
                %342 = vst [vmem:[%s274 + $0x108] sm:%s266] %v341
                %v343 = vld [vmem:[%s273 + $0x220] sm:%s266]
                %344 = vst [vmem:[%s274 + $0x110] sm:%s266] %v343
                %v345 = vld [vmem:[%s273 + $0x230] sm:%s266]
                %346 = vst [vmem:[%s274 + $0x118] sm:%s266] %v345
                %v347 = vld [vmem:[%s273 + $0x240] sm:%s266]
                %348 = vst [vmem:[%s274 + $0x120] sm:%s266] %v347
                %v349 = vld [vmem:[%s273 + $0x250] sm:%s266]
                %350 = vst [vmem:[%s274 + $0x128] sm:%s266] %v349
                %v351 = vld [vmem:[%s273 + $0x260] sm:%s266]
                %352 = vst [vmem:[%s274 + $0x130] sm:%s266] %v351
                %v353 = vld [vmem:[%s273 + $0x270] sm:%s266]
                %354 = vst [vmem:[%s274 + $0x138] sm:%s266] %v353
                %v355 = vld [vmem:[%s273 + $0x280] sm:%s266]
                %356 = vst [vmem:[%s274 + $0x140] sm:%s266] %v355
                %v357 = vld [vmem:[%s273 + $0x290] sm:%s266]
                %358 = vst [vmem:[%s274 + $0x148] sm:%s266] %v357
                %v359 = vld [vmem:[%s273 + $0x2a0] sm:%s266]
                %360 = vst [vmem:[%s274 + $0x150] sm:%s266] %v359
                %v361 = vld [vmem:[%s273 + $0x2b0] sm:%s266]
                %362 = vst [vmem:[%s274 + $0x158] sm:%s266] %v361
                %v363 = vld [vmem:[%s273 + $0x2c0] sm:%s266]
                %364 = vst [vmem:[%s274 + $0x160] sm:%s266] %v363
                %v365 = vld [vmem:[%s273 + $0x2d0] sm:%s266]
                %366 = vst [vmem:[%s274 + $0x168] sm:%s266] %v365
                %v367 = vld [vmem:[%s273 + $0x2e0] sm:%s266]
                %368 = vst [vmem:[%s274 + $0x170] sm:%s266] %v367
                %v369 = vld [vmem:[%s273 + $0x2f0] sm:%s266]
                %370 = vst [vmem:[%s274 + $0x178] sm:%s266] %v369
                %v371 = vld [vmem:[%s273 + $0x300] sm:%s266]
                %372 = vst [vmem:[%s274 + $0x180] sm:%s266] %v371
                %v373 = vld [vmem:[%s273 + $0x310] sm:%s266]
                %374 = vst [vmem:[%s274 + $0x188] sm:%s266] %v373
                %v375 = vld [vmem:[%s273 + $0x320] sm:%s266]
                %376 = vst [vmem:[%s274 + $0x190] sm:%s266] %v375
                %v377 = vld [vmem:[%s273 + $0x330] sm:%s266]
                %378 = vst [vmem:[%s274 + $0x198] sm:%s266] %v377
                %v379 = vld [vmem:[%s273 + $0x340] sm:%s266]
                %380 = vst [vmem:[%s274 + $0x1a0] sm:%s266] %v379
                %v381 = vld [vmem:[%s273 + $0x350] sm:%s266]
                %382 = vst [vmem:[%s274 + $0x1a8] sm:%s266] %v381
                %v383 = vld [vmem:[%s273 + $0x360] sm:%s266]
                %384 = vst [vmem:[%s274 + $0x1b0] sm:%s266] %v383
                %v385 = vld [vmem:[%s273 + $0x370] sm:%s266]
                %386 = vst [vmem:[%s274 + $0x1b8] sm:%s266] %v385
                %v387 = vld [vmem:[%s273 + $0x380] sm:%s266]
                %388 = vst [vmem:[%s274 + $0x1c0] sm:%s266] %v387
                %v389 = vld [vmem:[%s273 + $0x390] sm:%s266]
                %390 = vst [vmem:[%s274 + $0x1c8] sm:%s266] %v389
                %v391 = vld [vmem:[%s273 + $0x3a0] sm:%s266]
                %392 = vst [vmem:[%s274 + $0x1d0] sm:%s266] %v391
                %v393 = vld [vmem:[%s273 + $0x3b0] sm:%s266]
                %394 = vst [vmem:[%s274 + $0x1d8] sm:%s266] %v393
                %v395 = vld [vmem:[%s273 + $0x3c0] sm:%s266]
                %396 = vst [vmem:[%s274 + $0x1e0] sm:%s266] %v395
                %v397 = vld [vmem:[%s273 + $0x3d0] sm:%s266]
                %398 = vst [vmem:[%s274 + $0x1e8] sm:%s266] %v397
                %v399 = vld [vmem:[%s273 + $0x3e0] sm:%s266]
                %400 = vst [vmem:[%s274 + $0x1f0] sm:%s266] %v399
                %v401 = vld [vmem:[%s273 + $0x3f0] sm:%s266]
                %402 = vst [vmem:[%s274 + $0x1f8] sm:%s266] %v401
                %v403 = vld [vmem:[%s273 + $0x400] sm:%s266]
                %404 = vst [vmem:[%s274 + $0x200] sm:%s266] %v403
                %v405 = vld [vmem:[%s273 + $0x410] sm:%s266]
                %406 = vst [vmem:[%s274 + $0x208] sm:%s266] %v405
                %v407 = vld [vmem:[%s273 + $0x420] sm:%s266]
                %408 = vst [vmem:[%s274 + $0x210] sm:%s266] %v407
                %v409 = vld [vmem:[%s273 + $0x430] sm:%s266]
                %410 = vst [vmem:[%s274 + $0x218] sm:%s266] %v409
                %v411 = vld [vmem:[%s273 + $0x440] sm:%s266]
                %412 = vst [vmem:[%s274 + $0x220] sm:%s266] %v411
                %v413 = vld [vmem:[%s273 + $0x450] sm:%s266]
                %414 = vst [vmem:[%s274 + $0x228] sm:%s266] %v413
                %v415 = vld [vmem:[%s273 + $0x460] sm:%s266]
                %416 = vst [vmem:[%s274 + $0x230] sm:%s266] %v415
                %v417 = vld [vmem:[%s273 + $0x470] sm:%s266]
                %418 = vst [vmem:[%s274 + $0x238] sm:%s266] %v417
                %v419 = vld [vmem:[%s273 + $0x480] sm:%s266]
                %420 = vst [vmem:[%s274 + $0x240] sm:%s266] %v419
                %v421 = vld [vmem:[%s273 + $0x490] sm:%s266]
                %422 = vst [vmem:[%s274 + $0x248] sm:%s266] %v421
                %v423 = vld [vmem:[%s273 + $0x4a0] sm:%s266]
                %424 = vst [vmem:[%s274 + $0x250] sm:%s266] %v423
                %v425 = vld [vmem:[%s273 + $0x4b0] sm:%s266]
                %426 = vst [vmem:[%s274 + $0x258] sm:%s266] %v425
                %v427 = vld [vmem:[%s273 + $0x4c0] sm:%s266]
                %428 = vst [vmem:[%s274 + $0x260] sm:%s266] %v427
                %v429 = vld [vmem:[%s273 + $0x4d0] sm:%s266]
                %430 = vst [vmem:[%s274 + $0x268] sm:%s266] %v429
                %v431 = vld [vmem:[%s273 + $0x4e0] sm:%s266]
                %432 = vst [vmem:[%s274 + $0x270] sm:%s266] %v431
                %v433 = vld [vmem:[%s273 + $0x4f0] sm:%s266]
                %434 = vst [vmem:[%s274 + $0x278] sm:%s266] %v433
                %v435 = vld [vmem:[%s273 + $0x500] sm:%s266]
                %436 = vst [vmem:[%s274 + $0x280] sm:%s266] %v435
                %v437 = vld [vmem:[%s273 + $0x510] sm:%s266]
                %438 = vst [vmem:[%s274 + $0x288] sm:%s266] %v437
                %v439 = vld [vmem:[%s273 + $0x520] sm:%s266]
                %440 = vst [vmem:[%s274 + $0x290] sm:%s266] %v439
                %v441 = vld [vmem:[%s273 + $0x530] sm:%s266]
                %442 = vst [vmem:[%s274 + $0x298] sm:%s266] %v441
                %v443 = vld [vmem:[%s273 + $0x540] sm:%s266]
                %444 = vst [vmem:[%s274 + $0x2a0] sm:%s266] %v443
                %v445 = vld [vmem:[%s273 + $0x550] sm:%s266]
                %446 = vst [vmem:[%s274 + $0x2a8] sm:%s266] %v445
                %v447 = vld [vmem:[%s273 + $0x560] sm:%s266]
                %448 = vst [vmem:[%s274 + $0x2b0] sm:%s266] %v447
                %v449 = vld [vmem:[%s273 + $0x570] sm:%s266]
                %450 = vst [vmem:[%s274 + $0x2b8] sm:%s266] %v449
                %v451 = vld [vmem:[%s273 + $0x580] sm:%s266]
                %452 = vst [vmem:[%s274 + $0x2c0] sm:%s266] %v451
                %v453 = vld [vmem:[%s273 + $0x590] sm:%s266]
                %454 = vst [vmem:[%s274 + $0x2c8] sm:%s266] %v453
                %v455 = vld [vmem:[%s273 + $0x5a0] sm:%s266]
                %456 = vst [vmem:[%s274 + $0x2d0] sm:%s266] %v455
                %v457 = vld [vmem:[%s273 + $0x5b0] sm:%s266]
                %458 = vst [vmem:[%s274 + $0x2d8] sm:%s266] %v457
                %v459 = vld [vmem:[%s273 + $0x5c0] sm:%s266]
                %460 = vst [vmem:[%s274 + $0x2e0] sm:%s266] %v459
                %v461 = vld [vmem:[%s273 + $0x5d0] sm:%s266]
                %462 = vst [vmem:[%s274 + $0x2e8] sm:%s266] %v461
                %v463 = vld [vmem:[%s273 + $0x5e0] sm:%s266]
                %464 = vst [vmem:[%s274 + $0x2f0] sm:%s266] %v463
                %v465 = vld [vmem:[%s273 + $0x5f0] sm:%s266]
                %466 = vst [vmem:[%s274 + $0x2f8] sm:%s266] %v465
                %v467 = vld [vmem:[%s273 + $0x600] sm:%s266]
                %468 = vst [vmem:[%s274 + $0x300] sm:%s266] %v467
                %v469 = vld [vmem:[%s273 + $0x610] sm:%s266]
                %470 = vst [vmem:[%s274 + $0x308] sm:%s266] %v469
                %v471 = vld [vmem:[%s273 + $0x620] sm:%s266]
                %472 = vst [vmem:[%s274 + $0x310] sm:%s266] %v471
                %v473 = vld [vmem:[%s273 + $0x630] sm:%s266]
                %474 = vst [vmem:[%s274 + $0x318] sm:%s266] %v473
                %v475 = vld [vmem:[%s273 + $0x640] sm:%s266]
                %476 = vst [vmem:[%s274 + $0x320] sm:%s266] %v475
                %v477 = vld [vmem:[%s273 + $0x650] sm:%s266]
                %478 = vst [vmem:[%s274 + $0x328] sm:%s266] %v477
                %v479 = vld [vmem:[%s273 + $0x660] sm:%s266]
                %480 = vst [vmem:[%s274 + $0x330] sm:%s266] %v479
                %v481 = vld [vmem:[%s273 + $0x670] sm:%s266]
                %482 = vst [vmem:[%s274 + $0x338] sm:%s266] %v481
                %v483 = vld [vmem:[%s273 + $0x680] sm:%s266]
                %484 = vst [vmem:[%s274 + $0x340] sm:%s266] %v483
                %v485 = vld [vmem:[%s273 + $0x690] sm:%s266]
                %486 = vst [vmem:[%s274 + $0x348] sm:%s266] %v485
                %v487 = vld [vmem:[%s273 + $0x6a0] sm:%s266]
                %488 = vst [vmem:[%s274 + $0x350] sm:%s266] %v487
                %v489 = vld [vmem:[%s273 + $0x6b0] sm:%s266]
                %490 = vst [vmem:[%s274 + $0x358] sm:%s266] %v489
                %v491 = vld [vmem:[%s273 + $0x6c0] sm:%s266]
                %492 = vst [vmem:[%s274 + $0x360] sm:%s266] %v491
                %v493 = vld [vmem:[%s273 + $0x6d0] sm:%s266]
                %494 = vst [vmem:[%s274 + $0x368] sm:%s266] %v493
                %v495 = vld [vmem:[%s273 + $0x6e0] sm:%s266]
                %496 = vst [vmem:[%s274 + $0x370] sm:%s266] %v495
                %v497 = vld [vmem:[%s273 + $0x6f0] sm:%s266]
                %498 = vst [vmem:[%s274 + $0x378] sm:%s266] %v497
                %v499 = vld [vmem:[%s273 + $0x700] sm:%s266]
                %500 = vst [vmem:[%s274 + $0x380] sm:%s266] %v499
                %v501 = vld [vmem:[%s273 + $0x710] sm:%s266]
                %502 = vst [vmem:[%s274 + $0x388] sm:%s266] %v501
                %v503 = vld [vmem:[%s273 + $0x720] sm:%s266]
                %504 = vst [vmem:[%s274 + $0x390] sm:%s266] %v503
                %v505 = vld [vmem:[%s273 + $0x730] sm:%s266]
                %506 = vst [vmem:[%s274 + $0x398] sm:%s266] %v505
                %v507 = vld [vmem:[%s273 + $0x740] sm:%s266]
                %508 = vst [vmem:[%s274 + $0x3a0] sm:%s266] %v507
                %v509 = vld [vmem:[%s273 + $0x750] sm:%s266]
                %510 = vst [vmem:[%s274 + $0x3a8] sm:%s266] %v509
                %v511 = vld [vmem:[%s273 + $0x760] sm:%s266]
                %512 = vst [vmem:[%s274 + $0x3b0] sm:%s266] %v511
                %v513 = vld [vmem:[%s273 + $0x770] sm:%s266]
                %514 = vst [vmem:[%s274 + $0x3b8] sm:%s266] %v513
                %v515 = vld [vmem:[%s273 + $0x780] sm:%s266]
                %516 = vst [vmem:[%s274 + $0x3c0] sm:%s266] %v515
                %v517 = vld [vmem:[%s273 + $0x790] sm:%s266]
                %518 = vst [vmem:[%s274 + $0x3c8] sm:%s266] %v517
                %v519 = vld [vmem:[%s273 + $0x7a0] sm:%s266]
                %520 = vst [vmem:[%s274 + $0x3d0] sm:%s266] %v519
                %v521 = vld [vmem:[%s273 + $0x7b0] sm:%s266]
                %522 = vst [vmem:[%s274 + $0x3d8] sm:%s266] %v521
                %v523 = vld [vmem:[%s273 + $0x7c0] sm:%s266]
                %524 = vst [vmem:[%s274 + $0x3e0] sm:%s266] %v523
                %v525 = vld [vmem:[%s273 + $0x7d0] sm:%s266]
                %526 = vst [vmem:[%s274 + $0x3e8] sm:%s266] %v525
                %v527 = vld [vmem:[%s273 + $0x7e0] sm:%s266]
                %528 = vst [vmem:[%s274 + $0x3f0] sm:%s266] %v527
                %v529 = vld [vmem:[%s273 + $0x7f0] sm:%s266]
                %530 = vst [vmem:[%s274 + $0x3f8] sm:%s266] %v529
                %v531 = vld [vmem:[%s273 + $0x800] sm:%s266]
                %532 = vst [vmem:[%s274 + $0x400] sm:%s266] %v531
                %v533 = vld [vmem:[%s273 + $0x810] sm:%s266]
                %534 = vst [vmem:[%s274 + $0x408] sm:%s266] %v533
                %v535 = vld [vmem:[%s273 + $0x820] sm:%s266]
                %536 = vst [vmem:[%s274 + $0x410] sm:%s266] %v535
                %v537 = vld [vmem:[%s273 + $0x830] sm:%s266]
                %538 = vst [vmem:[%s274 + $0x418] sm:%s266] %v537
                %v539 = vld [vmem:[%s273 + $0x840] sm:%s266]
                %540 = vst [vmem:[%s274 + $0x420] sm:%s266] %v539
                %v541 = vld [vmem:[%s273 + $0x850] sm:%s266]
                %542 = vst [vmem:[%s274 + $0x428] sm:%s266] %v541
                %v543 = vld [vmem:[%s273 + $0x860] sm:%s266]
                %544 = vst [vmem:[%s274 + $0x430] sm:%s266] %v543
                %v545 = vld [vmem:[%s273 + $0x870] sm:%s266]
                %546 = vst [vmem:[%s274 + $0x438] sm:%s266] %v545
                %v547 = vld [vmem:[%s273 + $0x880] sm:%s266]
                %548 = vst [vmem:[%s274 + $0x440] sm:%s266] %v547
                %v549 = vld [vmem:[%s273 + $0x890] sm:%s266]
                %550 = vst [vmem:[%s274 + $0x448] sm:%s266] %v549
                %v551 = vld [vmem:[%s273 + $0x8a0] sm:%s266]
                %552 = vst [vmem:[%s274 + $0x450] sm:%s266] %v551
                %v553 = vld [vmem:[%s273 + $0x8b0] sm:%s266]
                %554 = vst [vmem:[%s274 + $0x458] sm:%s266] %v553
                %v555 = vld [vmem:[%s273 + $0x8c0] sm:%s266]
                %556 = vst [vmem:[%s274 + $0x460] sm:%s266] %v555
                %v557 = vld [vmem:[%s273 + $0x8d0] sm:%s266]
                %558 = vst [vmem:[%s274 + $0x468] sm:%s266] %v557
                %v559 = vld [vmem:[%s273 + $0x8e0] sm:%s266]
                %560 = vst [vmem:[%s274 + $0x470] sm:%s266] %v559
                %v561 = vld [vmem:[%s273 + $0x8f0] sm:%s266]
                %562 = vst [vmem:[%s274 + $0x478] sm:%s266] %v561
                %v563 = vld [vmem:[%s273 + $0x900] sm:%s266]
                %564 = vst [vmem:[%s274 + $0x480] sm:%s266] %v563
                %v565 = vld [vmem:[%s273 + $0x910] sm:%s266]
                %566 = vst [vmem:[%s274 + $0x488] sm:%s266] %v565
                %v567 = vld [vmem:[%s273 + $0x920] sm:%s266]
                %568 = vst [vmem:[%s274 + $0x490] sm:%s266] %v567
                %v569 = vld [vmem:[%s273 + $0x930] sm:%s266]
                %570 = vst [vmem:[%s274 + $0x498] sm:%s266] %v569
                %v571 = vld [vmem:[%s273 + $0x940] sm:%s266]
                %572 = vst [vmem:[%s274 + $0x4a0] sm:%s266] %v571
                %v573 = vld [vmem:[%s273 + $0x950] sm:%s266]
                %574 = vst [vmem:[%s274 + $0x4a8] sm:%s266] %v573
                %v575 = vld [vmem:[%s273 + $0x960] sm:%s266]
                %576 = vst [vmem:[%s274 + $0x4b0] sm:%s266] %v575
                %v577 = vld [vmem:[%s273 + $0x970] sm:%s266]
                %578 = vst [vmem:[%s274 + $0x4b8] sm:%s266] %v577
                %v579 = vld [vmem:[%s273 + $0x980] sm:%s266]
                %580 = vst [vmem:[%s274 + $0x4c0] sm:%s266] %v579
                %v581 = vld [vmem:[%s273 + $0x990] sm:%s266]
                %582 = vst [vmem:[%s274 + $0x4c8] sm:%s266] %v581
                %v583 = vld [vmem:[%s273 + $0x9a0] sm:%s266]
                %584 = vst [vmem:[%s274 + $0x4d0] sm:%s266] %v583
                %v585 = vld [vmem:[%s273 + $0x9b0] sm:%s266]
                %586 = vst [vmem:[%s274 + $0x4d8] sm:%s266] %v585
                %v587 = vld [vmem:[%s273 + $0x9c0] sm:%s266]
                %588 = vst [vmem:[%s274 + $0x4e0] sm:%s266] %v587
                %v589 = vld [vmem:[%s273 + $0x9d0] sm:%s266]
                %590 = vst [vmem:[%s274 + $0x4e8] sm:%s266] %v589
                %v591 = vld [vmem:[%s273 + $0x9e0] sm:%s266]
                %592 = vst [vmem:[%s274 + $0x4f0] sm:%s266] %v591
                %v593 = vld [vmem:[%s273 + $0x9f0] sm:%s266]
                %594 = vst [vmem:[%s274 + $0x4f8] sm:%s266] %v593
                %v595 = vld [vmem:[%s273 + $0xa00] sm:%s266]
                %596 = vst [vmem:[%s274 + $0x500] sm:%s266] %v595
                %v597 = vld [vmem:[%s273 + $0xa10] sm:%s266]
                %598 = vst [vmem:[%s274 + $0x508] sm:%s266] %v597
                %v599 = vld [vmem:[%s273 + $0xa20] sm:%s266]
                %600 = vst [vmem:[%s274 + $0x510] sm:%s266] %v599
                %v601 = vld [vmem:[%s273 + $0xa30] sm:%s266]
                %602 = vst [vmem:[%s274 + $0x518] sm:%s266] %v601
                %v603 = vld [vmem:[%s273 + $0xa40] sm:%s266]
                %604 = vst [vmem:[%s274 + $0x520] sm:%s266] %v603
                %v605 = vld [vmem:[%s273 + $0xa50] sm:%s266]
                %606 = vst [vmem:[%s274 + $0x528] sm:%s266] %v605
                %v607 = vld [vmem:[%s273 + $0xa60] sm:%s266]
                %608 = vst [vmem:[%s274 + $0x530] sm:%s266] %v607
                %v609 = vld [vmem:[%s273 + $0xa70] sm:%s266]
                %610 = vst [vmem:[%s274 + $0x538] sm:%s266] %v609
                %v611 = vld [vmem:[%s273 + $0xa80] sm:%s266]
                %612 = vst [vmem:[%s274 + $0x540] sm:%s266] %v611
                %v613 = vld [vmem:[%s273 + $0xa90] sm:%s266]
                %614 = vst [vmem:[%s274 + $0x548] sm:%s266] %v613
                %v615 = vld [vmem:[%s273 + $0xaa0] sm:%s266]
                %616 = vst [vmem:[%s274 + $0x550] sm:%s266] %v615
                %v617 = vld [vmem:[%s273 + $0xab0] sm:%s266]
                %618 = vst [vmem:[%s274 + $0x558] sm:%s266] %v617
                %v619 = vld [vmem:[%s273 + $0xac0] sm:%s266]
                %620 = vst [vmem:[%s274 + $0x560] sm:%s266] %v619
                %v621 = vld [vmem:[%s273 + $0xad0] sm:%s266]
                %622 = vst [vmem:[%s274 + $0x568] sm:%s266] %v621
                %v623 = vld [vmem:[%s273 + $0xae0] sm:%s266]
                %624 = vst [vmem:[%s274 + $0x570] sm:%s266] %v623
                %v625 = vld [vmem:[%s273 + $0xaf0] sm:%s266]
                %626 = vst [vmem:[%s274 + $0x578] sm:%s266] %v625
                %v627 = vld [vmem:[%s273 + $0xb00] sm:%s266]
                %628 = vst [vmem:[%s274 + $0x580] sm:%s266] %v627
                %v629 = vld [vmem:[%s273 + $0xb10] sm:%s266]
                %630 = vst [vmem:[%s274 + $0x588] sm:%s266] %v629
                %v631 = vld [vmem:[%s273 + $0xb20] sm:%s266]
                %632 = vst [vmem:[%s274 + $0x590] sm:%s266] %v631
                %v633 = vld [vmem:[%s273 + $0xb30] sm:%s266]
                %634 = vst [vmem:[%s274 + $0x598] sm:%s266] %v633
                %v635 = vld [vmem:[%s273 + $0xb40] sm:%s266]
                %636 = vst [vmem:[%s274 + $0x5a0] sm:%s266] %v635
                %v637 = vld [vmem:[%s273 + $0xb50] sm:%s266]
                %638 = vst [vmem:[%s274 + $0x5a8] sm:%s266] %v637
                %v639 = vld [vmem:[%s273 + $0xb60] sm:%s266]
                %640 = vst [vmem:[%s274 + $0x5b0] sm:%s266] %v639
                %v641 = vld [vmem:[%s273 + $0xb70] sm:%s266]
                %642 = vst [vmem:[%s274 + $0x5b8] sm:%s266] %v641
                %v643 = vld [vmem:[%s273 + $0xb80] sm:%s266]
                %644 = vst [vmem:[%s274 + $0x5c0] sm:%s266] %v643
                %v645 = vld [vmem:[%s273 + $0xb90] sm:%s266]
                %646 = vst [vmem:[%s274 + $0x5c8] sm:%s266] %v645
                %v647 = vld [vmem:[%s273 + $0xba0] sm:%s266]
                %648 = vst [vmem:[%s274 + $0x5d0] sm:%s266] %v647
                %v649 = vld [vmem:[%s273 + $0xbb0] sm:%s266]
                %650 = vst [vmem:[%s274 + $0x5d8] sm:%s266] %v649
                %v651 = vld [vmem:[%s273 + $0xbc0] sm:%s266]
                %652 = vst [vmem:[%s274 + $0x5e0] sm:%s266] %v651
                %v653 = vld [vmem:[%s273 + $0xbd0] sm:%s266]
                %654 = vst [vmem:[%s274 + $0x5e8] sm:%s266] %v653
                %v655 = vld [vmem:[%s273 + $0xbe0] sm:%s266]
                %656 = vst [vmem:[%s274 + $0x5f0] sm:%s266] %v655
                %v657 = vld [vmem:[%s273 + $0xbf0] sm:%s266]
                %658 = vst [vmem:[%s274 + $0x5f8] sm:%s266] %v657
                %v659 = vld [vmem:[%s273 + $0xc00] sm:%s266]
                %660 = vst [vmem:[%s274 + $0x600] sm:%s266] %v659
                %v661 = vld [vmem:[%s273 + $0xc10] sm:%s266]
                %662 = vst [vmem:[%s274 + $0x608] sm:%s266] %v661
                %v663 = vld [vmem:[%s273 + $0xc20] sm:%s266]
                %664 = vst [vmem:[%s274 + $0x610] sm:%s266] %v663
                %v665 = vld [vmem:[%s273 + $0xc30] sm:%s266]
                %666 = vst [vmem:[%s274 + $0x618] sm:%s266] %v665
                %v667 = vld [vmem:[%s273 + $0xc40] sm:%s266]
                %668 = vst [vmem:[%s274 + $0x620] sm:%s266] %v667
                %v669 = vld [vmem:[%s273 + $0xc50] sm:%s266]
                %670 = vst [vmem:[%s274 + $0x628] sm:%s266] %v669
                %v671 = vld [vmem:[%s273 + $0xc60] sm:%s266]
                %672 = vst [vmem:[%s274 + $0x630] sm:%s266] %v671
                %v673 = vld [vmem:[%s273 + $0xc70] sm:%s266]
                %674 = vst [vmem:[%s274 + $0x638] sm:%s266] %v673
                %v675 = vld [vmem:[%s273 + $0xc80] sm:%s266]
                %676 = vst [vmem:[%s274 + $0x640] sm:%s266] %v675
                %v677 = vld [vmem:[%s273 + $0xc90] sm:%s266]
                %678 = vst [vmem:[%s274 + $0x648] sm:%s266] %v677
                %v679 = vld [vmem:[%s273 + $0xca0] sm:%s266]
                %680 = vst [vmem:[%s274 + $0x650] sm:%s266] %v679
                %v681 = vld [vmem:[%s273 + $0xcb0] sm:%s266]
                %682 = vst [vmem:[%s274 + $0x658] sm:%s266] %v681
                %v683 = vld [vmem:[%s273 + $0xcc0] sm:%s266]
                %684 = vst [vmem:[%s274 + $0x660] sm:%s266] %v683
                %v685 = vld [vmem:[%s273 + $0xcd0] sm:%s266]
                %686 = vst [vmem:[%s274 + $0x668] sm:%s266] %v685
                %v687 = vld [vmem:[%s273 + $0xce0] sm:%s266]
                %688 = vst [vmem:[%s274 + $0x670] sm:%s266] %v687
                %v689 = vld [vmem:[%s273 + $0xcf0] sm:%s266]
                %690 = vst [vmem:[%s274 + $0x678] sm:%s266] %v689
                %v691 = vld [vmem:[%s273 + $0xd00] sm:%s266]
                %692 = vst [vmem:[%s274 + $0x680] sm:%s266] %v691
                %v693 = vld [vmem:[%s273 + $0xd10] sm:%s266]
                %694 = vst [vmem:[%s274 + $0x688] sm:%s266] %v693
                %v695 = vld [vmem:[%s273 + $0xd20] sm:%s266]
                %696 = vst [vmem:[%s274 + $0x690] sm:%s266] %v695
                %v697 = vld [vmem:[%s273 + $0xd30] sm:%s266]
                %698 = vst [vmem:[%s274 + $0x698] sm:%s266] %v697
                %v699 = vld [vmem:[%s273 + $0xd40] sm:%s266]
                %700 = vst [vmem:[%s274 + $0x6a0] sm:%s266] %v699
                %v701 = vld [vmem:[%s273 + $0xd50] sm:%s266]
                %702 = vst [vmem:[%s274 + $0x6a8] sm:%s266] %v701
                %v703 = vld [vmem:[%s273 + $0xd60] sm:%s266]
                %704 = vst [vmem:[%s274 + $0x6b0] sm:%s266] %v703
                %v705 = vld [vmem:[%s273 + $0xd70] sm:%s266]
                %706 = vst [vmem:[%s274 + $0x6b8] sm:%s266] %v705
                %v707 = vld [vmem:[%s273 + $0xd80] sm:%s266]
                %708 = vst [vmem:[%s274 + $0x6c0] sm:%s266] %v707
                %v709 = vld [vmem:[%s273 + $0xd90] sm:%s266]
                %710 = vst [vmem:[%s274 + $0x6c8] sm:%s266] %v709
                %v711 = vld [vmem:[%s273 + $0xda0] sm:%s266]
                %712 = vst [vmem:[%s274 + $0x6d0] sm:%s266] %v711
                %v713 = vld [vmem:[%s273 + $0xdb0] sm:%s266]
                %714 = vst [vmem:[%s274 + $0x6d8] sm:%s266] %v713
                %v715 = vld [vmem:[%s273 + $0xdc0] sm:%s266]
                %716 = vst [vmem:[%s274 + $0x6e0] sm:%s266] %v715
                %v717 = vld [vmem:[%s273 + $0xdd0] sm:%s266]
                %718 = vst [vmem:[%s274 + $0x6e8] sm:%s266] %v717
                %v719 = vld [vmem:[%s273 + $0xde0] sm:%s266]
                %720 = vst [vmem:[%s274 + $0x6f0] sm:%s266] %v719
                %v721 = vld [vmem:[%s273 + $0xdf0] sm:%s266]
                %722 = vst [vmem:[%s274 + $0x6f8] sm:%s266] %v721
                %v723 = vld [vmem:[%s273 + $0xe00] sm:%s266]
                %724 = vst [vmem:[%s274 + $0x700] sm:%s266] %v723
                %v725 = vld [vmem:[%s273 + $0xe10] sm:%s266]
                %726 = vst [vmem:[%s274 + $0x708] sm:%s266] %v725
                %v727 = vld [vmem:[%s273 + $0xe20] sm:%s266]
                %728 = vst [vmem:[%s274 + $0x710] sm:%s266] %v727
                %v729 = vld [vmem:[%s273 + $0xe30] sm:%s266]
                %730 = vst [vmem:[%s274 + $0x718] sm:%s266] %v729
                %v731 = vld [vmem:[%s273 + $0xe40] sm:%s266]
                %732 = vst [vmem:[%s274 + $0x720] sm:%s266] %v731
                %v733 = vld [vmem:[%s273 + $0xe50] sm:%s266]
                %734 = vst [vmem:[%s274 + $0x728] sm:%s266] %v733
                %v735 = vld [vmem:[%s273 + $0xe60] sm:%s266]
                %736 = vst [vmem:[%s274 + $0x730] sm:%s266] %v735
                %v737 = vld [vmem:[%s273 + $0xe70] sm:%s266]
                %738 = vst [vmem:[%s274 + $0x738] sm:%s266] %v737
                %v739 = vld [vmem:[%s273 + $0xe80] sm:%s266]
                %740 = vst [vmem:[%s274 + $0x740] sm:%s266] %v739
                %v741 = vld [vmem:[%s273 + $0xe90] sm:%s266]
                %742 = vst [vmem:[%s274 + $0x748] sm:%s266] %v741
                %v743 = vld [vmem:[%s273 + $0xea0] sm:%s266]
                %744 = vst [vmem:[%s274 + $0x750] sm:%s266] %v743
                %v745 = vld [vmem:[%s273 + $0xeb0] sm:%s266]
                %746 = vst [vmem:[%s274 + $0x758] sm:%s266] %v745
                %v747 = vld [vmem:[%s273 + $0xec0] sm:%s266]
                %748 = vst [vmem:[%s274 + $0x760] sm:%s266] %v747
                %v749 = vld [vmem:[%s273 + $0xed0] sm:%s266]
                %750 = vst [vmem:[%s274 + $0x768] sm:%s266] %v749
                %v751 = vld [vmem:[%s273 + $0xee0] sm:%s266]
                %752 = vst [vmem:[%s274 + $0x770] sm:%s266] %v751
                %v753 = vld [vmem:[%s273 + $0xef0] sm:%s266]
                %754 = vst [vmem:[%s274 + $0x778] sm:%s266] %v753
                %v755 = vld [vmem:[%s273 + $0xf00] sm:%s266]
                %756 = vst [vmem:[%s274 + $0x780] sm:%s266] %v755
                %v757 = vld [vmem:[%s273 + $0xf10] sm:%s266]
                %758 = vst [vmem:[%s274 + $0x788] sm:%s266] %v757
                %v759 = vld [vmem:[%s273 + $0xf20] sm:%s266]
                %760 = vst [vmem:[%s274 + $0x790] sm:%s266] %v759
                %v761 = vld [vmem:[%s273 + $0xf30] sm:%s266]
                %762 = vst [vmem:[%s274 + $0x798] sm:%s266] %v761
                %v763 = vld [vmem:[%s273 + $0xf40] sm:%s266]
                %764 = vst [vmem:[%s274 + $0x7a0] sm:%s266] %v763
                %v765 = vld [vmem:[%s273 + $0xf50] sm:%s266]
                %766 = vst [vmem:[%s274 + $0x7a8] sm:%s266] %v765
                %v767 = vld [vmem:[%s273 + $0xf60] sm:%s266]
                %768 = vst [vmem:[%s274 + $0x7b0] sm:%s266] %v767
                %v769 = vld [vmem:[%s273 + $0xf70] sm:%s266]
                %770 = vst [vmem:[%s274 + $0x7b8] sm:%s266] %v769
                %v771 = vld [vmem:[%s273 + $0xf80] sm:%s266]
                %772 = vst [vmem:[%s274 + $0x7c0] sm:%s266] %v771
                %v773 = vld [vmem:[%s273 + $0xf90] sm:%s266]
                %774 = vst [vmem:[%s274 + $0x7c8] sm:%s266] %v773
                %v775 = vld [vmem:[%s273 + $0xfa0] sm:%s266]
                %776 = vst [vmem:[%s274 + $0x7d0] sm:%s266] %v775
                %v777 = vld [vmem:[%s273 + $0xfb0] sm:%s266]
                %778 = vst [vmem:[%s274 + $0x7d8] sm:%s266] %v777
                %v779 = vld [vmem:[%s273 + $0xfc0] sm:%s266]
                %780 = vst [vmem:[%s274 + $0x7e0] sm:%s266] %v779
                %v781 = vld [vmem:[%s273 + $0xfd0] sm:%s266]
                %782 = vst [vmem:[%s274 + $0x7e8] sm:%s266] %v781
                %v783 = vld [vmem:[%s273 + $0xfe0] sm:%s266]
                %784 = vst [vmem:[%s274 + $0x7f0] sm:%s266] %v783
                %v785 = vld [vmem:[%s273 + $0xff0] sm:%s266]
                %786 = vst [vmem:[%s274 + $0x7f8] sm:%s266] %v785
              $region57: #{multi_stage_attention.1} parent=51 // loop_footer
                %s272 = sadd.s32 1, %s268
              $region58: #{multi_stage_attention.1} parent=51 // loop_footer_branch
                %267 = sbr.rel target = $region54
              $region59: #{multi_stage_attention.1} parent=51 // loop_exit
                _
            $region52: #{multi_stage_attention.1} parent=43 // pred_fallthru
              _
          $region44: #{multi_stage_attention.1} parent=39 // pred_fallthru
            _
          %1311 = vnop
        $region40: #{multi_stage_attention.1} parent=35 // pred_fallthru
          _
        // Predicated region
        $region75: #{multi_stage_attention.1} parent=35 // pred_check
          %p1312 = pneg %p75
        $region76: #{multi_stage_attention.1} parent=35 // pred_check_branch
          %1314 = sbr.rel (%p1312) target = $region78
        $region77: #{multi_stage_attention.1} parent=35 // pred_region
          %s1315 = sand.u32 %s65, 1
          %s1316 = sand.u32 %s65, 1
          %s1317 = smul.addr %s1316, 4096
          %s1318 = scalar_lea.vmem [#allocation3], %s1317
          %s1319 = smul.u32 4, %s21
          %s1320 = smul.addr %s20, 1024
          %s1321 = sadd.s32 %s1319, %s1320
          %s1322 = smul.addr %s1321, 8
          %s1323 = scalar_lea.vmem %s1, %s1322
          // Predicated region
          $region79: #{multi_stage_attention.1} parent=77 // pred_check
            _
          $region80: #{multi_stage_attention.1} parent=77 // pred_check_branch
            %1325 = sbr.rel (0) target = $region82
          $region81: #{multi_stage_attention.1} parent=77 // pred_region
            // Predicated region
            $region83: #{multi_stage_attention.1} parent=81 // pred_check
              _
            $region84: #{multi_stage_attention.1} parent=81 // pred_check_branch
              %1327 = sbr.rel (0) target = $region86
            $region85: #{multi_stage_attention.1} parent=81 // pred_region
              loop: start=0, step=1, limit=1
              $region87: #{multi_stage_attention.1} parent=85 // loop_pre_header
                _
              $region88: #{multi_stage_attention.1} parent=85 // loop_header
                %s1329 = sphi 0, %s1333
                %p1330 = scmp.ge.s32.totalorder %s1329, 1
                %s1334 = sphi %s1323, %s1323
                %s1335 = sphi %s1318, %s1318
              $region89: #{multi_stage_attention.1} parent=85 // loop_header_branch
                %1332 = sbr.rel (%p1330) target = $region93
              $region90: #{multi_stage_attention.1} parent=85 // loop_body
                %v1336 = vld [vmem:[%s1334] sm:$0xff]
                %1337 = vst [vmem:[%s1335] sm:$0xff] %v1336
                %v1338 = vld [vmem:[%s1334 + $0x8] sm:$0xff]
                %1339 = vst [vmem:[%s1335 + $0x8] sm:$0xff] %v1338
                %v1340 = vld [vmem:[%s1334 + $0x10] sm:$0xff]
                %1341 = vst [vmem:[%s1335 + $0x10] sm:$0xff] %v1340
                %v1342 = vld [vmem:[%s1334 + $0x18] sm:$0xff]
                %1343 = vst [vmem:[%s1335 + $0x18] sm:$0xff] %v1342
                %v1344 = vld [vmem:[%s1334 + $0x40] sm:$0xff]
                %1345 = vst [vmem:[%s1335 + $0x20] sm:$0xff] %v1344
                %v1346 = vld [vmem:[%s1334 + $0x48] sm:$0xff]
                %1347 = vst [vmem:[%s1335 + $0x28] sm:$0xff] %v1346
                %v1348 = vld [vmem:[%s1334 + $0x50] sm:$0xff]
                %1349 = vst [vmem:[%s1335 + $0x30] sm:$0xff] %v1348
                %v1350 = vld [vmem:[%s1334 + $0x58] sm:$0xff]
                %1351 = vst [vmem:[%s1335 + $0x38] sm:$0xff] %v1350
                %v1352 = vld [vmem:[%s1334 + $0x80] sm:$0xff]
                %1353 = vst [vmem:[%s1335 + $0x40] sm:$0xff] %v1352
                %v1354 = vld [vmem:[%s1334 + $0x88] sm:$0xff]
                %1355 = vst [vmem:[%s1335 + $0x48] sm:$0xff] %v1354
                %v1356 = vld [vmem:[%s1334 + $0x90] sm:$0xff]
                %1357 = vst [vmem:[%s1335 + $0x50] sm:$0xff] %v1356
                %v1358 = vld [vmem:[%s1334 + $0x98] sm:$0xff]
                %1359 = vst [vmem:[%s1335 + $0x58] sm:$0xff] %v1358
                %v1360 = vld [vmem:[%s1334 + $0xc0] sm:$0xff]
                %1361 = vst [vmem:[%s1335 + $0x60] sm:$0xff] %v1360
                %v1362 = vld [vmem:[%s1334 + $0xc8] sm:$0xff]
                %1363 = vst [vmem:[%s1335 + $0x68] sm:$0xff] %v1362
                %v1364 = vld [vmem:[%s1334 + $0xd0] sm:$0xff]
                %1365 = vst [vmem:[%s1335 + $0x70] sm:$0xff] %v1364
                %v1366 = vld [vmem:[%s1334 + $0xd8] sm:$0xff]
                %1367 = vst [vmem:[%s1335 + $0x78] sm:$0xff] %v1366
                %v1368 = vld [vmem:[%s1334 + $0x100] sm:$0xff]
                %1369 = vst [vmem:[%s1335 + $0x80] sm:$0xff] %v1368
                %v1370 = vld [vmem:[%s1334 + $0x108] sm:$0xff]
                %1371 = vst [vmem:[%s1335 + $0x88] sm:$0xff] %v1370
                %v1372 = vld [vmem:[%s1334 + $0x110] sm:$0xff]
                %1373 = vst [vmem:[%s1335 + $0x90] sm:$0xff] %v1372
                %v1374 = vld [vmem:[%s1334 + $0x118] sm:$0xff]
                %1375 = vst [vmem:[%s1335 + $0x98] sm:$0xff] %v1374
                %v1376 = vld [vmem:[%s1334 + $0x140] sm:$0xff]
                %1377 = vst [vmem:[%s1335 + $0xa0] sm:$0xff] %v1376
                %v1378 = vld [vmem:[%s1334 + $0x148] sm:$0xff]
                %1379 = vst [vmem:[%s1335 + $0xa8] sm:$0xff] %v1378
                %v1380 = vld [vmem:[%s1334 + $0x150] sm:$0xff]
                %1381 = vst [vmem:[%s1335 + $0xb0] sm:$0xff] %v1380
                %v1382 = vld [vmem:[%s1334 + $0x158] sm:$0xff]
                %1383 = vst [vmem:[%s1335 + $0xb8] sm:$0xff] %v1382
                %v1384 = vld [vmem:[%s1334 + $0x180] sm:$0xff]
                %1385 = vst [vmem:[%s1335 + $0xc0] sm:$0xff] %v1384
                %v1386 = vld [vmem:[%s1334 + $0x188] sm:$0xff]
                %1387 = vst [vmem:[%s1335 + $0xc8] sm:$0xff] %v1386
                %v1388 = vld [vmem:[%s1334 + $0x190] sm:$0xff]
                %1389 = vst [vmem:[%s1335 + $0xd0] sm:$0xff] %v1388
                %v1390 = vld [vmem:[%s1334 + $0x198] sm:$0xff]
                %1391 = vst [vmem:[%s1335 + $0xd8] sm:$0xff] %v1390
                %v1392 = vld [vmem:[%s1334 + $0x1c0] sm:$0xff]
                %1393 = vst [vmem:[%s1335 + $0xe0] sm:$0xff] %v1392
                %v1394 = vld [vmem:[%s1334 + $0x1c8] sm:$0xff]
                %1395 = vst [vmem:[%s1335 + $0xe8] sm:$0xff] %v1394
                %v1396 = vld [vmem:[%s1334 + $0x1d0] sm:$0xff]
                %1397 = vst [vmem:[%s1335 + $0xf0] sm:$0xff] %v1396
                %v1398 = vld [vmem:[%s1334 + $0x1d8] sm:$0xff]
                %1399 = vst [vmem:[%s1335 + $0xf8] sm:$0xff] %v1398
                %v1400 = vld [vmem:[%s1334 + $0x200] sm:$0xff]
                %1401 = vst [vmem:[%s1335 + $0x100] sm:$0xff] %v1400
                %v1402 = vld [vmem:[%s1334 + $0x208] sm:$0xff]
                %1403 = vst [vmem:[%s1335 + $0x108] sm:$0xff] %v1402
                %v1404 = vld [vmem:[%s1334 + $0x210] sm:$0xff]
                %1405 = vst [vmem:[%s1335 + $0x110] sm:$0xff] %v1404
                %v1406 = vld [vmem:[%s1334 + $0x218] sm:$0xff]
                %1407 = vst [vmem:[%s1335 + $0x118] sm:$0xff] %v1406
                %v1408 = vld [vmem:[%s1334 + $0x240] sm:$0xff]
                %1409 = vst [vmem:[%s1335 + $0x120] sm:$0xff] %v1408
                %v1410 = vld [vmem:[%s1334 + $0x248] sm:$0xff]
                %1411 = vst [vmem:[%s1335 + $0x128] sm:$0xff] %v1410
                %v1412 = vld [vmem:[%s1334 + $0x250] sm:$0xff]
                %1413 = vst [vmem:[%s1335 + $0x130] sm:$0xff] %v1412
                %v1414 = vld [vmem:[%s1334 + $0x258] sm:$0xff]
                %1415 = vst [vmem:[%s1335 + $0x138] sm:$0xff] %v1414
                %v1416 = vld [vmem:[%s1334 + $0x280] sm:$0xff]
                %1417 = vst [vmem:[%s1335 + $0x140] sm:$0xff] %v1416
                %v1418 = vld [vmem:[%s1334 + $0x288] sm:$0xff]
                %1419 = vst [vmem:[%s1335 + $0x148] sm:$0xff] %v1418
                %v1420 = vld [vmem:[%s1334 + $0x290] sm:$0xff]
                %1421 = vst [vmem:[%s1335 + $0x150] sm:$0xff] %v1420
                %v1422 = vld [vmem:[%s1334 + $0x298] sm:$0xff]
                %1423 = vst [vmem:[%s1335 + $0x158] sm:$0xff] %v1422
                %v1424 = vld [vmem:[%s1334 + $0x2c0] sm:$0xff]
                %1425 = vst [vmem:[%s1335 + $0x160] sm:$0xff] %v1424
                %v1426 = vld [vmem:[%s1334 + $0x2c8] sm:$0xff]
                %1427 = vst [vmem:[%s1335 + $0x168] sm:$0xff] %v1426
                %v1428 = vld [vmem:[%s1334 + $0x2d0] sm:$0xff]
                %1429 = vst [vmem:[%s1335 + $0x170] sm:$0xff] %v1428
                %v1430 = vld [vmem:[%s1334 + $0x2d8] sm:$0xff]
                %1431 = vst [vmem:[%s1335 + $0x178] sm:$0xff] %v1430
                %v1432 = vld [vmem:[%s1334 + $0x300] sm:$0xff]
                %1433 = vst [vmem:[%s1335 + $0x180] sm:$0xff] %v1432
                %v1434 = vld [vmem:[%s1334 + $0x308] sm:$0xff]
                %1435 = vst [vmem:[%s1335 + $0x188] sm:$0xff] %v1434
                %v1436 = vld [vmem:[%s1334 + $0x310] sm:$0xff]
                %1437 = vst [vmem:[%s1335 + $0x190] sm:$0xff] %v1436
                %v1438 = vld [vmem:[%s1334 + $0x318] sm:$0xff]
                %1439 = vst [vmem:[%s1335 + $0x198] sm:$0xff] %v1438
                %v1440 = vld [vmem:[%s1334 + $0x340] sm:$0xff]
                %1441 = vst [vmem:[%s1335 + $0x1a0] sm:$0xff] %v1440
                %v1442 = vld [vmem:[%s1334 + $0x348] sm:$0xff]
                %1443 = vst [vmem:[%s1335 + $0x1a8] sm:$0xff] %v1442
                %v1444 = vld [vmem:[%s1334 + $0x350] sm:$0xff]
                %1445 = vst [vmem:[%s1335 + $0x1b0] sm:$0xff] %v1444
                %v1446 = vld [vmem:[%s1334 + $0x358] sm:$0xff]
                %1447 = vst [vmem:[%s1335 + $0x1b8] sm:$0xff] %v1446
                %v1448 = vld [vmem:[%s1334 + $0x380] sm:$0xff]
                %1449 = vst [vmem:[%s1335 + $0x1c0] sm:$0xff] %v1448
                %v1450 = vld [vmem:[%s1334 + $0x388] sm:$0xff]
                %1451 = vst [vmem:[%s1335 + $0x1c8] sm:$0xff] %v1450
                %v1452 = vld [vmem:[%s1334 + $0x390] sm:$0xff]
                %1453 = vst [vmem:[%s1335 + $0x1d0] sm:$0xff] %v1452
                %v1454 = vld [vmem:[%s1334 + $0x398] sm:$0xff]
                %1455 = vst [vmem:[%s1335 + $0x1d8] sm:$0xff] %v1454
                %v1456 = vld [vmem:[%s1334 + $0x3c0] sm:$0xff]
                %1457 = vst [vmem:[%s1335 + $0x1e0] sm:$0xff] %v1456
                %v1458 = vld [vmem:[%s1334 + $0x3c8] sm:$0xff]
                %1459 = vst [vmem:[%s1335 + $0x1e8] sm:$0xff] %v1458
                %v1460 = vld [vmem:[%s1334 + $0x3d0] sm:$0xff]
                %1461 = vst [vmem:[%s1335 + $0x1f0] sm:$0xff] %v1460
                %v1462 = vld [vmem:[%s1334 + $0x3d8] sm:$0xff]
                %1463 = vst [vmem:[%s1335 + $0x1f8] sm:$0xff] %v1462
                %v1464 = vld [vmem:[%s1334 + $0x400] sm:$0xff]
                %1465 = vst [vmem:[%s1335 + $0x200] sm:$0xff] %v1464
                %v1466 = vld [vmem:[%s1334 + $0x408] sm:$0xff]
                %1467 = vst [vmem:[%s1335 + $0x208] sm:$0xff] %v1466
                %v1468 = vld [vmem:[%s1334 + $0x410] sm:$0xff]
                %1469 = vst [vmem:[%s1335 + $0x210] sm:$0xff] %v1468
                %v1470 = vld [vmem:[%s1334 + $0x418] sm:$0xff]
                %1471 = vst [vmem:[%s1335 + $0x218] sm:$0xff] %v1470
                %v1472 = vld [vmem:[%s1334 + $0x440] sm:$0xff]
                %1473 = vst [vmem:[%s1335 + $0x220] sm:$0xff] %v1472
                %v1474 = vld [vmem:[%s1334 + $0x448] sm:$0xff]
                %1475 = vst [vmem:[%s1335 + $0x228] sm:$0xff] %v1474
                %v1476 = vld [vmem:[%s1334 + $0x450] sm:$0xff]
                %1477 = vst [vmem:[%s1335 + $0x230] sm:$0xff] %v1476
                %v1478 = vld [vmem:[%s1334 + $0x458] sm:$0xff]
                %1479 = vst [vmem:[%s1335 + $0x238] sm:$0xff] %v1478
                %v1480 = vld [vmem:[%s1334 + $0x480] sm:$0xff]
                %1481 = vst [vmem:[%s1335 + $0x240] sm:$0xff] %v1480
                %v1482 = vld [vmem:[%s1334 + $0x488] sm:$0xff]
                %1483 = vst [vmem:[%s1335 + $0x248] sm:$0xff] %v1482
                %v1484 = vld [vmem:[%s1334 + $0x490] sm:$0xff]
                %1485 = vst [vmem:[%s1335 + $0x250] sm:$0xff] %v1484
                %v1486 = vld [vmem:[%s1334 + $0x498] sm:$0xff]
                %1487 = vst [vmem:[%s1335 + $0x258] sm:$0xff] %v1486
                %v1488 = vld [vmem:[%s1334 + $0x4c0] sm:$0xff]
                %1489 = vst [vmem:[%s1335 + $0x260] sm:$0xff] %v1488
                %v1490 = vld [vmem:[%s1334 + $0x4c8] sm:$0xff]
                %1491 = vst [vmem:[%s1335 + $0x268] sm:$0xff] %v1490
                %v1492 = vld [vmem:[%s1334 + $0x4d0] sm:$0xff]
                %1493 = vst [vmem:[%s1335 + $0x270] sm:$0xff] %v1492
                %v1494 = vld [vmem:[%s1334 + $0x4d8] sm:$0xff]
                %1495 = vst [vmem:[%s1335 + $0x278] sm:$0xff] %v1494
                %v1496 = vld [vmem:[%s1334 + $0x500] sm:$0xff]
                %1497 = vst [vmem:[%s1335 + $0x280] sm:$0xff] %v1496
                %v1498 = vld [vmem:[%s1334 + $0x508] sm:$0xff]
                %1499 = vst [vmem:[%s1335 + $0x288] sm:$0xff] %v1498
                %v1500 = vld [vmem:[%s1334 + $0x510] sm:$0xff]
                %1501 = vst [vmem:[%s1335 + $0x290] sm:$0xff] %v1500
                %v1502 = vld [vmem:[%s1334 + $0x518] sm:$0xff]
                %1503 = vst [vmem:[%s1335 + $0x298] sm:$0xff] %v1502
                %v1504 = vld [vmem:[%s1334 + $0x540] sm:$0xff]
                %1505 = vst [vmem:[%s1335 + $0x2a0] sm:$0xff] %v1504
                %v1506 = vld [vmem:[%s1334 + $0x548] sm:$0xff]
                %1507 = vst [vmem:[%s1335 + $0x2a8] sm:$0xff] %v1506
                %v1508 = vld [vmem:[%s1334 + $0x550] sm:$0xff]
                %1509 = vst [vmem:[%s1335 + $0x2b0] sm:$0xff] %v1508
                %v1510 = vld [vmem:[%s1334 + $0x558] sm:$0xff]
                %1511 = vst [vmem:[%s1335 + $0x2b8] sm:$0xff] %v1510
                %v1512 = vld [vmem:[%s1334 + $0x580] sm:$0xff]
                %1513 = vst [vmem:[%s1335 + $0x2c0] sm:$0xff] %v1512
                %v1514 = vld [vmem:[%s1334 + $0x588] sm:$0xff]
                %1515 = vst [vmem:[%s1335 + $0x2c8] sm:$0xff] %v1514
                %v1516 = vld [vmem:[%s1334 + $0x590] sm:$0xff]
                %1517 = vst [vmem:[%s1335 + $0x2d0] sm:$0xff] %v1516
                %v1518 = vld [vmem:[%s1334 + $0x598] sm:$0xff]
                %1519 = vst [vmem:[%s1335 + $0x2d8] sm:$0xff] %v1518
                %v1520 = vld [vmem:[%s1334 + $0x5c0] sm:$0xff]
                %1521 = vst [vmem:[%s1335 + $0x2e0] sm:$0xff] %v1520
                %v1522 = vld [vmem:[%s1334 + $0x5c8] sm:$0xff]
                %1523 = vst [vmem:[%s1335 + $0x2e8] sm:$0xff] %v1522
                %v1524 = vld [vmem:[%s1334 + $0x5d0] sm:$0xff]
                %1525 = vst [vmem:[%s1335 + $0x2f0] sm:$0xff] %v1524
                %v1526 = vld [vmem:[%s1334 + $0x5d8] sm:$0xff]
                %1527 = vst [vmem:[%s1335 + $0x2f8] sm:$0xff] %v1526
                %v1528 = vld [vmem:[%s1334 + $0x600] sm:$0xff]
                %1529 = vst [vmem:[%s1335 + $0x300] sm:$0xff] %v1528
                %v1530 = vld [vmem:[%s1334 + $0x608] sm:$0xff]
                %1531 = vst [vmem:[%s1335 + $0x308] sm:$0xff] %v1530
                %v1532 = vld [vmem:[%s1334 + $0x610] sm:$0xff]
                %1533 = vst [vmem:[%s1335 + $0x310] sm:$0xff] %v1532
                %v1534 = vld [vmem:[%s1334 + $0x618] sm:$0xff]
                %1535 = vst [vmem:[%s1335 + $0x318] sm:$0xff] %v1534
                %v1536 = vld [vmem:[%s1334 + $0x640] sm:$0xff]
                %1537 = vst [vmem:[%s1335 + $0x320] sm:$0xff] %v1536
                %v1538 = vld [vmem:[%s1334 + $0x648] sm:$0xff]
                %1539 = vst [vmem:[%s1335 + $0x328] sm:$0xff] %v1538
                %v1540 = vld [vmem:[%s1334 + $0x650] sm:$0xff]
                %1541 = vst [vmem:[%s1335 + $0x330] sm:$0xff] %v1540
                %v1542 = vld [vmem:[%s1334 + $0x658] sm:$0xff]
                %1543 = vst [vmem:[%s1335 + $0x338] sm:$0xff] %v1542
                %v1544 = vld [vmem:[%s1334 + $0x680] sm:$0xff]
                %1545 = vst [vmem:[%s1335 + $0x340] sm:$0xff] %v1544
                %v1546 = vld [vmem:[%s1334 + $0x688] sm:$0xff]
                %1547 = vst [vmem:[%s1335 + $0x348] sm:$0xff] %v1546
                %v1548 = vld [vmem:[%s1334 + $0x690] sm:$0xff]
                %1549 = vst [vmem:[%s1335 + $0x350] sm:$0xff] %v1548
                %v1550 = vld [vmem:[%s1334 + $0x698] sm:$0xff]
                %1551 = vst [vmem:[%s1335 + $0x358] sm:$0xff] %v1550
                %v1552 = vld [vmem:[%s1334 + $0x6c0] sm:$0xff]
                %1553 = vst [vmem:[%s1335 + $0x360] sm:$0xff] %v1552
                %v1554 = vld [vmem:[%s1334 + $0x6c8] sm:$0xff]
                %1555 = vst [vmem:[%s1335 + $0x368] sm:$0xff] %v1554
                %v1556 = vld [vmem:[%s1334 + $0x6d0] sm:$0xff]
                %1557 = vst [vmem:[%s1335 + $0x370] sm:$0xff] %v1556
                %v1558 = vld [vmem:[%s1334 + $0x6d8] sm:$0xff]
                %1559 = vst [vmem:[%s1335 + $0x378] sm:$0xff] %v1558
                %v1560 = vld [vmem:[%s1334 + $0x700] sm:$0xff]
                %1561 = vst [vmem:[%s1335 + $0x380] sm:$0xff] %v1560
                %v1562 = vld [vmem:[%s1334 + $0x708] sm:$0xff]
                %1563 = vst [vmem:[%s1335 + $0x388] sm:$0xff] %v1562
                %v1564 = vld [vmem:[%s1334 + $0x710] sm:$0xff]
                %1565 = vst [vmem:[%s1335 + $0x390] sm:$0xff] %v1564
                %v1566 = vld [vmem:[%s1334 + $0x718] sm:$0xff]
                %1567 = vst [vmem:[%s1335 + $0x398] sm:$0xff] %v1566
                %v1568 = vld [vmem:[%s1334 + $0x740] sm:$0xff]
                %1569 = vst [vmem:[%s1335 + $0x3a0] sm:$0xff] %v1568
                %v1570 = vld [vmem:[%s1334 + $0x748] sm:$0xff]
                %1571 = vst [vmem:[%s1335 + $0x3a8] sm:$0xff] %v1570
                %v1572 = vld [vmem:[%s1334 + $0x750] sm:$0xff]
                %1573 = vst [vmem:[%s1335 + $0x3b0] sm:$0xff] %v1572
                %v1574 = vld [vmem:[%s1334 + $0x758] sm:$0xff]
                %1575 = vst [vmem:[%s1335 + $0x3b8] sm:$0xff] %v1574
                %v1576 = vld [vmem:[%s1334 + $0x780] sm:$0xff]
                %1577 = vst [vmem:[%s1335 + $0x3c0] sm:$0xff] %v1576
                %v1578 = vld [vmem:[%s1334 + $0x788] sm:$0xff]
                %1579 = vst [vmem:[%s1335 + $0x3c8] sm:$0xff] %v1578
                %v1580 = vld [vmem:[%s1334 + $0x790] sm:$0xff]
                %1581 = vst [vmem:[%s1335 + $0x3d0] sm:$0xff] %v1580
                %v1582 = vld [vmem:[%s1334 + $0x798] sm:$0xff]
                %1583 = vst [vmem:[%s1335 + $0x3d8] sm:$0xff] %v1582
                %v1584 = vld [vmem:[%s1334 + $0x7c0] sm:$0xff]
                %1585 = vst [vmem:[%s1335 + $0x3e0] sm:$0xff] %v1584
                %v1586 = vld [vmem:[%s1334 + $0x7c8] sm:$0xff]
                %1587 = vst [vmem:[%s1335 + $0x3e8] sm:$0xff] %v1586
                %v1588 = vld [vmem:[%s1334 + $0x7d0] sm:$0xff]
                %1589 = vst [vmem:[%s1335 + $0x3f0] sm:$0xff] %v1588
                %v1590 = vld [vmem:[%s1334 + $0x7d8] sm:$0xff]
                %1591 = vst [vmem:[%s1335 + $0x3f8] sm:$0xff] %v1590
                %v1592 = vld [vmem:[%s1334 + $0x800] sm:$0xff]
                %1593 = vst [vmem:[%s1335 + $0x400] sm:$0xff] %v1592
                %v1594 = vld [vmem:[%s1334 + $0x808] sm:$0xff]
                %1595 = vst [vmem:[%s1335 + $0x408] sm:$0xff] %v1594
                %v1596 = vld [vmem:[%s1334 + $0x810] sm:$0xff]
                %1597 = vst [vmem:[%s1335 + $0x410] sm:$0xff] %v1596
                %v1598 = vld [vmem:[%s1334 + $0x818] sm:$0xff]
                %1599 = vst [vmem:[%s1335 + $0x418] sm:$0xff] %v1598
                %v1600 = vld [vmem:[%s1334 + $0x840] sm:$0xff]
                %1601 = vst [vmem:[%s1335 + $0x420] sm:$0xff] %v1600
                %v1602 = vld [vmem:[%s1334 + $0x848] sm:$0xff]
                %1603 = vst [vmem:[%s1335 + $0x428] sm:$0xff] %v1602
                %v1604 = vld [vmem:[%s1334 + $0x850] sm:$0xff]
                %1605 = vst [vmem:[%s1335 + $0x430] sm:$0xff] %v1604
                %v1606 = vld [vmem:[%s1334 + $0x858] sm:$0xff]
                %1607 = vst [vmem:[%s1335 + $0x438] sm:$0xff] %v1606
                %v1608 = vld [vmem:[%s1334 + $0x880] sm:$0xff]
                %1609 = vst [vmem:[%s1335 + $0x440] sm:$0xff] %v1608
                %v1610 = vld [vmem:[%s1334 + $0x888] sm:$0xff]
                %1611 = vst [vmem:[%s1335 + $0x448] sm:$0xff] %v1610
                %v1612 = vld [vmem:[%s1334 + $0x890] sm:$0xff]
                %1613 = vst [vmem:[%s1335 + $0x450] sm:$0xff] %v1612
                %v1614 = vld [vmem:[%s1334 + $0x898] sm:$0xff]
                %1615 = vst [vmem:[%s1335 + $0x458] sm:$0xff] %v1614
                %v1616 = vld [vmem:[%s1334 + $0x8c0] sm:$0xff]
                %1617 = vst [vmem:[%s1335 + $0x460] sm:$0xff] %v1616
                %v1618 = vld [vmem:[%s1334 + $0x8c8] sm:$0xff]
                %1619 = vst [vmem:[%s1335 + $0x468] sm:$0xff] %v1618
                %v1620 = vld [vmem:[%s1334 + $0x8d0] sm:$0xff]
                %1621 = vst [vmem:[%s1335 + $0x470] sm:$0xff] %v1620
                %v1622 = vld [vmem:[%s1334 + $0x8d8] sm:$0xff]
                %1623 = vst [vmem:[%s1335 + $0x478] sm:$0xff] %v1622
                %v1624 = vld [vmem:[%s1334 + $0x900] sm:$0xff]
                %1625 = vst [vmem:[%s1335 + $0x480] sm:$0xff] %v1624
                %v1626 = vld [vmem:[%s1334 + $0x908] sm:$0xff]
                %1627 = vst [vmem:[%s1335 + $0x488] sm:$0xff] %v1626
                %v1628 = vld [vmem:[%s1334 + $0x910] sm:$0xff]
                %1629 = vst [vmem:[%s1335 + $0x490] sm:$0xff] %v1628
                %v1630 = vld [vmem:[%s1334 + $0x918] sm:$0xff]
                %1631 = vst [vmem:[%s1335 + $0x498] sm:$0xff] %v1630
                %v1632 = vld [vmem:[%s1334 + $0x940] sm:$0xff]
                %1633 = vst [vmem:[%s1335 + $0x4a0] sm:$0xff] %v1632
                %v1634 = vld [vmem:[%s1334 + $0x948] sm:$0xff]
                %1635 = vst [vmem:[%s1335 + $0x4a8] sm:$0xff] %v1634
                %v1636 = vld [vmem:[%s1334 + $0x950] sm:$0xff]
                %1637 = vst [vmem:[%s1335 + $0x4b0] sm:$0xff] %v1636
                %v1638 = vld [vmem:[%s1334 + $0x958] sm:$0xff]
                %1639 = vst [vmem:[%s1335 + $0x4b8] sm:$0xff] %v1638
                %v1640 = vld [vmem:[%s1334 + $0x980] sm:$0xff]
                %1641 = vst [vmem:[%s1335 + $0x4c0] sm:$0xff] %v1640
                %v1642 = vld [vmem:[%s1334 + $0x988] sm:$0xff]
                %1643 = vst [vmem:[%s1335 + $0x4c8] sm:$0xff] %v1642
                %v1644 = vld [vmem:[%s1334 + $0x990] sm:$0xff]
                %1645 = vst [vmem:[%s1335 + $0x4d0] sm:$0xff] %v1644
                %v1646 = vld [vmem:[%s1334 + $0x998] sm:$0xff]
                %1647 = vst [vmem:[%s1335 + $0x4d8] sm:$0xff] %v1646
                %v1648 = vld [vmem:[%s1334 + $0x9c0] sm:$0xff]
                %1649 = vst [vmem:[%s1335 + $0x4e0] sm:$0xff] %v1648
                %v1650 = vld [vmem:[%s1334 + $0x9c8] sm:$0xff]
                %1651 = vst [vmem:[%s1335 + $0x4e8] sm:$0xff] %v1650
                %v1652 = vld [vmem:[%s1334 + $0x9d0] sm:$0xff]
                %1653 = vst [vmem:[%s1335 + $0x4f0] sm:$0xff] %v1652
                %v1654 = vld [vmem:[%s1334 + $0x9d8] sm:$0xff]
                %1655 = vst [vmem:[%s1335 + $0x4f8] sm:$0xff] %v1654
                %v1656 = vld [vmem:[%s1334 + $0xa00] sm:$0xff]
                %1657 = vst [vmem:[%s1335 + $0x500] sm:$0xff] %v1656
                %v1658 = vld [vmem:[%s1334 + $0xa08] sm:$0xff]
                %1659 = vst [vmem:[%s1335 + $0x508] sm:$0xff] %v1658
                %v1660 = vld [vmem:[%s1334 + $0xa10] sm:$0xff]
                %1661 = vst [vmem:[%s1335 + $0x510] sm:$0xff] %v1660
                %v1662 = vld [vmem:[%s1334 + $0xa18] sm:$0xff]
                %1663 = vst [vmem:[%s1335 + $0x518] sm:$0xff] %v1662
                %v1664 = vld [vmem:[%s1334 + $0xa40] sm:$0xff]
                %1665 = vst [vmem:[%s1335 + $0x520] sm:$0xff] %v1664
                %v1666 = vld [vmem:[%s1334 + $0xa48] sm:$0xff]
                %1667 = vst [vmem:[%s1335 + $0x528] sm:$0xff] %v1666
                %v1668 = vld [vmem:[%s1334 + $0xa50] sm:$0xff]
                %1669 = vst [vmem:[%s1335 + $0x530] sm:$0xff] %v1668
                %v1670 = vld [vmem:[%s1334 + $0xa58] sm:$0xff]
                %1671 = vst [vmem:[%s1335 + $0x538] sm:$0xff] %v1670
                %v1672 = vld [vmem:[%s1334 + $0xa80] sm:$0xff]
                %1673 = vst [vmem:[%s1335 + $0x540] sm:$0xff] %v1672
                %v1674 = vld [vmem:[%s1334 + $0xa88] sm:$0xff]
                %1675 = vst [vmem:[%s1335 + $0x548] sm:$0xff] %v1674
                %v1676 = vld [vmem:[%s1334 + $0xa90] sm:$0xff]
                %1677 = vst [vmem:[%s1335 + $0x550] sm:$0xff] %v1676
                %v1678 = vld [vmem:[%s1334 + $0xa98] sm:$0xff]
                %1679 = vst [vmem:[%s1335 + $0x558] sm:$0xff] %v1678
                %v1680 = vld [vmem:[%s1334 + $0xac0] sm:$0xff]
                %1681 = vst [vmem:[%s1335 + $0x560] sm:$0xff] %v1680
                %v1682 = vld [vmem:[%s1334 + $0xac8] sm:$0xff]
                %1683 = vst [vmem:[%s1335 + $0x568] sm:$0xff] %v1682
                %v1684 = vld [vmem:[%s1334 + $0xad0] sm:$0xff]
                %1685 = vst [vmem:[%s1335 + $0x570] sm:$0xff] %v1684
                %v1686 = vld [vmem:[%s1334 + $0xad8] sm:$0xff]
                %1687 = vst [vmem:[%s1335 + $0x578] sm:$0xff] %v1686
                %v1688 = vld [vmem:[%s1334 + $0xb00] sm:$0xff]
                %1689 = vst [vmem:[%s1335 + $0x580] sm:$0xff] %v1688
                %v1690 = vld [vmem:[%s1334 + $0xb08] sm:$0xff]
                %1691 = vst [vmem:[%s1335 + $0x588] sm:$0xff] %v1690
                %v1692 = vld [vmem:[%s1334 + $0xb10] sm:$0xff]
                %1693 = vst [vmem:[%s1335 + $0x590] sm:$0xff] %v1692
                %v1694 = vld [vmem:[%s1334 + $0xb18] sm:$0xff]
                %1695 = vst [vmem:[%s1335 + $0x598] sm:$0xff] %v1694
                %v1696 = vld [vmem:[%s1334 + $0xb40] sm:$0xff]
                %1697 = vst [vmem:[%s1335 + $0x5a0] sm:$0xff] %v1696
                %v1698 = vld [vmem:[%s1334 + $0xb48] sm:$0xff]
                %1699 = vst [vmem:[%s1335 + $0x5a8] sm:$0xff] %v1698
                %v1700 = vld [vmem:[%s1334 + $0xb50] sm:$0xff]
                %1701 = vst [vmem:[%s1335 + $0x5b0] sm:$0xff] %v1700
                %v1702 = vld [vmem:[%s1334 + $0xb58] sm:$0xff]
                %1703 = vst [vmem:[%s1335 + $0x5b8] sm:$0xff] %v1702
                %v1704 = vld [vmem:[%s1334 + $0xb80] sm:$0xff]
                %1705 = vst [vmem:[%s1335 + $0x5c0] sm:$0xff] %v1704
                %v1706 = vld [vmem:[%s1334 + $0xb88] sm:$0xff]
                %1707 = vst [vmem:[%s1335 + $0x5c8] sm:$0xff] %v1706
                %v1708 = vld [vmem:[%s1334 + $0xb90] sm:$0xff]
                %1709 = vst [vmem:[%s1335 + $0x5d0] sm:$0xff] %v1708
                %v1710 = vld [vmem:[%s1334 + $0xb98] sm:$0xff]
                %1711 = vst [vmem:[%s1335 + $0x5d8] sm:$0xff] %v1710
                %v1712 = vld [vmem:[%s1334 + $0xbc0] sm:$0xff]
                %1713 = vst [vmem:[%s1335 + $0x5e0] sm:$0xff] %v1712
                %v1714 = vld [vmem:[%s1334 + $0xbc8] sm:$0xff]
                %1715 = vst [vmem:[%s1335 + $0x5e8] sm:$0xff] %v1714
                %v1716 = vld [vmem:[%s1334 + $0xbd0] sm:$0xff]
                %1717 = vst [vmem:[%s1335 + $0x5f0] sm:$0xff] %v1716
                %v1718 = vld [vmem:[%s1334 + $0xbd8] sm:$0xff]
                %1719 = vst [vmem:[%s1335 + $0x5f8] sm:$0xff] %v1718
                %v1720 = vld [vmem:[%s1334 + $0xc00] sm:$0xff]
                %1721 = vst [vmem:[%s1335 + $0x600] sm:$0xff] %v1720
                %v1722 = vld [vmem:[%s1334 + $0xc08] sm:$0xff]
                %1723 = vst [vmem:[%s1335 + $0x608] sm:$0xff] %v1722
                %v1724 = vld [vmem:[%s1334 + $0xc10] sm:$0xff]
                %1725 = vst [vmem:[%s1335 + $0x610] sm:$0xff] %v1724
                %v1726 = vld [vmem:[%s1334 + $0xc18] sm:$0xff]
                %1727 = vst [vmem:[%s1335 + $0x618] sm:$0xff] %v1726
                %v1728 = vld [vmem:[%s1334 + $0xc40] sm:$0xff]
                %1729 = vst [vmem:[%s1335 + $0x620] sm:$0xff] %v1728
                %v1730 = vld [vmem:[%s1334 + $0xc48] sm:$0xff]
                %1731 = vst [vmem:[%s1335 + $0x628] sm:$0xff] %v1730
                %v1732 = vld [vmem:[%s1334 + $0xc50] sm:$0xff]
                %1733 = vst [vmem:[%s1335 + $0x630] sm:$0xff] %v1732
                %v1734 = vld [vmem:[%s1334 + $0xc58] sm:$0xff]
                %1735 = vst [vmem:[%s1335 + $0x638] sm:$0xff] %v1734
                %v1736 = vld [vmem:[%s1334 + $0xc80] sm:$0xff]
                %1737 = vst [vmem:[%s1335 + $0x640] sm:$0xff] %v1736
                %v1738 = vld [vmem:[%s1334 + $0xc88] sm:$0xff]
                %1739 = vst [vmem:[%s1335 + $0x648] sm:$0xff] %v1738
                %v1740 = vld [vmem:[%s1334 + $0xc90] sm:$0xff]
                %1741 = vst [vmem:[%s1335 + $0x650] sm:$0xff] %v1740
                %v1742 = vld [vmem:[%s1334 + $0xc98] sm:$0xff]
                %1743 = vst [vmem:[%s1335 + $0x658] sm:$0xff] %v1742
                %v1744 = vld [vmem:[%s1334 + $0xcc0] sm:$0xff]
                %1745 = vst [vmem:[%s1335 + $0x660] sm:$0xff] %v1744
                %v1746 = vld [vmem:[%s1334 + $0xcc8] sm:$0xff]
                %1747 = vst [vmem:[%s1335 + $0x668] sm:$0xff] %v1746
                %v1748 = vld [vmem:[%s1334 + $0xcd0] sm:$0xff]
                %1749 = vst [vmem:[%s1335 + $0x670] sm:$0xff] %v1748
                %v1750 = vld [vmem:[%s1334 + $0xcd8] sm:$0xff]
                %1751 = vst [vmem:[%s1335 + $0x678] sm:$0xff] %v1750
                %v1752 = vld [vmem:[%s1334 + $0xd00] sm:$0xff]
                %1753 = vst [vmem:[%s1335 + $0x680] sm:$0xff] %v1752
                %v1754 = vld [vmem:[%s1334 + $0xd08] sm:$0xff]
                %1755 = vst [vmem:[%s1335 + $0x688] sm:$0xff] %v1754
                %v1756 = vld [vmem:[%s1334 + $0xd10] sm:$0xff]
                %1757 = vst [vmem:[%s1335 + $0x690] sm:$0xff] %v1756
                %v1758 = vld [vmem:[%s1334 + $0xd18] sm:$0xff]
                %1759 = vst [vmem:[%s1335 + $0x698] sm:$0xff] %v1758
                %v1760 = vld [vmem:[%s1334 + $0xd40] sm:$0xff]
                %1761 = vst [vmem:[%s1335 + $0x6a0] sm:$0xff] %v1760
                %v1762 = vld [vmem:[%s1334 + $0xd48] sm:$0xff]
                %1763 = vst [vmem:[%s1335 + $0x6a8] sm:$0xff] %v1762
                %v1764 = vld [vmem:[%s1334 + $0xd50] sm:$0xff]
                %1765 = vst [vmem:[%s1335 + $0x6b0] sm:$0xff] %v1764
                %v1766 = vld [vmem:[%s1334 + $0xd58] sm:$0xff]
                %1767 = vst [vmem:[%s1335 + $0x6b8] sm:$0xff] %v1766
                %v1768 = vld [vmem:[%s1334 + $0xd80] sm:$0xff]
                %1769 = vst [vmem:[%s1335 + $0x6c0] sm:$0xff] %v1768
                %v1770 = vld [vmem:[%s1334 + $0xd88] sm:$0xff]
                %1771 = vst [vmem:[%s1335 + $0x6c8] sm:$0xff] %v1770
                %v1772 = vld [vmem:[%s1334 + $0xd90] sm:$0xff]
                %1773 = vst [vmem:[%s1335 + $0x6d0] sm:$0xff] %v1772
                %v1774 = vld [vmem:[%s1334 + $0xd98] sm:$0xff]
                %1775 = vst [vmem:[%s1335 + $0x6d8] sm:$0xff] %v1774
                %v1776 = vld [vmem:[%s1334 + $0xdc0] sm:$0xff]
                %1777 = vst [vmem:[%s1335 + $0x6e0] sm:$0xff] %v1776
                %v1778 = vld [vmem:[%s1334 + $0xdc8] sm:$0xff]
                %1779 = vst [vmem:[%s1335 + $0x6e8] sm:$0xff] %v1778
                %v1780 = vld [vmem:[%s1334 + $0xdd0] sm:$0xff]
                %1781 = vst [vmem:[%s1335 + $0x6f0] sm:$0xff] %v1780
                %v1782 = vld [vmem:[%s1334 + $0xdd8] sm:$0xff]
                %1783 = vst [vmem:[%s1335 + $0x6f8] sm:$0xff] %v1782
                %v1784 = vld [vmem:[%s1334 + $0xe00] sm:$0xff]
                %1785 = vst [vmem:[%s1335 + $0x700] sm:$0xff] %v1784
                %v1786 = vld [vmem:[%s1334 + $0xe08] sm:$0xff]
                %1787 = vst [vmem:[%s1335 + $0x708] sm:$0xff] %v1786
                %v1788 = vld [vmem:[%s1334 + $0xe10] sm:$0xff]
                %1789 = vst [vmem:[%s1335 + $0x710] sm:$0xff] %v1788
                %v1790 = vld [vmem:[%s1334 + $0xe18] sm:$0xff]
                %1791 = vst [vmem:[%s1335 + $0x718] sm:$0xff] %v1790
                %v1792 = vld [vmem:[%s1334 + $0xe40] sm:$0xff]
                %1793 = vst [vmem:[%s1335 + $0x720] sm:$0xff] %v1792
                %v1794 = vld [vmem:[%s1334 + $0xe48] sm:$0xff]
                %1795 = vst [vmem:[%s1335 + $0x728] sm:$0xff] %v1794
                %v1796 = vld [vmem:[%s1334 + $0xe50] sm:$0xff]
                %1797 = vst [vmem:[%s1335 + $0x730] sm:$0xff] %v1796
                %v1798 = vld [vmem:[%s1334 + $0xe58] sm:$0xff]
                %1799 = vst [vmem:[%s1335 + $0x738] sm:$0xff] %v1798
                %v1800 = vld [vmem:[%s1334 + $0xe80] sm:$0xff]
                %1801 = vst [vmem:[%s1335 + $0x740] sm:$0xff] %v1800
                %v1802 = vld [vmem:[%s1334 + $0xe88] sm:$0xff]
                %1803 = vst [vmem:[%s1335 + $0x748] sm:$0xff] %v1802
                %v1804 = vld [vmem:[%s1334 + $0xe90] sm:$0xff]
                %1805 = vst [vmem:[%s1335 + $0x750] sm:$0xff] %v1804
                %v1806 = vld [vmem:[%s1334 + $0xe98] sm:$0xff]
                %1807 = vst [vmem:[%s1335 + $0x758] sm:$0xff] %v1806
                %v1808 = vld [vmem:[%s1334 + $0xec0] sm:$0xff]
                %1809 = vst [vmem:[%s1335 + $0x760] sm:$0xff] %v1808
                %v1810 = vld [vmem:[%s1334 + $0xec8] sm:$0xff]
                %1811 = vst [vmem:[%s1335 + $0x768] sm:$0xff] %v1810
                %v1812 = vld [vmem:[%s1334 + $0xed0] sm:$0xff]
                %1813 = vst [vmem:[%s1335 + $0x770] sm:$0xff] %v1812
                %v1814 = vld [vmem:[%s1334 + $0xed8] sm:$0xff]
                %1815 = vst [vmem:[%s1335 + $0x778] sm:$0xff] %v1814
                %v1816 = vld [vmem:[%s1334 + $0xf00] sm:$0xff]
                %1817 = vst [vmem:[%s1335 + $0x780] sm:$0xff] %v1816
                %v1818 = vld [vmem:[%s1334 + $0xf08] sm:$0xff]
                %1819 = vst [vmem:[%s1335 + $0x788] sm:$0xff] %v1818
                %v1820 = vld [vmem:[%s1334 + $0xf10] sm:$0xff]
                %1821 = vst [vmem:[%s1335 + $0x790] sm:$0xff] %v1820
                %v1822 = vld [vmem:[%s1334 + $0xf18] sm:$0xff]
                %1823 = vst [vmem:[%s1335 + $0x798] sm:$0xff] %v1822
                %v1824 = vld [vmem:[%s1334 + $0xf40] sm:$0xff]
                %1825 = vst [vmem:[%s1335 + $0x7a0] sm:$0xff] %v1824
                %v1826 = vld [vmem:[%s1334 + $0xf48] sm:$0xff]
                %1827 = vst [vmem:[%s1335 + $0x7a8] sm:$0xff] %v1826
                %v1828 = vld [vmem:[%s1334 + $0xf50] sm:$0xff]
                %1829 = vst [vmem:[%s1335 + $0x7b0] sm:$0xff] %v1828
                %v1830 = vld [vmem:[%s1334 + $0xf58] sm:$0xff]
                %1831 = vst [vmem:[%s1335 + $0x7b8] sm:$0xff] %v1830
                %v1832 = vld [vmem:[%s1334 + $0xf80] sm:$0xff]
                %1833 = vst [vmem:[%s1335 + $0x7c0] sm:$0xff] %v1832
                %v1834 = vld [vmem:[%s1334 + $0xf88] sm:$0xff]
                %1835 = vst [vmem:[%s1335 + $0x7c8] sm:$0xff] %v1834
                %v1836 = vld [vmem:[%s1334 + $0xf90] sm:$0xff]
                %1837 = vst [vmem:[%s1335 + $0x7d0] sm:$0xff] %v1836
                %v1838 = vld [vmem:[%s1334 + $0xf98] sm:$0xff]
                %1839 = vst [vmem:[%s1335 + $0x7d8] sm:$0xff] %v1838
                %v1840 = vld [vmem:[%s1334 + $0xfc0] sm:$0xff]
                %1841 = vst [vmem:[%s1335 + $0x7e0] sm:$0xff] %v1840
                %v1842 = vld [vmem:[%s1334 + $0xfc8] sm:$0xff]
                %1843 = vst [vmem:[%s1335 + $0x7e8] sm:$0xff] %v1842
                %v1844 = vld [vmem:[%s1334 + $0xfd0] sm:$0xff]
                %1845 = vst [vmem:[%s1335 + $0x7f0] sm:$0xff] %v1844
                %v1846 = vld [vmem:[%s1334 + $0xfd8] sm:$0xff]
                %1847 = vst [vmem:[%s1335 + $0x7f8] sm:$0xff] %v1846
                %v1848 = vld [vmem:[%s1334 + $0x1000] sm:$0xff]
                %1849 = vst [vmem:[%s1335 + $0x800] sm:$0xff] %v1848
                %v1850 = vld [vmem:[%s1334 + $0x1008] sm:$0xff]
                %1851 = vst [vmem:[%s1335 + $0x808] sm:$0xff] %v1850
                %v1852 = vld [vmem:[%s1334 + $0x1010] sm:$0xff]
                %1853 = vst [vmem:[%s1335 + $0x810] sm:$0xff] %v1852
                %v1854 = vld [vmem:[%s1334 + $0x1018] sm:$0xff]
                %1855 = vst [vmem:[%s1335 + $0x818] sm:$0xff] %v1854
                %v1856 = vld [vmem:[%s1334 + $0x1040] sm:$0xff]
                %1857 = vst [vmem:[%s1335 + $0x820] sm:$0xff] %v1856
                %v1858 = vld [vmem:[%s1334 + $0x1048] sm:$0xff]
                %1859 = vst [vmem:[%s1335 + $0x828] sm:$0xff] %v1858
                %v1860 = vld [vmem:[%s1334 + $0x1050] sm:$0xff]
                %1861 = vst [vmem:[%s1335 + $0x830] sm:$0xff] %v1860
                %v1862 = vld [vmem:[%s1334 + $0x1058] sm:$0xff]
                %1863 = vst [vmem:[%s1335 + $0x838] sm:$0xff] %v1862
                %v1864 = vld [vmem:[%s1334 + $0x1080] sm:$0xff]
                %1865 = vst [vmem:[%s1335 + $0x840] sm:$0xff] %v1864
                %v1866 = vld [vmem:[%s1334 + $0x1088] sm:$0xff]
                %1867 = vst [vmem:[%s1335 + $0x848] sm:$0xff] %v1866
                %v1868 = vld [vmem:[%s1334 + $0x1090] sm:$0xff]
                %1869 = vst [vmem:[%s1335 + $0x850] sm:$0xff] %v1868
                %v1870 = vld [vmem:[%s1334 + $0x1098] sm:$0xff]
                %1871 = vst [vmem:[%s1335 + $0x858] sm:$0xff] %v1870
                %v1872 = vld [vmem:[%s1334 + $0x10c0] sm:$0xff]
                %1873 = vst [vmem:[%s1335 + $0x860] sm:$0xff] %v1872
                %v1874 = vld [vmem:[%s1334 + $0x10c8] sm:$0xff]
                %1875 = vst [vmem:[%s1335 + $0x868] sm:$0xff] %v1874
                %v1876 = vld [vmem:[%s1334 + $0x10d0] sm:$0xff]
                %1877 = vst [vmem:[%s1335 + $0x870] sm:$0xff] %v1876
                %v1878 = vld [vmem:[%s1334 + $0x10d8] sm:$0xff]
                %1879 = vst [vmem:[%s1335 + $0x878] sm:$0xff] %v1878
                %v1880 = vld [vmem:[%s1334 + $0x1100] sm:$0xff]
                %1881 = vst [vmem:[%s1335 + $0x880] sm:$0xff] %v1880
                %v1882 = vld [vmem:[%s1334 + $0x1108] sm:$0xff]
                %1883 = vst [vmem:[%s1335 + $0x888] sm:$0xff] %v1882
                %v1884 = vld [vmem:[%s1334 + $0x1110] sm:$0xff]
                %1885 = vst [vmem:[%s1335 + $0x890] sm:$0xff] %v1884
                %v1886 = vld [vmem:[%s1334 + $0x1118] sm:$0xff]
                %1887 = vst [vmem:[%s1335 + $0x898] sm:$0xff] %v1886
                %v1888 = vld [vmem:[%s1334 + $0x1140] sm:$0xff]
                %1889 = vst [vmem:[%s1335 + $0x8a0] sm:$0xff] %v1888
                %v1890 = vld [vmem:[%s1334 + $0x1148] sm:$0xff]
                %1891 = vst [vmem:[%s1335 + $0x8a8] sm:$0xff] %v1890
                %v1892 = vld [vmem:[%s1334 + $0x1150] sm:$0xff]
                %1893 = vst [vmem:[%s1335 + $0x8b0] sm:$0xff] %v1892
                %v1894 = vld [vmem:[%s1334 + $0x1158] sm:$0xff]
                %1895 = vst [vmem:[%s1335 + $0x8b8] sm:$0xff] %v1894
                %v1896 = vld [vmem:[%s1334 + $0x1180] sm:$0xff]
                %1897 = vst [vmem:[%s1335 + $0x8c0] sm:$0xff] %v1896
                %v1898 = vld [vmem:[%s1334 + $0x1188] sm:$0xff]
                %1899 = vst [vmem:[%s1335 + $0x8c8] sm:$0xff] %v1898
                %v1900 = vld [vmem:[%s1334 + $0x1190] sm:$0xff]
                %1901 = vst [vmem:[%s1335 + $0x8d0] sm:$0xff] %v1900
                %v1902 = vld [vmem:[%s1334 + $0x1198] sm:$0xff]
                %1903 = vst [vmem:[%s1335 + $0x8d8] sm:$0xff] %v1902
                %v1904 = vld [vmem:[%s1334 + $0x11c0] sm:$0xff]
                %1905 = vst [vmem:[%s1335 + $0x8e0] sm:$0xff] %v1904
                %v1906 = vld [vmem:[%s1334 + $0x11c8] sm:$0xff]
                %1907 = vst [vmem:[%s1335 + $0x8e8] sm:$0xff] %v1906
                %v1908 = vld [vmem:[%s1334 + $0x11d0] sm:$0xff]
                %1909 = vst [vmem:[%s1335 + $0x8f0] sm:$0xff] %v1908
                %v1910 = vld [vmem:[%s1334 + $0x11d8] sm:$0xff]
                %1911 = vst [vmem:[%s1335 + $0x8f8] sm:$0xff] %v1910
                %v1912 = vld [vmem:[%s1334 + $0x1200] sm:$0xff]
                %1913 = vst [vmem:[%s1335 + $0x900] sm:$0xff] %v1912
                %v1914 = vld [vmem:[%s1334 + $0x1208] sm:$0xff]
                %1915 = vst [vmem:[%s1335 + $0x908] sm:$0xff] %v1914
                %v1916 = vld [vmem:[%s1334 + $0x1210] sm:$0xff]
                %1917 = vst [vmem:[%s1335 + $0x910] sm:$0xff] %v1916
                %v1918 = vld [vmem:[%s1334 + $0x1218] sm:$0xff]
                %1919 = vst [vmem:[%s1335 + $0x918] sm:$0xff] %v1918
                %v1920 = vld [vmem:[%s1334 + $0x1240] sm:$0xff]
                %1921 = vst [vmem:[%s1335 + $0x920] sm:$0xff] %v1920
                %v1922 = vld [vmem:[%s1334 + $0x1248] sm:$0xff]
                %1923 = vst [vmem:[%s1335 + $0x928] sm:$0xff] %v1922
                %v1924 = vld [vmem:[%s1334 + $0x1250] sm:$0xff]
                %1925 = vst [vmem:[%s1335 + $0x930] sm:$0xff] %v1924
                %v1926 = vld [vmem:[%s1334 + $0x1258] sm:$0xff]
                %1927 = vst [vmem:[%s1335 + $0x938] sm:$0xff] %v1926
                %v1928 = vld [vmem:[%s1334 + $0x1280] sm:$0xff]
                %1929 = vst [vmem:[%s1335 + $0x940] sm:$0xff] %v1928
                %v1930 = vld [vmem:[%s1334 + $0x1288] sm:$0xff]
                %1931 = vst [vmem:[%s1335 + $0x948] sm:$0xff] %v1930
                %v1932 = vld [vmem:[%s1334 + $0x1290] sm:$0xff]
                %1933 = vst [vmem:[%s1335 + $0x950] sm:$0xff] %v1932
                %v1934 = vld [vmem:[%s1334 + $0x1298] sm:$0xff]
                %1935 = vst [vmem:[%s1335 + $0x958] sm:$0xff] %v1934
                %v1936 = vld [vmem:[%s1334 + $0x12c0] sm:$0xff]
                %1937 = vst [vmem:[%s1335 + $0x960] sm:$0xff] %v1936
                %v1938 = vld [vmem:[%s1334 + $0x12c8] sm:$0xff]
                %1939 = vst [vmem:[%s1335 + $0x968] sm:$0xff] %v1938
                %v1940 = vld [vmem:[%s1334 + $0x12d0] sm:$0xff]
                %1941 = vst [vmem:[%s1335 + $0x970] sm:$0xff] %v1940
                %v1942 = vld [vmem:[%s1334 + $0x12d8] sm:$0xff]
                %1943 = vst [vmem:[%s1335 + $0x978] sm:$0xff] %v1942
                %v1944 = vld [vmem:[%s1334 + $0x1300] sm:$0xff]
                %1945 = vst [vmem:[%s1335 + $0x980] sm:$0xff] %v1944
                %v1946 = vld [vmem:[%s1334 + $0x1308] sm:$0xff]
                %1947 = vst [vmem:[%s1335 + $0x988] sm:$0xff] %v1946
                %v1948 = vld [vmem:[%s1334 + $0x1310] sm:$0xff]
                %1949 = vst [vmem:[%s1335 + $0x990] sm:$0xff] %v1948
                %v1950 = vld [vmem:[%s1334 + $0x1318] sm:$0xff]
                %1951 = vst [vmem:[%s1335 + $0x998] sm:$0xff] %v1950
                %v1952 = vld [vmem:[%s1334 + $0x1340] sm:$0xff]
                %1953 = vst [vmem:[%s1335 + $0x9a0] sm:$0xff] %v1952
                %v1954 = vld [vmem:[%s1334 + $0x1348] sm:$0xff]
                %1955 = vst [vmem:[%s1335 + $0x9a8] sm:$0xff] %v1954
                %v1956 = vld [vmem:[%s1334 + $0x1350] sm:$0xff]
                %1957 = vst [vmem:[%s1335 + $0x9b0] sm:$0xff] %v1956
                %v1958 = vld [vmem:[%s1334 + $0x1358] sm:$0xff]
                %1959 = vst [vmem:[%s1335 + $0x9b8] sm:$0xff] %v1958
                %v1960 = vld [vmem:[%s1334 + $0x1380] sm:$0xff]
                %1961 = vst [vmem:[%s1335 + $0x9c0] sm:$0xff] %v1960
                %v1962 = vld [vmem:[%s1334 + $0x1388] sm:$0xff]
                %1963 = vst [vmem:[%s1335 + $0x9c8] sm:$0xff] %v1962
                %v1964 = vld [vmem:[%s1334 + $0x1390] sm:$0xff]
                %1965 = vst [vmem:[%s1335 + $0x9d0] sm:$0xff] %v1964
                %v1966 = vld [vmem:[%s1334 + $0x1398] sm:$0xff]
                %1967 = vst [vmem:[%s1335 + $0x9d8] sm:$0xff] %v1966
                %v1968 = vld [vmem:[%s1334 + $0x13c0] sm:$0xff]
                %1969 = vst [vmem:[%s1335 + $0x9e0] sm:$0xff] %v1968
                %v1970 = vld [vmem:[%s1334 + $0x13c8] sm:$0xff]
                %1971 = vst [vmem:[%s1335 + $0x9e8] sm:$0xff] %v1970
                %v1972 = vld [vmem:[%s1334 + $0x13d0] sm:$0xff]
                %1973 = vst [vmem:[%s1335 + $0x9f0] sm:$0xff] %v1972
                %v1974 = vld [vmem:[%s1334 + $0x13d8] sm:$0xff]
                %1975 = vst [vmem:[%s1335 + $0x9f8] sm:$0xff] %v1974
                %v1976 = vld [vmem:[%s1334 + $0x1400] sm:$0xff]
                %1977 = vst [vmem:[%s1335 + $0xa00] sm:$0xff] %v1976
                %v1978 = vld [vmem:[%s1334 + $0x1408] sm:$0xff]
                %1979 = vst [vmem:[%s1335 + $0xa08] sm:$0xff] %v1978
                %v1980 = vld [vmem:[%s1334 + $0x1410] sm:$0xff]
                %1981 = vst [vmem:[%s1335 + $0xa10] sm:$0xff] %v1980
                %v1982 = vld [vmem:[%s1334 + $0x1418] sm:$0xff]
                %1983 = vst [vmem:[%s1335 + $0xa18] sm:$0xff] %v1982
                %v1984 = vld [vmem:[%s1334 + $0x1440] sm:$0xff]
                %1985 = vst [vmem:[%s1335 + $0xa20] sm:$0xff] %v1984
                %v1986 = vld [vmem:[%s1334 + $0x1448] sm:$0xff]
                %1987 = vst [vmem:[%s1335 + $0xa28] sm:$0xff] %v1986
                %v1988 = vld [vmem:[%s1334 + $0x1450] sm:$0xff]
                %1989 = vst [vmem:[%s1335 + $0xa30] sm:$0xff] %v1988
                %v1990 = vld [vmem:[%s1334 + $0x1458] sm:$0xff]
                %1991 = vst [vmem:[%s1335 + $0xa38] sm:$0xff] %v1990
                %v1992 = vld [vmem:[%s1334 + $0x1480] sm:$0xff]
                %1993 = vst [vmem:[%s1335 + $0xa40] sm:$0xff] %v1992
                %v1994 = vld [vmem:[%s1334 + $0x1488] sm:$0xff]
                %1995 = vst [vmem:[%s1335 + $0xa48] sm:$0xff] %v1994
                %v1996 = vld [vmem:[%s1334 + $0x1490] sm:$0xff]
                %1997 = vst [vmem:[%s1335 + $0xa50] sm:$0xff] %v1996
                %v1998 = vld [vmem:[%s1334 + $0x1498] sm:$0xff]
                %1999 = vst [vmem:[%s1335 + $0xa58] sm:$0xff] %v1998
                %v2000 = vld [vmem:[%s1334 + $0x14c0] sm:$0xff]
                %2001 = vst [vmem:[%s1335 + $0xa60] sm:$0xff] %v2000
                %v2002 = vld [vmem:[%s1334 + $0x14c8] sm:$0xff]
                %2003 = vst [vmem:[%s1335 + $0xa68] sm:$0xff] %v2002
                %v2004 = vld [vmem:[%s1334 + $0x14d0] sm:$0xff]
                %2005 = vst [vmem:[%s1335 + $0xa70] sm:$0xff] %v2004
                %v2006 = vld [vmem:[%s1334 + $0x14d8] sm:$0xff]
                %2007 = vst [vmem:[%s1335 + $0xa78] sm:$0xff] %v2006
                %v2008 = vld [vmem:[%s1334 + $0x1500] sm:$0xff]
                %2009 = vst [vmem:[%s1335 + $0xa80] sm:$0xff] %v2008
                %v2010 = vld [vmem:[%s1334 + $0x1508] sm:$0xff]
                %2011 = vst [vmem:[%s1335 + $0xa88] sm:$0xff] %v2010
                %v2012 = vld [vmem:[%s1334 + $0x1510] sm:$0xff]
                %2013 = vst [vmem:[%s1335 + $0xa90] sm:$0xff] %v2012
                %v2014 = vld [vmem:[%s1334 + $0x1518] sm:$0xff]
                %2015 = vst [vmem:[%s1335 + $0xa98] sm:$0xff] %v2014
                %v2016 = vld [vmem:[%s1334 + $0x1540] sm:$0xff]
                %2017 = vst [vmem:[%s1335 + $0xaa0] sm:$0xff] %v2016
                %v2018 = vld [vmem:[%s1334 + $0x1548] sm:$0xff]
                %2019 = vst [vmem:[%s1335 + $0xaa8] sm:$0xff] %v2018
                %v2020 = vld [vmem:[%s1334 + $0x1550] sm:$0xff]
                %2021 = vst [vmem:[%s1335 + $0xab0] sm:$0xff] %v2020
                %v2022 = vld [vmem:[%s1334 + $0x1558] sm:$0xff]
                %2023 = vst [vmem:[%s1335 + $0xab8] sm:$0xff] %v2022
                %v2024 = vld [vmem:[%s1334 + $0x1580] sm:$0xff]
                %2025 = vst [vmem:[%s1335 + $0xac0] sm:$0xff] %v2024
                %v2026 = vld [vmem:[%s1334 + $0x1588] sm:$0xff]
                %2027 = vst [vmem:[%s1335 + $0xac8] sm:$0xff] %v2026
                %v2028 = vld [vmem:[%s1334 + $0x1590] sm:$0xff]
                %2029 = vst [vmem:[%s1335 + $0xad0] sm:$0xff] %v2028
                %v2030 = vld [vmem:[%s1334 + $0x1598] sm:$0xff]
                %2031 = vst [vmem:[%s1335 + $0xad8] sm:$0xff] %v2030
                %v2032 = vld [vmem:[%s1334 + $0x15c0] sm:$0xff]
                %2033 = vst [vmem:[%s1335 + $0xae0] sm:$0xff] %v2032
                %v2034 = vld [vmem:[%s1334 + $0x15c8] sm:$0xff]
                %2035 = vst [vmem:[%s1335 + $0xae8] sm:$0xff] %v2034
                %v2036 = vld [vmem:[%s1334 + $0x15d0] sm:$0xff]
                %2037 = vst [vmem:[%s1335 + $0xaf0] sm:$0xff] %v2036
                %v2038 = vld [vmem:[%s1334 + $0x15d8] sm:$0xff]
                %2039 = vst [vmem:[%s1335 + $0xaf8] sm:$0xff] %v2038
                %v2040 = vld [vmem:[%s1334 + $0x1600] sm:$0xff]
                %2041 = vst [vmem:[%s1335 + $0xb00] sm:$0xff] %v2040
                %v2042 = vld [vmem:[%s1334 + $0x1608] sm:$0xff]
                %2043 = vst [vmem:[%s1335 + $0xb08] sm:$0xff] %v2042
                %v2044 = vld [vmem:[%s1334 + $0x1610] sm:$0xff]
                %2045 = vst [vmem:[%s1335 + $0xb10] sm:$0xff] %v2044
                %v2046 = vld [vmem:[%s1334 + $0x1618] sm:$0xff]
                %2047 = vst [vmem:[%s1335 + $0xb18] sm:$0xff] %v2046
                %v2048 = vld [vmem:[%s1334 + $0x1640] sm:$0xff]
                %2049 = vst [vmem:[%s1335 + $0xb20] sm:$0xff] %v2048
                %v2050 = vld [vmem:[%s1334 + $0x1648] sm:$0xff]
                %2051 = vst [vmem:[%s1335 + $0xb28] sm:$0xff] %v2050
                %v2052 = vld [vmem:[%s1334 + $0x1650] sm:$0xff]
                %2053 = vst [vmem:[%s1335 + $0xb30] sm:$0xff] %v2052
                %v2054 = vld [vmem:[%s1334 + $0x1658] sm:$0xff]
                %2055 = vst [vmem:[%s1335 + $0xb38] sm:$0xff] %v2054
                %v2056 = vld [vmem:[%s1334 + $0x1680] sm:$0xff]
                %2057 = vst [vmem:[%s1335 + $0xb40] sm:$0xff] %v2056
                %v2058 = vld [vmem:[%s1334 + $0x1688] sm:$0xff]
                %2059 = vst [vmem:[%s1335 + $0xb48] sm:$0xff] %v2058
                %v2060 = vld [vmem:[%s1334 + $0x1690] sm:$0xff]
                %2061 = vst [vmem:[%s1335 + $0xb50] sm:$0xff] %v2060
                %v2062 = vld [vmem:[%s1334 + $0x1698] sm:$0xff]
                %2063 = vst [vmem:[%s1335 + $0xb58] sm:$0xff] %v2062
                %v2064 = vld [vmem:[%s1334 + $0x16c0] sm:$0xff]
                %2065 = vst [vmem:[%s1335 + $0xb60] sm:$0xff] %v2064
                %v2066 = vld [vmem:[%s1334 + $0x16c8] sm:$0xff]
                %2067 = vst [vmem:[%s1335 + $0xb68] sm:$0xff] %v2066
                %v2068 = vld [vmem:[%s1334 + $0x16d0] sm:$0xff]
                %2069 = vst [vmem:[%s1335 + $0xb70] sm:$0xff] %v2068
                %v2070 = vld [vmem:[%s1334 + $0x16d8] sm:$0xff]
                %2071 = vst [vmem:[%s1335 + $0xb78] sm:$0xff] %v2070
                %v2072 = vld [vmem:[%s1334 + $0x1700] sm:$0xff]
                %2073 = vst [vmem:[%s1335 + $0xb80] sm:$0xff] %v2072
                %v2074 = vld [vmem:[%s1334 + $0x1708] sm:$0xff]
                %2075 = vst [vmem:[%s1335 + $0xb88] sm:$0xff] %v2074
                %v2076 = vld [vmem:[%s1334 + $0x1710] sm:$0xff]
                %2077 = vst [vmem:[%s1335 + $0xb90] sm:$0xff] %v2076
                %v2078 = vld [vmem:[%s1334 + $0x1718] sm:$0xff]
                %2079 = vst [vmem:[%s1335 + $0xb98] sm:$0xff] %v2078
                %v2080 = vld [vmem:[%s1334 + $0x1740] sm:$0xff]
                %2081 = vst [vmem:[%s1335 + $0xba0] sm:$0xff] %v2080
                %v2082 = vld [vmem:[%s1334 + $0x1748] sm:$0xff]
                %2083 = vst [vmem:[%s1335 + $0xba8] sm:$0xff] %v2082
                %v2084 = vld [vmem:[%s1334 + $0x1750] sm:$0xff]
                %2085 = vst [vmem:[%s1335 + $0xbb0] sm:$0xff] %v2084
                %v2086 = vld [vmem:[%s1334 + $0x1758] sm:$0xff]
                %2087 = vst [vmem:[%s1335 + $0xbb8] sm:$0xff] %v2086
                %v2088 = vld [vmem:[%s1334 + $0x1780] sm:$0xff]
                %2089 = vst [vmem:[%s1335 + $0xbc0] sm:$0xff] %v2088
                %v2090 = vld [vmem:[%s1334 + $0x1788] sm:$0xff]
                %2091 = vst [vmem:[%s1335 + $0xbc8] sm:$0xff] %v2090
                %v2092 = vld [vmem:[%s1334 + $0x1790] sm:$0xff]
                %2093 = vst [vmem:[%s1335 + $0xbd0] sm:$0xff] %v2092
                %v2094 = vld [vmem:[%s1334 + $0x1798] sm:$0xff]
                %2095 = vst [vmem:[%s1335 + $0xbd8] sm:$0xff] %v2094
                %v2096 = vld [vmem:[%s1334 + $0x17c0] sm:$0xff]
                %2097 = vst [vmem:[%s1335 + $0xbe0] sm:$0xff] %v2096
                %v2098 = vld [vmem:[%s1334 + $0x17c8] sm:$0xff]
                %2099 = vst [vmem:[%s1335 + $0xbe8] sm:$0xff] %v2098
                %v2100 = vld [vmem:[%s1334 + $0x17d0] sm:$0xff]
                %2101 = vst [vmem:[%s1335 + $0xbf0] sm:$0xff] %v2100
                %v2102 = vld [vmem:[%s1334 + $0x17d8] sm:$0xff]
                %2103 = vst [vmem:[%s1335 + $0xbf8] sm:$0xff] %v2102
                %v2104 = vld [vmem:[%s1334 + $0x1800] sm:$0xff]
                %2105 = vst [vmem:[%s1335 + $0xc00] sm:$0xff] %v2104
                %v2106 = vld [vmem:[%s1334 + $0x1808] sm:$0xff]
                %2107 = vst [vmem:[%s1335 + $0xc08] sm:$0xff] %v2106
                %v2108 = vld [vmem:[%s1334 + $0x1810] sm:$0xff]
                %2109 = vst [vmem:[%s1335 + $0xc10] sm:$0xff] %v2108
                %v2110 = vld [vmem:[%s1334 + $0x1818] sm:$0xff]
                %2111 = vst [vmem:[%s1335 + $0xc18] sm:$0xff] %v2110
                %v2112 = vld [vmem:[%s1334 + $0x1840] sm:$0xff]
                %2113 = vst [vmem:[%s1335 + $0xc20] sm:$0xff] %v2112
                %v2114 = vld [vmem:[%s1334 + $0x1848] sm:$0xff]
                %2115 = vst [vmem:[%s1335 + $0xc28] sm:$0xff] %v2114
                %v2116 = vld [vmem:[%s1334 + $0x1850] sm:$0xff]
                %2117 = vst [vmem:[%s1335 + $0xc30] sm:$0xff] %v2116
                %v2118 = vld [vmem:[%s1334 + $0x1858] sm:$0xff]
                %2119 = vst [vmem:[%s1335 + $0xc38] sm:$0xff] %v2118
                %v2120 = vld [vmem:[%s1334 + $0x1880] sm:$0xff]
                %2121 = vst [vmem:[%s1335 + $0xc40] sm:$0xff] %v2120
                %v2122 = vld [vmem:[%s1334 + $0x1888] sm:$0xff]
                %2123 = vst [vmem:[%s1335 + $0xc48] sm:$0xff] %v2122
                %v2124 = vld [vmem:[%s1334 + $0x1890] sm:$0xff]
                %2125 = vst [vmem:[%s1335 + $0xc50] sm:$0xff] %v2124
                %v2126 = vld [vmem:[%s1334 + $0x1898] sm:$0xff]
                %2127 = vst [vmem:[%s1335 + $0xc58] sm:$0xff] %v2126
                %v2128 = vld [vmem:[%s1334 + $0x18c0] sm:$0xff]
                %2129 = vst [vmem:[%s1335 + $0xc60] sm:$0xff] %v2128
                %v2130 = vld [vmem:[%s1334 + $0x18c8] sm:$0xff]
                %2131 = vst [vmem:[%s1335 + $0xc68] sm:$0xff] %v2130
                %v2132 = vld [vmem:[%s1334 + $0x18d0] sm:$0xff]
                %2133 = vst [vmem:[%s1335 + $0xc70] sm:$0xff] %v2132
                %v2134 = vld [vmem:[%s1334 + $0x18d8] sm:$0xff]
                %2135 = vst [vmem:[%s1335 + $0xc78] sm:$0xff] %v2134
                %v2136 = vld [vmem:[%s1334 + $0x1900] sm:$0xff]
                %2137 = vst [vmem:[%s1335 + $0xc80] sm:$0xff] %v2136
                %v2138 = vld [vmem:[%s1334 + $0x1908] sm:$0xff]
                %2139 = vst [vmem:[%s1335 + $0xc88] sm:$0xff] %v2138
                %v2140 = vld [vmem:[%s1334 + $0x1910] sm:$0xff]
                %2141 = vst [vmem:[%s1335 + $0xc90] sm:$0xff] %v2140
                %v2142 = vld [vmem:[%s1334 + $0x1918] sm:$0xff]
                %2143 = vst [vmem:[%s1335 + $0xc98] sm:$0xff] %v2142
                %v2144 = vld [vmem:[%s1334 + $0x1940] sm:$0xff]
                %2145 = vst [vmem:[%s1335 + $0xca0] sm:$0xff] %v2144
                %v2146 = vld [vmem:[%s1334 + $0x1948] sm:$0xff]
                %2147 = vst [vmem:[%s1335 + $0xca8] sm:$0xff] %v2146
                %v2148 = vld [vmem:[%s1334 + $0x1950] sm:$0xff]
                %2149 = vst [vmem:[%s1335 + $0xcb0] sm:$0xff] %v2148
                %v2150 = vld [vmem:[%s1334 + $0x1958] sm:$0xff]
                %2151 = vst [vmem:[%s1335 + $0xcb8] sm:$0xff] %v2150
                %v2152 = vld [vmem:[%s1334 + $0x1980] sm:$0xff]
                %2153 = vst [vmem:[%s1335 + $0xcc0] sm:$0xff] %v2152
                %v2154 = vld [vmem:[%s1334 + $0x1988] sm:$0xff]
                %2155 = vst [vmem:[%s1335 + $0xcc8] sm:$0xff] %v2154
                %v2156 = vld [vmem:[%s1334 + $0x1990] sm:$0xff]
                %2157 = vst [vmem:[%s1335 + $0xcd0] sm:$0xff] %v2156
                %v2158 = vld [vmem:[%s1334 + $0x1998] sm:$0xff]
                %2159 = vst [vmem:[%s1335 + $0xcd8] sm:$0xff] %v2158
                %v2160 = vld [vmem:[%s1334 + $0x19c0] sm:$0xff]
                %2161 = vst [vmem:[%s1335 + $0xce0] sm:$0xff] %v2160
                %v2162 = vld [vmem:[%s1334 + $0x19c8] sm:$0xff]
                %2163 = vst [vmem:[%s1335 + $0xce8] sm:$0xff] %v2162
                %v2164 = vld [vmem:[%s1334 + $0x19d0] sm:$0xff]
                %2165 = vst [vmem:[%s1335 + $0xcf0] sm:$0xff] %v2164
                %v2166 = vld [vmem:[%s1334 + $0x19d8] sm:$0xff]
                %2167 = vst [vmem:[%s1335 + $0xcf8] sm:$0xff] %v2166
                %v2168 = vld [vmem:[%s1334 + $0x1a00] sm:$0xff]
                %2169 = vst [vmem:[%s1335 + $0xd00] sm:$0xff] %v2168
                %v2170 = vld [vmem:[%s1334 + $0x1a08] sm:$0xff]
                %2171 = vst [vmem:[%s1335 + $0xd08] sm:$0xff] %v2170
                %v2172 = vld [vmem:[%s1334 + $0x1a10] sm:$0xff]
                %2173 = vst [vmem:[%s1335 + $0xd10] sm:$0xff] %v2172
                %v2174 = vld [vmem:[%s1334 + $0x1a18] sm:$0xff]
                %2175 = vst [vmem:[%s1335 + $0xd18] sm:$0xff] %v2174
                %v2176 = vld [vmem:[%s1334 + $0x1a40] sm:$0xff]
                %2177 = vst [vmem:[%s1335 + $0xd20] sm:$0xff] %v2176
                %v2178 = vld [vmem:[%s1334 + $0x1a48] sm:$0xff]
                %2179 = vst [vmem:[%s1335 + $0xd28] sm:$0xff] %v2178
                %v2180 = vld [vmem:[%s1334 + $0x1a50] sm:$0xff]
                %2181 = vst [vmem:[%s1335 + $0xd30] sm:$0xff] %v2180
                %v2182 = vld [vmem:[%s1334 + $0x1a58] sm:$0xff]
                %2183 = vst [vmem:[%s1335 + $0xd38] sm:$0xff] %v2182
                %v2184 = vld [vmem:[%s1334 + $0x1a80] sm:$0xff]
                %2185 = vst [vmem:[%s1335 + $0xd40] sm:$0xff] %v2184
                %v2186 = vld [vmem:[%s1334 + $0x1a88] sm:$0xff]
                %2187 = vst [vmem:[%s1335 + $0xd48] sm:$0xff] %v2186
                %v2188 = vld [vmem:[%s1334 + $0x1a90] sm:$0xff]
                %2189 = vst [vmem:[%s1335 + $0xd50] sm:$0xff] %v2188
                %v2190 = vld [vmem:[%s1334 + $0x1a98] sm:$0xff]
                %2191 = vst [vmem:[%s1335 + $0xd58] sm:$0xff] %v2190
                %v2192 = vld [vmem:[%s1334 + $0x1ac0] sm:$0xff]
                %2193 = vst [vmem:[%s1335 + $0xd60] sm:$0xff] %v2192
                %v2194 = vld [vmem:[%s1334 + $0x1ac8] sm:$0xff]
                %2195 = vst [vmem:[%s1335 + $0xd68] sm:$0xff] %v2194
                %v2196 = vld [vmem:[%s1334 + $0x1ad0] sm:$0xff]
                %2197 = vst [vmem:[%s1335 + $0xd70] sm:$0xff] %v2196
                %v2198 = vld [vmem:[%s1334 + $0x1ad8] sm:$0xff]
                %2199 = vst [vmem:[%s1335 + $0xd78] sm:$0xff] %v2198
                %v2200 = vld [vmem:[%s1334 + $0x1b00] sm:$0xff]
                %2201 = vst [vmem:[%s1335 + $0xd80] sm:$0xff] %v2200
                %v2202 = vld [vmem:[%s1334 + $0x1b08] sm:$0xff]
                %2203 = vst [vmem:[%s1335 + $0xd88] sm:$0xff] %v2202
                %v2204 = vld [vmem:[%s1334 + $0x1b10] sm:$0xff]
                %2205 = vst [vmem:[%s1335 + $0xd90] sm:$0xff] %v2204
                %v2206 = vld [vmem:[%s1334 + $0x1b18] sm:$0xff]
                %2207 = vst [vmem:[%s1335 + $0xd98] sm:$0xff] %v2206
                %v2208 = vld [vmem:[%s1334 + $0x1b40] sm:$0xff]
                %2209 = vst [vmem:[%s1335 + $0xda0] sm:$0xff] %v2208
                %v2210 = vld [vmem:[%s1334 + $0x1b48] sm:$0xff]
                %2211 = vst [vmem:[%s1335 + $0xda8] sm:$0xff] %v2210
                %v2212 = vld [vmem:[%s1334 + $0x1b50] sm:$0xff]
                %2213 = vst [vmem:[%s1335 + $0xdb0] sm:$0xff] %v2212
                %v2214 = vld [vmem:[%s1334 + $0x1b58] sm:$0xff]
                %2215 = vst [vmem:[%s1335 + $0xdb8] sm:$0xff] %v2214
                %v2216 = vld [vmem:[%s1334 + $0x1b80] sm:$0xff]
                %2217 = vst [vmem:[%s1335 + $0xdc0] sm:$0xff] %v2216
                %v2218 = vld [vmem:[%s1334 + $0x1b88] sm:$0xff]
                %2219 = vst [vmem:[%s1335 + $0xdc8] sm:$0xff] %v2218
                %v2220 = vld [vmem:[%s1334 + $0x1b90] sm:$0xff]
                %2221 = vst [vmem:[%s1335 + $0xdd0] sm:$0xff] %v2220
                %v2222 = vld [vmem:[%s1334 + $0x1b98] sm:$0xff]
                %2223 = vst [vmem:[%s1335 + $0xdd8] sm:$0xff] %v2222
                %v2224 = vld [vmem:[%s1334 + $0x1bc0] sm:$0xff]
                %2225 = vst [vmem:[%s1335 + $0xde0] sm:$0xff] %v2224
                %v2226 = vld [vmem:[%s1334 + $0x1bc8] sm:$0xff]
                %2227 = vst [vmem:[%s1335 + $0xde8] sm:$0xff] %v2226
                %v2228 = vld [vmem:[%s1334 + $0x1bd0] sm:$0xff]
                %2229 = vst [vmem:[%s1335 + $0xdf0] sm:$0xff] %v2228
                %v2230 = vld [vmem:[%s1334 + $0x1bd8] sm:$0xff]
                %2231 = vst [vmem:[%s1335 + $0xdf8] sm:$0xff] %v2230
                %v2232 = vld [vmem:[%s1334 + $0x1c00] sm:$0xff]
                %2233 = vst [vmem:[%s1335 + $0xe00] sm:$0xff] %v2232
                %v2234 = vld [vmem:[%s1334 + $0x1c08] sm:$0xff]
                %2235 = vst [vmem:[%s1335 + $0xe08] sm:$0xff] %v2234
                %v2236 = vld [vmem:[%s1334 + $0x1c10] sm:$0xff]
                %2237 = vst [vmem:[%s1335 + $0xe10] sm:$0xff] %v2236
                %v2238 = vld [vmem:[%s1334 + $0x1c18] sm:$0xff]
                %2239 = vst [vmem:[%s1335 + $0xe18] sm:$0xff] %v2238
                %v2240 = vld [vmem:[%s1334 + $0x1c40] sm:$0xff]
                %2241 = vst [vmem:[%s1335 + $0xe20] sm:$0xff] %v2240
                %v2242 = vld [vmem:[%s1334 + $0x1c48] sm:$0xff]
                %2243 = vst [vmem:[%s1335 + $0xe28] sm:$0xff] %v2242
                %v2244 = vld [vmem:[%s1334 + $0x1c50] sm:$0xff]
                %2245 = vst [vmem:[%s1335 + $0xe30] sm:$0xff] %v2244
                %v2246 = vld [vmem:[%s1334 + $0x1c58] sm:$0xff]
                %2247 = vst [vmem:[%s1335 + $0xe38] sm:$0xff] %v2246
                %v2248 = vld [vmem:[%s1334 + $0x1c80] sm:$0xff]
                %2249 = vst [vmem:[%s1335 + $0xe40] sm:$0xff] %v2248
                %v2250 = vld [vmem:[%s1334 + $0x1c88] sm:$0xff]
                %2251 = vst [vmem:[%s1335 + $0xe48] sm:$0xff] %v2250
                %v2252 = vld [vmem:[%s1334 + $0x1c90] sm:$0xff]
                %2253 = vst [vmem:[%s1335 + $0xe50] sm:$0xff] %v2252
                %v2254 = vld [vmem:[%s1334 + $0x1c98] sm:$0xff]
                %2255 = vst [vmem:[%s1335 + $0xe58] sm:$0xff] %v2254
                %v2256 = vld [vmem:[%s1334 + $0x1cc0] sm:$0xff]
                %2257 = vst [vmem:[%s1335 + $0xe60] sm:$0xff] %v2256
                %v2258 = vld [vmem:[%s1334 + $0x1cc8] sm:$0xff]
                %2259 = vst [vmem:[%s1335 + $0xe68] sm:$0xff] %v2258
                %v2260 = vld [vmem:[%s1334 + $0x1cd0] sm:$0xff]
                %2261 = vst [vmem:[%s1335 + $0xe70] sm:$0xff] %v2260
                %v2262 = vld [vmem:[%s1334 + $0x1cd8] sm:$0xff]
                %2263 = vst [vmem:[%s1335 + $0xe78] sm:$0xff] %v2262
                %v2264 = vld [vmem:[%s1334 + $0x1d00] sm:$0xff]
                %2265 = vst [vmem:[%s1335 + $0xe80] sm:$0xff] %v2264
                %v2266 = vld [vmem:[%s1334 + $0x1d08] sm:$0xff]
                %2267 = vst [vmem:[%s1335 + $0xe88] sm:$0xff] %v2266
                %v2268 = vld [vmem:[%s1334 + $0x1d10] sm:$0xff]
                %2269 = vst [vmem:[%s1335 + $0xe90] sm:$0xff] %v2268
                %v2270 = vld [vmem:[%s1334 + $0x1d18] sm:$0xff]
                %2271 = vst [vmem:[%s1335 + $0xe98] sm:$0xff] %v2270
                %v2272 = vld [vmem:[%s1334 + $0x1d40] sm:$0xff]
                %2273 = vst [vmem:[%s1335 + $0xea0] sm:$0xff] %v2272
                %v2274 = vld [vmem:[%s1334 + $0x1d48] sm:$0xff]
                %2275 = vst [vmem:[%s1335 + $0xea8] sm:$0xff] %v2274
                %v2276 = vld [vmem:[%s1334 + $0x1d50] sm:$0xff]
                %2277 = vst [vmem:[%s1335 + $0xeb0] sm:$0xff] %v2276
                %v2278 = vld [vmem:[%s1334 + $0x1d58] sm:$0xff]
                %2279 = vst [vmem:[%s1335 + $0xeb8] sm:$0xff] %v2278
                %v2280 = vld [vmem:[%s1334 + $0x1d80] sm:$0xff]
                %2281 = vst [vmem:[%s1335 + $0xec0] sm:$0xff] %v2280
                %v2282 = vld [vmem:[%s1334 + $0x1d88] sm:$0xff]
                %2283 = vst [vmem:[%s1335 + $0xec8] sm:$0xff] %v2282
                %v2284 = vld [vmem:[%s1334 + $0x1d90] sm:$0xff]
                %2285 = vst [vmem:[%s1335 + $0xed0] sm:$0xff] %v2284
                %v2286 = vld [vmem:[%s1334 + $0x1d98] sm:$0xff]
                %2287 = vst [vmem:[%s1335 + $0xed8] sm:$0xff] %v2286
                %v2288 = vld [vmem:[%s1334 + $0x1dc0] sm:$0xff]
                %2289 = vst [vmem:[%s1335 + $0xee0] sm:$0xff] %v2288
                %v2290 = vld [vmem:[%s1334 + $0x1dc8] sm:$0xff]
                %2291 = vst [vmem:[%s1335 + $0xee8] sm:$0xff] %v2290
                %v2292 = vld [vmem:[%s1334 + $0x1dd0] sm:$0xff]
                %2293 = vst [vmem:[%s1335 + $0xef0] sm:$0xff] %v2292
                %v2294 = vld [vmem:[%s1334 + $0x1dd8] sm:$0xff]
                %2295 = vst [vmem:[%s1335 + $0xef8] sm:$0xff] %v2294
                %v2296 = vld [vmem:[%s1334 + $0x1e00] sm:$0xff]
                %2297 = vst [vmem:[%s1335 + $0xf00] sm:$0xff] %v2296
                %v2298 = vld [vmem:[%s1334 + $0x1e08] sm:$0xff]
                %2299 = vst [vmem:[%s1335 + $0xf08] sm:$0xff] %v2298
                %v2300 = vld [vmem:[%s1334 + $0x1e10] sm:$0xff]
                %2301 = vst [vmem:[%s1335 + $0xf10] sm:$0xff] %v2300
                %v2302 = vld [vmem:[%s1334 + $0x1e18] sm:$0xff]
                %2303 = vst [vmem:[%s1335 + $0xf18] sm:$0xff] %v2302
                %v2304 = vld [vmem:[%s1334 + $0x1e40] sm:$0xff]
                %2305 = vst [vmem:[%s1335 + $0xf20] sm:$0xff] %v2304
                %v2306 = vld [vmem:[%s1334 + $0x1e48] sm:$0xff]
                %2307 = vst [vmem:[%s1335 + $0xf28] sm:$0xff] %v2306
                %v2308 = vld [vmem:[%s1334 + $0x1e50] sm:$0xff]
                %2309 = vst [vmem:[%s1335 + $0xf30] sm:$0xff] %v2308
                %v2310 = vld [vmem:[%s1334 + $0x1e58] sm:$0xff]
                %2311 = vst [vmem:[%s1335 + $0xf38] sm:$0xff] %v2310
                %v2312 = vld [vmem:[%s1334 + $0x1e80] sm:$0xff]
                %2313 = vst [vmem:[%s1335 + $0xf40] sm:$0xff] %v2312
                %v2314 = vld [vmem:[%s1334 + $0x1e88] sm:$0xff]
                %2315 = vst [vmem:[%s1335 + $0xf48] sm:$0xff] %v2314
                %v2316 = vld [vmem:[%s1334 + $0x1e90] sm:$0xff]
                %2317 = vst [vmem:[%s1335 + $0xf50] sm:$0xff] %v2316
                %v2318 = vld [vmem:[%s1334 + $0x1e98] sm:$0xff]
                %2319 = vst [vmem:[%s1335 + $0xf58] sm:$0xff] %v2318
                %v2320 = vld [vmem:[%s1334 + $0x1ec0] sm:$0xff]
                %2321 = vst [vmem:[%s1335 + $0xf60] sm:$0xff] %v2320
                %v2322 = vld [vmem:[%s1334 + $0x1ec8] sm:$0xff]
                %2323 = vst [vmem:[%s1335 + $0xf68] sm:$0xff] %v2322
                %v2324 = vld [vmem:[%s1334 + $0x1ed0] sm:$0xff]
                %2325 = vst [vmem:[%s1335 + $0xf70] sm:$0xff] %v2324
                %v2326 = vld [vmem:[%s1334 + $0x1ed8] sm:$0xff]
                %2327 = vst [vmem:[%s1335 + $0xf78] sm:$0xff] %v2326
                %v2328 = vld [vmem:[%s1334 + $0x1f00] sm:$0xff]
                %2329 = vst [vmem:[%s1335 + $0xf80] sm:$0xff] %v2328
                %v2330 = vld [vmem:[%s1334 + $0x1f08] sm:$0xff]
                %2331 = vst [vmem:[%s1335 + $0xf88] sm:$0xff] %v2330
                %v2332 = vld [vmem:[%s1334 + $0x1f10] sm:$0xff]
                %2333 = vst [vmem:[%s1335 + $0xf90] sm:$0xff] %v2332
                %v2334 = vld [vmem:[%s1334 + $0x1f18] sm:$0xff]
                %2335 = vst [vmem:[%s1335 + $0xf98] sm:$0xff] %v2334
                %v2336 = vld [vmem:[%s1334 + $0x1f40] sm:$0xff]
                %2337 = vst [vmem:[%s1335 + $0xfa0] sm:$0xff] %v2336
                %v2338 = vld [vmem:[%s1334 + $0x1f48] sm:$0xff]
                %2339 = vst [vmem:[%s1335 + $0xfa8] sm:$0xff] %v2338
                %v2340 = vld [vmem:[%s1334 + $0x1f50] sm:$0xff]
                %2341 = vst [vmem:[%s1335 + $0xfb0] sm:$0xff] %v2340
                %v2342 = vld [vmem:[%s1334 + $0x1f58] sm:$0xff]
                %2343 = vst [vmem:[%s1335 + $0xfb8] sm:$0xff] %v2342
                %v2344 = vld [vmem:[%s1334 + $0x1f80] sm:$0xff]
                %2345 = vst [vmem:[%s1335 + $0xfc0] sm:$0xff] %v2344
                %v2346 = vld [vmem:[%s1334 + $0x1f88] sm:$0xff]
                %2347 = vst [vmem:[%s1335 + $0xfc8] sm:$0xff] %v2346
                %v2348 = vld [vmem:[%s1334 + $0x1f90] sm:$0xff]
                %2349 = vst [vmem:[%s1335 + $0xfd0] sm:$0xff] %v2348
                %v2350 = vld [vmem:[%s1334 + $0x1f98] sm:$0xff]
                %2351 = vst [vmem:[%s1335 + $0xfd8] sm:$0xff] %v2350
                %v2352 = vld [vmem:[%s1334 + $0x1fc0] sm:$0xff]
                %2353 = vst [vmem:[%s1335 + $0xfe0] sm:$0xff] %v2352
                %v2354 = vld [vmem:[%s1334 + $0x1fc8] sm:$0xff]
                %2355 = vst [vmem:[%s1335 + $0xfe8] sm:$0xff] %v2354
                %v2356 = vld [vmem:[%s1334 + $0x1fd0] sm:$0xff]
                %2357 = vst [vmem:[%s1335 + $0xff0] sm:$0xff] %v2356
                %v2358 = vld [vmem:[%s1334 + $0x1fd8] sm:$0xff]
                %2359 = vst [vmem:[%s1335 + $0xff8] sm:$0xff] %v2358
              $region91: #{multi_stage_attention.1} parent=85 // loop_footer
                %s1333 = sadd.s32 1, %s1329
              $region92: #{multi_stage_attention.1} parent=85 // loop_footer_branch
                %1328 = sbr.rel target = $region88
              $region93: #{multi_stage_attention.1} parent=85 // loop_exit
                _
            $region86: #{multi_stage_attention.1} parent=81 // pred_fallthru
              _
            // Predicated region
            $region94: #{multi_stage_attention.1} parent=81 // pred_check
              _
            $region95: #{multi_stage_attention.1} parent=81 // pred_check_branch
              %2361 = sbr.rel target = $region97
            $region96: #{multi_stage_attention.1} parent=81 // pred_region
              _
            $region97: #{multi_stage_attention.1} parent=81 // pred_fallthru
              _
          $region82: #{multi_stage_attention.1} parent=77 // pred_fallthru
            _
          %2362 = vnop
        $region78: #{multi_stage_attention.1} parent=35 // pred_fallthru
          _
      $region36: #{multi_stage_attention.1} parent=5 // pred_fallthru
        _
      %p2363 = scmp.le.s32.totalorder 1, %s13
      %p2364 = scmp.lt.s32.totalorder %s13, 5
      %p2365 = pnand %p2363, %p2364
      %p2366 = pneg %p2365
      // Predicated region
      $region98: #{multi_stage_attention.1} parent=5 // pred_check
        _
      $region99: #{multi_stage_attention.1} parent=5 // pred_check_branch
        %2368 = sbr.rel (%p2365) target = $region101
      $region100: #{multi_stage_attention.1} parent=5 // pred_region
        %s2369 = ssub.s32 %s13, 1
        %s2370 = sand.u32 %s40, 1
        %s2371 = sand.u32 %s40, 1
        %s2372 = smul.addr %s2371, 2048
        %s2373 = scalar_lea.vmem [#allocation2], %s2372
        // Predicated region
        $region102: #{multi_stage_attention.1} parent=100 // pred_check
          %p2374 = pneg %p53
        $region103: #{multi_stage_attention.1} parent=100 // pred_check_branch
          %2376 = sbr.rel (%p2374) target = $region105
        $region104: #{multi_stage_attention.1} parent=100 // pred_region
          _
        $region105: #{multi_stage_attention.1} parent=100 // pred_fallthru
          _
        %s2377 = sand.u32 %s68, 1
        %s2378 = sand.u32 %s68, 1
        %s2379 = smul.addr %s2378, 4096
        %s2380 = scalar_lea.vmem [#allocation3], %s2379
        // Predicated region
        $region106: #{multi_stage_attention.1} parent=100 // pred_check
          %p2381 = pneg %p81
        $region107: #{multi_stage_attention.1} parent=100 // pred_check_branch
          %2383 = sbr.rel (%p2381) target = $region109
        $region108: #{multi_stage_attention.1} parent=100 // pred_region
          _
        $region109: #{multi_stage_attention.1} parent=100 // pred_fallthru
          _
        %s2384 = sand.u32 %s40, 1
        %s2385 = sand.u32 %s40, 1
        %s2386 = smul.addr %s2385, 2048
        %s2387 = scalar_lea.vmem [#allocation2], %s2386
        %p2388 = pneg %p53
        %p2389 = pneg %p50
        %s2390 = sand.u32 %s68, 1
        %s2391 = sand.u32 %s68, 1
        %s2392 = smul.addr %s2391, 4096
        %s2393 = scalar_lea.vmem [#allocation3], %s2392
        %p2394 = pneg %p81
        %p2395 = pneg %p78
        %p2396 = pneg %p102
        %p2397 = pneg %p99
        %p2398 = pneg %p123
        %p2399 = pneg %p120
        %p2400 = pneg %p144
        %p2401 = pneg %p141
        %p2402 = pneg %p165
        %p2403 = pneg %p162
        %p2404 = pneg %p186
        %p2405 = pneg %p183
        %p2406 = pneg %p214
        %p2407 = pneg %p211
        %s2408 = sand.u32 %s201, 1
        %s2409 = sand.u32 %s201, 1
        %s2410 = smul.addr %s2409, 64
        %s2411 = scalar_lea.vmem [#allocation4], %s2410
        %s2412 = smul.u32 4, %s23
        %v2414 = vld [vmem:[%s2373] sm:$0xff]
        %v2415 = vld [vmem:[%s2373 + $0x8] sm:$0xff]
        %v2416 = vld [vmem:[%s2373 + $0x10] sm:$0xff]
        %v2417 = vld [vmem:[%s2373 + $0x18] sm:$0xff]
        %v2418 = vld [vmem:[%s2373 + $0x20] sm:$0xff]
        %v2419 = vld [vmem:[%s2373 + $0x28] sm:$0xff]
        %v2420 = vld [vmem:[%s2373 + $0x30] sm:$0xff]
        %v2421 = vld [vmem:[%s2373 + $0x38] sm:$0xff]
        %v2422 = vld [vmem:[%s2373 + $0x40] sm:$0xff]
        %v2423 = vld [vmem:[%s2373 + $0x48] sm:$0xff]
        %v2424 = vld [vmem:[%s2373 + $0x50] sm:$0xff]
        %v2425 = vld [vmem:[%s2373 + $0x58] sm:$0xff]
        %v2426 = vld [vmem:[%s2373 + $0x60] sm:$0xff]
        %v2427 = vld [vmem:[%s2373 + $0x68] sm:$0xff]
        %v2428 = vld [vmem:[%s2373 + $0x70] sm:$0xff]
        %v2429 = vld [vmem:[%s2373 + $0x78] sm:$0xff]
        %v2430 = vld [vmem:[%s2373 + $0x80] sm:$0xff]
        %v2431 = vld [vmem:[%s2373 + $0x88] sm:$0xff]
        %v2432 = vld [vmem:[%s2373 + $0x90] sm:$0xff]
        %v2433 = vld [vmem:[%s2373 + $0x98] sm:$0xff]
        %v2434 = vld [vmem:[%s2373 + $0xa0] sm:$0xff]
        %v2435 = vld [vmem:[%s2373 + $0xa8] sm:$0xff]
        %v2436 = vld [vmem:[%s2373 + $0xb0] sm:$0xff]
        %v2437 = vld [vmem:[%s2373 + $0xb8] sm:$0xff]
        %v2438 = vld [vmem:[%s2373 + $0xc0] sm:$0xff]
        %v2439 = vld [vmem:[%s2373 + $0xc8] sm:$0xff]
        %v2440 = vld [vmem:[%s2373 + $0xd0] sm:$0xff]
        %v2441 = vld [vmem:[%s2373 + $0xd8] sm:$0xff]
        %v2442 = vld [vmem:[%s2373 + $0xe0] sm:$0xff]
        %v2443 = vld [vmem:[%s2373 + $0xe8] sm:$0xff]
        %v2444 = vld [vmem:[%s2373 + $0xf0] sm:$0xff]
        %v2445 = vld [vmem:[%s2373 + $0xf8] sm:$0xff]
        %v2446 = vld [vmem:[%s2373 + $0x100] sm:$0xff]
        %v2447 = vld [vmem:[%s2373 + $0x108] sm:$0xff]
        %v2448 = vld [vmem:[%s2373 + $0x110] sm:$0xff]
        %v2449 = vld [vmem:[%s2373 + $0x118] sm:$0xff]
        %v2450 = vld [vmem:[%s2373 + $0x120] sm:$0xff]
        %v2451 = vld [vmem:[%s2373 + $0x128] sm:$0xff]
        %v2452 = vld [vmem:[%s2373 + $0x130] sm:$0xff]
        %v2453 = vld [vmem:[%s2373 + $0x138] sm:$0xff]
        %v2454 = vld [vmem:[%s2373 + $0x140] sm:$0xff]
        %v2455 = vld [vmem:[%s2373 + $0x148] sm:$0xff]
        %v2456 = vld [vmem:[%s2373 + $0x150] sm:$0xff]
        %v2457 = vld [vmem:[%s2373 + $0x158] sm:$0xff]
        %v2458 = vld [vmem:[%s2373 + $0x160] sm:$0xff]
        %v2459 = vld [vmem:[%s2373 + $0x168] sm:$0xff]
        %v2460 = vld [vmem:[%s2373 + $0x170] sm:$0xff]
        %v2461 = vld [vmem:[%s2373 + $0x178] sm:$0xff]
        %v2462 = vld [vmem:[%s2373 + $0x180] sm:$0xff]
        %v2463 = vld [vmem:[%s2373 + $0x188] sm:$0xff]
        %v2464 = vld [vmem:[%s2373 + $0x190] sm:$0xff]
        %v2465 = vld [vmem:[%s2373 + $0x198] sm:$0xff]
        %v2466 = vld [vmem:[%s2373 + $0x1a0] sm:$0xff]
        %v2467 = vld [vmem:[%s2373 + $0x1a8] sm:$0xff]
        %v2468 = vld [vmem:[%s2373 + $0x1b0] sm:$0xff]
        %v2469 = vld [vmem:[%s2373 + $0x1b8] sm:$0xff]
        %v2470 = vld [vmem:[%s2373 + $0x1c0] sm:$0xff]
        %v2471 = vld [vmem:[%s2373 + $0x1c8] sm:$0xff]
        %v2472 = vld [vmem:[%s2373 + $0x1d0] sm:$0xff]
        %v2473 = vld [vmem:[%s2373 + $0x1d8] sm:$0xff]
        %v2474 = vld [vmem:[%s2373 + $0x1e0] sm:$0xff]
        %v2475 = vld [vmem:[%s2373 + $0x1e8] sm:$0xff]
        %v2476 = vld [vmem:[%s2373 + $0x1f0] sm:$0xff]
        %v2477 = vld [vmem:[%s2373 + $0x1f8] sm:$0xff]
        %v2478 = vld [vmem:[%s2373 + $0x200] sm:$0xff]
        %v2479 = vld [vmem:[%s2373 + $0x208] sm:$0xff]
        %v2480 = vld [vmem:[%s2373 + $0x210] sm:$0xff]
        %v2481 = vld [vmem:[%s2373 + $0x218] sm:$0xff]
        %v2482 = vld [vmem:[%s2373 + $0x220] sm:$0xff]
        %v2483 = vld [vmem:[%s2373 + $0x228] sm:$0xff]
        %v2484 = vld [vmem:[%s2373 + $0x230] sm:$0xff]
        %v2485 = vld [vmem:[%s2373 + $0x238] sm:$0xff]
        %v2486 = vld [vmem:[%s2373 + $0x240] sm:$0xff]
        %v2487 = vld [vmem:[%s2373 + $0x248] sm:$0xff]
        %v2488 = vld [vmem:[%s2373 + $0x250] sm:$0xff]
        %v2489 = vld [vmem:[%s2373 + $0x258] sm:$0xff]
        %v2490 = vld [vmem:[%s2373 + $0x260] sm:$0xff]
        %v2491 = vld [vmem:[%s2373 + $0x268] sm:$0xff]
        %v2492 = vld [vmem:[%s2373 + $0x270] sm:$0xff]
        %v2493 = vld [vmem:[%s2373 + $0x278] sm:$0xff]
        %v2494 = vld [vmem:[%s2373 + $0x280] sm:$0xff]
        %v2495 = vld [vmem:[%s2373 + $0x288] sm:$0xff]
        %v2496 = vld [vmem:[%s2373 + $0x290] sm:$0xff]
        %v2497 = vld [vmem:[%s2373 + $0x298] sm:$0xff]
        %v2498 = vld [vmem:[%s2373 + $0x2a0] sm:$0xff]
        %v2499 = vld [vmem:[%s2373 + $0x2a8] sm:$0xff]
        %v2500 = vld [vmem:[%s2373 + $0x2b0] sm:$0xff]
        %v2501 = vld [vmem:[%s2373 + $0x2b8] sm:$0xff]
        %v2502 = vld [vmem:[%s2373 + $0x2c0] sm:$0xff]
        %v2503 = vld [vmem:[%s2373 + $0x2c8] sm:$0xff]
        %v2504 = vld [vmem:[%s2373 + $0x2d0] sm:$0xff]
        %v2505 = vld [vmem:[%s2373 + $0x2d8] sm:$0xff]
        %v2506 = vld [vmem:[%s2373 + $0x2e0] sm:$0xff]
        %v2507 = vld [vmem:[%s2373 + $0x2e8] sm:$0xff]
        %v2508 = vld [vmem:[%s2373 + $0x2f0] sm:$0xff]
        %v2509 = vld [vmem:[%s2373 + $0x2f8] sm:$0xff]
        %v2510 = vld [vmem:[%s2373 + $0x300] sm:$0xff]
        %v2511 = vld [vmem:[%s2373 + $0x308] sm:$0xff]
        %v2512 = vld [vmem:[%s2373 + $0x310] sm:$0xff]
        %v2513 = vld [vmem:[%s2373 + $0x318] sm:$0xff]
        %v2514 = vld [vmem:[%s2373 + $0x320] sm:$0xff]
        %v2515 = vld [vmem:[%s2373 + $0x328] sm:$0xff]
        %v2516 = vld [vmem:[%s2373 + $0x330] sm:$0xff]
        %v2517 = vld [vmem:[%s2373 + $0x338] sm:$0xff]
        %v2518 = vld [vmem:[%s2373 + $0x340] sm:$0xff]
        %v2519 = vld [vmem:[%s2373 + $0x348] sm:$0xff]
        %v2520 = vld [vmem:[%s2373 + $0x350] sm:$0xff]
        %v2521 = vld [vmem:[%s2373 + $0x358] sm:$0xff]
        %v2522 = vld [vmem:[%s2373 + $0x360] sm:$0xff]
        %v2523 = vld [vmem:[%s2373 + $0x368] sm:$0xff]
        %v2524 = vld [vmem:[%s2373 + $0x370] sm:$0xff]
        %v2525 = vld [vmem:[%s2373 + $0x378] sm:$0xff]
        %v2526 = vld [vmem:[%s2373 + $0x380] sm:$0xff]
        %v2527 = vld [vmem:[%s2373 + $0x388] sm:$0xff]
        %v2528 = vld [vmem:[%s2373 + $0x390] sm:$0xff]
        %v2529 = vld [vmem:[%s2373 + $0x398] sm:$0xff]
        %v2530 = vld [vmem:[%s2373 + $0x3a0] sm:$0xff]
        %v2531 = vld [vmem:[%s2373 + $0x3a8] sm:$0xff]
        %v2532 = vld [vmem:[%s2373 + $0x3b0] sm:$0xff]
        %v2533 = vld [vmem:[%s2373 + $0x3b8] sm:$0xff]
        %v2534 = vld [vmem:[%s2373 + $0x3c0] sm:$0xff]
        %v2535 = vld [vmem:[%s2373 + $0x3c8] sm:$0xff]
        %v2536 = vld [vmem:[%s2373 + $0x3d0] sm:$0xff]
        %v2537 = vld [vmem:[%s2373 + $0x3d8] sm:$0xff]
        %v2538 = vld [vmem:[%s2373 + $0x3e0] sm:$0xff]
        %v2539 = vld [vmem:[%s2373 + $0x3e8] sm:$0xff]
        %v2540 = vld [vmem:[%s2373 + $0x3f0] sm:$0xff]
        %v2541 = vld [vmem:[%s2373 + $0x3f8] sm:$0xff]
        %v2542 = vld [vmem:[%s2373 + $0x400] sm:$0xff]
        %v2543 = vld [vmem:[%s2373 + $0x408] sm:$0xff]
        %v2544 = vld [vmem:[%s2373 + $0x410] sm:$0xff]
        %v2545 = vld [vmem:[%s2373 + $0x418] sm:$0xff]
        %v2546 = vld [vmem:[%s2373 + $0x420] sm:$0xff]
        %v2547 = vld [vmem:[%s2373 + $0x428] sm:$0xff]
        %v2548 = vld [vmem:[%s2373 + $0x430] sm:$0xff]
        %v2549 = vld [vmem:[%s2373 + $0x438] sm:$0xff]
        %v2550 = vld [vmem:[%s2373 + $0x440] sm:$0xff]
        %v2551 = vld [vmem:[%s2373 + $0x448] sm:$0xff]
        %v2552 = vld [vmem:[%s2373 + $0x450] sm:$0xff]
        %v2553 = vld [vmem:[%s2373 + $0x458] sm:$0xff]
        %v2554 = vld [vmem:[%s2373 + $0x460] sm:$0xff]
        %v2555 = vld [vmem:[%s2373 + $0x468] sm:$0xff]
        %v2556 = vld [vmem:[%s2373 + $0x470] sm:$0xff]
        %v2557 = vld [vmem:[%s2373 + $0x478] sm:$0xff]
        %v2558 = vld [vmem:[%s2373 + $0x480] sm:$0xff]
        %v2559 = vld [vmem:[%s2373 + $0x488] sm:$0xff]
        %v2560 = vld [vmem:[%s2373 + $0x490] sm:$0xff]
        %v2561 = vld [vmem:[%s2373 + $0x498] sm:$0xff]
        %v2562 = vld [vmem:[%s2373 + $0x4a0] sm:$0xff]
        %v2563 = vld [vmem:[%s2373 + $0x4a8] sm:$0xff]
        %v2564 = vld [vmem:[%s2373 + $0x4b0] sm:$0xff]
        %v2565 = vld [vmem:[%s2373 + $0x4b8] sm:$0xff]
        %v2566 = vld [vmem:[%s2373 + $0x4c0] sm:$0xff]
        %v2567 = vld [vmem:[%s2373 + $0x4c8] sm:$0xff]
        %v2568 = vld [vmem:[%s2373 + $0x4d0] sm:$0xff]
        %v2569 = vld [vmem:[%s2373 + $0x4d8] sm:$0xff]
        %v2570 = vld [vmem:[%s2373 + $0x4e0] sm:$0xff]
        %v2571 = vld [vmem:[%s2373 + $0x4e8] sm:$0xff]
        %v2572 = vld [vmem:[%s2373 + $0x4f0] sm:$0xff]
        %v2573 = vld [vmem:[%s2373 + $0x4f8] sm:$0xff]
        %v2574 = vld [vmem:[%s2373 + $0x500] sm:$0xff]
        %v2575 = vld [vmem:[%s2373 + $0x508] sm:$0xff]
        %v2576 = vld [vmem:[%s2373 + $0x510] sm:$0xff]
        %v2577 = vld [vmem:[%s2373 + $0x518] sm:$0xff]
        %v2578 = vld [vmem:[%s2373 + $0x520] sm:$0xff]
        %v2579 = vld [vmem:[%s2373 + $0x528] sm:$0xff]
        %v2580 = vld [vmem:[%s2373 + $0x530] sm:$0xff]
        %v2581 = vld [vmem:[%s2373 + $0x538] sm:$0xff]
        %v2582 = vld [vmem:[%s2373 + $0x540] sm:$0xff]
        %v2583 = vld [vmem:[%s2373 + $0x548] sm:$0xff]
        %v2584 = vld [vmem:[%s2373 + $0x550] sm:$0xff]
        %v2585 = vld [vmem:[%s2373 + $0x558] sm:$0xff]
        %v2586 = vld [vmem:[%s2373 + $0x560] sm:$0xff]
        %v2587 = vld [vmem:[%s2373 + $0x568] sm:$0xff]
        %v2588 = vld [vmem:[%s2373 + $0x570] sm:$0xff]
        %v2589 = vld [vmem:[%s2373 + $0x578] sm:$0xff]
        %v2590 = vld [vmem:[%s2373 + $0x580] sm:$0xff]
        %v2591 = vld [vmem:[%s2373 + $0x588] sm:$0xff]
        %v2592 = vld [vmem:[%s2373 + $0x590] sm:$0xff]
        %v2593 = vld [vmem:[%s2373 + $0x598] sm:$0xff]
        %v2594 = vld [vmem:[%s2373 + $0x5a0] sm:$0xff]
        %v2595 = vld [vmem:[%s2373 + $0x5a8] sm:$0xff]
        %v2596 = vld [vmem:[%s2373 + $0x5b0] sm:$0xff]
        %v2597 = vld [vmem:[%s2373 + $0x5b8] sm:$0xff]
        %v2598 = vld [vmem:[%s2373 + $0x5c0] sm:$0xff]
        %v2599 = vld [vmem:[%s2373 + $0x5c8] sm:$0xff]
        %v2600 = vld [vmem:[%s2373 + $0x5d0] sm:$0xff]
        %v2601 = vld [vmem:[%s2373 + $0x5d8] sm:$0xff]
        %v2602 = vld [vmem:[%s2373 + $0x5e0] sm:$0xff]
        %v2603 = vld [vmem:[%s2373 + $0x5e8] sm:$0xff]
        %v2604 = vld [vmem:[%s2373 + $0x5f0] sm:$0xff]
        %v2605 = vld [vmem:[%s2373 + $0x5f8] sm:$0xff]
        %v2606 = vld [vmem:[%s2373 + $0x600] sm:$0xff]
        %v2607 = vld [vmem:[%s2373 + $0x608] sm:$0xff]
        %v2608 = vld [vmem:[%s2373 + $0x610] sm:$0xff]
        %v2609 = vld [vmem:[%s2373 + $0x618] sm:$0xff]
        %v2610 = vld [vmem:[%s2373 + $0x620] sm:$0xff]
        %v2611 = vld [vmem:[%s2373 + $0x628] sm:$0xff]
        %v2612 = vld [vmem:[%s2373 + $0x630] sm:$0xff]
        %v2613 = vld [vmem:[%s2373 + $0x638] sm:$0xff]
        %v2614 = vld [vmem:[%s2373 + $0x640] sm:$0xff]
        %v2615 = vld [vmem:[%s2373 + $0x648] sm:$0xff]
        %v2616 = vld [vmem:[%s2373 + $0x650] sm:$0xff]
        %v2617 = vld [vmem:[%s2373 + $0x658] sm:$0xff]
        %v2618 = vld [vmem:[%s2373 + $0x660] sm:$0xff]
        %v2619 = vld [vmem:[%s2373 + $0x668] sm:$0xff]
        %v2620 = vld [vmem:[%s2373 + $0x670] sm:$0xff]
        %v2621 = vld [vmem:[%s2373 + $0x678] sm:$0xff]
        %v2622 = vld [vmem:[%s2373 + $0x680] sm:$0xff]
        %v2623 = vld [vmem:[%s2373 + $0x688] sm:$0xff]
        %v2624 = vld [vmem:[%s2373 + $0x690] sm:$0xff]
        %v2625 = vld [vmem:[%s2373 + $0x698] sm:$0xff]
        %v2626 = vld [vmem:[%s2373 + $0x6a0] sm:$0xff]
        %v2627 = vld [vmem:[%s2373 + $0x6a8] sm:$0xff]
        %v2628 = vld [vmem:[%s2373 + $0x6b0] sm:$0xff]
        %v2629 = vld [vmem:[%s2373 + $0x6b8] sm:$0xff]
        %v2630 = vld [vmem:[%s2373 + $0x6c0] sm:$0xff]
        %v2631 = vld [vmem:[%s2373 + $0x6c8] sm:$0xff]
        %v2632 = vld [vmem:[%s2373 + $0x6d0] sm:$0xff]
        %v2633 = vld [vmem:[%s2373 + $0x6d8] sm:$0xff]
        %v2634 = vld [vmem:[%s2373 + $0x6e0] sm:$0xff]
        %v2635 = vld [vmem:[%s2373 + $0x6e8] sm:$0xff]
        %v2636 = vld [vmem:[%s2373 + $0x6f0] sm:$0xff]
        %v2637 = vld [vmem:[%s2373 + $0x6f8] sm:$0xff]
        %v2638 = vld [vmem:[%s2373 + $0x700] sm:$0xff]
        %v2639 = vld [vmem:[%s2373 + $0x708] sm:$0xff]
        %v2640 = vld [vmem:[%s2373 + $0x710] sm:$0xff]
        %v2641 = vld [vmem:[%s2373 + $0x718] sm:$0xff]
        %v2642 = vld [vmem:[%s2373 + $0x720] sm:$0xff]
        %v2643 = vld [vmem:[%s2373 + $0x728] sm:$0xff]
        %v2644 = vld [vmem:[%s2373 + $0x730] sm:$0xff]
        %v2645 = vld [vmem:[%s2373 + $0x738] sm:$0xff]
        %v2646 = vld [vmem:[%s2373 + $0x740] sm:$0xff]
        %v2647 = vld [vmem:[%s2373 + $0x748] sm:$0xff]
        %v2648 = vld [vmem:[%s2373 + $0x750] sm:$0xff]
        %v2649 = vld [vmem:[%s2373 + $0x758] sm:$0xff]
        %v2650 = vld [vmem:[%s2373 + $0x760] sm:$0xff]
        %v2651 = vld [vmem:[%s2373 + $0x768] sm:$0xff]
        %v2652 = vld [vmem:[%s2373 + $0x770] sm:$0xff]
        %v2653 = vld [vmem:[%s2373 + $0x778] sm:$0xff]
        %v2654 = vld [vmem:[%s2373 + $0x780] sm:$0xff]
        %v2655 = vld [vmem:[%s2373 + $0x788] sm:$0xff]
        %v2656 = vld [vmem:[%s2373 + $0x790] sm:$0xff]
        %v2657 = vld [vmem:[%s2373 + $0x798] sm:$0xff]
        %v2658 = vld [vmem:[%s2373 + $0x7a0] sm:$0xff]
        %v2659 = vld [vmem:[%s2373 + $0x7a8] sm:$0xff]
        %v2660 = vld [vmem:[%s2373 + $0x7b0] sm:$0xff]
        %v2661 = vld [vmem:[%s2373 + $0x7b8] sm:$0xff]
        %v2662 = vld [vmem:[%s2373 + $0x7c0] sm:$0xff]
        %v2663 = vld [vmem:[%s2373 + $0x7c8] sm:$0xff]
        %v2664 = vld [vmem:[%s2373 + $0x7d0] sm:$0xff]
        %v2665 = vld [vmem:[%s2373 + $0x7d8] sm:$0xff]
        %v2666 = vld [vmem:[%s2373 + $0x7e0] sm:$0xff]
        %v2667 = vld [vmem:[%s2373 + $0x7e8] sm:$0xff]
        %v2668 = vld [vmem:[%s2373 + $0x7f0] sm:$0xff]
        %v2669 = vld [vmem:[%s2373 + $0x7f8] sm:$0xff]
        %v2670 = vpack.c.bf16 %v2415, %v2414
        %v2671 = vpack.c.bf16 %v2417, %v2416
        %v2672 = vpack.c.bf16 %v2419, %v2418
        %v2673 = vpack.c.bf16 %v2421, %v2420
        %v2674 = vpack.c.bf16 %v2423, %v2422
        %v2675 = vpack.c.bf16 %v2425, %v2424
        %v2676 = vpack.c.bf16 %v2427, %v2426
        %v2677 = vpack.c.bf16 %v2429, %v2428
        %v2678 = vpack.c.bf16 %v2431, %v2430
        %v2679 = vpack.c.bf16 %v2433, %v2432
        %v2680 = vpack.c.bf16 %v2435, %v2434
        %v2681 = vpack.c.bf16 %v2437, %v2436
        %v2682 = vpack.c.bf16 %v2439, %v2438
        %v2683 = vpack.c.bf16 %v2441, %v2440
        %v2684 = vpack.c.bf16 %v2443, %v2442
        %v2685 = vpack.c.bf16 %v2445, %v2444
        %v2686 = vpack.c.bf16 %v2447, %v2446
        %v2687 = vpack.c.bf16 %v2449, %v2448
        %v2688 = vpack.c.bf16 %v2451, %v2450
        %v2689 = vpack.c.bf16 %v2453, %v2452
        %v2690 = vpack.c.bf16 %v2455, %v2454
        %v2691 = vpack.c.bf16 %v2457, %v2456
        %v2692 = vpack.c.bf16 %v2459, %v2458
        %v2693 = vpack.c.bf16 %v2461, %v2460
        %v2694 = vpack.c.bf16 %v2463, %v2462
        %v2695 = vpack.c.bf16 %v2465, %v2464
        %v2696 = vpack.c.bf16 %v2467, %v2466
        %v2697 = vpack.c.bf16 %v2469, %v2468
        %v2698 = vpack.c.bf16 %v2471, %v2470
        %v2699 = vpack.c.bf16 %v2473, %v2472
        %v2700 = vpack.c.bf16 %v2475, %v2474
        %v2701 = vpack.c.bf16 %v2477, %v2476
        %v2702 = vpack.c.bf16 %v2479, %v2478
        %v2703 = vpack.c.bf16 %v2481, %v2480
        %v2704 = vpack.c.bf16 %v2483, %v2482
        %v2705 = vpack.c.bf16 %v2485, %v2484
        %v2706 = vpack.c.bf16 %v2487, %v2486
        %v2707 = vpack.c.bf16 %v2489, %v2488
        %v2708 = vpack.c.bf16 %v2491, %v2490
        %v2709 = vpack.c.bf16 %v2493, %v2492
        %v2710 = vpack.c.bf16 %v2495, %v2494
        %v2711 = vpack.c.bf16 %v2497, %v2496
        %v2712 = vpack.c.bf16 %v2499, %v2498
        %v2713 = vpack.c.bf16 %v2501, %v2500
        %v2714 = vpack.c.bf16 %v2503, %v2502
        %v2715 = vpack.c.bf16 %v2505, %v2504
        %v2716 = vpack.c.bf16 %v2507, %v2506
        %v2717 = vpack.c.bf16 %v2509, %v2508
        %v2718 = vpack.c.bf16 %v2511, %v2510
        %v2719 = vpack.c.bf16 %v2513, %v2512
        %v2720 = vpack.c.bf16 %v2515, %v2514
        %v2721 = vpack.c.bf16 %v2517, %v2516
        %v2722 = vpack.c.bf16 %v2519, %v2518
        %v2723 = vpack.c.bf16 %v2521, %v2520
        %v2724 = vpack.c.bf16 %v2523, %v2522
        %v2725 = vpack.c.bf16 %v2525, %v2524
        %v2726 = vpack.c.bf16 %v2527, %v2526
        %v2727 = vpack.c.bf16 %v2529, %v2528
        %v2728 = vpack.c.bf16 %v2531, %v2530
        %v2729 = vpack.c.bf16 %v2533, %v2532
        %v2730 = vpack.c.bf16 %v2535, %v2534
        %v2731 = vpack.c.bf16 %v2537, %v2536
        %v2732 = vpack.c.bf16 %v2539, %v2538
        %v2733 = vpack.c.bf16 %v2541, %v2540
        %v2734 = vpack.c.bf16 %v2543, %v2542
        %v2735 = vpack.c.bf16 %v2545, %v2544
        %v2736 = vpack.c.bf16 %v2547, %v2546
        %v2737 = vpack.c.bf16 %v2549, %v2548
        %v2738 = vpack.c.bf16 %v2551, %v2550
        %v2739 = vpack.c.bf16 %v2553, %v2552
        %v2740 = vpack.c.bf16 %v2555, %v2554
        %v2741 = vpack.c.bf16 %v2557, %v2556
        %v2742 = vpack.c.bf16 %v2559, %v2558
        %v2743 = vpack.c.bf16 %v2561, %v2560
        %v2744 = vpack.c.bf16 %v2563, %v2562
        %v2745 = vpack.c.bf16 %v2565, %v2564
        %v2746 = vpack.c.bf16 %v2567, %v2566
        %v2747 = vpack.c.bf16 %v2569, %v2568
        %v2748 = vpack.c.bf16 %v2571, %v2570
        %v2749 = vpack.c.bf16 %v2573, %v2572
        %v2750 = vpack.c.bf16 %v2575, %v2574
        %v2751 = vpack.c.bf16 %v2577, %v2576
        %v2752 = vpack.c.bf16 %v2579, %v2578
        %v2753 = vpack.c.bf16 %v2581, %v2580
        %v2754 = vpack.c.bf16 %v2583, %v2582
        %v2755 = vpack.c.bf16 %v2585, %v2584
        %v2756 = vpack.c.bf16 %v2587, %v2586
        %v2757 = vpack.c.bf16 %v2589, %v2588
        %v2758 = vpack.c.bf16 %v2591, %v2590
        %v2759 = vpack.c.bf16 %v2593, %v2592
        %v2760 = vpack.c.bf16 %v2595, %v2594
        %v2761 = vpack.c.bf16 %v2597, %v2596
        %v2762 = vpack.c.bf16 %v2599, %v2598
        %v2763 = vpack.c.bf16 %v2601, %v2600
        %v2764 = vpack.c.bf16 %v2603, %v2602
        %v2765 = vpack.c.bf16 %v2605, %v2604
        %v2766 = vpack.c.bf16 %v2607, %v2606
        %v2767 = vpack.c.bf16 %v2609, %v2608
        %v2768 = vpack.c.bf16 %v2611, %v2610
        %v2769 = vpack.c.bf16 %v2613, %v2612
        %v2770 = vpack.c.bf16 %v2615, %v2614
        %v2771 = vpack.c.bf16 %v2617, %v2616
        %v2772 = vpack.c.bf16 %v2619, %v2618
        %v2773 = vpack.c.bf16 %v2621, %v2620
        %v2774 = vpack.c.bf16 %v2623, %v2622
        %v2775 = vpack.c.bf16 %v2625, %v2624
        %v2776 = vpack.c.bf16 %v2627, %v2626
        %v2777 = vpack.c.bf16 %v2629, %v2628
        %v2778 = vpack.c.bf16 %v2631, %v2630
        %v2779 = vpack.c.bf16 %v2633, %v2632
        %v2780 = vpack.c.bf16 %v2635, %v2634
        %v2781 = vpack.c.bf16 %v2637, %v2636
        %v2782 = vpack.c.bf16 %v2639, %v2638
        %v2783 = vpack.c.bf16 %v2641, %v2640
        %v2784 = vpack.c.bf16 %v2643, %v2642
        %v2785 = vpack.c.bf16 %v2645, %v2644
        %v2786 = vpack.c.bf16 %v2647, %v2646
        %v2787 = vpack.c.bf16 %v2649, %v2648
        %v2788 = vpack.c.bf16 %v2651, %v2650
        %v2789 = vpack.c.bf16 %v2653, %v2652
        %v2790 = vpack.c.bf16 %v2655, %v2654
        %v2791 = vpack.c.bf16 %v2657, %v2656
        %v2792 = vpack.c.bf16 %v2659, %v2658
        %v2793 = vpack.c.bf16 %v2661, %v2660
        %v2794 = vpack.c.bf16 %v2663, %v2662
        %v2795 = vpack.c.bf16 %v2665, %v2664
        %v2796 = vpack.c.bf16 %v2667, %v2666
        %v2797 = vpack.c.bf16 %v2669, %v2668
        %v2798 = vld [vmem:[%s2] sm:$0xff]
        %v2799 = vld [vmem:[%s2 + $0x8] sm:$0xff]
        %v2800 = vld [vmem:[%s2 + $0x10] sm:$0xff]
        %v2801 = vld [vmem:[%s2 + $0x18] sm:$0xff]
        %v2802 = vld [vmem:[%s2 + $0x20] sm:$0xff]
        %v2803 = vld [vmem:[%s2 + $0x28] sm:$0xff]
        %v2804 = vld [vmem:[%s2 + $0x30] sm:$0xff]
        %v2805 = vld [vmem:[%s2 + $0x38] sm:$0xff]
        %v2806 = vld [vmem:[%s2 + $0x40] sm:$0xff]
        %v2807 = vld [vmem:[%s2 + $0x48] sm:$0xff]
        %v2808 = vld [vmem:[%s2 + $0x50] sm:$0xff]
        %v2809 = vld [vmem:[%s2 + $0x58] sm:$0xff]
        %v2810 = vld [vmem:[%s2 + $0x60] sm:$0xff]
        %v2811 = vld [vmem:[%s2 + $0x68] sm:$0xff]
        %v2812 = vld [vmem:[%s2 + $0x70] sm:$0xff]
        %v2813 = vld [vmem:[%s2 + $0x78] sm:$0xff]
        %v2814 = vld [vmem:[%s2 + $0x80] sm:$0xff]
        %v2815 = vld [vmem:[%s2 + $0x88] sm:$0xff]
        %v2816 = vld [vmem:[%s2 + $0x90] sm:$0xff]
        %v2817 = vld [vmem:[%s2 + $0x98] sm:$0xff]
        %v2818 = vld [vmem:[%s2 + $0xa0] sm:$0xff]
        %v2819 = vld [vmem:[%s2 + $0xa8] sm:$0xff]
        %v2820 = vld [vmem:[%s2 + $0xb0] sm:$0xff]
        %v2821 = vld [vmem:[%s2 + $0xb8] sm:$0xff]
        %v2822 = vld [vmem:[%s2 + $0xc0] sm:$0xff]
        %v2823 = vld [vmem:[%s2 + $0xc8] sm:$0xff]
        %v2824 = vld [vmem:[%s2 + $0xd0] sm:$0xff]
        %v2825 = vld [vmem:[%s2 + $0xd8] sm:$0xff]
        %v2826 = vld [vmem:[%s2 + $0xe0] sm:$0xff]
        %v2827 = vld [vmem:[%s2 + $0xe8] sm:$0xff]
        %v2828 = vld [vmem:[%s2 + $0xf0] sm:$0xff]
        %v2829 = vld [vmem:[%s2 + $0xf8] sm:$0xff]
        %v2830 = vld [vmem:[%s2 + $0x100] sm:$0xff]
        %v2831 = vld [vmem:[%s2 + $0x108] sm:$0xff]
        %v2832 = vld [vmem:[%s2 + $0x110] sm:$0xff]
        %v2833 = vld [vmem:[%s2 + $0x118] sm:$0xff]
        %v2834 = vld [vmem:[%s2 + $0x120] sm:$0xff]
        %v2835 = vld [vmem:[%s2 + $0x128] sm:$0xff]
        %v2836 = vld [vmem:[%s2 + $0x130] sm:$0xff]
        %v2837 = vld [vmem:[%s2 + $0x138] sm:$0xff]
        %v2838 = vld [vmem:[%s2 + $0x140] sm:$0xff]
        %v2839 = vld [vmem:[%s2 + $0x148] sm:$0xff]
        %v2840 = vld [vmem:[%s2 + $0x150] sm:$0xff]
        %v2841 = vld [vmem:[%s2 + $0x158] sm:$0xff]
        %v2842 = vld [vmem:[%s2 + $0x160] sm:$0xff]
        %v2843 = vld [vmem:[%s2 + $0x168] sm:$0xff]
        %v2844 = vld [vmem:[%s2 + $0x170] sm:$0xff]
        %v2845 = vld [vmem:[%s2 + $0x178] sm:$0xff]
        %v2846 = vld [vmem:[%s2 + $0x180] sm:$0xff]
        %v2847 = vld [vmem:[%s2 + $0x188] sm:$0xff]
        %v2848 = vld [vmem:[%s2 + $0x190] sm:$0xff]
        %v2849 = vld [vmem:[%s2 + $0x198] sm:$0xff]
        %v2850 = vld [vmem:[%s2 + $0x1a0] sm:$0xff]
        %v2851 = vld [vmem:[%s2 + $0x1a8] sm:$0xff]
        %v2852 = vld [vmem:[%s2 + $0x1b0] sm:$0xff]
        %v2853 = vld [vmem:[%s2 + $0x1b8] sm:$0xff]
        %v2854 = vld [vmem:[%s2 + $0x1c0] sm:$0xff]
        %v2855 = vld [vmem:[%s2 + $0x1c8] sm:$0xff]
        %v2856 = vld [vmem:[%s2 + $0x1d0] sm:$0xff]
        %v2857 = vld [vmem:[%s2 + $0x1d8] sm:$0xff]
        %v2858 = vld [vmem:[%s2 + $0x1e0] sm:$0xff]
        %v2859 = vld [vmem:[%s2 + $0x1e8] sm:$0xff]
        %v2860 = vld [vmem:[%s2 + $0x1f0] sm:$0xff]
        %v2861 = vld [vmem:[%s2 + $0x1f8] sm:$0xff]
        %v2862 = vld [vmem:[%s2 + $0x200] sm:$0xff]
        %v2863 = vld [vmem:[%s2 + $0x208] sm:$0xff]
        %v2864 = vld [vmem:[%s2 + $0x210] sm:$0xff]
        %v2865 = vld [vmem:[%s2 + $0x218] sm:$0xff]
        %v2866 = vld [vmem:[%s2 + $0x220] sm:$0xff]
        %v2867 = vld [vmem:[%s2 + $0x228] sm:$0xff]
        %v2868 = vld [vmem:[%s2 + $0x230] sm:$0xff]
        %v2869 = vld [vmem:[%s2 + $0x238] sm:$0xff]
        %v2870 = vld [vmem:[%s2 + $0x240] sm:$0xff]
        %v2871 = vld [vmem:[%s2 + $0x248] sm:$0xff]
        %v2872 = vld [vmem:[%s2 + $0x250] sm:$0xff]
        %v2873 = vld [vmem:[%s2 + $0x258] sm:$0xff]
        %v2874 = vld [vmem:[%s2 + $0x260] sm:$0xff]
        %v2875 = vld [vmem:[%s2 + $0x268] sm:$0xff]
        %v2876 = vld [vmem:[%s2 + $0x270] sm:$0xff]
        %v2877 = vld [vmem:[%s2 + $0x278] sm:$0xff]
        %v2878 = vld [vmem:[%s2 + $0x280] sm:$0xff]
        %v2879 = vld [vmem:[%s2 + $0x288] sm:$0xff]
        %v2880 = vld [vmem:[%s2 + $0x290] sm:$0xff]
        %v2881 = vld [vmem:[%s2 + $0x298] sm:$0xff]
        %v2882 = vld [vmem:[%s2 + $0x2a0] sm:$0xff]
        %v2883 = vld [vmem:[%s2 + $0x2a8] sm:$0xff]
        %v2884 = vld [vmem:[%s2 + $0x2b0] sm:$0xff]
        %v2885 = vld [vmem:[%s2 + $0x2b8] sm:$0xff]
        %v2886 = vld [vmem:[%s2 + $0x2c0] sm:$0xff]
        %v2887 = vld [vmem:[%s2 + $0x2c8] sm:$0xff]
        %v2888 = vld [vmem:[%s2 + $0x2d0] sm:$0xff]
        %v2889 = vld [vmem:[%s2 + $0x2d8] sm:$0xff]
        %v2890 = vld [vmem:[%s2 + $0x2e0] sm:$0xff]
        %v2891 = vld [vmem:[%s2 + $0x2e8] sm:$0xff]
        %v2892 = vld [vmem:[%s2 + $0x2f0] sm:$0xff]
        %v2893 = vld [vmem:[%s2 + $0x2f8] sm:$0xff]
        %v2894 = vld [vmem:[%s2 + $0x300] sm:$0xff]
        %v2895 = vld [vmem:[%s2 + $0x308] sm:$0xff]
        %v2896 = vld [vmem:[%s2 + $0x310] sm:$0xff]
        %v2897 = vld [vmem:[%s2 + $0x318] sm:$0xff]
        %v2898 = vld [vmem:[%s2 + $0x320] sm:$0xff]
        %v2899 = vld [vmem:[%s2 + $0x328] sm:$0xff]
        %v2900 = vld [vmem:[%s2 + $0x330] sm:$0xff]
        %v2901 = vld [vmem:[%s2 + $0x338] sm:$0xff]
        %v2902 = vld [vmem:[%s2 + $0x340] sm:$0xff]
        %v2903 = vld [vmem:[%s2 + $0x348] sm:$0xff]
        %v2904 = vld [vmem:[%s2 + $0x350] sm:$0xff]
        %v2905 = vld [vmem:[%s2 + $0x358] sm:$0xff]
        %v2906 = vld [vmem:[%s2 + $0x360] sm:$0xff]
        %v2907 = vld [vmem:[%s2 + $0x368] sm:$0xff]
        %v2908 = vld [vmem:[%s2 + $0x370] sm:$0xff]
        %v2909 = vld [vmem:[%s2 + $0x378] sm:$0xff]
        %v2910 = vld [vmem:[%s2 + $0x380] sm:$0xff]
        %v2911 = vld [vmem:[%s2 + $0x388] sm:$0xff]
        %v2912 = vld [vmem:[%s2 + $0x390] sm:$0xff]
        %v2913 = vld [vmem:[%s2 + $0x398] sm:$0xff]
        %v2914 = vld [vmem:[%s2 + $0x3a0] sm:$0xff]
        %v2915 = vld [vmem:[%s2 + $0x3a8] sm:$0xff]
        %v2916 = vld [vmem:[%s2 + $0x3b0] sm:$0xff]
        %v2917 = vld [vmem:[%s2 + $0x3b8] sm:$0xff]
        %v2918 = vld [vmem:[%s2 + $0x3c0] sm:$0xff]
        %v2919 = vld [vmem:[%s2 + $0x3c8] sm:$0xff]
        %v2920 = vld [vmem:[%s2 + $0x3d0] sm:$0xff]
        %v2921 = vld [vmem:[%s2 + $0x3d8] sm:$0xff]
        %v2922 = vld [vmem:[%s2 + $0x3e0] sm:$0xff]
        %v2923 = vld [vmem:[%s2 + $0x3e8] sm:$0xff]
        %v2924 = vld [vmem:[%s2 + $0x3f0] sm:$0xff]
        %v2925 = vld [vmem:[%s2 + $0x3f8] sm:$0xff]
        %v2926 = vld [vmem:[%s3] sm:$0xff]
        %v2927 = vld [vmem:[%s3 + $0x8] sm:$0xff]
        %v2928 = vld [vmem:[%s3 + $0x10] sm:$0xff]
        %v2929 = vld [vmem:[%s3 + $0x18] sm:$0xff]
        %v2930 = vld [vmem:[%s3 + $0x20] sm:$0xff]
        %v2931 = vld [vmem:[%s3 + $0x28] sm:$0xff]
        %v2932 = vld [vmem:[%s3 + $0x30] sm:$0xff]
        %v2933 = vld [vmem:[%s3 + $0x38] sm:$0xff]
        %v2934 = vld [vmem:[%s3 + $0x40] sm:$0xff]
        %v2935 = vld [vmem:[%s3 + $0x48] sm:$0xff]
        %v2936 = vld [vmem:[%s3 + $0x50] sm:$0xff]
        %v2937 = vld [vmem:[%s3 + $0x58] sm:$0xff]
        %v2938 = vld [vmem:[%s3 + $0x60] sm:$0xff]
        %v2939 = vld [vmem:[%s3 + $0x68] sm:$0xff]
        %v2940 = vld [vmem:[%s3 + $0x70] sm:$0xff]
        %v2941 = vld [vmem:[%s3 + $0x78] sm:$0xff]
        %2943 = vset.pattern.permute.xlu0 0
        %2944 = vperm.xlu0 %2943, %v2926
        %v2945 = vpop.permute.xlu0 %2944
        %2948 = vset.pattern.permute.xlu0 0
        %2949 = vperm.xlu0 %2948, %v2927
        %v2950 = vpop.permute.xlu0 %2949
        %2953 = vset.pattern.permute.xlu0 0
        %2954 = vperm.xlu0 %2953, %v2928
        %v2955 = vpop.permute.xlu0 %2954
        %2958 = vset.pattern.permute.xlu0 0
        %2959 = vperm.xlu0 %2958, %v2929
        %v2960 = vpop.permute.xlu0 %2959
        %2963 = vset.pattern.permute.xlu0 0
        %2964 = vperm.xlu0 %2963, %v2930
        %v2965 = vpop.permute.xlu0 %2964
        %2968 = vset.pattern.permute.xlu0 0
        %2969 = vperm.xlu0 %2968, %v2931
        %v2970 = vpop.permute.xlu0 %2969
        %2973 = vset.pattern.permute.xlu0 0
        %2974 = vperm.xlu0 %2973, %v2932
        %v2975 = vpop.permute.xlu0 %2974
        %2978 = vset.pattern.permute.xlu0 0
        %2979 = vperm.xlu0 %2978, %v2933
        %v2980 = vpop.permute.xlu0 %2979
        %2983 = vset.pattern.permute.xlu0 0
        %2984 = vperm.xlu0 %2983, %v2934
        %v2985 = vpop.permute.xlu0 %2984
        %2988 = vset.pattern.permute.xlu0 0
        %2989 = vperm.xlu0 %2988, %v2935
        %v2990 = vpop.permute.xlu0 %2989
        %2993 = vset.pattern.permute.xlu0 0
        %2994 = vperm.xlu0 %2993, %v2936
        %v2995 = vpop.permute.xlu0 %2994
        %2998 = vset.pattern.permute.xlu0 0
        %2999 = vperm.xlu0 %2998, %v2937
        %v3000 = vpop.permute.xlu0 %2999
        %3003 = vset.pattern.permute.xlu0 0
        %3004 = vperm.xlu0 %3003, %v2938
        %v3005 = vpop.permute.xlu0 %3004
        %3008 = vset.pattern.permute.xlu0 0
        %3009 = vperm.xlu0 %3008, %v2939
        %v3010 = vpop.permute.xlu0 %3009
        %3013 = vset.pattern.permute.xlu0 0
        %3014 = vperm.xlu0 %3013, %v2940
        %v3015 = vpop.permute.xlu0 %3014
        %3018 = vset.pattern.permute.xlu0 0
        %3019 = vperm.xlu0 %3018, %v2941
        %v3020 = vpop.permute.xlu0 %3019
        %v3150 = vunpack.c.l.b16 %v2798
        %v3151 = vunpack.c.h.b16 %v2798
        %v3152 = vunpack.c.l.b16 %v2799
        %v3153 = vunpack.c.h.b16 %v2799
        %v3154 = vunpack.c.l.b16 %v2800
        %v3155 = vunpack.c.h.b16 %v2800
        %v3156 = vunpack.c.l.b16 %v2801
        %v3157 = vunpack.c.h.b16 %v2801
        %v3158 = vunpack.c.l.b16 %v2802
        %v3159 = vunpack.c.h.b16 %v2802
        %v3160 = vunpack.c.l.b16 %v2803
        %v3161 = vunpack.c.h.b16 %v2803
        %v3162 = vunpack.c.l.b16 %v2804
        %v3163 = vunpack.c.h.b16 %v2804
        %v3164 = vunpack.c.l.b16 %v2805
        %v3165 = vunpack.c.h.b16 %v2805
        %v3166 = vunpack.c.l.b16 %v2806
        %v3167 = vunpack.c.h.b16 %v2806
        %v3168 = vunpack.c.l.b16 %v2807
        %v3169 = vunpack.c.h.b16 %v2807
        %v3170 = vunpack.c.l.b16 %v2808
        %v3171 = vunpack.c.h.b16 %v2808
        %v3172 = vunpack.c.l.b16 %v2809
        %v3173 = vunpack.c.h.b16 %v2809
        %v3174 = vunpack.c.l.b16 %v2810
        %v3175 = vunpack.c.h.b16 %v2810
        %v3176 = vunpack.c.l.b16 %v2811
        %v3177 = vunpack.c.h.b16 %v2811
        %v3178 = vunpack.c.l.b16 %v2812
        %v3179 = vunpack.c.h.b16 %v2812
        %v3180 = vunpack.c.l.b16 %v2813
        %v3181 = vunpack.c.h.b16 %v2813
        %v3182 = vunpack.c.l.b16 %v2814
        %v3183 = vunpack.c.h.b16 %v2814
        %v3184 = vunpack.c.l.b16 %v2815
        %v3185 = vunpack.c.h.b16 %v2815
        %v3186 = vunpack.c.l.b16 %v2816
        %v3187 = vunpack.c.h.b16 %v2816
        %v3188 = vunpack.c.l.b16 %v2817
        %v3189 = vunpack.c.h.b16 %v2817
        %v3190 = vunpack.c.l.b16 %v2818
        %v3191 = vunpack.c.h.b16 %v2818
        %v3192 = vunpack.c.l.b16 %v2819
        %v3193 = vunpack.c.h.b16 %v2819
        %v3194 = vunpack.c.l.b16 %v2820
        %v3195 = vunpack.c.h.b16 %v2820
        %v3196 = vunpack.c.l.b16 %v2821
        %v3197 = vunpack.c.h.b16 %v2821
        %v3198 = vunpack.c.l.b16 %v2822
        %v3199 = vunpack.c.h.b16 %v2822
        %v3200 = vunpack.c.l.b16 %v2823
        %v3201 = vunpack.c.h.b16 %v2823
        %v3202 = vunpack.c.l.b16 %v2824
        %v3203 = vunpack.c.h.b16 %v2824
        %v3204 = vunpack.c.l.b16 %v2825
        %v3205 = vunpack.c.h.b16 %v2825
        %v3206 = vunpack.c.l.b16 %v2826
        %v3207 = vunpack.c.h.b16 %v2826
        %v3208 = vunpack.c.l.b16 %v2827
        %v3209 = vunpack.c.h.b16 %v2827
        %v3210 = vunpack.c.l.b16 %v2828
        %v3211 = vunpack.c.h.b16 %v2828
        %v3212 = vunpack.c.l.b16 %v2829
        %v3213 = vunpack.c.h.b16 %v2829
        %v3214 = vunpack.c.l.b16 %v2830
        %v3215 = vunpack.c.h.b16 %v2830
        %v3216 = vunpack.c.l.b16 %v2831
        %v3217 = vunpack.c.h.b16 %v2831
        %v3218 = vunpack.c.l.b16 %v2832
        %v3219 = vunpack.c.h.b16 %v2832
        %v3220 = vunpack.c.l.b16 %v2833
        %v3221 = vunpack.c.h.b16 %v2833
        %v3222 = vunpack.c.l.b16 %v2834
        %v3223 = vunpack.c.h.b16 %v2834
        %v3224 = vunpack.c.l.b16 %v2835
        %v3225 = vunpack.c.h.b16 %v2835
        %v3226 = vunpack.c.l.b16 %v2836
        %v3227 = vunpack.c.h.b16 %v2836
        %v3228 = vunpack.c.l.b16 %v2837
        %v3229 = vunpack.c.h.b16 %v2837
        %v3230 = vunpack.c.l.b16 %v2838
        %v3231 = vunpack.c.h.b16 %v2838
        %v3232 = vunpack.c.l.b16 %v2839
        %v3233 = vunpack.c.h.b16 %v2839
        %v3234 = vunpack.c.l.b16 %v2840
        %v3235 = vunpack.c.h.b16 %v2840
        %v3236 = vunpack.c.l.b16 %v2841
        %v3237 = vunpack.c.h.b16 %v2841
        %v3238 = vunpack.c.l.b16 %v2842
        %v3239 = vunpack.c.h.b16 %v2842
        %v3240 = vunpack.c.l.b16 %v2843
        %v3241 = vunpack.c.h.b16 %v2843
        %v3242 = vunpack.c.l.b16 %v2844
        %v3243 = vunpack.c.h.b16 %v2844
        %v3244 = vunpack.c.l.b16 %v2845
        %v3245 = vunpack.c.h.b16 %v2845
        %v3246 = vunpack.c.l.b16 %v2846
        %v3247 = vunpack.c.h.b16 %v2846
        %v3248 = vunpack.c.l.b16 %v2847
        %v3249 = vunpack.c.h.b16 %v2847
        %v3250 = vunpack.c.l.b16 %v2848
        %v3251 = vunpack.c.h.b16 %v2848
        %v3252 = vunpack.c.l.b16 %v2849
        %v3253 = vunpack.c.h.b16 %v2849
        %v3254 = vunpack.c.l.b16 %v2850
        %v3255 = vunpack.c.h.b16 %v2850
        %v3256 = vunpack.c.l.b16 %v2851
        %v3257 = vunpack.c.h.b16 %v2851
        %v3258 = vunpack.c.l.b16 %v2852
        %v3259 = vunpack.c.h.b16 %v2852
        %v3260 = vunpack.c.l.b16 %v2853
        %v3261 = vunpack.c.h.b16 %v2853
        %v3262 = vunpack.c.l.b16 %v2854
        %v3263 = vunpack.c.h.b16 %v2854
        %v3264 = vunpack.c.l.b16 %v2855
        %v3265 = vunpack.c.h.b16 %v2855
        %v3266 = vunpack.c.l.b16 %v2856
        %v3267 = vunpack.c.h.b16 %v2856
        %v3268 = vunpack.c.l.b16 %v2857
        %v3269 = vunpack.c.h.b16 %v2857
        %v3270 = vunpack.c.l.b16 %v2858
        %v3271 = vunpack.c.h.b16 %v2858
        %v3272 = vunpack.c.l.b16 %v2859
        %v3273 = vunpack.c.h.b16 %v2859
        %v3274 = vunpack.c.l.b16 %v2860
        %v3275 = vunpack.c.h.b16 %v2860
        %v3276 = vunpack.c.l.b16 %v2861
        %v3277 = vunpack.c.h.b16 %v2861
        %v3278 = vunpack.c.l.b16 %v2862
        %v3279 = vunpack.c.h.b16 %v2862
        %v3280 = vunpack.c.l.b16 %v2863
        %v3281 = vunpack.c.h.b16 %v2863
        %v3282 = vunpack.c.l.b16 %v2864
        %v3283 = vunpack.c.h.b16 %v2864
        %v3284 = vunpack.c.l.b16 %v2865
        %v3285 = vunpack.c.h.b16 %v2865
        %v3286 = vunpack.c.l.b16 %v2866
        %v3287 = vunpack.c.h.b16 %v2866
        %v3288 = vunpack.c.l.b16 %v2867
        %v3289 = vunpack.c.h.b16 %v2867
        %v3290 = vunpack.c.l.b16 %v2868
        %v3291 = vunpack.c.h.b16 %v2868
        %v3292 = vunpack.c.l.b16 %v2869
        %v3293 = vunpack.c.h.b16 %v2869
        %v3294 = vunpack.c.l.b16 %v2870
        %v3295 = vunpack.c.h.b16 %v2870
        %v3296 = vunpack.c.l.b16 %v2871
        %v3297 = vunpack.c.h.b16 %v2871
        %v3298 = vunpack.c.l.b16 %v2872
        %v3299 = vunpack.c.h.b16 %v2872
        %v3300 = vunpack.c.l.b16 %v2873
        %v3301 = vunpack.c.h.b16 %v2873
        %v3302 = vunpack.c.l.b16 %v2874
        %v3303 = vunpack.c.h.b16 %v2874
        %v3304 = vunpack.c.l.b16 %v2875
        %v3305 = vunpack.c.h.b16 %v2875
        %v3306 = vunpack.c.l.b16 %v2876
        %v3307 = vunpack.c.h.b16 %v2876
        %v3308 = vunpack.c.l.b16 %v2877
        %v3309 = vunpack.c.h.b16 %v2877
        %v3310 = vunpack.c.l.b16 %v2878
        %v3311 = vunpack.c.h.b16 %v2878
        %v3312 = vunpack.c.l.b16 %v2879
        %v3313 = vunpack.c.h.b16 %v2879
        %v3314 = vunpack.c.l.b16 %v2880
        %v3315 = vunpack.c.h.b16 %v2880
        %v3316 = vunpack.c.l.b16 %v2881
        %v3317 = vunpack.c.h.b16 %v2881
        %v3318 = vunpack.c.l.b16 %v2882
        %v3319 = vunpack.c.h.b16 %v2882
        %v3320 = vunpack.c.l.b16 %v2883
        %v3321 = vunpack.c.h.b16 %v2883
        %v3322 = vunpack.c.l.b16 %v2884
        %v3323 = vunpack.c.h.b16 %v2884
        %v3324 = vunpack.c.l.b16 %v2885
        %v3325 = vunpack.c.h.b16 %v2885
        %v3326 = vunpack.c.l.b16 %v2886
        %v3327 = vunpack.c.h.b16 %v2886
        %v3328 = vunpack.c.l.b16 %v2887
        %v3329 = vunpack.c.h.b16 %v2887
        %v3330 = vunpack.c.l.b16 %v2888
        %v3331 = vunpack.c.h.b16 %v2888
        %v3332 = vunpack.c.l.b16 %v2889
        %v3333 = vunpack.c.h.b16 %v2889
        %v3334 = vunpack.c.l.b16 %v2890
        %v3335 = vunpack.c.h.b16 %v2890
        %v3336 = vunpack.c.l.b16 %v2891
        %v3337 = vunpack.c.h.b16 %v2891
        %v3338 = vunpack.c.l.b16 %v2892
        %v3339 = vunpack.c.h.b16 %v2892
        %v3340 = vunpack.c.l.b16 %v2893
        %v3341 = vunpack.c.h.b16 %v2893
        %v3342 = vunpack.c.l.b16 %v2894
        %v3343 = vunpack.c.h.b16 %v2894
        %v3344 = vunpack.c.l.b16 %v2895
        %v3345 = vunpack.c.h.b16 %v2895
        %v3346 = vunpack.c.l.b16 %v2896
        %v3347 = vunpack.c.h.b16 %v2896
        %v3348 = vunpack.c.l.b16 %v2897
        %v3349 = vunpack.c.h.b16 %v2897
        %v3350 = vunpack.c.l.b16 %v2898
        %v3351 = vunpack.c.h.b16 %v2898
        %v3352 = vunpack.c.l.b16 %v2899
        %v3353 = vunpack.c.h.b16 %v2899
        %v3354 = vunpack.c.l.b16 %v2900
        %v3355 = vunpack.c.h.b16 %v2900
        %v3356 = vunpack.c.l.b16 %v2901
        %v3357 = vunpack.c.h.b16 %v2901
        %v3358 = vunpack.c.l.b16 %v2902
        %v3359 = vunpack.c.h.b16 %v2902
        %v3360 = vunpack.c.l.b16 %v2903
        %v3361 = vunpack.c.h.b16 %v2903
        %v3362 = vunpack.c.l.b16 %v2904
        %v3363 = vunpack.c.h.b16 %v2904
        %v3364 = vunpack.c.l.b16 %v2905
        %v3365 = vunpack.c.h.b16 %v2905
        %v3366 = vunpack.c.l.b16 %v2906
        %v3367 = vunpack.c.h.b16 %v2906
        %v3368 = vunpack.c.l.b16 %v2907
        %v3369 = vunpack.c.h.b16 %v2907
        %v3370 = vunpack.c.l.b16 %v2908
        %v3371 = vunpack.c.h.b16 %v2908
        %v3372 = vunpack.c.l.b16 %v2909
        %v3373 = vunpack.c.h.b16 %v2909
        %v3374 = vunpack.c.l.b16 %v2910
        %v3375 = vunpack.c.h.b16 %v2910
        %v3376 = vunpack.c.l.b16 %v2911
        %v3377 = vunpack.c.h.b16 %v2911
        %v3378 = vunpack.c.l.b16 %v2912
        %v3379 = vunpack.c.h.b16 %v2912
        %v3380 = vunpack.c.l.b16 %v2913
        %v3381 = vunpack.c.h.b16 %v2913
        %v3382 = vunpack.c.l.b16 %v2914
        %v3383 = vunpack.c.h.b16 %v2914
        %v3384 = vunpack.c.l.b16 %v2915
        %v3385 = vunpack.c.h.b16 %v2915
        %v3386 = vunpack.c.l.b16 %v2916
        %v3387 = vunpack.c.h.b16 %v2916
        %v3388 = vunpack.c.l.b16 %v2917
        %v3389 = vunpack.c.h.b16 %v2917
        %v3390 = vunpack.c.l.b16 %v2918
        %v3391 = vunpack.c.h.b16 %v2918
        %v3392 = vunpack.c.l.b16 %v2919
        %v3393 = vunpack.c.h.b16 %v2919
        %v3394 = vunpack.c.l.b16 %v2920
        %v3395 = vunpack.c.h.b16 %v2920
        %v3396 = vunpack.c.l.b16 %v2921
        %v3397 = vunpack.c.h.b16 %v2921
        %v3398 = vunpack.c.l.b16 %v2922
        %v3399 = vunpack.c.h.b16 %v2922
        %v3400 = vunpack.c.l.b16 %v2923
        %v3401 = vunpack.c.h.b16 %v2923
        %v3402 = vunpack.c.l.b16 %v2924
        %v3403 = vunpack.c.h.b16 %v2924
        %v3404 = vunpack.c.l.b16 %v2925
        %v3405 = vunpack.c.h.b16 %v2925
        %v3406 = vpack.c.b16 %v3166, %v3150
        %v3407 = vpack.c.b16 %v3167, %v3151
        %v3408 = vpack.c.b16 %v3168, %v3152
        %v3409 = vpack.c.b16 %v3169, %v3153
        %v3410 = vpack.c.b16 %v3170, %v3154
        %v3411 = vpack.c.b16 %v3171, %v3155
        %v3412 = vpack.c.b16 %v3172, %v3156
        %v3413 = vpack.c.b16 %v3173, %v3157
        %v3414 = vpack.c.b16 %v3174, %v3158
        %v3415 = vpack.c.b16 %v3175, %v3159
        %v3416 = vpack.c.b16 %v3176, %v3160
        %v3417 = vpack.c.b16 %v3177, %v3161
        %v3418 = vpack.c.b16 %v3178, %v3162
        %v3419 = vpack.c.b16 %v3179, %v3163
        %v3420 = vpack.c.b16 %v3180, %v3164
        %v3421 = vpack.c.b16 %v3181, %v3165
        %v3422 = vpack.c.b16 %v3198, %v3182
        %v3423 = vpack.c.b16 %v3199, %v3183
        %v3424 = vpack.c.b16 %v3200, %v3184
        %v3425 = vpack.c.b16 %v3201, %v3185
        %v3426 = vpack.c.b16 %v3202, %v3186
        %v3427 = vpack.c.b16 %v3203, %v3187
        %v3428 = vpack.c.b16 %v3204, %v3188
        %v3429 = vpack.c.b16 %v3205, %v3189
        %v3430 = vpack.c.b16 %v3206, %v3190
        %v3431 = vpack.c.b16 %v3207, %v3191
        %v3432 = vpack.c.b16 %v3208, %v3192
        %v3433 = vpack.c.b16 %v3209, %v3193
        %v3434 = vpack.c.b16 %v3210, %v3194
        %v3435 = vpack.c.b16 %v3211, %v3195
        %v3436 = vpack.c.b16 %v3212, %v3196
        %v3437 = vpack.c.b16 %v3213, %v3197
        %v3438 = vpack.c.b16 %v3230, %v3214
        %v3439 = vpack.c.b16 %v3231, %v3215
        %v3440 = vpack.c.b16 %v3232, %v3216
        %v3441 = vpack.c.b16 %v3233, %v3217
        %v3442 = vpack.c.b16 %v3234, %v3218
        %v3443 = vpack.c.b16 %v3235, %v3219
        %v3444 = vpack.c.b16 %v3236, %v3220
        %v3445 = vpack.c.b16 %v3237, %v3221
        %v3446 = vpack.c.b16 %v3238, %v3222
        %v3447 = vpack.c.b16 %v3239, %v3223
        %v3448 = vpack.c.b16 %v3240, %v3224
        %v3449 = vpack.c.b16 %v3241, %v3225
        %v3450 = vpack.c.b16 %v3242, %v3226
        %v3451 = vpack.c.b16 %v3243, %v3227
        %v3452 = vpack.c.b16 %v3244, %v3228
        %v3453 = vpack.c.b16 %v3245, %v3229
        %v3454 = vpack.c.b16 %v3262, %v3246
        %v3455 = vpack.c.b16 %v3263, %v3247
        %v3456 = vpack.c.b16 %v3264, %v3248
        %v3457 = vpack.c.b16 %v3265, %v3249
        %v3458 = vpack.c.b16 %v3266, %v3250
        %v3459 = vpack.c.b16 %v3267, %v3251
        %v3460 = vpack.c.b16 %v3268, %v3252
        %v3461 = vpack.c.b16 %v3269, %v3253
        %v3462 = vpack.c.b16 %v3270, %v3254
        %v3463 = vpack.c.b16 %v3271, %v3255
        %v3464 = vpack.c.b16 %v3272, %v3256
        %v3465 = vpack.c.b16 %v3273, %v3257
        %v3466 = vpack.c.b16 %v3274, %v3258
        %v3467 = vpack.c.b16 %v3275, %v3259
        %v3468 = vpack.c.b16 %v3276, %v3260
        %v3469 = vpack.c.b16 %v3277, %v3261
        %v3470 = vpack.c.b16 %v3294, %v3278
        %v3471 = vpack.c.b16 %v3295, %v3279
        %v3472 = vpack.c.b16 %v3296, %v3280
        %v3473 = vpack.c.b16 %v3297, %v3281
        %v3474 = vpack.c.b16 %v3298, %v3282
        %v3475 = vpack.c.b16 %v3299, %v3283
        %v3476 = vpack.c.b16 %v3300, %v3284
        %v3477 = vpack.c.b16 %v3301, %v3285
        %v3478 = vpack.c.b16 %v3302, %v3286
        %v3479 = vpack.c.b16 %v3303, %v3287
        %v3480 = vpack.c.b16 %v3304, %v3288
        %v3481 = vpack.c.b16 %v3305, %v3289
        %v3482 = vpack.c.b16 %v3306, %v3290
        %v3483 = vpack.c.b16 %v3307, %v3291
        %v3484 = vpack.c.b16 %v3308, %v3292
        %v3485 = vpack.c.b16 %v3309, %v3293
        %v3486 = vpack.c.b16 %v3326, %v3310
        %v3487 = vpack.c.b16 %v3327, %v3311
        %v3488 = vpack.c.b16 %v3328, %v3312
        %v3489 = vpack.c.b16 %v3329, %v3313
        %v3490 = vpack.c.b16 %v3330, %v3314
        %v3491 = vpack.c.b16 %v3331, %v3315
        %v3492 = vpack.c.b16 %v3332, %v3316
        %v3493 = vpack.c.b16 %v3333, %v3317
        %v3494 = vpack.c.b16 %v3334, %v3318
        %v3495 = vpack.c.b16 %v3335, %v3319
        %v3496 = vpack.c.b16 %v3336, %v3320
        %v3497 = vpack.c.b16 %v3337, %v3321
        %v3498 = vpack.c.b16 %v3338, %v3322
        %v3499 = vpack.c.b16 %v3339, %v3323
        %v3500 = vpack.c.b16 %v3340, %v3324
        %v3501 = vpack.c.b16 %v3341, %v3325
        %v3502 = vpack.c.b16 %v3358, %v3342
        %v3503 = vpack.c.b16 %v3359, %v3343
        %v3504 = vpack.c.b16 %v3360, %v3344
        %v3505 = vpack.c.b16 %v3361, %v3345
        %v3506 = vpack.c.b16 %v3362, %v3346
        %v3507 = vpack.c.b16 %v3363, %v3347
        %v3508 = vpack.c.b16 %v3364, %v3348
        %v3509 = vpack.c.b16 %v3365, %v3349
        %v3510 = vpack.c.b16 %v3366, %v3350
        %v3511 = vpack.c.b16 %v3367, %v3351
        %v3512 = vpack.c.b16 %v3368, %v3352
        %v3513 = vpack.c.b16 %v3369, %v3353
        %v3514 = vpack.c.b16 %v3370, %v3354
        %v3515 = vpack.c.b16 %v3371, %v3355
        %v3516 = vpack.c.b16 %v3372, %v3356
        %v3517 = vpack.c.b16 %v3373, %v3357
        %v3518 = vpack.c.b16 %v3390, %v3374
        %v3519 = vpack.c.b16 %v3391, %v3375
        %v3520 = vpack.c.b16 %v3392, %v3376
        %v3521 = vpack.c.b16 %v3393, %v3377
        %v3522 = vpack.c.b16 %v3394, %v3378
        %v3523 = vpack.c.b16 %v3395, %v3379
        %v3524 = vpack.c.b16 %v3396, %v3380
        %v3525 = vpack.c.b16 %v3397, %v3381
        %v3526 = vpack.c.b16 %v3398, %v3382
        %v3527 = vpack.c.b16 %v3399, %v3383
        %v3528 = vpack.c.b16 %v3400, %v3384
        %v3529 = vpack.c.b16 %v3401, %v3385
        %v3530 = vpack.c.b16 %v3402, %v3386
        %v3531 = vpack.c.b16 %v3403, %v3387
        %v3532 = vpack.c.b16 %v3404, %v3388
        %v3533 = vpack.c.b16 %v3405, %v3389
        %3662 = vmatprep.subr.bf16.mxu0 0
        %3663 = vmatpush1.bf16.msra.mxu0 %v2677
        %3664 = vmatprep.subr.bf16.mxu0 0
        %3665 = vmatpush1.bf16.msra.mxu0 %v2676
        %3666 = vmatprep.subr.bf16.mxu0 0
        %3667 = vmatpush1.bf16.msra.mxu0 %v2675
        %3668 = vmatprep.subr.bf16.mxu0 0
        %3669 = vmatpush1.bf16.msra.mxu0 %v2674
        %3670 = vmatprep.subr.bf16.mxu0 0
        %3671 = vmatpush1.bf16.msra.mxu0 %v2673
        %3672 = vmatprep.subr.bf16.mxu0 0
        %3673 = vmatpush1.bf16.msra.mxu0 %v2672
        %3674 = vmatprep.subr.bf16.mxu0 0
        %3675 = vmatpush1.bf16.msra.mxu0 %v2671
        %3676 = vmatprep.subr.bf16.mxu0 0
        %3677 = vmatpush1.bf16.msra.mxu0 %v2670
        %3678 = vmatprep.subr.bf16.mxu0 0
        %3679 = vmatpush2.bf16.msra.mxu0 %v2685
        %3680 = vmatprep.subr.bf16.mxu0 0
        %3681 = vmatpush2.bf16.msra.mxu0 %v2684
        %3682 = vmatprep.subr.bf16.mxu0 0
        %3683 = vmatpush2.bf16.msra.mxu0 %v2683
        %3684 = vmatprep.subr.bf16.mxu0 0
        %3685 = vmatpush2.bf16.msra.mxu0 %v2682
        %3686 = vmatprep.subr.bf16.mxu0 0
        %3687 = vmatpush2.bf16.msra.mxu0 %v2681
        %3688 = vmatprep.subr.bf16.mxu0 0
        %3689 = vmatpush2.bf16.msra.mxu0 %v2680
        %3690 = vmatprep.subr.bf16.mxu0 0
        %3691 = vmatpush2.bf16.msra.mxu0 %v2679
        %3692 = vmatprep.subr.bf16.mxu0 0
        %3693 = vmatpush2.bf16.msra.mxu0 %v2678
        %3694 = vmatprep.mubr.bf16.mxu0 %v3407
        %3695 = vmatmul.mubr.bf16.gmra.mxu0 %v3406
        %v3696 = vpop.f32.mrf.mxu0
        %v3697 = vadd.f32 %v2945, %v3696
        %v3698 = vpop.f32.mrf.mxu0
        %v3699 = vpop.f32.mrf.mxu0
        %v3700 = vadd.f32 %v2950, %v3699
        %v3701 = vpop.f32.mrf.mxu0
        %3702 = vmatprep.mubr.bf16.mxu0 %v3423
        %3703 = vmatmul.mubr.bf16.gmra.mxu0 %v3422
        %v3704 = vpop.f32.mrf.mxu0
        %v3705 = vadd.f32 %v2955, %v3704
        %v3706 = vpop.f32.mrf.mxu0
        %v3707 = vpop.f32.mrf.mxu0
        %v3708 = vadd.f32 %v2960, %v3707
        %v3709 = vpop.f32.mrf.mxu0
        %3710 = vmatprep.mubr.bf16.mxu0 %v3439
        %3711 = vmatmul.mubr.bf16.gmra.mxu0 %v3438
        %v3712 = vpop.f32.mrf.mxu0
        %v3713 = vadd.f32 %v2965, %v3712
        %v3714 = vpop.f32.mrf.mxu0
        %v3715 = vpop.f32.mrf.mxu0
        %v3716 = vadd.f32 %v2970, %v3715
        %v3717 = vpop.f32.mrf.mxu0
        %3718 = vmatprep.mubr.bf16.mxu0 %v3455
        %3719 = vmatmul.mubr.bf16.gmra.mxu0 %v3454
        %v3720 = vpop.f32.mrf.mxu0
        %v3721 = vadd.f32 %v2975, %v3720
        %v3722 = vpop.f32.mrf.mxu0
        %v3723 = vpop.f32.mrf.mxu0
        %v3724 = vadd.f32 %v2980, %v3723
        %v3725 = vpop.f32.mrf.mxu0
        %3726 = vmatprep.mubr.bf16.mxu0 %v3471
        %3727 = vmatmul.mubr.bf16.gmra.mxu0 %v3470
        %v3728 = vpop.f32.mrf.mxu0
        %v3729 = vadd.f32 %v2985, %v3728
        %v3730 = vpop.f32.mrf.mxu0
        %v3731 = vpop.f32.mrf.mxu0
        %v3732 = vadd.f32 %v2990, %v3731
        %v3733 = vpop.f32.mrf.mxu0
        %3734 = vmatprep.mubr.bf16.mxu0 %v3487
        %3735 = vmatmul.mubr.bf16.gmra.mxu0 %v3486
        %v3736 = vpop.f32.mrf.mxu0
        %v3737 = vadd.f32 %v2995, %v3736
        %v3738 = vpop.f32.mrf.mxu0
        %v3739 = vpop.f32.mrf.mxu0
        %v3740 = vadd.f32 %v3000, %v3739
        %v3741 = vpop.f32.mrf.mxu0
        %3742 = vmatprep.mubr.bf16.mxu0 %v3503
        %3743 = vmatmul.mubr.bf16.gmra.mxu0 %v3502
        %v3744 = vpop.f32.mrf.mxu0
        %v3745 = vadd.f32 %v3005, %v3744
        %v3746 = vpop.f32.mrf.mxu0
        %v3747 = vpop.f32.mrf.mxu0
        %v3748 = vadd.f32 %v3010, %v3747
        %v3749 = vpop.f32.mrf.mxu0
        %3750 = vmatprep.mubr.bf16.mxu0 %v3519
        %3751 = vmatmul.mubr.bf16.gmra.mxu0 %v3518
        %v3752 = vpop.f32.mrf.mxu0
        %v3753 = vadd.f32 %v3015, %v3752
        %v3754 = vpop.f32.mrf.mxu0
        %v3755 = vpop.f32.mrf.mxu0
        %v3756 = vadd.f32 %v3020, %v3755
        %v3757 = vpop.f32.mrf.mxu0
        %3758 = vdwg.mxu0
        %3759 = vmatprep.subr.bf16.mxu0 0
        %3760 = vmatpush1.bf16.msra.mxu0 %v2693
        %3761 = vmatprep.subr.bf16.mxu0 0
        %3762 = vmatpush1.bf16.msra.mxu0 %v2692
        %3763 = vmatprep.subr.bf16.mxu0 0
        %3764 = vmatpush1.bf16.msra.mxu0 %v2691
        %3765 = vmatprep.subr.bf16.mxu0 0
        %3766 = vmatpush1.bf16.msra.mxu0 %v2690
        %3767 = vmatprep.subr.bf16.mxu0 0
        %3768 = vmatpush1.bf16.msra.mxu0 %v2689
        %3769 = vmatprep.subr.bf16.mxu0 0
        %3770 = vmatpush1.bf16.msra.mxu0 %v2688
        %3771 = vmatprep.subr.bf16.mxu0 0
        %3772 = vmatpush1.bf16.msra.mxu0 %v2687
        %3773 = vmatprep.subr.bf16.mxu0 0
        %3774 = vmatpush1.bf16.msra.mxu0 %v2686
        %3775 = vmatprep.subr.bf16.mxu0 0
        %3776 = vmatpush2.bf16.msra.mxu0 %v2701
        %3777 = vmatprep.subr.bf16.mxu0 0
        %3778 = vmatpush2.bf16.msra.mxu0 %v2700
        %3779 = vmatprep.subr.bf16.mxu0 0
        %3780 = vmatpush2.bf16.msra.mxu0 %v2699
        %3781 = vmatprep.subr.bf16.mxu0 0
        %3782 = vmatpush2.bf16.msra.mxu0 %v2698
        %3783 = vmatprep.subr.bf16.mxu0 0
        %3784 = vmatpush2.bf16.msra.mxu0 %v2697
        %3785 = vmatprep.subr.bf16.mxu0 0
        %3786 = vmatpush2.bf16.msra.mxu0 %v2696
        %3787 = vmatprep.subr.bf16.mxu0 0
        %3788 = vmatpush2.bf16.msra.mxu0 %v2695
        %3789 = vmatprep.subr.bf16.mxu0 0
        %3790 = vmatpush2.bf16.msra.mxu0 %v2694
        %3791 = vmatprep.mubr.bf16.mxu0 %v3409
        %3792 = vmatmul.mubr.bf16.gmra.mxu0 %v3408
        %v3793 = vpop.f32.mrf.mxu0
        %v3794 = vadd.f32 %v3697, %v3793
        %v3795 = vpop.f32.mrf.mxu0
        %v3796 = vpop.f32.mrf.mxu0
        %v3797 = vadd.f32 %v3700, %v3796
        %v3798 = vpop.f32.mrf.mxu0
        %3799 = vmatprep.mubr.bf16.mxu0 %v3425
        %3800 = vmatmul.mubr.bf16.gmra.mxu0 %v3424
        %v3801 = vpop.f32.mrf.mxu0
        %v3802 = vadd.f32 %v3705, %v3801
        %v3803 = vpop.f32.mrf.mxu0
        %v3804 = vpop.f32.mrf.mxu0
        %v3805 = vadd.f32 %v3708, %v3804
        %v3806 = vpop.f32.mrf.mxu0
        %3807 = vmatprep.mubr.bf16.mxu0 %v3441
        %3808 = vmatmul.mubr.bf16.gmra.mxu0 %v3440
        %v3809 = vpop.f32.mrf.mxu0
        %v3810 = vadd.f32 %v3713, %v3809
        %v3811 = vpop.f32.mrf.mxu0
        %v3812 = vpop.f32.mrf.mxu0
        %v3813 = vadd.f32 %v3716, %v3812
        %v3814 = vpop.f32.mrf.mxu0
        %3815 = vmatprep.mubr.bf16.mxu0 %v3457
        %3816 = vmatmul.mubr.bf16.gmra.mxu0 %v3456
        %v3817 = vpop.f32.mrf.mxu0
        %v3818 = vadd.f32 %v3721, %v3817
        %v3819 = vpop.f32.mrf.mxu0
        %v3820 = vpop.f32.mrf.mxu0
        %v3821 = vadd.f32 %v3724, %v3820
        %v3822 = vpop.f32.mrf.mxu0
        %3823 = vmatprep.mubr.bf16.mxu0 %v3473
        %3824 = vmatmul.mubr.bf16.gmra.mxu0 %v3472
        %v3825 = vpop.f32.mrf.mxu0
        %v3826 = vadd.f32 %v3729, %v3825
        %v3827 = vpop.f32.mrf.mxu0
        %v3828 = vpop.f32.mrf.mxu0
        %v3829 = vadd.f32 %v3732, %v3828
        %v3830 = vpop.f32.mrf.mxu0
        %3831 = vmatprep.mubr.bf16.mxu0 %v3489
        %3832 = vmatmul.mubr.bf16.gmra.mxu0 %v3488
        %v3833 = vpop.f32.mrf.mxu0
        %v3834 = vadd.f32 %v3737, %v3833
        %v3835 = vpop.f32.mrf.mxu0
        %v3836 = vpop.f32.mrf.mxu0
        %v3837 = vadd.f32 %v3740, %v3836
        %v3838 = vpop.f32.mrf.mxu0
        %3839 = vmatprep.mubr.bf16.mxu0 %v3505
        %3840 = vmatmul.mubr.bf16.gmra.mxu0 %v3504
        %v3841 = vpop.f32.mrf.mxu0
        %v3842 = vadd.f32 %v3745, %v3841
        %v3843 = vpop.f32.mrf.mxu0
        %v3844 = vpop.f32.mrf.mxu0
        %v3845 = vadd.f32 %v3748, %v3844
        %v3846 = vpop.f32.mrf.mxu0
        %3847 = vmatprep.mubr.bf16.mxu0 %v3521
        %3848 = vmatmul.mubr.bf16.gmra.mxu0 %v3520
        %v3849 = vpop.f32.mrf.mxu0
        %v3850 = vadd.f32 %v3753, %v3849
        %v3851 = vpop.f32.mrf.mxu0
        %v3852 = vpop.f32.mrf.mxu0
        %v3853 = vadd.f32 %v3756, %v3852
        %v3854 = vpop.f32.mrf.mxu0
        %3855 = vdwg.mxu0
        %3856 = vmatprep.subr.bf16.mxu0 0
        %3857 = vmatpush1.bf16.msra.mxu0 %v2709
        %3858 = vmatprep.subr.bf16.mxu0 0
        %3859 = vmatpush1.bf16.msra.mxu0 %v2708
        %3860 = vmatprep.subr.bf16.mxu0 0
        %3861 = vmatpush1.bf16.msra.mxu0 %v2707
        %3862 = vmatprep.subr.bf16.mxu0 0
        %3863 = vmatpush1.bf16.msra.mxu0 %v2706
        %3864 = vmatprep.subr.bf16.mxu0 0
        %3865 = vmatpush1.bf16.msra.mxu0 %v2705
        %3866 = vmatprep.subr.bf16.mxu0 0
        %3867 = vmatpush1.bf16.msra.mxu0 %v2704
        %3868 = vmatprep.subr.bf16.mxu0 0
        %3869 = vmatpush1.bf16.msra.mxu0 %v2703
        %3870 = vmatprep.subr.bf16.mxu0 0
        %3871 = vmatpush1.bf16.msra.mxu0 %v2702
        %3872 = vmatprep.subr.bf16.mxu0 0
        %3873 = vmatpush2.bf16.msra.mxu0 %v2717
        %3874 = vmatprep.subr.bf16.mxu0 0
        %3875 = vmatpush2.bf16.msra.mxu0 %v2716
        %3876 = vmatprep.subr.bf16.mxu0 0
        %3877 = vmatpush2.bf16.msra.mxu0 %v2715
        %3878 = vmatprep.subr.bf16.mxu0 0
        %3879 = vmatpush2.bf16.msra.mxu0 %v2714
        %3880 = vmatprep.subr.bf16.mxu0 0
        %3881 = vmatpush2.bf16.msra.mxu0 %v2713
        %3882 = vmatprep.subr.bf16.mxu0 0
        %3883 = vmatpush2.bf16.msra.mxu0 %v2712
        %3884 = vmatprep.subr.bf16.mxu0 0
        %3885 = vmatpush2.bf16.msra.mxu0 %v2711
        %3886 = vmatprep.subr.bf16.mxu0 0
        %3887 = vmatpush2.bf16.msra.mxu0 %v2710
        %3888 = vmatprep.mubr.bf16.mxu0 %v3411
        %3889 = vmatmul.mubr.bf16.gmra.mxu0 %v3410
        %v3890 = vpop.f32.mrf.mxu0
        %v3891 = vadd.f32 %v3794, %v3890
        %v3892 = vpop.f32.mrf.mxu0
        %v3893 = vpop.f32.mrf.mxu0
        %v3894 = vadd.f32 %v3797, %v3893
        %v3895 = vpop.f32.mrf.mxu0
        %3896 = vmatprep.mubr.bf16.mxu0 %v3427
        %3897 = vmatmul.mubr.bf16.gmra.mxu0 %v3426
        %v3898 = vpop.f32.mrf.mxu0
        %v3899 = vadd.f32 %v3802, %v3898
        %v3900 = vpop.f32.mrf.mxu0
        %v3901 = vpop.f32.mrf.mxu0
        %v3902 = vadd.f32 %v3805, %v3901
        %v3903 = vpop.f32.mrf.mxu0
        %3904 = vmatprep.mubr.bf16.mxu0 %v3443
        %3905 = vmatmul.mubr.bf16.gmra.mxu0 %v3442
        %v3906 = vpop.f32.mrf.mxu0
        %v3907 = vadd.f32 %v3810, %v3906
        %v3908 = vpop.f32.mrf.mxu0
        %v3909 = vpop.f32.mrf.mxu0
        %v3910 = vadd.f32 %v3813, %v3909
        %v3911 = vpop.f32.mrf.mxu0
        %3912 = vmatprep.mubr.bf16.mxu0 %v3459
        %3913 = vmatmul.mubr.bf16.gmra.mxu0 %v3458
        %v3914 = vpop.f32.mrf.mxu0
        %v3915 = vadd.f32 %v3818, %v3914
        %v3916 = vpop.f32.mrf.mxu0
        %v3917 = vpop.f32.mrf.mxu0
        %v3918 = vadd.f32 %v3821, %v3917
        %v3919 = vpop.f32.mrf.mxu0
        %3920 = vmatprep.mubr.bf16.mxu0 %v3475
        %3921 = vmatmul.mubr.bf16.gmra.mxu0 %v3474
        %v3922 = vpop.f32.mrf.mxu0
        %v3923 = vadd.f32 %v3826, %v3922
        %v3924 = vpop.f32.mrf.mxu0
        %v3925 = vpop.f32.mrf.mxu0
        %v3926 = vadd.f32 %v3829, %v3925
        %v3927 = vpop.f32.mrf.mxu0
        %3928 = vmatprep.mubr.bf16.mxu0 %v3491
        %3929 = vmatmul.mubr.bf16.gmra.mxu0 %v3490
        %v3930 = vpop.f32.mrf.mxu0
        %v3931 = vadd.f32 %v3834, %v3930
        %v3932 = vpop.f32.mrf.mxu0
        %v3933 = vpop.f32.mrf.mxu0
        %v3934 = vadd.f32 %v3837, %v3933
        %v3935 = vpop.f32.mrf.mxu0
        %3936 = vmatprep.mubr.bf16.mxu0 %v3507
        %3937 = vmatmul.mubr.bf16.gmra.mxu0 %v3506
        %v3938 = vpop.f32.mrf.mxu0
        %v3939 = vadd.f32 %v3842, %v3938
        %v3940 = vpop.f32.mrf.mxu0
        %v3941 = vpop.f32.mrf.mxu0
        %v3942 = vadd.f32 %v3845, %v3941
        %v3943 = vpop.f32.mrf.mxu0
        %3944 = vmatprep.mubr.bf16.mxu0 %v3523
        %3945 = vmatmul.mubr.bf16.gmra.mxu0 %v3522
        %v3946 = vpop.f32.mrf.mxu0
        %v3947 = vadd.f32 %v3850, %v3946
        %v3948 = vpop.f32.mrf.mxu0
        %v3949 = vpop.f32.mrf.mxu0
        %v3950 = vadd.f32 %v3853, %v3949
        %v3951 = vpop.f32.mrf.mxu0
        %3952 = vdwg.mxu0
        %3953 = vmatprep.subr.bf16.mxu0 0
        %3954 = vmatpush1.bf16.msra.mxu0 %v2725
        %3955 = vmatprep.subr.bf16.mxu0 0
        %3956 = vmatpush1.bf16.msra.mxu0 %v2724
        %3957 = vmatprep.subr.bf16.mxu0 0
        %3958 = vmatpush1.bf16.msra.mxu0 %v2723
        %3959 = vmatprep.subr.bf16.mxu0 0
        %3960 = vmatpush1.bf16.msra.mxu0 %v2722
        %3961 = vmatprep.subr.bf16.mxu0 0
        %3962 = vmatpush1.bf16.msra.mxu0 %v2721
        %3963 = vmatprep.subr.bf16.mxu0 0
        %3964 = vmatpush1.bf16.msra.mxu0 %v2720
        %3965 = vmatprep.subr.bf16.mxu0 0
        %3966 = vmatpush1.bf16.msra.mxu0 %v2719
        %3967 = vmatprep.subr.bf16.mxu0 0
        %3968 = vmatpush1.bf16.msra.mxu0 %v2718
        %3969 = vmatprep.subr.bf16.mxu0 0
        %3970 = vmatpush2.bf16.msra.mxu0 %v2733
        %3971 = vmatprep.subr.bf16.mxu0 0
        %3972 = vmatpush2.bf16.msra.mxu0 %v2732
        %3973 = vmatprep.subr.bf16.mxu0 0
        %3974 = vmatpush2.bf16.msra.mxu0 %v2731
        %3975 = vmatprep.subr.bf16.mxu0 0
        %3976 = vmatpush2.bf16.msra.mxu0 %v2730
        %3977 = vmatprep.subr.bf16.mxu0 0
        %3978 = vmatpush2.bf16.msra.mxu0 %v2729
        %3979 = vmatprep.subr.bf16.mxu0 0
        %3980 = vmatpush2.bf16.msra.mxu0 %v2728
        %3981 = vmatprep.subr.bf16.mxu0 0
        %3982 = vmatpush2.bf16.msra.mxu0 %v2727
        %3983 = vmatprep.subr.bf16.mxu0 0
        %3984 = vmatpush2.bf16.msra.mxu0 %v2726
        %3985 = vmatprep.mubr.bf16.mxu0 %v3413
        %3986 = vmatmul.mubr.bf16.gmra.mxu0 %v3412
        %v3987 = vpop.f32.mrf.mxu0
        %v3988 = vadd.f32 %v3891, %v3987
        %v3989 = vpop.f32.mrf.mxu0
        %v3990 = vpop.f32.mrf.mxu0
        %v3991 = vadd.f32 %v3894, %v3990
        %v3992 = vpop.f32.mrf.mxu0
        %3993 = vmatprep.mubr.bf16.mxu0 %v3429
        %3994 = vmatmul.mubr.bf16.gmra.mxu0 %v3428
        %v3995 = vpop.f32.mrf.mxu0
        %v3996 = vadd.f32 %v3899, %v3995
        %v3997 = vpop.f32.mrf.mxu0
        %v3998 = vpop.f32.mrf.mxu0
        %v3999 = vadd.f32 %v3902, %v3998
        %v4000 = vpop.f32.mrf.mxu0
        %4001 = vmatprep.mubr.bf16.mxu0 %v3445
        %4002 = vmatmul.mubr.bf16.gmra.mxu0 %v3444
        %v4003 = vpop.f32.mrf.mxu0
        %v4004 = vadd.f32 %v3907, %v4003
        %v4005 = vpop.f32.mrf.mxu0
        %v4006 = vpop.f32.mrf.mxu0
        %v4007 = vadd.f32 %v3910, %v4006
        %v4008 = vpop.f32.mrf.mxu0
        %4009 = vmatprep.mubr.bf16.mxu0 %v3461
        %4010 = vmatmul.mubr.bf16.gmra.mxu0 %v3460
        %v4011 = vpop.f32.mrf.mxu0
        %v4012 = vadd.f32 %v3915, %v4011
        %v4013 = vpop.f32.mrf.mxu0
        %v4014 = vpop.f32.mrf.mxu0
        %v4015 = vadd.f32 %v3918, %v4014
        %v4016 = vpop.f32.mrf.mxu0
        %4017 = vmatprep.mubr.bf16.mxu0 %v3477
        %4018 = vmatmul.mubr.bf16.gmra.mxu0 %v3476
        %v4019 = vpop.f32.mrf.mxu0
        %v4020 = vadd.f32 %v3923, %v4019
        %v4021 = vpop.f32.mrf.mxu0
        %v4022 = vpop.f32.mrf.mxu0
        %v4023 = vadd.f32 %v3926, %v4022
        %v4024 = vpop.f32.mrf.mxu0
        %4025 = vmatprep.mubr.bf16.mxu0 %v3493
        %4026 = vmatmul.mubr.bf16.gmra.mxu0 %v3492
        %v4027 = vpop.f32.mrf.mxu0
        %v4028 = vadd.f32 %v3931, %v4027
        %v4029 = vpop.f32.mrf.mxu0
        %v4030 = vpop.f32.mrf.mxu0
        %v4031 = vadd.f32 %v3934, %v4030
        %v4032 = vpop.f32.mrf.mxu0
        %4033 = vmatprep.mubr.bf16.mxu0 %v3509
        %4034 = vmatmul.mubr.bf16.gmra.mxu0 %v3508
        %v4035 = vpop.f32.mrf.mxu0
        %v4036 = vadd.f32 %v3939, %v4035
        %v4037 = vpop.f32.mrf.mxu0
        %v4038 = vpop.f32.mrf.mxu0
        %v4039 = vadd.f32 %v3942, %v4038
        %v4040 = vpop.f32.mrf.mxu0
        %4041 = vmatprep.mubr.bf16.mxu0 %v3525
        %4042 = vmatmul.mubr.bf16.gmra.mxu0 %v3524
        %v4043 = vpop.f32.mrf.mxu0
        %v4044 = vadd.f32 %v3947, %v4043
        %v4045 = vpop.f32.mrf.mxu0
        %v4046 = vpop.f32.mrf.mxu0
        %v4047 = vadd.f32 %v3950, %v4046
        %v4048 = vpop.f32.mrf.mxu0
        %4049 = vdwg.mxu0
        %4050 = vmatprep.subr.bf16.mxu0 0
        %4051 = vmatpush1.bf16.msra.mxu0 %v2741
        %4052 = vmatprep.subr.bf16.mxu0 0
        %4053 = vmatpush1.bf16.msra.mxu0 %v2740
        %4054 = vmatprep.subr.bf16.mxu0 0
        %4055 = vmatpush1.bf16.msra.mxu0 %v2739
        %4056 = vmatprep.subr.bf16.mxu0 0
        %4057 = vmatpush1.bf16.msra.mxu0 %v2738
        %4058 = vmatprep.subr.bf16.mxu0 0
        %4059 = vmatpush1.bf16.msra.mxu0 %v2737
        %4060 = vmatprep.subr.bf16.mxu0 0
        %4061 = vmatpush1.bf16.msra.mxu0 %v2736
        %4062 = vmatprep.subr.bf16.mxu0 0
        %4063 = vmatpush1.bf16.msra.mxu0 %v2735
        %4064 = vmatprep.subr.bf16.mxu0 0
        %4065 = vmatpush1.bf16.msra.mxu0 %v2734
        %4066 = vmatprep.subr.bf16.mxu0 0
        %4067 = vmatpush2.bf16.msra.mxu0 %v2749
        %4068 = vmatprep.subr.bf16.mxu0 0
        %4069 = vmatpush2.bf16.msra.mxu0 %v2748
        %4070 = vmatprep.subr.bf16.mxu0 0
        %4071 = vmatpush2.bf16.msra.mxu0 %v2747
        %4072 = vmatprep.subr.bf16.mxu0 0
        %4073 = vmatpush2.bf16.msra.mxu0 %v2746
        %4074 = vmatprep.subr.bf16.mxu0 0
        %4075 = vmatpush2.bf16.msra.mxu0 %v2745
        %4076 = vmatprep.subr.bf16.mxu0 0
        %4077 = vmatpush2.bf16.msra.mxu0 %v2744
        %4078 = vmatprep.subr.bf16.mxu0 0
        %4079 = vmatpush2.bf16.msra.mxu0 %v2743
        %4080 = vmatprep.subr.bf16.mxu0 0
        %4081 = vmatpush2.bf16.msra.mxu0 %v2742
        %4082 = vmatprep.mubr.bf16.mxu0 %v3415
        %4083 = vmatmul.mubr.bf16.gmra.mxu0 %v3414
        %v4084 = vpop.f32.mrf.mxu0
        %v4085 = vadd.f32 %v3988, %v4084
        %v4086 = vpop.f32.mrf.mxu0
        %v4087 = vpop.f32.mrf.mxu0
        %v4088 = vadd.f32 %v3991, %v4087
        %v4089 = vpop.f32.mrf.mxu0
        %4090 = vmatprep.mubr.bf16.mxu0 %v3431
        %4091 = vmatmul.mubr.bf16.gmra.mxu0 %v3430
        %v4092 = vpop.f32.mrf.mxu0
        %v4093 = vadd.f32 %v3996, %v4092
        %v4094 = vpop.f32.mrf.mxu0
        %v4095 = vpop.f32.mrf.mxu0
        %v4096 = vadd.f32 %v3999, %v4095
        %v4097 = vpop.f32.mrf.mxu0
        %4098 = vmatprep.mubr.bf16.mxu0 %v3447
        %4099 = vmatmul.mubr.bf16.gmra.mxu0 %v3446
        %v4100 = vpop.f32.mrf.mxu0
        %v4101 = vadd.f32 %v4004, %v4100
        %v4102 = vpop.f32.mrf.mxu0
        %v4103 = vpop.f32.mrf.mxu0
        %v4104 = vadd.f32 %v4007, %v4103
        %v4105 = vpop.f32.mrf.mxu0
        %4106 = vmatprep.mubr.bf16.mxu0 %v3463
        %4107 = vmatmul.mubr.bf16.gmra.mxu0 %v3462
        %v4108 = vpop.f32.mrf.mxu0
        %v4109 = vadd.f32 %v4012, %v4108
        %v4110 = vpop.f32.mrf.mxu0
        %v4111 = vpop.f32.mrf.mxu0
        %v4112 = vadd.f32 %v4015, %v4111
        %v4113 = vpop.f32.mrf.mxu0
        %4114 = vmatprep.mubr.bf16.mxu0 %v3479
        %4115 = vmatmul.mubr.bf16.gmra.mxu0 %v3478
        %v4116 = vpop.f32.mrf.mxu0
        %v4117 = vadd.f32 %v4020, %v4116
        %v4118 = vpop.f32.mrf.mxu0
        %v4119 = vpop.f32.mrf.mxu0
        %v4120 = vadd.f32 %v4023, %v4119
        %v4121 = vpop.f32.mrf.mxu0
        %4122 = vmatprep.mubr.bf16.mxu0 %v3495
        %4123 = vmatmul.mubr.bf16.gmra.mxu0 %v3494
        %v4124 = vpop.f32.mrf.mxu0
        %v4125 = vadd.f32 %v4028, %v4124
        %v4126 = vpop.f32.mrf.mxu0
        %v4127 = vpop.f32.mrf.mxu0
        %v4128 = vadd.f32 %v4031, %v4127
        %v4129 = vpop.f32.mrf.mxu0
        %4130 = vmatprep.mubr.bf16.mxu0 %v3511
        %4131 = vmatmul.mubr.bf16.gmra.mxu0 %v3510
        %v4132 = vpop.f32.mrf.mxu0
        %v4133 = vadd.f32 %v4036, %v4132
        %v4134 = vpop.f32.mrf.mxu0
        %v4135 = vpop.f32.mrf.mxu0
        %v4136 = vadd.f32 %v4039, %v4135
        %v4137 = vpop.f32.mrf.mxu0
        %4138 = vmatprep.mubr.bf16.mxu0 %v3527
        %4139 = vmatmul.mubr.bf16.gmra.mxu0 %v3526
        %v4140 = vpop.f32.mrf.mxu0
        %v4141 = vadd.f32 %v4044, %v4140
        %v4142 = vpop.f32.mrf.mxu0
        %v4143 = vpop.f32.mrf.mxu0
        %v4144 = vadd.f32 %v4047, %v4143
        %v4145 = vpop.f32.mrf.mxu0
        %4146 = vdwg.mxu0
        %4147 = vmatprep.subr.bf16.mxu0 0
        %4148 = vmatpush1.bf16.msra.mxu0 %v2757
        %4149 = vmatprep.subr.bf16.mxu0 0
        %4150 = vmatpush1.bf16.msra.mxu0 %v2756
        %4151 = vmatprep.subr.bf16.mxu0 0
        %4152 = vmatpush1.bf16.msra.mxu0 %v2755
        %4153 = vmatprep.subr.bf16.mxu0 0
        %4154 = vmatpush1.bf16.msra.mxu0 %v2754
        %4155 = vmatprep.subr.bf16.mxu0 0
        %4156 = vmatpush1.bf16.msra.mxu0 %v2753
        %4157 = vmatprep.subr.bf16.mxu0 0
        %4158 = vmatpush1.bf16.msra.mxu0 %v2752
        %4159 = vmatprep.subr.bf16.mxu0 0
        %4160 = vmatpush1.bf16.msra.mxu0 %v2751
        %4161 = vmatprep.subr.bf16.mxu0 0
        %4162 = vmatpush1.bf16.msra.mxu0 %v2750
        %4163 = vmatprep.subr.bf16.mxu0 0
        %4164 = vmatpush2.bf16.msra.mxu0 %v2765
        %4165 = vmatprep.subr.bf16.mxu0 0
        %4166 = vmatpush2.bf16.msra.mxu0 %v2764
        %4167 = vmatprep.subr.bf16.mxu0 0
        %4168 = vmatpush2.bf16.msra.mxu0 %v2763
        %4169 = vmatprep.subr.bf16.mxu0 0
        %4170 = vmatpush2.bf16.msra.mxu0 %v2762
        %4171 = vmatprep.subr.bf16.mxu0 0
        %4172 = vmatpush2.bf16.msra.mxu0 %v2761
        %4173 = vmatprep.subr.bf16.mxu0 0
        %4174 = vmatpush2.bf16.msra.mxu0 %v2760
        %4175 = vmatprep.subr.bf16.mxu0 0
        %4176 = vmatpush2.bf16.msra.mxu0 %v2759
        %4177 = vmatprep.subr.bf16.mxu0 0
        %4178 = vmatpush2.bf16.msra.mxu0 %v2758
        %4179 = vmatprep.mubr.bf16.mxu0 %v3417
        %4180 = vmatmul.mubr.bf16.gmra.mxu0 %v3416
        %v4181 = vpop.f32.mrf.mxu0
        %v4182 = vadd.f32 %v4085, %v4181
        %v4183 = vpop.f32.mrf.mxu0
        %v4184 = vpop.f32.mrf.mxu0
        %v4185 = vadd.f32 %v4088, %v4184
        %v4186 = vpop.f32.mrf.mxu0
        %4187 = vmatprep.mubr.bf16.mxu0 %v3433
        %4188 = vmatmul.mubr.bf16.gmra.mxu0 %v3432
        %v4189 = vpop.f32.mrf.mxu0
        %v4190 = vadd.f32 %v4093, %v4189
        %v4191 = vpop.f32.mrf.mxu0
        %v4192 = vpop.f32.mrf.mxu0
        %v4193 = vadd.f32 %v4096, %v4192
        %v4194 = vpop.f32.mrf.mxu0
        %4195 = vmatprep.mubr.bf16.mxu0 %v3449
        %4196 = vmatmul.mubr.bf16.gmra.mxu0 %v3448
        %v4197 = vpop.f32.mrf.mxu0
        %v4198 = vadd.f32 %v4101, %v4197
        %v4199 = vpop.f32.mrf.mxu0
        %v4200 = vpop.f32.mrf.mxu0
        %v4201 = vadd.f32 %v4104, %v4200
        %v4202 = vpop.f32.mrf.mxu0
        %4203 = vmatprep.mubr.bf16.mxu0 %v3465
        %4204 = vmatmul.mubr.bf16.gmra.mxu0 %v3464
        %v4205 = vpop.f32.mrf.mxu0
        %v4206 = vadd.f32 %v4109, %v4205
        %v4207 = vpop.f32.mrf.mxu0
        %v4208 = vpop.f32.mrf.mxu0
        %v4209 = vadd.f32 %v4112, %v4208
        %v4210 = vpop.f32.mrf.mxu0
        %4211 = vmatprep.mubr.bf16.mxu0 %v3481
        %4212 = vmatmul.mubr.bf16.gmra.mxu0 %v3480
        %v4213 = vpop.f32.mrf.mxu0
        %v4214 = vadd.f32 %v4117, %v4213
        %v4215 = vpop.f32.mrf.mxu0
        %v4216 = vpop.f32.mrf.mxu0
        %v4217 = vadd.f32 %v4120, %v4216
        %v4218 = vpop.f32.mrf.mxu0
        %4219 = vmatprep.mubr.bf16.mxu0 %v3497
        %4220 = vmatmul.mubr.bf16.gmra.mxu0 %v3496
        %v4221 = vpop.f32.mrf.mxu0
        %v4222 = vadd.f32 %v4125, %v4221
        %v4223 = vpop.f32.mrf.mxu0
        %v4224 = vpop.f32.mrf.mxu0
        %v4225 = vadd.f32 %v4128, %v4224
        %v4226 = vpop.f32.mrf.mxu0
        %4227 = vmatprep.mubr.bf16.mxu0 %v3513
        %4228 = vmatmul.mubr.bf16.gmra.mxu0 %v3512
        %v4229 = vpop.f32.mrf.mxu0
        %v4230 = vadd.f32 %v4133, %v4229
        %v4231 = vpop.f32.mrf.mxu0
        %v4232 = vpop.f32.mrf.mxu0
        %v4233 = vadd.f32 %v4136, %v4232
        %v4234 = vpop.f32.mrf.mxu0
        %4235 = vmatprep.mubr.bf16.mxu0 %v3529
        %4236 = vmatmul.mubr.bf16.gmra.mxu0 %v3528
        %v4237 = vpop.f32.mrf.mxu0
        %v4238 = vadd.f32 %v4141, %v4237
        %v4239 = vpop.f32.mrf.mxu0
        %v4240 = vpop.f32.mrf.mxu0
        %v4241 = vadd.f32 %v4144, %v4240
        %v4242 = vpop.f32.mrf.mxu0
        %4243 = vdwg.mxu0
        %4244 = vmatprep.subr.bf16.mxu0 0
        %4245 = vmatpush1.bf16.msra.mxu0 %v2773
        %4246 = vmatprep.subr.bf16.mxu0 0
        %4247 = vmatpush1.bf16.msra.mxu0 %v2772
        %4248 = vmatprep.subr.bf16.mxu0 0
        %4249 = vmatpush1.bf16.msra.mxu0 %v2771
        %4250 = vmatprep.subr.bf16.mxu0 0
        %4251 = vmatpush1.bf16.msra.mxu0 %v2770
        %4252 = vmatprep.subr.bf16.mxu0 0
        %4253 = vmatpush1.bf16.msra.mxu0 %v2769
        %4254 = vmatprep.subr.bf16.mxu0 0
        %4255 = vmatpush1.bf16.msra.mxu0 %v2768
        %4256 = vmatprep.subr.bf16.mxu0 0
        %4257 = vmatpush1.bf16.msra.mxu0 %v2767
        %4258 = vmatprep.subr.bf16.mxu0 0
        %4259 = vmatpush1.bf16.msra.mxu0 %v2766
        %4260 = vmatprep.subr.bf16.mxu0 0
        %4261 = vmatpush2.bf16.msra.mxu0 %v2781
        %4262 = vmatprep.subr.bf16.mxu0 0
        %4263 = vmatpush2.bf16.msra.mxu0 %v2780
        %4264 = vmatprep.subr.bf16.mxu0 0
        %4265 = vmatpush2.bf16.msra.mxu0 %v2779
        %4266 = vmatprep.subr.bf16.mxu0 0
        %4267 = vmatpush2.bf16.msra.mxu0 %v2778
        %4268 = vmatprep.subr.bf16.mxu0 0
        %4269 = vmatpush2.bf16.msra.mxu0 %v2777
        %4270 = vmatprep.subr.bf16.mxu0 0
        %4271 = vmatpush2.bf16.msra.mxu0 %v2776
        %4272 = vmatprep.subr.bf16.mxu0 0
        %4273 = vmatpush2.bf16.msra.mxu0 %v2775
        %4274 = vmatprep.subr.bf16.mxu0 0
        %4275 = vmatpush2.bf16.msra.mxu0 %v2774
        %4276 = vmatprep.mubr.bf16.mxu0 %v3419
        %4277 = vmatmul.mubr.bf16.gmra.mxu0 %v3418
        %v4278 = vpop.f32.mrf.mxu0
        %v4279 = vadd.f32 %v4182, %v4278
        %v4280 = vpop.f32.mrf.mxu0
        %v4281 = vpop.f32.mrf.mxu0
        %v4282 = vadd.f32 %v4185, %v4281
        %v4283 = vpop.f32.mrf.mxu0
        %4284 = vmatprep.mubr.bf16.mxu0 %v3435
        %4285 = vmatmul.mubr.bf16.gmra.mxu0 %v3434
        %v4286 = vpop.f32.mrf.mxu0
        %v4287 = vadd.f32 %v4190, %v4286
        %v4288 = vpop.f32.mrf.mxu0
        %v4289 = vpop.f32.mrf.mxu0
        %v4290 = vadd.f32 %v4193, %v4289
        %v4291 = vpop.f32.mrf.mxu0
        %4292 = vmatprep.mubr.bf16.mxu0 %v3451
        %4293 = vmatmul.mubr.bf16.gmra.mxu0 %v3450
        %v4294 = vpop.f32.mrf.mxu0
        %v4295 = vadd.f32 %v4198, %v4294
        %v4296 = vpop.f32.mrf.mxu0
        %v4297 = vpop.f32.mrf.mxu0
        %v4298 = vadd.f32 %v4201, %v4297
        %v4299 = vpop.f32.mrf.mxu0
        %4300 = vmatprep.mubr.bf16.mxu0 %v3467
        %4301 = vmatmul.mubr.bf16.gmra.mxu0 %v3466
        %v4302 = vpop.f32.mrf.mxu0
        %v4303 = vadd.f32 %v4206, %v4302
        %v4304 = vpop.f32.mrf.mxu0
        %v4305 = vpop.f32.mrf.mxu0
        %v4306 = vadd.f32 %v4209, %v4305
        %v4307 = vpop.f32.mrf.mxu0
        %4308 = vmatprep.mubr.bf16.mxu0 %v3483
        %4309 = vmatmul.mubr.bf16.gmra.mxu0 %v3482
        %v4310 = vpop.f32.mrf.mxu0
        %v4311 = vadd.f32 %v4214, %v4310
        %v4312 = vpop.f32.mrf.mxu0
        %v4313 = vpop.f32.mrf.mxu0
        %v4314 = vadd.f32 %v4217, %v4313
        %v4315 = vpop.f32.mrf.mxu0
        %4316 = vmatprep.mubr.bf16.mxu0 %v3499
        %4317 = vmatmul.mubr.bf16.gmra.mxu0 %v3498
        %v4318 = vpop.f32.mrf.mxu0
        %v4319 = vadd.f32 %v4222, %v4318
        %v4320 = vpop.f32.mrf.mxu0
        %v4321 = vpop.f32.mrf.mxu0
        %v4322 = vadd.f32 %v4225, %v4321
        %v4323 = vpop.f32.mrf.mxu0
        %4324 = vmatprep.mubr.bf16.mxu0 %v3515
        %4325 = vmatmul.mubr.bf16.gmra.mxu0 %v3514
        %v4326 = vpop.f32.mrf.mxu0
        %v4327 = vadd.f32 %v4230, %v4326
        %v4328 = vpop.f32.mrf.mxu0
        %v4329 = vpop.f32.mrf.mxu0
        %v4330 = vadd.f32 %v4233, %v4329
        %v4331 = vpop.f32.mrf.mxu0
        %4332 = vmatprep.mubr.bf16.mxu0 %v3531
        %4333 = vmatmul.mubr.bf16.gmra.mxu0 %v3530
        %v4334 = vpop.f32.mrf.mxu0
        %v4335 = vadd.f32 %v4238, %v4334
        %v4336 = vpop.f32.mrf.mxu0
        %v4337 = vpop.f32.mrf.mxu0
        %v4338 = vadd.f32 %v4241, %v4337
        %v4339 = vpop.f32.mrf.mxu0
        %4340 = vdwg.mxu0
        %4341 = vmatprep.subr.bf16.mxu0 0
        %4342 = vmatpush1.bf16.msra.mxu0 %v2789
        %4343 = vmatprep.subr.bf16.mxu0 0
        %4344 = vmatpush1.bf16.msra.mxu0 %v2788
        %4345 = vmatprep.subr.bf16.mxu0 0
        %4346 = vmatpush1.bf16.msra.mxu0 %v2787
        %4347 = vmatprep.subr.bf16.mxu0 0
        %4348 = vmatpush1.bf16.msra.mxu0 %v2786
        %4349 = vmatprep.subr.bf16.mxu0 0
        %4350 = vmatpush1.bf16.msra.mxu0 %v2785
        %4351 = vmatprep.subr.bf16.mxu0 0
        %4352 = vmatpush1.bf16.msra.mxu0 %v2784
        %4353 = vmatprep.subr.bf16.mxu0 0
        %4354 = vmatpush1.bf16.msra.mxu0 %v2783
        %4355 = vmatprep.subr.bf16.mxu0 0
        %4356 = vmatpush1.bf16.msra.mxu0 %v2782
        %4357 = vmatprep.subr.bf16.mxu0 0
        %4358 = vmatpush2.bf16.msra.mxu0 %v2797
        %4359 = vmatprep.subr.bf16.mxu0 0
        %4360 = vmatpush2.bf16.msra.mxu0 %v2796
        %4361 = vmatprep.subr.bf16.mxu0 0
        %4362 = vmatpush2.bf16.msra.mxu0 %v2795
        %4363 = vmatprep.subr.bf16.mxu0 0
        %4364 = vmatpush2.bf16.msra.mxu0 %v2794
        %4365 = vmatprep.subr.bf16.mxu0 0
        %4366 = vmatpush2.bf16.msra.mxu0 %v2793
        %4367 = vmatprep.subr.bf16.mxu0 0
        %4368 = vmatpush2.bf16.msra.mxu0 %v2792
        %4369 = vmatprep.subr.bf16.mxu0 0
        %4370 = vmatpush2.bf16.msra.mxu0 %v2791
        %4371 = vmatprep.subr.bf16.mxu0 0
        %4372 = vmatpush2.bf16.msra.mxu0 %v2790
        %4373 = vmatprep.mubr.bf16.mxu0 %v3421
        %4374 = vmatmul.mubr.bf16.gmra.mxu0 %v3420
        %v4375 = vpop.f32.mrf.mxu0
        %v4376 = vadd.f32 %v4279, %v4375
        %v4377 = vpop.f32.mrf.mxu0
        %v4378 = vpop.f32.mrf.mxu0
        %v4379 = vadd.f32 %v4282, %v4378
        %v4380 = vpop.f32.mrf.mxu0
        %4381 = vmatprep.mubr.bf16.mxu0 %v3437
        %4382 = vmatmul.mubr.bf16.gmra.mxu0 %v3436
        %v4383 = vpop.f32.mrf.mxu0
        %v4384 = vadd.f32 %v4287, %v4383
        %v4385 = vpop.f32.mrf.mxu0
        %v4386 = vpop.f32.mrf.mxu0
        %v4387 = vadd.f32 %v4290, %v4386
        %v4388 = vpop.f32.mrf.mxu0
        %4389 = vmatprep.mubr.bf16.mxu0 %v3453
        %4390 = vmatmul.mubr.bf16.gmra.mxu0 %v3452
        %v4391 = vpop.f32.mrf.mxu0
        %v4392 = vadd.f32 %v4295, %v4391
        %v4393 = vpop.f32.mrf.mxu0
        %v4394 = vpop.f32.mrf.mxu0
        %v4395 = vadd.f32 %v4298, %v4394
        %v4396 = vpop.f32.mrf.mxu0
        %4397 = vmatprep.mubr.bf16.mxu0 %v3469
        %4398 = vmatmul.mubr.bf16.gmra.mxu0 %v3468
        %v4399 = vpop.f32.mrf.mxu0
        %v4400 = vadd.f32 %v4303, %v4399
        %v4401 = vpop.f32.mrf.mxu0
        %v4402 = vpop.f32.mrf.mxu0
        %v4403 = vadd.f32 %v4306, %v4402
        %v4404 = vpop.f32.mrf.mxu0
        %4405 = vmatprep.mubr.bf16.mxu0 %v3485
        %4406 = vmatmul.mubr.bf16.gmra.mxu0 %v3484
        %v4407 = vpop.f32.mrf.mxu0
        %v4408 = vadd.f32 %v4311, %v4407
        %v4409 = vpop.f32.mrf.mxu0
        %v4410 = vpop.f32.mrf.mxu0
        %v4411 = vadd.f32 %v4314, %v4410
        %v4412 = vpop.f32.mrf.mxu0
        %4413 = vmatprep.mubr.bf16.mxu0 %v3501
        %4414 = vmatmul.mubr.bf16.gmra.mxu0 %v3500
        %v4415 = vpop.f32.mrf.mxu0
        %v4416 = vadd.f32 %v4319, %v4415
        %v4417 = vpop.f32.mrf.mxu0
        %v4418 = vpop.f32.mrf.mxu0
        %v4419 = vadd.f32 %v4322, %v4418
        %v4420 = vpop.f32.mrf.mxu0
        %4421 = vmatprep.mubr.bf16.mxu0 %v3517
        %4422 = vmatmul.mubr.bf16.gmra.mxu0 %v3516
        %v4423 = vpop.f32.mrf.mxu0
        %v4424 = vadd.f32 %v4327, %v4423
        %v4425 = vpop.f32.mrf.mxu0
        %v4426 = vpop.f32.mrf.mxu0
        %v4427 = vadd.f32 %v4330, %v4426
        %v4428 = vpop.f32.mrf.mxu0
        %4429 = vmatprep.mubr.bf16.mxu0 %v3533
        %4430 = vmatmul.mubr.bf16.gmra.mxu0 %v3532
        %v4431 = vpop.f32.mrf.mxu0
        %v4432 = vadd.f32 %v4335, %v4431
        %v4433 = vpop.f32.mrf.mxu0
        %v4434 = vpop.f32.mrf.mxu0
        %v4435 = vadd.f32 %v4338, %v4434
        %v4436 = vpop.f32.mrf.mxu0
        %4437 = vdwg.mxu0
        %v4438 = vmax.f32 %v4376, 0.0
        %v4439 = vmax.f32 %v4379, 0.0
        %v4440 = vmax.f32 %v4384, 0.0
        %v4441 = vmax.f32 %v4387, 0.0
        %v4442 = vmax.f32 %v4392, 0.0
        %v4443 = vmax.f32 %v4395, 0.0
        %v4444 = vmax.f32 %v4400, 0.0
        %v4445 = vmax.f32 %v4403, 0.0
        %v4446 = vmax.f32 %v4408, 0.0
        %v4447 = vmax.f32 %v4411, 0.0
        %v4448 = vmax.f32 %v4416, 0.0
        %v4449 = vmax.f32 %v4419, 0.0
        %v4450 = vmax.f32 %v4424, 0.0
        %v4451 = vmax.f32 %v4427, 0.0
        %v4452 = vmax.f32 %v4432, 0.0
        %v4453 = vmax.f32 %v4435, 0.0
        %v4454 = vld [vmem:[%s2380] sm:$0xff]
        %v4455 = vld [vmem:[%s2380 + $0x8] sm:$0xff]
        %v4456 = vld [vmem:[%s2380 + $0x10] sm:$0xff]
        %v4457 = vld [vmem:[%s2380 + $0x18] sm:$0xff]
        %v4458 = vld [vmem:[%s2380 + $0x20] sm:$0xff]
        %v4459 = vld [vmem:[%s2380 + $0x28] sm:$0xff]
        %v4460 = vld [vmem:[%s2380 + $0x30] sm:$0xff]
        %v4461 = vld [vmem:[%s2380 + $0x38] sm:$0xff]
        %v4462 = vld [vmem:[%s2380 + $0x40] sm:$0xff]
        %v4463 = vld [vmem:[%s2380 + $0x48] sm:$0xff]
        %v4464 = vld [vmem:[%s2380 + $0x50] sm:$0xff]
        %v4465 = vld [vmem:[%s2380 + $0x58] sm:$0xff]
        %v4466 = vld [vmem:[%s2380 + $0x60] sm:$0xff]
        %v4467 = vld [vmem:[%s2380 + $0x68] sm:$0xff]
        %v4468 = vld [vmem:[%s2380 + $0x70] sm:$0xff]
        %v4469 = vld [vmem:[%s2380 + $0x78] sm:$0xff]
        %v4470 = vld [vmem:[%s2380 + $0x80] sm:$0xff]
        %v4471 = vld [vmem:[%s2380 + $0x88] sm:$0xff]
        %v4472 = vld [vmem:[%s2380 + $0x90] sm:$0xff]
        %v4473 = vld [vmem:[%s2380 + $0x98] sm:$0xff]
        %v4474 = vld [vmem:[%s2380 + $0xa0] sm:$0xff]
        %v4475 = vld [vmem:[%s2380 + $0xa8] sm:$0xff]
        %v4476 = vld [vmem:[%s2380 + $0xb0] sm:$0xff]
        %v4477 = vld [vmem:[%s2380 + $0xb8] sm:$0xff]
        %v4478 = vld [vmem:[%s2380 + $0xc0] sm:$0xff]
        %v4479 = vld [vmem:[%s2380 + $0xc8] sm:$0xff]
        %v4480 = vld [vmem:[%s2380 + $0xd0] sm:$0xff]
        %v4481 = vld [vmem:[%s2380 + $0xd8] sm:$0xff]
        %v4482 = vld [vmem:[%s2380 + $0xe0] sm:$0xff]
        %v4483 = vld [vmem:[%s2380 + $0xe8] sm:$0xff]
        %v4484 = vld [vmem:[%s2380 + $0xf0] sm:$0xff]
        %v4485 = vld [vmem:[%s2380 + $0xf8] sm:$0xff]
        %v4486 = vld [vmem:[%s2380 + $0x100] sm:$0xff]
        %v4487 = vld [vmem:[%s2380 + $0x108] sm:$0xff]
        %v4488 = vld [vmem:[%s2380 + $0x110] sm:$0xff]
        %v4489 = vld [vmem:[%s2380 + $0x118] sm:$0xff]
        %v4490 = vld [vmem:[%s2380 + $0x120] sm:$0xff]
        %v4491 = vld [vmem:[%s2380 + $0x128] sm:$0xff]
        %v4492 = vld [vmem:[%s2380 + $0x130] sm:$0xff]
        %v4493 = vld [vmem:[%s2380 + $0x138] sm:$0xff]
        %v4494 = vld [vmem:[%s2380 + $0x140] sm:$0xff]
        %v4495 = vld [vmem:[%s2380 + $0x148] sm:$0xff]
        %v4496 = vld [vmem:[%s2380 + $0x150] sm:$0xff]
        %v4497 = vld [vmem:[%s2380 + $0x158] sm:$0xff]
        %v4498 = vld [vmem:[%s2380 + $0x160] sm:$0xff]
        %v4499 = vld [vmem:[%s2380 + $0x168] sm:$0xff]
        %v4500 = vld [vmem:[%s2380 + $0x170] sm:$0xff]
        %v4501 = vld [vmem:[%s2380 + $0x178] sm:$0xff]
        %v4502 = vld [vmem:[%s2380 + $0x180] sm:$0xff]
        %v4503 = vld [vmem:[%s2380 + $0x188] sm:$0xff]
        %v4504 = vld [vmem:[%s2380 + $0x190] sm:$0xff]
        %v4505 = vld [vmem:[%s2380 + $0x198] sm:$0xff]
        %v4506 = vld [vmem:[%s2380 + $0x1a0] sm:$0xff]
        %v4507 = vld [vmem:[%s2380 + $0x1a8] sm:$0xff]
        %v4508 = vld [vmem:[%s2380 + $0x1b0] sm:$0xff]
        %v4509 = vld [vmem:[%s2380 + $0x1b8] sm:$0xff]
        %v4510 = vld [vmem:[%s2380 + $0x1c0] sm:$0xff]
        %v4511 = vld [vmem:[%s2380 + $0x1c8] sm:$0xff]
        %v4512 = vld [vmem:[%s2380 + $0x1d0] sm:$0xff]
        %v4513 = vld [vmem:[%s2380 + $0x1d8] sm:$0xff]
        %v4514 = vld [vmem:[%s2380 + $0x1e0] sm:$0xff]
        %v4515 = vld [vmem:[%s2380 + $0x1e8] sm:$0xff]
        %v4516 = vld [vmem:[%s2380 + $0x1f0] sm:$0xff]
        %v4517 = vld [vmem:[%s2380 + $0x1f8] sm:$0xff]
        %v4518 = vld [vmem:[%s2380 + $0x200] sm:$0xff]
        %v4519 = vld [vmem:[%s2380 + $0x208] sm:$0xff]
        %v4520 = vld [vmem:[%s2380 + $0x210] sm:$0xff]
        %v4521 = vld [vmem:[%s2380 + $0x218] sm:$0xff]
        %v4522 = vld [vmem:[%s2380 + $0x220] sm:$0xff]
        %v4523 = vld [vmem:[%s2380 + $0x228] sm:$0xff]
        %v4524 = vld [vmem:[%s2380 + $0x230] sm:$0xff]
        %v4525 = vld [vmem:[%s2380 + $0x238] sm:$0xff]
        %v4526 = vld [vmem:[%s2380 + $0x240] sm:$0xff]
        %v4527 = vld [vmem:[%s2380 + $0x248] sm:$0xff]
        %v4528 = vld [vmem:[%s2380 + $0x250] sm:$0xff]
        %v4529 = vld [vmem:[%s2380 + $0x258] sm:$0xff]
        %v4530 = vld [vmem:[%s2380 + $0x260] sm:$0xff]
        %v4531 = vld [vmem:[%s2380 + $0x268] sm:$0xff]
        %v4532 = vld [vmem:[%s2380 + $0x270] sm:$0xff]
        %v4533 = vld [vmem:[%s2380 + $0x278] sm:$0xff]
        %v4534 = vld [vmem:[%s2380 + $0x280] sm:$0xff]
        %v4535 = vld [vmem:[%s2380 + $0x288] sm:$0xff]
        %v4536 = vld [vmem:[%s2380 + $0x290] sm:$0xff]
        %v4537 = vld [vmem:[%s2380 + $0x298] sm:$0xff]
        %v4538 = vld [vmem:[%s2380 + $0x2a0] sm:$0xff]
        %v4539 = vld [vmem:[%s2380 + $0x2a8] sm:$0xff]
        %v4540 = vld [vmem:[%s2380 + $0x2b0] sm:$0xff]
        %v4541 = vld [vmem:[%s2380 + $0x2b8] sm:$0xff]
        %v4542 = vld [vmem:[%s2380 + $0x2c0] sm:$0xff]
        %v4543 = vld [vmem:[%s2380 + $0x2c8] sm:$0xff]
        %v4544 = vld [vmem:[%s2380 + $0x2d0] sm:$0xff]
        %v4545 = vld [vmem:[%s2380 + $0x2d8] sm:$0xff]
        %v4546 = vld [vmem:[%s2380 + $0x2e0] sm:$0xff]
        %v4547 = vld [vmem:[%s2380 + $0x2e8] sm:$0xff]
        %v4548 = vld [vmem:[%s2380 + $0x2f0] sm:$0xff]
        %v4549 = vld [vmem:[%s2380 + $0x2f8] sm:$0xff]
        %v4550 = vld [vmem:[%s2380 + $0x300] sm:$0xff]
        %v4551 = vld [vmem:[%s2380 + $0x308] sm:$0xff]
        %v4552 = vld [vmem:[%s2380 + $0x310] sm:$0xff]
        %v4553 = vld [vmem:[%s2380 + $0x318] sm:$0xff]
        %v4554 = vld [vmem:[%s2380 + $0x320] sm:$0xff]
        %v4555 = vld [vmem:[%s2380 + $0x328] sm:$0xff]
        %v4556 = vld [vmem:[%s2380 + $0x330] sm:$0xff]
        %v4557 = vld [vmem:[%s2380 + $0x338] sm:$0xff]
        %v4558 = vld [vmem:[%s2380 + $0x340] sm:$0xff]
        %v4559 = vld [vmem:[%s2380 + $0x348] sm:$0xff]
        %v4560 = vld [vmem:[%s2380 + $0x350] sm:$0xff]
        %v4561 = vld [vmem:[%s2380 + $0x358] sm:$0xff]
        %v4562 = vld [vmem:[%s2380 + $0x360] sm:$0xff]
        %v4563 = vld [vmem:[%s2380 + $0x368] sm:$0xff]
        %v4564 = vld [vmem:[%s2380 + $0x370] sm:$0xff]
        %v4565 = vld [vmem:[%s2380 + $0x378] sm:$0xff]
        %v4566 = vld [vmem:[%s2380 + $0x380] sm:$0xff]
        %v4567 = vld [vmem:[%s2380 + $0x388] sm:$0xff]
        %v4568 = vld [vmem:[%s2380 + $0x390] sm:$0xff]
        %v4569 = vld [vmem:[%s2380 + $0x398] sm:$0xff]
        %v4570 = vld [vmem:[%s2380 + $0x3a0] sm:$0xff]
        %v4571 = vld [vmem:[%s2380 + $0x3a8] sm:$0xff]
        %v4572 = vld [vmem:[%s2380 + $0x3b0] sm:$0xff]
        %v4573 = vld [vmem:[%s2380 + $0x3b8] sm:$0xff]
        %v4574 = vld [vmem:[%s2380 + $0x3c0] sm:$0xff]
        %v4575 = vld [vmem:[%s2380 + $0x3c8] sm:$0xff]
        %v4576 = vld [vmem:[%s2380 + $0x3d0] sm:$0xff]
        %v4577 = vld [vmem:[%s2380 + $0x3d8] sm:$0xff]
        %v4578 = vld [vmem:[%s2380 + $0x3e0] sm:$0xff]
        %v4579 = vld [vmem:[%s2380 + $0x3e8] sm:$0xff]
        %v4580 = vld [vmem:[%s2380 + $0x3f0] sm:$0xff]
        %v4581 = vld [vmem:[%s2380 + $0x3f8] sm:$0xff]
        %v4582 = vld [vmem:[%s2380 + $0x400] sm:$0xff]
        %v4583 = vld [vmem:[%s2380 + $0x408] sm:$0xff]
        %v4584 = vld [vmem:[%s2380 + $0x410] sm:$0xff]
        %v4585 = vld [vmem:[%s2380 + $0x418] sm:$0xff]
        %v4586 = vld [vmem:[%s2380 + $0x420] sm:$0xff]
        %v4587 = vld [vmem:[%s2380 + $0x428] sm:$0xff]
        %v4588 = vld [vmem:[%s2380 + $0x430] sm:$0xff]
        %v4589 = vld [vmem:[%s2380 + $0x438] sm:$0xff]
        %v4590 = vld [vmem:[%s2380 + $0x440] sm:$0xff]
        %v4591 = vld [vmem:[%s2380 + $0x448] sm:$0xff]
        %v4592 = vld [vmem:[%s2380 + $0x450] sm:$0xff]
        %v4593 = vld [vmem:[%s2380 + $0x458] sm:$0xff]
        %v4594 = vld [vmem:[%s2380 + $0x460] sm:$0xff]
        %v4595 = vld [vmem:[%s2380 + $0x468] sm:$0xff]
        %v4596 = vld [vmem:[%s2380 + $0x470] sm:$0xff]
        %v4597 = vld [vmem:[%s2380 + $0x478] sm:$0xff]
        %v4598 = vld [vmem:[%s2380 + $0x480] sm:$0xff]
        %v4599 = vld [vmem:[%s2380 + $0x488] sm:$0xff]
        %v4600 = vld [vmem:[%s2380 + $0x490] sm:$0xff]
        %v4601 = vld [vmem:[%s2380 + $0x498] sm:$0xff]
        %v4602 = vld [vmem:[%s2380 + $0x4a0] sm:$0xff]
        %v4603 = vld [vmem:[%s2380 + $0x4a8] sm:$0xff]
        %v4604 = vld [vmem:[%s2380 + $0x4b0] sm:$0xff]
        %v4605 = vld [vmem:[%s2380 + $0x4b8] sm:$0xff]
        %v4606 = vld [vmem:[%s2380 + $0x4c0] sm:$0xff]
        %v4607 = vld [vmem:[%s2380 + $0x4c8] sm:$0xff]
        %v4608 = vld [vmem:[%s2380 + $0x4d0] sm:$0xff]
        %v4609 = vld [vmem:[%s2380 + $0x4d8] sm:$0xff]
        %v4610 = vld [vmem:[%s2380 + $0x4e0] sm:$0xff]
        %v4611 = vld [vmem:[%s2380 + $0x4e8] sm:$0xff]
        %v4612 = vld [vmem:[%s2380 + $0x4f0] sm:$0xff]
        %v4613 = vld [vmem:[%s2380 + $0x4f8] sm:$0xff]
        %v4614 = vld [vmem:[%s2380 + $0x500] sm:$0xff]
        %v4615 = vld [vmem:[%s2380 + $0x508] sm:$0xff]
        %v4616 = vld [vmem:[%s2380 + $0x510] sm:$0xff]
        %v4617 = vld [vmem:[%s2380 + $0x518] sm:$0xff]
        %v4618 = vld [vmem:[%s2380 + $0x520] sm:$0xff]
        %v4619 = vld [vmem:[%s2380 + $0x528] sm:$0xff]
        %v4620 = vld [vmem:[%s2380 + $0x530] sm:$0xff]
        %v4621 = vld [vmem:[%s2380 + $0x538] sm:$0xff]
        %v4622 = vld [vmem:[%s2380 + $0x540] sm:$0xff]
        %v4623 = vld [vmem:[%s2380 + $0x548] sm:$0xff]
        %v4624 = vld [vmem:[%s2380 + $0x550] sm:$0xff]
        %v4625 = vld [vmem:[%s2380 + $0x558] sm:$0xff]
        %v4626 = vld [vmem:[%s2380 + $0x560] sm:$0xff]
        %v4627 = vld [vmem:[%s2380 + $0x568] sm:$0xff]
        %v4628 = vld [vmem:[%s2380 + $0x570] sm:$0xff]
        %v4629 = vld [vmem:[%s2380 + $0x578] sm:$0xff]
        %v4630 = vld [vmem:[%s2380 + $0x580] sm:$0xff]
        %v4631 = vld [vmem:[%s2380 + $0x588] sm:$0xff]
        %v4632 = vld [vmem:[%s2380 + $0x590] sm:$0xff]
        %v4633 = vld [vmem:[%s2380 + $0x598] sm:$0xff]
        %v4634 = vld [vmem:[%s2380 + $0x5a0] sm:$0xff]
        %v4635 = vld [vmem:[%s2380 + $0x5a8] sm:$0xff]
        %v4636 = vld [vmem:[%s2380 + $0x5b0] sm:$0xff]
        %v4637 = vld [vmem:[%s2380 + $0x5b8] sm:$0xff]
        %v4638 = vld [vmem:[%s2380 + $0x5c0] sm:$0xff]
        %v4639 = vld [vmem:[%s2380 + $0x5c8] sm:$0xff]
        %v4640 = vld [vmem:[%s2380 + $0x5d0] sm:$0xff]
        %v4641 = vld [vmem:[%s2380 + $0x5d8] sm:$0xff]
        %v4642 = vld [vmem:[%s2380 + $0x5e0] sm:$0xff]
        %v4643 = vld [vmem:[%s2380 + $0x5e8] sm:$0xff]
        %v4644 = vld [vmem:[%s2380 + $0x5f0] sm:$0xff]
        %v4645 = vld [vmem:[%s2380 + $0x5f8] sm:$0xff]
        %v4646 = vld [vmem:[%s2380 + $0x600] sm:$0xff]
        %v4647 = vld [vmem:[%s2380 + $0x608] sm:$0xff]
        %v4648 = vld [vmem:[%s2380 + $0x610] sm:$0xff]
        %v4649 = vld [vmem:[%s2380 + $0x618] sm:$0xff]
        %v4650 = vld [vmem:[%s2380 + $0x620] sm:$0xff]
        %v4651 = vld [vmem:[%s2380 + $0x628] sm:$0xff]
        %v4652 = vld [vmem:[%s2380 + $0x630] sm:$0xff]
        %v4653 = vld [vmem:[%s2380 + $0x638] sm:$0xff]
        %v4654 = vld [vmem:[%s2380 + $0x640] sm:$0xff]
        %v4655 = vld [vmem:[%s2380 + $0x648] sm:$0xff]
        %v4656 = vld [vmem:[%s2380 + $0x650] sm:$0xff]
        %v4657 = vld [vmem:[%s2380 + $0x658] sm:$0xff]
        %v4658 = vld [vmem:[%s2380 + $0x660] sm:$0xff]
        %v4659 = vld [vmem:[%s2380 + $0x668] sm:$0xff]
        %v4660 = vld [vmem:[%s2380 + $0x670] sm:$0xff]
        %v4661 = vld [vmem:[%s2380 + $0x678] sm:$0xff]
        %v4662 = vld [vmem:[%s2380 + $0x680] sm:$0xff]
        %v4663 = vld [vmem:[%s2380 + $0x688] sm:$0xff]
        %v4664 = vld [vmem:[%s2380 + $0x690] sm:$0xff]
        %v4665 = vld [vmem:[%s2380 + $0x698] sm:$0xff]
        %v4666 = vld [vmem:[%s2380 + $0x6a0] sm:$0xff]
        %v4667 = vld [vmem:[%s2380 + $0x6a8] sm:$0xff]
        %v4668 = vld [vmem:[%s2380 + $0x6b0] sm:$0xff]
        %v4669 = vld [vmem:[%s2380 + $0x6b8] sm:$0xff]
        %v4670 = vld [vmem:[%s2380 + $0x6c0] sm:$0xff]
        %v4671 = vld [vmem:[%s2380 + $0x6c8] sm:$0xff]
        %v4672 = vld [vmem:[%s2380 + $0x6d0] sm:$0xff]
        %v4673 = vld [vmem:[%s2380 + $0x6d8] sm:$0xff]
        %v4674 = vld [vmem:[%s2380 + $0x6e0] sm:$0xff]
        %v4675 = vld [vmem:[%s2380 + $0x6e8] sm:$0xff]
        %v4676 = vld [vmem:[%s2380 + $0x6f0] sm:$0xff]
        %v4677 = vld [vmem:[%s2380 + $0x6f8] sm:$0xff]
        %v4678 = vld [vmem:[%s2380 + $0x700] sm:$0xff]
        %v4679 = vld [vmem:[%s2380 + $0x708] sm:$0xff]
        %v4680 = vld [vmem:[%s2380 + $0x710] sm:$0xff]
        %v4681 = vld [vmem:[%s2380 + $0x718] sm:$0xff]
        %v4682 = vld [vmem:[%s2380 + $0x720] sm:$0xff]
        %v4683 = vld [vmem:[%s2380 + $0x728] sm:$0xff]
        %v4684 = vld [vmem:[%s2380 + $0x730] sm:$0xff]
        %v4685 = vld [vmem:[%s2380 + $0x738] sm:$0xff]
        %v4686 = vld [vmem:[%s2380 + $0x740] sm:$0xff]
        %v4687 = vld [vmem:[%s2380 + $0x748] sm:$0xff]
        %v4688 = vld [vmem:[%s2380 + $0x750] sm:$0xff]
        %v4689 = vld [vmem:[%s2380 + $0x758] sm:$0xff]
        %v4690 = vld [vmem:[%s2380 + $0x760] sm:$0xff]
        %v4691 = vld [vmem:[%s2380 + $0x768] sm:$0xff]
        %v4692 = vld [vmem:[%s2380 + $0x770] sm:$0xff]
        %v4693 = vld [vmem:[%s2380 + $0x778] sm:$0xff]
        %v4694 = vld [vmem:[%s2380 + $0x780] sm:$0xff]
        %v4695 = vld [vmem:[%s2380 + $0x788] sm:$0xff]
        %v4696 = vld [vmem:[%s2380 + $0x790] sm:$0xff]
        %v4697 = vld [vmem:[%s2380 + $0x798] sm:$0xff]
        %v4698 = vld [vmem:[%s2380 + $0x7a0] sm:$0xff]
        %v4699 = vld [vmem:[%s2380 + $0x7a8] sm:$0xff]
        %v4700 = vld [vmem:[%s2380 + $0x7b0] sm:$0xff]
        %v4701 = vld [vmem:[%s2380 + $0x7b8] sm:$0xff]
        %v4702 = vld [vmem:[%s2380 + $0x7c0] sm:$0xff]
        %v4703 = vld [vmem:[%s2380 + $0x7c8] sm:$0xff]
        %v4704 = vld [vmem:[%s2380 + $0x7d0] sm:$0xff]
        %v4705 = vld [vmem:[%s2380 + $0x7d8] sm:$0xff]
        %v4706 = vld [vmem:[%s2380 + $0x7e0] sm:$0xff]
        %v4707 = vld [vmem:[%s2380 + $0x7e8] sm:$0xff]
        %v4708 = vld [vmem:[%s2380 + $0x7f0] sm:$0xff]
        %v4709 = vld [vmem:[%s2380 + $0x7f8] sm:$0xff]
        %v4710 = vld [vmem:[%s2380 + $0x800] sm:$0xff]
        %v4711 = vld [vmem:[%s2380 + $0x808] sm:$0xff]
        %v4712 = vld [vmem:[%s2380 + $0x810] sm:$0xff]
        %v4713 = vld [vmem:[%s2380 + $0x818] sm:$0xff]
        %v4714 = vld [vmem:[%s2380 + $0x820] sm:$0xff]
        %v4715 = vld [vmem:[%s2380 + $0x828] sm:$0xff]
        %v4716 = vld [vmem:[%s2380 + $0x830] sm:$0xff]
        %v4717 = vld [vmem:[%s2380 + $0x838] sm:$0xff]
        %v4718 = vld [vmem:[%s2380 + $0x840] sm:$0xff]
        %v4719 = vld [vmem:[%s2380 + $0x848] sm:$0xff]
        %v4720 = vld [vmem:[%s2380 + $0x850] sm:$0xff]
        %v4721 = vld [vmem:[%s2380 + $0x858] sm:$0xff]
        %v4722 = vld [vmem:[%s2380 + $0x860] sm:$0xff]
        %v4723 = vld [vmem:[%s2380 + $0x868] sm:$0xff]
        %v4724 = vld [vmem:[%s2380 + $0x870] sm:$0xff]
        %v4725 = vld [vmem:[%s2380 + $0x878] sm:$0xff]
        %v4726 = vld [vmem:[%s2380 + $0x880] sm:$0xff]
        %v4727 = vld [vmem:[%s2380 + $0x888] sm:$0xff]
        %v4728 = vld [vmem:[%s2380 + $0x890] sm:$0xff]
        %v4729 = vld [vmem:[%s2380 + $0x898] sm:$0xff]
        %v4730 = vld [vmem:[%s2380 + $0x8a0] sm:$0xff]
        %v4731 = vld [vmem:[%s2380 + $0x8a8] sm:$0xff]
        %v4732 = vld [vmem:[%s2380 + $0x8b0] sm:$0xff]
        %v4733 = vld [vmem:[%s2380 + $0x8b8] sm:$0xff]
        %v4734 = vld [vmem:[%s2380 + $0x8c0] sm:$0xff]
        %v4735 = vld [vmem:[%s2380 + $0x8c8] sm:$0xff]
        %v4736 = vld [vmem:[%s2380 + $0x8d0] sm:$0xff]
        %v4737 = vld [vmem:[%s2380 + $0x8d8] sm:$0xff]
        %v4738 = vld [vmem:[%s2380 + $0x8e0] sm:$0xff]
        %v4739 = vld [vmem:[%s2380 + $0x8e8] sm:$0xff]
        %v4740 = vld [vmem:[%s2380 + $0x8f0] sm:$0xff]
        %v4741 = vld [vmem:[%s2380 + $0x8f8] sm:$0xff]
        %v4742 = vld [vmem:[%s2380 + $0x900] sm:$0xff]
        %v4743 = vld [vmem:[%s2380 + $0x908] sm:$0xff]
        %v4744 = vld [vmem:[%s2380 + $0x910] sm:$0xff]
        %v4745 = vld [vmem:[%s2380 + $0x918] sm:$0xff]
        %v4746 = vld [vmem:[%s2380 + $0x920] sm:$0xff]
        %v4747 = vld [vmem:[%s2380 + $0x928] sm:$0xff]
        %v4748 = vld [vmem:[%s2380 + $0x930] sm:$0xff]
        %v4749 = vld [vmem:[%s2380 + $0x938] sm:$0xff]
        %v4750 = vld [vmem:[%s2380 + $0x940] sm:$0xff]
        %v4751 = vld [vmem:[%s2380 + $0x948] sm:$0xff]
        %v4752 = vld [vmem:[%s2380 + $0x950] sm:$0xff]
        %v4753 = vld [vmem:[%s2380 + $0x958] sm:$0xff]
        %v4754 = vld [vmem:[%s2380 + $0x960] sm:$0xff]
        %v4755 = vld [vmem:[%s2380 + $0x968] sm:$0xff]
        %v4756 = vld [vmem:[%s2380 + $0x970] sm:$0xff]
        %v4757 = vld [vmem:[%s2380 + $0x978] sm:$0xff]
        %v4758 = vld [vmem:[%s2380 + $0x980] sm:$0xff]
        %v4759 = vld [vmem:[%s2380 + $0x988] sm:$0xff]
        %v4760 = vld [vmem:[%s2380 + $0x990] sm:$0xff]
        %v4761 = vld [vmem:[%s2380 + $0x998] sm:$0xff]
        %v4762 = vld [vmem:[%s2380 + $0x9a0] sm:$0xff]
        %v4763 = vld [vmem:[%s2380 + $0x9a8] sm:$0xff]
        %v4764 = vld [vmem:[%s2380 + $0x9b0] sm:$0xff]
        %v4765 = vld [vmem:[%s2380 + $0x9b8] sm:$0xff]
        %v4766 = vld [vmem:[%s2380 + $0x9c0] sm:$0xff]
        %v4767 = vld [vmem:[%s2380 + $0x9c8] sm:$0xff]
        %v4768 = vld [vmem:[%s2380 + $0x9d0] sm:$0xff]
        %v4769 = vld [vmem:[%s2380 + $0x9d8] sm:$0xff]
        %v4770 = vld [vmem:[%s2380 + $0x9e0] sm:$0xff]
        %v4771 = vld [vmem:[%s2380 + $0x9e8] sm:$0xff]
        %v4772 = vld [vmem:[%s2380 + $0x9f0] sm:$0xff]
        %v4773 = vld [vmem:[%s2380 + $0x9f8] sm:$0xff]
        %v4774 = vld [vmem:[%s2380 + $0xa00] sm:$0xff]
        %v4775 = vld [vmem:[%s2380 + $0xa08] sm:$0xff]
        %v4776 = vld [vmem:[%s2380 + $0xa10] sm:$0xff]
        %v4777 = vld [vmem:[%s2380 + $0xa18] sm:$0xff]
        %v4778 = vld [vmem:[%s2380 + $0xa20] sm:$0xff]
        %v4779 = vld [vmem:[%s2380 + $0xa28] sm:$0xff]
        %v4780 = vld [vmem:[%s2380 + $0xa30] sm:$0xff]
        %v4781 = vld [vmem:[%s2380 + $0xa38] sm:$0xff]
        %v4782 = vld [vmem:[%s2380 + $0xa40] sm:$0xff]
        %v4783 = vld [vmem:[%s2380 + $0xa48] sm:$0xff]
        %v4784 = vld [vmem:[%s2380 + $0xa50] sm:$0xff]
        %v4785 = vld [vmem:[%s2380 + $0xa58] sm:$0xff]
        %v4786 = vld [vmem:[%s2380 + $0xa60] sm:$0xff]
        %v4787 = vld [vmem:[%s2380 + $0xa68] sm:$0xff]
        %v4788 = vld [vmem:[%s2380 + $0xa70] sm:$0xff]
        %v4789 = vld [vmem:[%s2380 + $0xa78] sm:$0xff]
        %v4790 = vld [vmem:[%s2380 + $0xa80] sm:$0xff]
        %v4791 = vld [vmem:[%s2380 + $0xa88] sm:$0xff]
        %v4792 = vld [vmem:[%s2380 + $0xa90] sm:$0xff]
        %v4793 = vld [vmem:[%s2380 + $0xa98] sm:$0xff]
        %v4794 = vld [vmem:[%s2380 + $0xaa0] sm:$0xff]
        %v4795 = vld [vmem:[%s2380 + $0xaa8] sm:$0xff]
        %v4796 = vld [vmem:[%s2380 + $0xab0] sm:$0xff]
        %v4797 = vld [vmem:[%s2380 + $0xab8] sm:$0xff]
        %v4798 = vld [vmem:[%s2380 + $0xac0] sm:$0xff]
        %v4799 = vld [vmem:[%s2380 + $0xac8] sm:$0xff]
        %v4800 = vld [vmem:[%s2380 + $0xad0] sm:$0xff]
        %v4801 = vld [vmem:[%s2380 + $0xad8] sm:$0xff]
        %v4802 = vld [vmem:[%s2380 + $0xae0] sm:$0xff]
        %v4803 = vld [vmem:[%s2380 + $0xae8] sm:$0xff]
        %v4804 = vld [vmem:[%s2380 + $0xaf0] sm:$0xff]
        %v4805 = vld [vmem:[%s2380 + $0xaf8] sm:$0xff]
        %v4806 = vld [vmem:[%s2380 + $0xb00] sm:$0xff]
        %v4807 = vld [vmem:[%s2380 + $0xb08] sm:$0xff]
        %v4808 = vld [vmem:[%s2380 + $0xb10] sm:$0xff]
        %v4809 = vld [vmem:[%s2380 + $0xb18] sm:$0xff]
        %v4810 = vld [vmem:[%s2380 + $0xb20] sm:$0xff]
        %v4811 = vld [vmem:[%s2380 + $0xb28] sm:$0xff]
        %v4812 = vld [vmem:[%s2380 + $0xb30] sm:$0xff]
        %v4813 = vld [vmem:[%s2380 + $0xb38] sm:$0xff]
        %v4814 = vld [vmem:[%s2380 + $0xb40] sm:$0xff]
        %v4815 = vld [vmem:[%s2380 + $0xb48] sm:$0xff]
        %v4816 = vld [vmem:[%s2380 + $0xb50] sm:$0xff]
        %v4817 = vld [vmem:[%s2380 + $0xb58] sm:$0xff]
        %v4818 = vld [vmem:[%s2380 + $0xb60] sm:$0xff]
        %v4819 = vld [vmem:[%s2380 + $0xb68] sm:$0xff]
        %v4820 = vld [vmem:[%s2380 + $0xb70] sm:$0xff]
        %v4821 = vld [vmem:[%s2380 + $0xb78] sm:$0xff]
        %v4822 = vld [vmem:[%s2380 + $0xb80] sm:$0xff]
        %v4823 = vld [vmem:[%s2380 + $0xb88] sm:$0xff]
        %v4824 = vld [vmem:[%s2380 + $0xb90] sm:$0xff]
        %v4825 = vld [vmem:[%s2380 + $0xb98] sm:$0xff]
        %v4826 = vld [vmem:[%s2380 + $0xba0] sm:$0xff]
        %v4827 = vld [vmem:[%s2380 + $0xba8] sm:$0xff]
        %v4828 = vld [vmem:[%s2380 + $0xbb0] sm:$0xff]
        %v4829 = vld [vmem:[%s2380 + $0xbb8] sm:$0xff]
        %v4830 = vld [vmem:[%s2380 + $0xbc0] sm:$0xff]
        %v4831 = vld [vmem:[%s2380 + $0xbc8] sm:$0xff]
        %v4832 = vld [vmem:[%s2380 + $0xbd0] sm:$0xff]
        %v4833 = vld [vmem:[%s2380 + $0xbd8] sm:$0xff]
        %v4834 = vld [vmem:[%s2380 + $0xbe0] sm:$0xff]
        %v4835 = vld [vmem:[%s2380 + $0xbe8] sm:$0xff]
        %v4836 = vld [vmem:[%s2380 + $0xbf0] sm:$0xff]
        %v4837 = vld [vmem:[%s2380 + $0xbf8] sm:$0xff]
        %v4838 = vld [vmem:[%s2380 + $0xc00] sm:$0xff]
        %v4839 = vld [vmem:[%s2380 + $0xc08] sm:$0xff]
        %v4840 = vld [vmem:[%s2380 + $0xc10] sm:$0xff]
        %v4841 = vld [vmem:[%s2380 + $0xc18] sm:$0xff]
        %v4842 = vld [vmem:[%s2380 + $0xc20] sm:$0xff]
        %v4843 = vld [vmem:[%s2380 + $0xc28] sm:$0xff]
        %v4844 = vld [vmem:[%s2380 + $0xc30] sm:$0xff]
        %v4845 = vld [vmem:[%s2380 + $0xc38] sm:$0xff]
        %v4846 = vld [vmem:[%s2380 + $0xc40] sm:$0xff]
        %v4847 = vld [vmem:[%s2380 + $0xc48] sm:$0xff]
        %v4848 = vld [vmem:[%s2380 + $0xc50] sm:$0xff]
        %v4849 = vld [vmem:[%s2380 + $0xc58] sm:$0xff]
        %v4850 = vld [vmem:[%s2380 + $0xc60] sm:$0xff]
        %v4851 = vld [vmem:[%s2380 + $0xc68] sm:$0xff]
        %v4852 = vld [vmem:[%s2380 + $0xc70] sm:$0xff]
        %v4853 = vld [vmem:[%s2380 + $0xc78] sm:$0xff]
        %v4854 = vld [vmem:[%s2380 + $0xc80] sm:$0xff]
        %v4855 = vld [vmem:[%s2380 + $0xc88] sm:$0xff]
        %v4856 = vld [vmem:[%s2380 + $0xc90] sm:$0xff]
        %v4857 = vld [vmem:[%s2380 + $0xc98] sm:$0xff]
        %v4858 = vld [vmem:[%s2380 + $0xca0] sm:$0xff]
        %v4859 = vld [vmem:[%s2380 + $0xca8] sm:$0xff]
        %v4860 = vld [vmem:[%s2380 + $0xcb0] sm:$0xff]
        %v4861 = vld [vmem:[%s2380 + $0xcb8] sm:$0xff]
        %v4862 = vld [vmem:[%s2380 + $0xcc0] sm:$0xff]
        %v4863 = vld [vmem:[%s2380 + $0xcc8] sm:$0xff]
        %v4864 = vld [vmem:[%s2380 + $0xcd0] sm:$0xff]
        %v4865 = vld [vmem:[%s2380 + $0xcd8] sm:$0xff]
        %v4866 = vld [vmem:[%s2380 + $0xce0] sm:$0xff]
        %v4867 = vld [vmem:[%s2380 + $0xce8] sm:$0xff]
        %v4868 = vld [vmem:[%s2380 + $0xcf0] sm:$0xff]
        %v4869 = vld [vmem:[%s2380 + $0xcf8] sm:$0xff]
        %v4870 = vld [vmem:[%s2380 + $0xd00] sm:$0xff]
        %v4871 = vld [vmem:[%s2380 + $0xd08] sm:$0xff]
        %v4872 = vld [vmem:[%s2380 + $0xd10] sm:$0xff]
        %v4873 = vld [vmem:[%s2380 + $0xd18] sm:$0xff]
        %v4874 = vld [vmem:[%s2380 + $0xd20] sm:$0xff]
        %v4875 = vld [vmem:[%s2380 + $0xd28] sm:$0xff]
        %v4876 = vld [vmem:[%s2380 + $0xd30] sm:$0xff]
        %v4877 = vld [vmem:[%s2380 + $0xd38] sm:$0xff]
        %v4878 = vld [vmem:[%s2380 + $0xd40] sm:$0xff]
        %v4879 = vld [vmem:[%s2380 + $0xd48] sm:$0xff]
        %v4880 = vld [vmem:[%s2380 + $0xd50] sm:$0xff]
        %v4881 = vld [vmem:[%s2380 + $0xd58] sm:$0xff]
        %v4882 = vld [vmem:[%s2380 + $0xd60] sm:$0xff]
        %v4883 = vld [vmem:[%s2380 + $0xd68] sm:$0xff]
        %v4884 = vld [vmem:[%s2380 + $0xd70] sm:$0xff]
        %v4885 = vld [vmem:[%s2380 + $0xd78] sm:$0xff]
        %v4886 = vld [vmem:[%s2380 + $0xd80] sm:$0xff]
        %v4887 = vld [vmem:[%s2380 + $0xd88] sm:$0xff]
        %v4888 = vld [vmem:[%s2380 + $0xd90] sm:$0xff]
        %v4889 = vld [vmem:[%s2380 + $0xd98] sm:$0xff]
        %v4890 = vld [vmem:[%s2380 + $0xda0] sm:$0xff]
        %v4891 = vld [vmem:[%s2380 + $0xda8] sm:$0xff]
        %v4892 = vld [vmem:[%s2380 + $0xdb0] sm:$0xff]
        %v4893 = vld [vmem:[%s2380 + $0xdb8] sm:$0xff]
        %v4894 = vld [vmem:[%s2380 + $0xdc0] sm:$0xff]
        %v4895 = vld [vmem:[%s2380 + $0xdc8] sm:$0xff]
        %v4896 = vld [vmem:[%s2380 + $0xdd0] sm:$0xff]
        %v4897 = vld [vmem:[%s2380 + $0xdd8] sm:$0xff]
        %v4898 = vld [vmem:[%s2380 + $0xde0] sm:$0xff]
        %v4899 = vld [vmem:[%s2380 + $0xde8] sm:$0xff]
        %v4900 = vld [vmem:[%s2380 + $0xdf0] sm:$0xff]
        %v4901 = vld [vmem:[%s2380 + $0xdf8] sm:$0xff]
        %v4902 = vld [vmem:[%s2380 + $0xe00] sm:$0xff]
        %v4903 = vld [vmem:[%s2380 + $0xe08] sm:$0xff]
        %v4904 = vld [vmem:[%s2380 + $0xe10] sm:$0xff]
        %v4905 = vld [vmem:[%s2380 + $0xe18] sm:$0xff]
        %v4906 = vld [vmem:[%s2380 + $0xe20] sm:$0xff]
        %v4907 = vld [vmem:[%s2380 + $0xe28] sm:$0xff]
        %v4908 = vld [vmem:[%s2380 + $0xe30] sm:$0xff]
        %v4909 = vld [vmem:[%s2380 + $0xe38] sm:$0xff]
        %v4910 = vld [vmem:[%s2380 + $0xe40] sm:$0xff]
        %v4911 = vld [vmem:[%s2380 + $0xe48] sm:$0xff]
        %v4912 = vld [vmem:[%s2380 + $0xe50] sm:$0xff]
        %v4913 = vld [vmem:[%s2380 + $0xe58] sm:$0xff]
        %v4914 = vld [vmem:[%s2380 + $0xe60] sm:$0xff]
        %v4915 = vld [vmem:[%s2380 + $0xe68] sm:$0xff]
        %v4916 = vld [vmem:[%s2380 + $0xe70] sm:$0xff]
        %v4917 = vld [vmem:[%s2380 + $0xe78] sm:$0xff]
        %v4918 = vld [vmem:[%s2380 + $0xe80] sm:$0xff]
        %v4919 = vld [vmem:[%s2380 + $0xe88] sm:$0xff]
        %v4920 = vld [vmem:[%s2380 + $0xe90] sm:$0xff]
        %v4921 = vld [vmem:[%s2380 + $0xe98] sm:$0xff]
        %v4922 = vld [vmem:[%s2380 + $0xea0] sm:$0xff]
        %v4923 = vld [vmem:[%s2380 + $0xea8] sm:$0xff]
        %v4924 = vld [vmem:[%s2380 + $0xeb0] sm:$0xff]
        %v4925 = vld [vmem:[%s2380 + $0xeb8] sm:$0xff]
        %v4926 = vld [vmem:[%s2380 + $0xec0] sm:$0xff]
        %v4927 = vld [vmem:[%s2380 + $0xec8] sm:$0xff]
        %v4928 = vld [vmem:[%s2380 + $0xed0] sm:$0xff]
        %v4929 = vld [vmem:[%s2380 + $0xed8] sm:$0xff]
        %v4930 = vld [vmem:[%s2380 + $0xee0] sm:$0xff]
        %v4931 = vld [vmem:[%s2380 + $0xee8] sm:$0xff]
        %v4932 = vld [vmem:[%s2380 + $0xef0] sm:$0xff]
        %v4933 = vld [vmem:[%s2380 + $0xef8] sm:$0xff]
        %v4934 = vld [vmem:[%s2380 + $0xf00] sm:$0xff]
        %v4935 = vld [vmem:[%s2380 + $0xf08] sm:$0xff]
        %v4936 = vld [vmem:[%s2380 + $0xf10] sm:$0xff]
        %v4937 = vld [vmem:[%s2380 + $0xf18] sm:$0xff]
        %v4938 = vld [vmem:[%s2380 + $0xf20] sm:$0xff]
        %v4939 = vld [vmem:[%s2380 + $0xf28] sm:$0xff]
        %v4940 = vld [vmem:[%s2380 + $0xf30] sm:$0xff]
        %v4941 = vld [vmem:[%s2380 + $0xf38] sm:$0xff]
        %v4942 = vld [vmem:[%s2380 + $0xf40] sm:$0xff]
        %v4943 = vld [vmem:[%s2380 + $0xf48] sm:$0xff]
        %v4944 = vld [vmem:[%s2380 + $0xf50] sm:$0xff]
        %v4945 = vld [vmem:[%s2380 + $0xf58] sm:$0xff]
        %v4946 = vld [vmem:[%s2380 + $0xf60] sm:$0xff]
        %v4947 = vld [vmem:[%s2380 + $0xf68] sm:$0xff]
        %v4948 = vld [vmem:[%s2380 + $0xf70] sm:$0xff]
        %v4949 = vld [vmem:[%s2380 + $0xf78] sm:$0xff]
        %v4950 = vld [vmem:[%s2380 + $0xf80] sm:$0xff]
        %v4951 = vld [vmem:[%s2380 + $0xf88] sm:$0xff]
        %v4952 = vld [vmem:[%s2380 + $0xf90] sm:$0xff]
        %v4953 = vld [vmem:[%s2380 + $0xf98] sm:$0xff]
        %v4954 = vld [vmem:[%s2380 + $0xfa0] sm:$0xff]
        %v4955 = vld [vmem:[%s2380 + $0xfa8] sm:$0xff]
        %v4956 = vld [vmem:[%s2380 + $0xfb0] sm:$0xff]
        %v4957 = vld [vmem:[%s2380 + $0xfb8] sm:$0xff]
        %v4958 = vld [vmem:[%s2380 + $0xfc0] sm:$0xff]
        %v4959 = vld [vmem:[%s2380 + $0xfc8] sm:$0xff]
        %v4960 = vld [vmem:[%s2380 + $0xfd0] sm:$0xff]
        %v4961 = vld [vmem:[%s2380 + $0xfd8] sm:$0xff]
        %v4962 = vld [vmem:[%s2380 + $0xfe0] sm:$0xff]
        %v4963 = vld [vmem:[%s2380 + $0xfe8] sm:$0xff]
        %v4964 = vld [vmem:[%s2380 + $0xff0] sm:$0xff]
        %v4965 = vld [vmem:[%s2380 + $0xff8] sm:$0xff]
        %v4966 = vpack.c.bf16 %v4458, %v4454
        %v4967 = vpack.c.bf16 %v4459, %v4455
        %v4968 = vpack.c.bf16 %v4460, %v4456
        %v4969 = vpack.c.bf16 %v4461, %v4457
        %v4970 = vpack.c.bf16 %v4466, %v4462
        %v4971 = vpack.c.bf16 %v4467, %v4463
        %v4972 = vpack.c.bf16 %v4468, %v4464
        %v4973 = vpack.c.bf16 %v4469, %v4465
        %v4974 = vpack.c.bf16 %v4474, %v4470
        %v4975 = vpack.c.bf16 %v4475, %v4471
        %v4976 = vpack.c.bf16 %v4476, %v4472
        %v4977 = vpack.c.bf16 %v4477, %v4473
        %v4978 = vpack.c.bf16 %v4482, %v4478
        %v4979 = vpack.c.bf16 %v4483, %v4479
        %v4980 = vpack.c.bf16 %v4484, %v4480
        %v4981 = vpack.c.bf16 %v4485, %v4481
        %v4982 = vpack.c.bf16 %v4490, %v4486
        %v4983 = vpack.c.bf16 %v4491, %v4487
        %v4984 = vpack.c.bf16 %v4492, %v4488
        %v4985 = vpack.c.bf16 %v4493, %v4489
        %v4986 = vpack.c.bf16 %v4498, %v4494
        %v4987 = vpack.c.bf16 %v4499, %v4495
        %v4988 = vpack.c.bf16 %v4500, %v4496
        %v4989 = vpack.c.bf16 %v4501, %v4497
        %v4990 = vpack.c.bf16 %v4506, %v4502
        %v4991 = vpack.c.bf16 %v4507, %v4503
        %v4992 = vpack.c.bf16 %v4508, %v4504
        %v4993 = vpack.c.bf16 %v4509, %v4505
        %v4994 = vpack.c.bf16 %v4514, %v4510
        %v4995 = vpack.c.bf16 %v4515, %v4511
        %v4996 = vpack.c.bf16 %v4516, %v4512
        %v4997 = vpack.c.bf16 %v4517, %v4513
        %v4998 = vpack.c.bf16 %v4522, %v4518
        %v4999 = vpack.c.bf16 %v4523, %v4519
        %v5000 = vpack.c.bf16 %v4524, %v4520
        %v5001 = vpack.c.bf16 %v4525, %v4521
        %v5002 = vpack.c.bf16 %v4530, %v4526
        %v5003 = vpack.c.bf16 %v4531, %v4527
        %v5004 = vpack.c.bf16 %v4532, %v4528
        %v5005 = vpack.c.bf16 %v4533, %v4529
        %v5006 = vpack.c.bf16 %v4538, %v4534
        %v5007 = vpack.c.bf16 %v4539, %v4535
        %v5008 = vpack.c.bf16 %v4540, %v4536
        %v5009 = vpack.c.bf16 %v4541, %v4537
        %v5010 = vpack.c.bf16 %v4546, %v4542
        %v5011 = vpack.c.bf16 %v4547, %v4543
        %v5012 = vpack.c.bf16 %v4548, %v4544
        %v5013 = vpack.c.bf16 %v4549, %v4545
        %v5014 = vpack.c.bf16 %v4554, %v4550
        %v5015 = vpack.c.bf16 %v4555, %v4551
        %v5016 = vpack.c.bf16 %v4556, %v4552
        %v5017 = vpack.c.bf16 %v4557, %v4553
        %v5018 = vpack.c.bf16 %v4562, %v4558
        %v5019 = vpack.c.bf16 %v4563, %v4559
        %v5020 = vpack.c.bf16 %v4564, %v4560
        %v5021 = vpack.c.bf16 %v4565, %v4561
        %v5022 = vpack.c.bf16 %v4570, %v4566
        %v5023 = vpack.c.bf16 %v4571, %v4567
        %v5024 = vpack.c.bf16 %v4572, %v4568
        %v5025 = vpack.c.bf16 %v4573, %v4569
        %v5026 = vpack.c.bf16 %v4578, %v4574
        %v5027 = vpack.c.bf16 %v4579, %v4575
        %v5028 = vpack.c.bf16 %v4580, %v4576
        %v5029 = vpack.c.bf16 %v4581, %v4577
        %v5030 = vpack.c.bf16 %v4586, %v4582
        %v5031 = vpack.c.bf16 %v4587, %v4583
        %v5032 = vpack.c.bf16 %v4588, %v4584
        %v5033 = vpack.c.bf16 %v4589, %v4585
        %v5034 = vpack.c.bf16 %v4594, %v4590
        %v5035 = vpack.c.bf16 %v4595, %v4591
        %v5036 = vpack.c.bf16 %v4596, %v4592
        %v5037 = vpack.c.bf16 %v4597, %v4593
        %v5038 = vpack.c.bf16 %v4602, %v4598
        %v5039 = vpack.c.bf16 %v4603, %v4599
        %v5040 = vpack.c.bf16 %v4604, %v4600
        %v5041 = vpack.c.bf16 %v4605, %v4601
        %v5042 = vpack.c.bf16 %v4610, %v4606
        %v5043 = vpack.c.bf16 %v4611, %v4607
        %v5044 = vpack.c.bf16 %v4612, %v4608
        %v5045 = vpack.c.bf16 %v4613, %v4609
        %v5046 = vpack.c.bf16 %v4618, %v4614
        %v5047 = vpack.c.bf16 %v4619, %v4615
        %v5048 = vpack.c.bf16 %v4620, %v4616
        %v5049 = vpack.c.bf16 %v4621, %v4617
        %v5050 = vpack.c.bf16 %v4626, %v4622
        %v5051 = vpack.c.bf16 %v4627, %v4623
        %v5052 = vpack.c.bf16 %v4628, %v4624
        %v5053 = vpack.c.bf16 %v4629, %v4625
        %v5054 = vpack.c.bf16 %v4634, %v4630
        %v5055 = vpack.c.bf16 %v4635, %v4631
        %v5056 = vpack.c.bf16 %v4636, %v4632
        %v5057 = vpack.c.bf16 %v4637, %v4633
        %v5058 = vpack.c.bf16 %v4642, %v4638
        %v5059 = vpack.c.bf16 %v4643, %v4639
        %v5060 = vpack.c.bf16 %v4644, %v4640
        %v5061 = vpack.c.bf16 %v4645, %v4641
        %v5062 = vpack.c.bf16 %v4650, %v4646
        %v5063 = vpack.c.bf16 %v4651, %v4647
        %v5064 = vpack.c.bf16 %v4652, %v4648
        %v5065 = vpack.c.bf16 %v4653, %v4649
        %v5066 = vpack.c.bf16 %v4658, %v4654
        %v5067 = vpack.c.bf16 %v4659, %v4655
        %v5068 = vpack.c.bf16 %v4660, %v4656
        %v5069 = vpack.c.bf16 %v4661, %v4657
        %v5070 = vpack.c.bf16 %v4666, %v4662
        %v5071 = vpack.c.bf16 %v4667, %v4663
        %v5072 = vpack.c.bf16 %v4668, %v4664
        %v5073 = vpack.c.bf16 %v4669, %v4665
        %v5074 = vpack.c.bf16 %v4674, %v4670
        %v5075 = vpack.c.bf16 %v4675, %v4671
        %v5076 = vpack.c.bf16 %v4676, %v4672
        %v5077 = vpack.c.bf16 %v4677, %v4673
        %v5078 = vpack.c.bf16 %v4682, %v4678
        %v5079 = vpack.c.bf16 %v4683, %v4679
        %v5080 = vpack.c.bf16 %v4684, %v4680
        %v5081 = vpack.c.bf16 %v4685, %v4681
        %v5082 = vpack.c.bf16 %v4690, %v4686
        %v5083 = vpack.c.bf16 %v4691, %v4687
        %v5084 = vpack.c.bf16 %v4692, %v4688
        %v5085 = vpack.c.bf16 %v4693, %v4689
        %v5086 = vpack.c.bf16 %v4698, %v4694
        %v5087 = vpack.c.bf16 %v4699, %v4695
        %v5088 = vpack.c.bf16 %v4700, %v4696
        %v5089 = vpack.c.bf16 %v4701, %v4697
        %v5090 = vpack.c.bf16 %v4706, %v4702
        %v5091 = vpack.c.bf16 %v4707, %v4703
        %v5092 = vpack.c.bf16 %v4708, %v4704
        %v5093 = vpack.c.bf16 %v4709, %v4705
        %v5094 = vpack.c.bf16 %v4714, %v4710
        %v5095 = vpack.c.bf16 %v4715, %v4711
        %v5096 = vpack.c.bf16 %v4716, %v4712
        %v5097 = vpack.c.bf16 %v4717, %v4713
        %v5098 = vpack.c.bf16 %v4722, %v4718
        %v5099 = vpack.c.bf16 %v4723, %v4719
        %v5100 = vpack.c.bf16 %v4724, %v4720
        %v5101 = vpack.c.bf16 %v4725, %v4721
        %v5102 = vpack.c.bf16 %v4730, %v4726
        %v5103 = vpack.c.bf16 %v4731, %v4727
        %v5104 = vpack.c.bf16 %v4732, %v4728
        %v5105 = vpack.c.bf16 %v4733, %v4729
        %v5106 = vpack.c.bf16 %v4738, %v4734
        %v5107 = vpack.c.bf16 %v4739, %v4735
        %v5108 = vpack.c.bf16 %v4740, %v4736
        %v5109 = vpack.c.bf16 %v4741, %v4737
        %v5110 = vpack.c.bf16 %v4746, %v4742
        %v5111 = vpack.c.bf16 %v4747, %v4743
        %v5112 = vpack.c.bf16 %v4748, %v4744
        %v5113 = vpack.c.bf16 %v4749, %v4745
        %v5114 = vpack.c.bf16 %v4754, %v4750
        %v5115 = vpack.c.bf16 %v4755, %v4751
        %v5116 = vpack.c.bf16 %v4756, %v4752
        %v5117 = vpack.c.bf16 %v4757, %v4753
        %v5118 = vpack.c.bf16 %v4762, %v4758
        %v5119 = vpack.c.bf16 %v4763, %v4759
        %v5120 = vpack.c.bf16 %v4764, %v4760
        %v5121 = vpack.c.bf16 %v4765, %v4761
        %v5122 = vpack.c.bf16 %v4770, %v4766
        %v5123 = vpack.c.bf16 %v4771, %v4767
        %v5124 = vpack.c.bf16 %v4772, %v4768
        %v5125 = vpack.c.bf16 %v4773, %v4769
        %v5126 = vpack.c.bf16 %v4778, %v4774
        %v5127 = vpack.c.bf16 %v4779, %v4775
        %v5128 = vpack.c.bf16 %v4780, %v4776
        %v5129 = vpack.c.bf16 %v4781, %v4777
        %v5130 = vpack.c.bf16 %v4786, %v4782
        %v5131 = vpack.c.bf16 %v4787, %v4783
        %v5132 = vpack.c.bf16 %v4788, %v4784
        %v5133 = vpack.c.bf16 %v4789, %v4785
        %v5134 = vpack.c.bf16 %v4794, %v4790
        %v5135 = vpack.c.bf16 %v4795, %v4791
        %v5136 = vpack.c.bf16 %v4796, %v4792
        %v5137 = vpack.c.bf16 %v4797, %v4793
        %v5138 = vpack.c.bf16 %v4802, %v4798
        %v5139 = vpack.c.bf16 %v4803, %v4799
        %v5140 = vpack.c.bf16 %v4804, %v4800
        %v5141 = vpack.c.bf16 %v4805, %v4801
        %v5142 = vpack.c.bf16 %v4810, %v4806
        %v5143 = vpack.c.bf16 %v4811, %v4807
        %v5144 = vpack.c.bf16 %v4812, %v4808
        %v5145 = vpack.c.bf16 %v4813, %v4809
        %v5146 = vpack.c.bf16 %v4818, %v4814
        %v5147 = vpack.c.bf16 %v4819, %v4815
        %v5148 = vpack.c.bf16 %v4820, %v4816
        %v5149 = vpack.c.bf16 %v4821, %v4817
        %v5150 = vpack.c.bf16 %v4826, %v4822
        %v5151 = vpack.c.bf16 %v4827, %v4823
        %v5152 = vpack.c.bf16 %v4828, %v4824
        %v5153 = vpack.c.bf16 %v4829, %v4825
        %v5154 = vpack.c.bf16 %v4834, %v4830
        %v5155 = vpack.c.bf16 %v4835, %v4831
        %v5156 = vpack.c.bf16 %v4836, %v4832
        %v5157 = vpack.c.bf16 %v4837, %v4833
        %v5158 = vpack.c.bf16 %v4842, %v4838
        %v5159 = vpack.c.bf16 %v4843, %v4839
        %v5160 = vpack.c.bf16 %v4844, %v4840
        %v5161 = vpack.c.bf16 %v4845, %v4841
        %v5162 = vpack.c.bf16 %v4850, %v4846
        %v5163 = vpack.c.bf16 %v4851, %v4847
        %v5164 = vpack.c.bf16 %v4852, %v4848
        %v5165 = vpack.c.bf16 %v4853, %v4849
        %v5166 = vpack.c.bf16 %v4858, %v4854
        %v5167 = vpack.c.bf16 %v4859, %v4855
        %v5168 = vpack.c.bf16 %v4860, %v4856
        %v5169 = vpack.c.bf16 %v4861, %v4857
        %v5170 = vpack.c.bf16 %v4866, %v4862
        %v5171 = vpack.c.bf16 %v4867, %v4863
        %v5172 = vpack.c.bf16 %v4868, %v4864
        %v5173 = vpack.c.bf16 %v4869, %v4865
        %v5174 = vpack.c.bf16 %v4874, %v4870
        %v5175 = vpack.c.bf16 %v4875, %v4871
        %v5176 = vpack.c.bf16 %v4876, %v4872
        %v5177 = vpack.c.bf16 %v4877, %v4873
        %v5178 = vpack.c.bf16 %v4882, %v4878
        %v5179 = vpack.c.bf16 %v4883, %v4879
        %v5180 = vpack.c.bf16 %v4884, %v4880
        %v5181 = vpack.c.bf16 %v4885, %v4881
        %v5182 = vpack.c.bf16 %v4890, %v4886
        %v5183 = vpack.c.bf16 %v4891, %v4887
        %v5184 = vpack.c.bf16 %v4892, %v4888
        %v5185 = vpack.c.bf16 %v4893, %v4889
        %v5186 = vpack.c.bf16 %v4898, %v4894
        %v5187 = vpack.c.bf16 %v4899, %v4895
        %v5188 = vpack.c.bf16 %v4900, %v4896
        %v5189 = vpack.c.bf16 %v4901, %v4897
        %v5190 = vpack.c.bf16 %v4906, %v4902
        %v5191 = vpack.c.bf16 %v4907, %v4903
        %v5192 = vpack.c.bf16 %v4908, %v4904
        %v5193 = vpack.c.bf16 %v4909, %v4905
        %v5194 = vpack.c.bf16 %v4914, %v4910
        %v5195 = vpack.c.bf16 %v4915, %v4911
        %v5196 = vpack.c.bf16 %v4916, %v4912
        %v5197 = vpack.c.bf16 %v4917, %v4913
        %v5198 = vpack.c.bf16 %v4922, %v4918
        %v5199 = vpack.c.bf16 %v4923, %v4919
        %v5200 = vpack.c.bf16 %v4924, %v4920
        %v5201 = vpack.c.bf16 %v4925, %v4921
        %v5202 = vpack.c.bf16 %v4930, %v4926
        %v5203 = vpack.c.bf16 %v4931, %v4927
        %v5204 = vpack.c.bf16 %v4932, %v4928
        %v5205 = vpack.c.bf16 %v4933, %v4929
        %v5206 = vpack.c.bf16 %v4938, %v4934
        %v5207 = vpack.c.bf16 %v4939, %v4935
        %v5208 = vpack.c.bf16 %v4940, %v4936
        %v5209 = vpack.c.bf16 %v4941, %v4937
        %v5210 = vpack.c.bf16 %v4946, %v4942
        %v5211 = vpack.c.bf16 %v4947, %v4943
        %v5212 = vpack.c.bf16 %v4948, %v4944
        %v5213 = vpack.c.bf16 %v4949, %v4945
        %v5214 = vpack.c.bf16 %v4954, %v4950
        %v5215 = vpack.c.bf16 %v4955, %v4951
        %v5216 = vpack.c.bf16 %v4956, %v4952
        %v5217 = vpack.c.bf16 %v4957, %v4953
        %v5218 = vpack.c.bf16 %v4962, %v4958
        %v5219 = vpack.c.bf16 %v4963, %v4959
        %v5220 = vpack.c.bf16 %v4964, %v4960
        %v5221 = vpack.c.bf16 %v4965, %v4961
        %v5222 = vld [vmem:[%s4] sm:$0xff]
        %v5223 = vld [vmem:[%s4 + $0x8] sm:$0xff]
        %v5224 = vld [vmem:[%s4 + $0x10] sm:$0xff]
        %v5225 = vld [vmem:[%s4 + $0x18] sm:$0xff]
        %v5226 = vld [vmem:[%s4 + $0x20] sm:$0xff]
        %v5227 = vld [vmem:[%s4 + $0x28] sm:$0xff]
        %v5228 = vld [vmem:[%s4 + $0x30] sm:$0xff]
        %v5229 = vld [vmem:[%s4 + $0x38] sm:$0xff]
        %v5230 = vld [vmem:[%s4 + $0x40] sm:$0xff]
        %v5231 = vld [vmem:[%s4 + $0x48] sm:$0xff]
        %v5232 = vld [vmem:[%s4 + $0x50] sm:$0xff]
        %v5233 = vld [vmem:[%s4 + $0x58] sm:$0xff]
        %v5234 = vld [vmem:[%s4 + $0x60] sm:$0xff]
        %v5235 = vld [vmem:[%s4 + $0x68] sm:$0xff]
        %v5236 = vld [vmem:[%s4 + $0x70] sm:$0xff]
        %v5237 = vld [vmem:[%s4 + $0x78] sm:$0xff]
        %v5238 = vld [vmem:[%s4 + $0x80] sm:$0xff]
        %v5239 = vld [vmem:[%s4 + $0x88] sm:$0xff]
        %v5240 = vld [vmem:[%s4 + $0x90] sm:$0xff]
        %v5241 = vld [vmem:[%s4 + $0x98] sm:$0xff]
        %v5242 = vld [vmem:[%s4 + $0xa0] sm:$0xff]
        %v5243 = vld [vmem:[%s4 + $0xa8] sm:$0xff]
        %v5244 = vld [vmem:[%s4 + $0xb0] sm:$0xff]
        %v5245 = vld [vmem:[%s4 + $0xb8] sm:$0xff]
        %v5246 = vld [vmem:[%s4 + $0xc0] sm:$0xff]
        %v5247 = vld [vmem:[%s4 + $0xc8] sm:$0xff]
        %v5248 = vld [vmem:[%s4 + $0xd0] sm:$0xff]
        %v5249 = vld [vmem:[%s4 + $0xd8] sm:$0xff]
        %v5250 = vld [vmem:[%s4 + $0xe0] sm:$0xff]
        %v5251 = vld [vmem:[%s4 + $0xe8] sm:$0xff]
        %v5252 = vld [vmem:[%s4 + $0xf0] sm:$0xff]
        %v5253 = vld [vmem:[%s4 + $0xf8] sm:$0xff]
        %v5254 = vld [vmem:[%s4 + $0x100] sm:$0xff]
        %v5255 = vld [vmem:[%s4 + $0x108] sm:$0xff]
        %v5256 = vld [vmem:[%s4 + $0x110] sm:$0xff]
        %v5257 = vld [vmem:[%s4 + $0x118] sm:$0xff]
        %v5258 = vld [vmem:[%s4 + $0x120] sm:$0xff]
        %v5259 = vld [vmem:[%s4 + $0x128] sm:$0xff]
        %v5260 = vld [vmem:[%s4 + $0x130] sm:$0xff]
        %v5261 = vld [vmem:[%s4 + $0x138] sm:$0xff]
        %v5262 = vld [vmem:[%s4 + $0x140] sm:$0xff]
        %v5263 = vld [vmem:[%s4 + $0x148] sm:$0xff]
        %v5264 = vld [vmem:[%s4 + $0x150] sm:$0xff]
        %v5265 = vld [vmem:[%s4 + $0x158] sm:$0xff]
        %v5266 = vld [vmem:[%s4 + $0x160] sm:$0xff]
        %v5267 = vld [vmem:[%s4 + $0x168] sm:$0xff]
        %v5268 = vld [vmem:[%s4 + $0x170] sm:$0xff]
        %v5269 = vld [vmem:[%s4 + $0x178] sm:$0xff]
        %v5270 = vld [vmem:[%s4 + $0x180] sm:$0xff]
        %v5271 = vld [vmem:[%s4 + $0x188] sm:$0xff]
        %v5272 = vld [vmem:[%s4 + $0x190] sm:$0xff]
        %v5273 = vld [vmem:[%s4 + $0x198] sm:$0xff]
        %v5274 = vld [vmem:[%s4 + $0x1a0] sm:$0xff]
        %v5275 = vld [vmem:[%s4 + $0x1a8] sm:$0xff]
        %v5276 = vld [vmem:[%s4 + $0x1b0] sm:$0xff]
        %v5277 = vld [vmem:[%s4 + $0x1b8] sm:$0xff]
        %v5278 = vld [vmem:[%s4 + $0x1c0] sm:$0xff]
        %v5279 = vld [vmem:[%s4 + $0x1c8] sm:$0xff]
        %v5280 = vld [vmem:[%s4 + $0x1d0] sm:$0xff]
        %v5281 = vld [vmem:[%s4 + $0x1d8] sm:$0xff]
        %v5282 = vld [vmem:[%s4 + $0x1e0] sm:$0xff]
        %v5283 = vld [vmem:[%s4 + $0x1e8] sm:$0xff]
        %v5284 = vld [vmem:[%s4 + $0x1f0] sm:$0xff]
        %v5285 = vld [vmem:[%s4 + $0x1f8] sm:$0xff]
        %v5286 = vld [vmem:[%s5] sm:$0xff]
        %v5287 = vld [vmem:[%s5 + $0x8] sm:$0xff]
        %v5288 = vld [vmem:[%s5 + $0x10] sm:$0xff]
        %v5289 = vld [vmem:[%s5 + $0x18] sm:$0xff]
        %v5290 = vld [vmem:[%s5 + $0x20] sm:$0xff]
        %v5291 = vld [vmem:[%s5 + $0x28] sm:$0xff]
        %v5292 = vld [vmem:[%s5 + $0x30] sm:$0xff]
        %v5293 = vld [vmem:[%s5 + $0x38] sm:$0xff]
        %v5294 = vld [vmem:[%s5 + $0x40] sm:$0xff]
        %v5295 = vld [vmem:[%s5 + $0x48] sm:$0xff]
        %v5296 = vld [vmem:[%s5 + $0x50] sm:$0xff]
        %v5297 = vld [vmem:[%s5 + $0x58] sm:$0xff]
        %v5298 = vld [vmem:[%s5 + $0x60] sm:$0xff]
        %v5299 = vld [vmem:[%s5 + $0x68] sm:$0xff]
        %v5300 = vld [vmem:[%s5 + $0x70] sm:$0xff]
        %v5301 = vld [vmem:[%s5 + $0x78] sm:$0xff]
        %5303 = vset.pattern.permute.xlu0 0
        %5304 = vperm.xlu0 %5303, %v5286
        %v5305 = vpop.permute.xlu0 %5304
        %5308 = vset.pattern.permute.xlu0 0
        %5309 = vperm.xlu0 %5308, %v5287
        %v5310 = vpop.permute.xlu0 %5309
        %5313 = vset.pattern.permute.xlu0 0
        %5314 = vperm.xlu0 %5313, %v5288
        %v5315 = vpop.permute.xlu0 %5314
        %5318 = vset.pattern.permute.xlu0 0
        %5319 = vperm.xlu0 %5318, %v5289
        %v5320 = vpop.permute.xlu0 %5319
        %5323 = vset.pattern.permute.xlu0 0
        %5324 = vperm.xlu0 %5323, %v5290
        %v5325 = vpop.permute.xlu0 %5324
        %5328 = vset.pattern.permute.xlu0 0
        %5329 = vperm.xlu0 %5328, %v5291
        %v5330 = vpop.permute.xlu0 %5329
        %5333 = vset.pattern.permute.xlu0 0
        %5334 = vperm.xlu0 %5333, %v5292
        %v5335 = vpop.permute.xlu0 %5334
        %5338 = vset.pattern.permute.xlu0 0
        %5339 = vperm.xlu0 %5338, %v5293
        %v5340 = vpop.permute.xlu0 %5339
        %5343 = vset.pattern.permute.xlu0 0
        %5344 = vperm.xlu0 %5343, %v5294
        %v5345 = vpop.permute.xlu0 %5344
        %5348 = vset.pattern.permute.xlu0 0
        %5349 = vperm.xlu0 %5348, %v5295
        %v5350 = vpop.permute.xlu0 %5349
        %5353 = vset.pattern.permute.xlu0 0
        %5354 = vperm.xlu0 %5353, %v5296
        %v5355 = vpop.permute.xlu0 %5354
        %5358 = vset.pattern.permute.xlu0 0
        %5359 = vperm.xlu0 %5358, %v5297
        %v5360 = vpop.permute.xlu0 %5359
        %5363 = vset.pattern.permute.xlu0 0
        %5364 = vperm.xlu0 %5363, %v5298
        %v5365 = vpop.permute.xlu0 %5364
        %5368 = vset.pattern.permute.xlu0 0
        %5369 = vperm.xlu0 %5368, %v5299
        %v5370 = vpop.permute.xlu0 %5369
        %5373 = vset.pattern.permute.xlu0 0
        %5374 = vperm.xlu0 %5373, %v5300
        %v5375 = vpop.permute.xlu0 %5374
        %5378 = vset.pattern.permute.xlu0 0
        %5379 = vperm.xlu0 %5378, %v5301
        %v5380 = vpop.permute.xlu0 %5379
        %v5446 = vunpack.c.l.b16 %v5222
        %v5447 = vunpack.c.h.b16 %v5222
        %v5448 = vunpack.c.l.b16 %v5223
        %v5449 = vunpack.c.h.b16 %v5223
        %v5450 = vunpack.c.l.b16 %v5224
        %v5451 = vunpack.c.h.b16 %v5224
        %v5452 = vunpack.c.l.b16 %v5225
        %v5453 = vunpack.c.h.b16 %v5225
        %v5454 = vunpack.c.l.b16 %v5226
        %v5455 = vunpack.c.h.b16 %v5226
        %v5456 = vunpack.c.l.b16 %v5227
        %v5457 = vunpack.c.h.b16 %v5227
        %v5458 = vunpack.c.l.b16 %v5228
        %v5459 = vunpack.c.h.b16 %v5228
        %v5460 = vunpack.c.l.b16 %v5229
        %v5461 = vunpack.c.h.b16 %v5229
        %v5462 = vunpack.c.l.b16 %v5230
        %v5463 = vunpack.c.h.b16 %v5230
        %v5464 = vunpack.c.l.b16 %v5231
        %v5465 = vunpack.c.h.b16 %v5231
        %v5466 = vunpack.c.l.b16 %v5232
        %v5467 = vunpack.c.h.b16 %v5232
        %v5468 = vunpack.c.l.b16 %v5233
        %v5469 = vunpack.c.h.b16 %v5233
        %v5470 = vunpack.c.l.b16 %v5234
        %v5471 = vunpack.c.h.b16 %v5234
        %v5472 = vunpack.c.l.b16 %v5235
        %v5473 = vunpack.c.h.b16 %v5235
        %v5474 = vunpack.c.l.b16 %v5236
        %v5475 = vunpack.c.h.b16 %v5236
        %v5476 = vunpack.c.l.b16 %v5237
        %v5477 = vunpack.c.h.b16 %v5237
        %v5478 = vunpack.c.l.b16 %v5238
        %v5479 = vunpack.c.h.b16 %v5238
        %v5480 = vunpack.c.l.b16 %v5239
        %v5481 = vunpack.c.h.b16 %v5239
        %v5482 = vunpack.c.l.b16 %v5240
        %v5483 = vunpack.c.h.b16 %v5240
        %v5484 = vunpack.c.l.b16 %v5241
        %v5485 = vunpack.c.h.b16 %v5241
        %v5486 = vunpack.c.l.b16 %v5242
        %v5487 = vunpack.c.h.b16 %v5242
        %v5488 = vunpack.c.l.b16 %v5243
        %v5489 = vunpack.c.h.b16 %v5243
        %v5490 = vunpack.c.l.b16 %v5244
        %v5491 = vunpack.c.h.b16 %v5244
        %v5492 = vunpack.c.l.b16 %v5245
        %v5493 = vunpack.c.h.b16 %v5245
        %v5494 = vunpack.c.l.b16 %v5246
        %v5495 = vunpack.c.h.b16 %v5246
        %v5496 = vunpack.c.l.b16 %v5247
        %v5497 = vunpack.c.h.b16 %v5247
        %v5498 = vunpack.c.l.b16 %v5248
        %v5499 = vunpack.c.h.b16 %v5248
        %v5500 = vunpack.c.l.b16 %v5249
        %v5501 = vunpack.c.h.b16 %v5249
        %v5502 = vunpack.c.l.b16 %v5250
        %v5503 = vunpack.c.h.b16 %v5250
        %v5504 = vunpack.c.l.b16 %v5251
        %v5505 = vunpack.c.h.b16 %v5251
        %v5506 = vunpack.c.l.b16 %v5252
        %v5507 = vunpack.c.h.b16 %v5252
        %v5508 = vunpack.c.l.b16 %v5253
        %v5509 = vunpack.c.h.b16 %v5253
        %v5510 = vunpack.c.l.b16 %v5254
        %v5511 = vunpack.c.h.b16 %v5254
        %v5512 = vunpack.c.l.b16 %v5255
        %v5513 = vunpack.c.h.b16 %v5255
        %v5514 = vunpack.c.l.b16 %v5256
        %v5515 = vunpack.c.h.b16 %v5256
        %v5516 = vunpack.c.l.b16 %v5257
        %v5517 = vunpack.c.h.b16 %v5257
        %v5518 = vunpack.c.l.b16 %v5258
        %v5519 = vunpack.c.h.b16 %v5258
        %v5520 = vunpack.c.l.b16 %v5259
        %v5521 = vunpack.c.h.b16 %v5259
        %v5522 = vunpack.c.l.b16 %v5260
        %v5523 = vunpack.c.h.b16 %v5260
        %v5524 = vunpack.c.l.b16 %v5261
        %v5525 = vunpack.c.h.b16 %v5261
        %v5526 = vunpack.c.l.b16 %v5262
        %v5527 = vunpack.c.h.b16 %v5262
        %v5528 = vunpack.c.l.b16 %v5263
        %v5529 = vunpack.c.h.b16 %v5263
        %v5530 = vunpack.c.l.b16 %v5264
        %v5531 = vunpack.c.h.b16 %v5264
        %v5532 = vunpack.c.l.b16 %v5265
        %v5533 = vunpack.c.h.b16 %v5265
        %v5534 = vunpack.c.l.b16 %v5266
        %v5535 = vunpack.c.h.b16 %v5266
        %v5536 = vunpack.c.l.b16 %v5267
        %v5537 = vunpack.c.h.b16 %v5267
        %v5538 = vunpack.c.l.b16 %v5268
        %v5539 = vunpack.c.h.b16 %v5268
        %v5540 = vunpack.c.l.b16 %v5269
        %v5541 = vunpack.c.h.b16 %v5269
        %v5542 = vunpack.c.l.b16 %v5270
        %v5543 = vunpack.c.h.b16 %v5270
        %v5544 = vunpack.c.l.b16 %v5271
        %v5545 = vunpack.c.h.b16 %v5271
        %v5546 = vunpack.c.l.b16 %v5272
        %v5547 = vunpack.c.h.b16 %v5272
        %v5548 = vunpack.c.l.b16 %v5273
        %v5549 = vunpack.c.h.b16 %v5273
        %v5550 = vunpack.c.l.b16 %v5274
        %v5551 = vunpack.c.h.b16 %v5274
        %v5552 = vunpack.c.l.b16 %v5275
        %v5553 = vunpack.c.h.b16 %v5275
        %v5554 = vunpack.c.l.b16 %v5276
        %v5555 = vunpack.c.h.b16 %v5276
        %v5556 = vunpack.c.l.b16 %v5277
        %v5557 = vunpack.c.h.b16 %v5277
        %v5558 = vunpack.c.l.b16 %v5278
        %v5559 = vunpack.c.h.b16 %v5278
        %v5560 = vunpack.c.l.b16 %v5279
        %v5561 = vunpack.c.h.b16 %v5279
        %v5562 = vunpack.c.l.b16 %v5280
        %v5563 = vunpack.c.h.b16 %v5280
        %v5564 = vunpack.c.l.b16 %v5281
        %v5565 = vunpack.c.h.b16 %v5281
        %v5566 = vunpack.c.l.b16 %v5282
        %v5567 = vunpack.c.h.b16 %v5282
        %v5568 = vunpack.c.l.b16 %v5283
        %v5569 = vunpack.c.h.b16 %v5283
        %v5570 = vunpack.c.l.b16 %v5284
        %v5571 = vunpack.c.h.b16 %v5284
        %v5572 = vunpack.c.l.b16 %v5285
        %v5573 = vunpack.c.h.b16 %v5285
        %v5574 = vpack.c.b16 %v5454, %v5446
        %v5575 = vpack.c.b16 %v5455, %v5447
        %v5576 = vpack.c.b16 %v5456, %v5448
        %v5577 = vpack.c.b16 %v5457, %v5449
        %v5578 = vpack.c.b16 %v5458, %v5450
        %v5579 = vpack.c.b16 %v5459, %v5451
        %v5580 = vpack.c.b16 %v5460, %v5452
        %v5581 = vpack.c.b16 %v5461, %v5453
        %v5582 = vpack.c.b16 %v5470, %v5462
        %v5583 = vpack.c.b16 %v5471, %v5463
        %v5584 = vpack.c.b16 %v5472, %v5464
        %v5585 = vpack.c.b16 %v5473, %v5465
        %v5586 = vpack.c.b16 %v5474, %v5466
        %v5587 = vpack.c.b16 %v5475, %v5467
        %v5588 = vpack.c.b16 %v5476, %v5468
        %v5589 = vpack.c.b16 %v5477, %v5469
        %v5590 = vpack.c.b16 %v5486, %v5478
        %v5591 = vpack.c.b16 %v5487, %v5479
        %v5592 = vpack.c.b16 %v5488, %v5480
        %v5593 = vpack.c.b16 %v5489, %v5481
        %v5594 = vpack.c.b16 %v5490, %v5482
        %v5595 = vpack.c.b16 %v5491, %v5483
        %v5596 = vpack.c.b16 %v5492, %v5484
        %v5597 = vpack.c.b16 %v5493, %v5485
        %v5598 = vpack.c.b16 %v5502, %v5494
        %v5599 = vpack.c.b16 %v5503, %v5495
        %v5600 = vpack.c.b16 %v5504, %v5496
        %v5601 = vpack.c.b16 %v5505, %v5497
        %v5602 = vpack.c.b16 %v5506, %v5498
        %v5603 = vpack.c.b16 %v5507, %v5499
        %v5604 = vpack.c.b16 %v5508, %v5500
        %v5605 = vpack.c.b16 %v5509, %v5501
        %v5606 = vpack.c.b16 %v5518, %v5510
        %v5607 = vpack.c.b16 %v5519, %v5511
        %v5608 = vpack.c.b16 %v5520, %v5512
        %v5609 = vpack.c.b16 %v5521, %v5513
        %v5610 = vpack.c.b16 %v5522, %v5514
        %v5611 = vpack.c.b16 %v5523, %v5515
        %v5612 = vpack.c.b16 %v5524, %v5516
        %v5613 = vpack.c.b16 %v5525, %v5517
        %v5614 = vpack.c.b16 %v5534, %v5526
        %v5615 = vpack.c.b16 %v5535, %v5527
        %v5616 = vpack.c.b16 %v5536, %v5528
        %v5617 = vpack.c.b16 %v5537, %v5529
        %v5618 = vpack.c.b16 %v5538, %v5530
        %v5619 = vpack.c.b16 %v5539, %v5531
        %v5620 = vpack.c.b16 %v5540, %v5532
        %v5621 = vpack.c.b16 %v5541, %v5533
        %v5622 = vpack.c.b16 %v5550, %v5542
        %v5623 = vpack.c.b16 %v5551, %v5543
        %v5624 = vpack.c.b16 %v5552, %v5544
        %v5625 = vpack.c.b16 %v5553, %v5545
        %v5626 = vpack.c.b16 %v5554, %v5546
        %v5627 = vpack.c.b16 %v5555, %v5547
        %v5628 = vpack.c.b16 %v5556, %v5548
        %v5629 = vpack.c.b16 %v5557, %v5549
        %v5630 = vpack.c.b16 %v5566, %v5558
        %v5631 = vpack.c.b16 %v5567, %v5559
        %v5632 = vpack.c.b16 %v5568, %v5560
        %v5633 = vpack.c.b16 %v5569, %v5561
        %v5634 = vpack.c.b16 %v5570, %v5562
        %v5635 = vpack.c.b16 %v5571, %v5563
        %v5636 = vpack.c.b16 %v5572, %v5564
        %v5637 = vpack.c.b16 %v5573, %v5565
        %5702 = vmatprep.subr.bf16.mxu0 %v4995
        %5703 = vmatpush1.bf16.msra.mxu0 %v4994
        %5704 = vmatprep.subr.bf16.mxu0 %v4991
        %5705 = vmatpush1.bf16.msra.mxu0 %v4990
        %5706 = vmatprep.subr.bf16.mxu0 %v4987
        %5707 = vmatpush1.bf16.msra.mxu0 %v4986
        %5708 = vmatprep.subr.bf16.mxu0 %v4983
        %5709 = vmatpush1.bf16.msra.mxu0 %v4982
        %5710 = vmatprep.subr.bf16.mxu0 %v4979
        %5711 = vmatpush1.bf16.msra.mxu0 %v4978
        %5712 = vmatprep.subr.bf16.mxu0 %v4975
        %5713 = vmatpush1.bf16.msra.mxu0 %v4974
        %5714 = vmatprep.subr.bf16.mxu0 %v4971
        %5715 = vmatpush1.bf16.msra.mxu0 %v4970
        %5716 = vmatprep.subr.bf16.mxu0 %v4967
        %5717 = vmatpush1.bf16.msra.mxu0 %v4966
        %5718 = vmatprep.subr.bf16.mxu0 %v5027
        %5719 = vmatpush2.bf16.msra.mxu0 %v5026
        %5720 = vmatprep.subr.bf16.mxu0 %v5023
        %5721 = vmatpush2.bf16.msra.mxu0 %v5022
        %5722 = vmatprep.subr.bf16.mxu0 %v5019
        %5723 = vmatpush2.bf16.msra.mxu0 %v5018
        %5724 = vmatprep.subr.bf16.mxu0 %v5015
        %5725 = vmatpush2.bf16.msra.mxu0 %v5014
        %5726 = vmatprep.subr.bf16.mxu0 %v5011
        %5727 = vmatpush2.bf16.msra.mxu0 %v5010
        %5728 = vmatprep.subr.bf16.mxu0 %v5007
        %5729 = vmatpush2.bf16.msra.mxu0 %v5006
        %5730 = vmatprep.subr.bf16.mxu0 %v5003
        %5731 = vmatpush2.bf16.msra.mxu0 %v5002
        %5732 = vmatprep.subr.bf16.mxu0 %v4999
        %5733 = vmatpush2.bf16.msra.mxu0 %v4998
        %5734 = vmatprep.mubr.bf16.mxu0 %v5575
        %5735 = vmatmul.mubr.bf16.gmra.mxu0 %v5574
        %v5736 = vpop.f32.mrf.mxu0
        %v5737 = vadd.f32 %v5305, %v5736
        %v5738 = vpop.f32.mrf.mxu0
        %v5739 = vadd.f32 %v5305, %v5738
        %v5740 = vpop.f32.mrf.mxu0
        %v5741 = vadd.f32 %v5310, %v5740
        %v5742 = vpop.f32.mrf.mxu0
        %v5743 = vadd.f32 %v5310, %v5742
        %5744 = vmatprep.mubr.bf16.mxu0 %v5583
        %5745 = vmatmul.mubr.bf16.gmra.mxu0 %v5582
        %v5746 = vpop.f32.mrf.mxu0
        %v5747 = vadd.f32 %v5315, %v5746
        %v5748 = vpop.f32.mrf.mxu0
        %v5749 = vadd.f32 %v5315, %v5748
        %v5750 = vpop.f32.mrf.mxu0
        %v5751 = vadd.f32 %v5320, %v5750
        %v5752 = vpop.f32.mrf.mxu0
        %v5753 = vadd.f32 %v5320, %v5752
        %5754 = vmatprep.mubr.bf16.mxu0 %v5591
        %5755 = vmatmul.mubr.bf16.gmra.mxu0 %v5590
        %v5756 = vpop.f32.mrf.mxu0
        %v5757 = vadd.f32 %v5325, %v5756
        %v5758 = vpop.f32.mrf.mxu0
        %v5759 = vadd.f32 %v5325, %v5758
        %v5760 = vpop.f32.mrf.mxu0
        %v5761 = vadd.f32 %v5330, %v5760
        %v5762 = vpop.f32.mrf.mxu0
        %v5763 = vadd.f32 %v5330, %v5762
        %5764 = vmatprep.mubr.bf16.mxu0 %v5599
        %5765 = vmatmul.mubr.bf16.gmra.mxu0 %v5598
        %v5766 = vpop.f32.mrf.mxu0
        %v5767 = vadd.f32 %v5335, %v5766
        %v5768 = vpop.f32.mrf.mxu0
        %v5769 = vadd.f32 %v5335, %v5768
        %v5770 = vpop.f32.mrf.mxu0
        %v5771 = vadd.f32 %v5340, %v5770
        %v5772 = vpop.f32.mrf.mxu0
        %v5773 = vadd.f32 %v5340, %v5772
        %5774 = vmatprep.mubr.bf16.mxu0 %v5607
        %5775 = vmatmul.mubr.bf16.gmra.mxu0 %v5606
        %v5776 = vpop.f32.mrf.mxu0
        %v5777 = vadd.f32 %v5345, %v5776
        %v5778 = vpop.f32.mrf.mxu0
        %v5779 = vadd.f32 %v5345, %v5778
        %v5780 = vpop.f32.mrf.mxu0
        %v5781 = vadd.f32 %v5350, %v5780
        %v5782 = vpop.f32.mrf.mxu0
        %v5783 = vadd.f32 %v5350, %v5782
        %5784 = vmatprep.mubr.bf16.mxu0 %v5615
        %5785 = vmatmul.mubr.bf16.gmra.mxu0 %v5614
        %v5786 = vpop.f32.mrf.mxu0
        %v5787 = vadd.f32 %v5355, %v5786
        %v5788 = vpop.f32.mrf.mxu0
        %v5789 = vadd.f32 %v5355, %v5788
        %v5790 = vpop.f32.mrf.mxu0
        %v5791 = vadd.f32 %v5360, %v5790
        %v5792 = vpop.f32.mrf.mxu0
        %v5793 = vadd.f32 %v5360, %v5792
        %5794 = vmatprep.mubr.bf16.mxu0 %v5623
        %5795 = vmatmul.mubr.bf16.gmra.mxu0 %v5622
        %v5796 = vpop.f32.mrf.mxu0
        %v5797 = vadd.f32 %v5365, %v5796
        %v5798 = vpop.f32.mrf.mxu0
        %v5799 = vadd.f32 %v5365, %v5798
        %v5800 = vpop.f32.mrf.mxu0
        %v5801 = vadd.f32 %v5370, %v5800
        %v5802 = vpop.f32.mrf.mxu0
        %v5803 = vadd.f32 %v5370, %v5802
        %5804 = vmatprep.mubr.bf16.mxu0 %v5631
        %5805 = vmatmul.mubr.bf16.gmra.mxu0 %v5630
        %v5806 = vpop.f32.mrf.mxu0
        %v5807 = vadd.f32 %v5375, %v5806
        %v5808 = vpop.f32.mrf.mxu0
        %v5809 = vadd.f32 %v5375, %v5808
        %v5810 = vpop.f32.mrf.mxu0
        %v5811 = vadd.f32 %v5380, %v5810
        %v5812 = vpop.f32.mrf.mxu0
        %v5813 = vadd.f32 %v5380, %v5812
        %5814 = vdwg.mxu0
        %5815 = vmatprep.subr.bf16.mxu0 %v5059
        %5816 = vmatpush1.bf16.msra.mxu0 %v5058
        %5817 = vmatprep.subr.bf16.mxu0 %v5055
        %5818 = vmatpush1.bf16.msra.mxu0 %v5054
        %5819 = vmatprep.subr.bf16.mxu0 %v5051
        %5820 = vmatpush1.bf16.msra.mxu0 %v5050
        %5821 = vmatprep.subr.bf16.mxu0 %v5047
        %5822 = vmatpush1.bf16.msra.mxu0 %v5046
        %5823 = vmatprep.subr.bf16.mxu0 %v5043
        %5824 = vmatpush1.bf16.msra.mxu0 %v5042
        %5825 = vmatprep.subr.bf16.mxu0 %v5039
        %5826 = vmatpush1.bf16.msra.mxu0 %v5038
        %5827 = vmatprep.subr.bf16.mxu0 %v5035
        %5828 = vmatpush1.bf16.msra.mxu0 %v5034
        %5829 = vmatprep.subr.bf16.mxu0 %v5031
        %5830 = vmatpush1.bf16.msra.mxu0 %v5030
        %5831 = vmatprep.subr.bf16.mxu0 %v5091
        %5832 = vmatpush2.bf16.msra.mxu0 %v5090
        %5833 = vmatprep.subr.bf16.mxu0 %v5087
        %5834 = vmatpush2.bf16.msra.mxu0 %v5086
        %5835 = vmatprep.subr.bf16.mxu0 %v5083
        %5836 = vmatpush2.bf16.msra.mxu0 %v5082
        %5837 = vmatprep.subr.bf16.mxu0 %v5079
        %5838 = vmatpush2.bf16.msra.mxu0 %v5078
        %5839 = vmatprep.subr.bf16.mxu0 %v5075
        %5840 = vmatpush2.bf16.msra.mxu0 %v5074
        %5841 = vmatprep.subr.bf16.mxu0 %v5071
        %5842 = vmatpush2.bf16.msra.mxu0 %v5070
        %5843 = vmatprep.subr.bf16.mxu0 %v5067
        %5844 = vmatpush2.bf16.msra.mxu0 %v5066
        %5845 = vmatprep.subr.bf16.mxu0 %v5063
        %5846 = vmatpush2.bf16.msra.mxu0 %v5062
        %5847 = vmatprep.mubr.bf16.mxu0 %v5577
        %5848 = vmatmul.mubr.bf16.gmra.mxu0 %v5576
        %v5849 = vpop.f32.mrf.mxu0
        %v5850 = vadd.f32 %v5737, %v5849
        %v5851 = vpop.f32.mrf.mxu0
        %v5852 = vadd.f32 %v5739, %v5851
        %v5853 = vpop.f32.mrf.mxu0
        %v5854 = vadd.f32 %v5741, %v5853
        %v5855 = vpop.f32.mrf.mxu0
        %v5856 = vadd.f32 %v5743, %v5855
        %5857 = vmatprep.mubr.bf16.mxu0 %v5585
        %5858 = vmatmul.mubr.bf16.gmra.mxu0 %v5584
        %v5859 = vpop.f32.mrf.mxu0
        %v5860 = vadd.f32 %v5747, %v5859
        %v5861 = vpop.f32.mrf.mxu0
        %v5862 = vadd.f32 %v5749, %v5861
        %v5863 = vpop.f32.mrf.mxu0
        %v5864 = vadd.f32 %v5751, %v5863
        %v5865 = vpop.f32.mrf.mxu0
        %v5866 = vadd.f32 %v5753, %v5865
        %5867 = vmatprep.mubr.bf16.mxu0 %v5593
        %5868 = vmatmul.mubr.bf16.gmra.mxu0 %v5592
        %v5869 = vpop.f32.mrf.mxu0
        %v5870 = vadd.f32 %v5757, %v5869
        %v5871 = vpop.f32.mrf.mxu0
        %v5872 = vadd.f32 %v5759, %v5871
        %v5873 = vpop.f32.mrf.mxu0
        %v5874 = vadd.f32 %v5761, %v5873
        %v5875 = vpop.f32.mrf.mxu0
        %v5876 = vadd.f32 %v5763, %v5875
        %5877 = vmatprep.mubr.bf16.mxu0 %v5601
        %5878 = vmatmul.mubr.bf16.gmra.mxu0 %v5600
        %v5879 = vpop.f32.mrf.mxu0
        %v5880 = vadd.f32 %v5767, %v5879
        %v5881 = vpop.f32.mrf.mxu0
        %v5882 = vadd.f32 %v5769, %v5881
        %v5883 = vpop.f32.mrf.mxu0
        %v5884 = vadd.f32 %v5771, %v5883
        %v5885 = vpop.f32.mrf.mxu0
        %v5886 = vadd.f32 %v5773, %v5885
        %5887 = vmatprep.mubr.bf16.mxu0 %v5609
        %5888 = vmatmul.mubr.bf16.gmra.mxu0 %v5608
        %v5889 = vpop.f32.mrf.mxu0
        %v5890 = vadd.f32 %v5777, %v5889
        %v5891 = vpop.f32.mrf.mxu0
        %v5892 = vadd.f32 %v5779, %v5891
        %v5893 = vpop.f32.mrf.mxu0
        %v5894 = vadd.f32 %v5781, %v5893
        %v5895 = vpop.f32.mrf.mxu0
        %v5896 = vadd.f32 %v5783, %v5895
        %5897 = vmatprep.mubr.bf16.mxu0 %v5617
        %5898 = vmatmul.mubr.bf16.gmra.mxu0 %v5616
        %v5899 = vpop.f32.mrf.mxu0
        %v5900 = vadd.f32 %v5787, %v5899
        %v5901 = vpop.f32.mrf.mxu0
        %v5902 = vadd.f32 %v5789, %v5901
        %v5903 = vpop.f32.mrf.mxu0
        %v5904 = vadd.f32 %v5791, %v5903
        %v5905 = vpop.f32.mrf.mxu0
        %v5906 = vadd.f32 %v5793, %v5905
        %5907 = vmatprep.mubr.bf16.mxu0 %v5625
        %5908 = vmatmul.mubr.bf16.gmra.mxu0 %v5624
        %v5909 = vpop.f32.mrf.mxu0
        %v5910 = vadd.f32 %v5797, %v5909
        %v5911 = vpop.f32.mrf.mxu0
        %v5912 = vadd.f32 %v5799, %v5911
        %v5913 = vpop.f32.mrf.mxu0
        %v5914 = vadd.f32 %v5801, %v5913
        %v5915 = vpop.f32.mrf.mxu0
        %v5916 = vadd.f32 %v5803, %v5915
        %5917 = vmatprep.mubr.bf16.mxu0 %v5633
        %5918 = vmatmul.mubr.bf16.gmra.mxu0 %v5632
        %v5919 = vpop.f32.mrf.mxu0
        %v5920 = vadd.f32 %v5807, %v5919
        %v5921 = vpop.f32.mrf.mxu0
        %v5922 = vadd.f32 %v5809, %v5921
        %v5923 = vpop.f32.mrf.mxu0
        %v5924 = vadd.f32 %v5811, %v5923
        %v5925 = vpop.f32.mrf.mxu0
        %v5926 = vadd.f32 %v5813, %v5925
        %5927 = vdwg.mxu0
        %5928 = vmatprep.subr.bf16.mxu0 %v5123
        %5929 = vmatpush1.bf16.msra.mxu0 %v5122
        %5930 = vmatprep.subr.bf16.mxu0 %v5119
        %5931 = vmatpush1.bf16.msra.mxu0 %v5118
        %5932 = vmatprep.subr.bf16.mxu0 %v5115
        %5933 = vmatpush1.bf16.msra.mxu0 %v5114
        %5934 = vmatprep.subr.bf16.mxu0 %v5111
        %5935 = vmatpush1.bf16.msra.mxu0 %v5110
        %5936 = vmatprep.subr.bf16.mxu0 %v5107
        %5937 = vmatpush1.bf16.msra.mxu0 %v5106
        %5938 = vmatprep.subr.bf16.mxu0 %v5103
        %5939 = vmatpush1.bf16.msra.mxu0 %v5102
        %5940 = vmatprep.subr.bf16.mxu0 %v5099
        %5941 = vmatpush1.bf16.msra.mxu0 %v5098
        %5942 = vmatprep.subr.bf16.mxu0 %v5095
        %5943 = vmatpush1.bf16.msra.mxu0 %v5094
        %5944 = vmatprep.subr.bf16.mxu0 %v5155
        %5945 = vmatpush2.bf16.msra.mxu0 %v5154
        %5946 = vmatprep.subr.bf16.mxu0 %v5151
        %5947 = vmatpush2.bf16.msra.mxu0 %v5150
        %5948 = vmatprep.subr.bf16.mxu0 %v5147
        %5949 = vmatpush2.bf16.msra.mxu0 %v5146
        %5950 = vmatprep.subr.bf16.mxu0 %v5143
        %5951 = vmatpush2.bf16.msra.mxu0 %v5142
        %5952 = vmatprep.subr.bf16.mxu0 %v5139
        %5953 = vmatpush2.bf16.msra.mxu0 %v5138
        %5954 = vmatprep.subr.bf16.mxu0 %v5135
        %5955 = vmatpush2.bf16.msra.mxu0 %v5134
        %5956 = vmatprep.subr.bf16.mxu0 %v5131
        %5957 = vmatpush2.bf16.msra.mxu0 %v5130
        %5958 = vmatprep.subr.bf16.mxu0 %v5127
        %5959 = vmatpush2.bf16.msra.mxu0 %v5126
        %5960 = vmatprep.mubr.bf16.mxu0 %v5579
        %5961 = vmatmul.mubr.bf16.gmra.mxu0 %v5578
        %v5962 = vpop.f32.mrf.mxu0
        %v5963 = vadd.f32 %v5850, %v5962
        %v5964 = vpop.f32.mrf.mxu0
        %v5965 = vadd.f32 %v5852, %v5964
        %v5966 = vpop.f32.mrf.mxu0
        %v5967 = vadd.f32 %v5854, %v5966
        %v5968 = vpop.f32.mrf.mxu0
        %v5969 = vadd.f32 %v5856, %v5968
        %5970 = vmatprep.mubr.bf16.mxu0 %v5587
        %5971 = vmatmul.mubr.bf16.gmra.mxu0 %v5586
        %v5972 = vpop.f32.mrf.mxu0
        %v5973 = vadd.f32 %v5860, %v5972
        %v5974 = vpop.f32.mrf.mxu0
        %v5975 = vadd.f32 %v5862, %v5974
        %v5976 = vpop.f32.mrf.mxu0
        %v5977 = vadd.f32 %v5864, %v5976
        %v5978 = vpop.f32.mrf.mxu0
        %v5979 = vadd.f32 %v5866, %v5978
        %5980 = vmatprep.mubr.bf16.mxu0 %v5595
        %5981 = vmatmul.mubr.bf16.gmra.mxu0 %v5594
        %v5982 = vpop.f32.mrf.mxu0
        %v5983 = vadd.f32 %v5870, %v5982
        %v5984 = vpop.f32.mrf.mxu0
        %v5985 = vadd.f32 %v5872, %v5984
        %v5986 = vpop.f32.mrf.mxu0
        %v5987 = vadd.f32 %v5874, %v5986
        %v5988 = vpop.f32.mrf.mxu0
        %v5989 = vadd.f32 %v5876, %v5988
        %5990 = vmatprep.mubr.bf16.mxu0 %v5603
        %5991 = vmatmul.mubr.bf16.gmra.mxu0 %v5602
        %v5992 = vpop.f32.mrf.mxu0
        %v5993 = vadd.f32 %v5880, %v5992
        %v5994 = vpop.f32.mrf.mxu0
        %v5995 = vadd.f32 %v5882, %v5994
        %v5996 = vpop.f32.mrf.mxu0
        %v5997 = vadd.f32 %v5884, %v5996
        %v5998 = vpop.f32.mrf.mxu0
        %v5999 = vadd.f32 %v5886, %v5998
        %6000 = vmatprep.mubr.bf16.mxu0 %v5611
        %6001 = vmatmul.mubr.bf16.gmra.mxu0 %v5610
        %v6002 = vpop.f32.mrf.mxu0
        %v6003 = vadd.f32 %v5890, %v6002
        %v6004 = vpop.f32.mrf.mxu0
        %v6005 = vadd.f32 %v5892, %v6004
        %v6006 = vpop.f32.mrf.mxu0
        %v6007 = vadd.f32 %v5894, %v6006
        %v6008 = vpop.f32.mrf.mxu0
        %v6009 = vadd.f32 %v5896, %v6008
        %6010 = vmatprep.mubr.bf16.mxu0 %v5619
        %6011 = vmatmul.mubr.bf16.gmra.mxu0 %v5618
        %v6012 = vpop.f32.mrf.mxu0
        %v6013 = vadd.f32 %v5900, %v6012
        %v6014 = vpop.f32.mrf.mxu0
        %v6015 = vadd.f32 %v5902, %v6014
        %v6016 = vpop.f32.mrf.mxu0
        %v6017 = vadd.f32 %v5904, %v6016
        %v6018 = vpop.f32.mrf.mxu0
        %v6019 = vadd.f32 %v5906, %v6018
        %6020 = vmatprep.mubr.bf16.mxu0 %v5627
        %6021 = vmatmul.mubr.bf16.gmra.mxu0 %v5626
        %v6022 = vpop.f32.mrf.mxu0
        %v6023 = vadd.f32 %v5910, %v6022
        %v6024 = vpop.f32.mrf.mxu0
        %v6025 = vadd.f32 %v5912, %v6024
        %v6026 = vpop.f32.mrf.mxu0
        %v6027 = vadd.f32 %v5914, %v6026
        %v6028 = vpop.f32.mrf.mxu0
        %v6029 = vadd.f32 %v5916, %v6028
        %6030 = vmatprep.mubr.bf16.mxu0 %v5635
        %6031 = vmatmul.mubr.bf16.gmra.mxu0 %v5634
        %v6032 = vpop.f32.mrf.mxu0
        %v6033 = vadd.f32 %v5920, %v6032
        %v6034 = vpop.f32.mrf.mxu0
        %v6035 = vadd.f32 %v5922, %v6034
        %v6036 = vpop.f32.mrf.mxu0
        %v6037 = vadd.f32 %v5924, %v6036
        %v6038 = vpop.f32.mrf.mxu0
        %v6039 = vadd.f32 %v5926, %v6038
        %6040 = vdwg.mxu0
        %6041 = vmatprep.subr.bf16.mxu0 %v5187
        %6042 = vmatpush1.bf16.msra.mxu0 %v5186
        %6043 = vmatprep.subr.bf16.mxu0 %v5183
        %6044 = vmatpush1.bf16.msra.mxu0 %v5182
        %6045 = vmatprep.subr.bf16.mxu0 %v5179
        %6046 = vmatpush1.bf16.msra.mxu0 %v5178
        %6047 = vmatprep.subr.bf16.mxu0 %v5175
        %6048 = vmatpush1.bf16.msra.mxu0 %v5174
        %6049 = vmatprep.subr.bf16.mxu0 %v5171
        %6050 = vmatpush1.bf16.msra.mxu0 %v5170
        %6051 = vmatprep.subr.bf16.mxu0 %v5167
        %6052 = vmatpush1.bf16.msra.mxu0 %v5166
        %6053 = vmatprep.subr.bf16.mxu0 %v5163
        %6054 = vmatpush1.bf16.msra.mxu0 %v5162
        %6055 = vmatprep.subr.bf16.mxu0 %v5159
        %6056 = vmatpush1.bf16.msra.mxu0 %v5158
        %6057 = vmatprep.subr.bf16.mxu0 %v5219
        %6058 = vmatpush2.bf16.msra.mxu0 %v5218
        %6059 = vmatprep.subr.bf16.mxu0 %v5215
        %6060 = vmatpush2.bf16.msra.mxu0 %v5214
        %6061 = vmatprep.subr.bf16.mxu0 %v5211
        %6062 = vmatpush2.bf16.msra.mxu0 %v5210
        %6063 = vmatprep.subr.bf16.mxu0 %v5207
        %6064 = vmatpush2.bf16.msra.mxu0 %v5206
        %6065 = vmatprep.subr.bf16.mxu0 %v5203
        %6066 = vmatpush2.bf16.msra.mxu0 %v5202
        %6067 = vmatprep.subr.bf16.mxu0 %v5199
        %6068 = vmatpush2.bf16.msra.mxu0 %v5198
        %6069 = vmatprep.subr.bf16.mxu0 %v5195
        %6070 = vmatpush2.bf16.msra.mxu0 %v5194
        %6071 = vmatprep.subr.bf16.mxu0 %v5191
        %6072 = vmatpush2.bf16.msra.mxu0 %v5190
        %6073 = vmatprep.mubr.bf16.mxu0 %v5581
        %6074 = vmatmul.mubr.bf16.gmra.mxu0 %v5580
        %v6075 = vpop.f32.mrf.mxu0
        %v6076 = vadd.f32 %v5963, %v6075
        %v6077 = vpop.f32.mrf.mxu0
        %v6078 = vadd.f32 %v5965, %v6077
        %v6079 = vpop.f32.mrf.mxu0
        %v6080 = vadd.f32 %v5967, %v6079
        %v6081 = vpop.f32.mrf.mxu0
        %v6082 = vadd.f32 %v5969, %v6081
        %6083 = vmatprep.mubr.bf16.mxu0 %v5589
        %6084 = vmatmul.mubr.bf16.gmra.mxu0 %v5588
        %v6085 = vpop.f32.mrf.mxu0
        %v6086 = vadd.f32 %v5973, %v6085
        %v6087 = vpop.f32.mrf.mxu0
        %v6088 = vadd.f32 %v5975, %v6087
        %v6089 = vpop.f32.mrf.mxu0
        %v6090 = vadd.f32 %v5977, %v6089
        %v6091 = vpop.f32.mrf.mxu0
        %v6092 = vadd.f32 %v5979, %v6091
        %6093 = vmatprep.mubr.bf16.mxu0 %v5597
        %6094 = vmatmul.mubr.bf16.gmra.mxu0 %v5596
        %v6095 = vpop.f32.mrf.mxu0
        %v6096 = vadd.f32 %v5983, %v6095
        %v6097 = vpop.f32.mrf.mxu0
        %v6098 = vadd.f32 %v5985, %v6097
        %v6099 = vpop.f32.mrf.mxu0
        %v6100 = vadd.f32 %v5987, %v6099
        %v6101 = vpop.f32.mrf.mxu0
        %v6102 = vadd.f32 %v5989, %v6101
        %6103 = vmatprep.mubr.bf16.mxu0 %v5605
        %6104 = vmatmul.mubr.bf16.gmra.mxu0 %v5604
        %v6105 = vpop.f32.mrf.mxu0
        %v6106 = vadd.f32 %v5993, %v6105
        %v6107 = vpop.f32.mrf.mxu0
        %v6108 = vadd.f32 %v5995, %v6107
        %v6109 = vpop.f32.mrf.mxu0
        %v6110 = vadd.f32 %v5997, %v6109
        %v6111 = vpop.f32.mrf.mxu0
        %v6112 = vadd.f32 %v5999, %v6111
        %6113 = vmatprep.mubr.bf16.mxu0 %v5613
        %6114 = vmatmul.mubr.bf16.gmra.mxu0 %v5612
        %v6115 = vpop.f32.mrf.mxu0
        %v6116 = vadd.f32 %v6003, %v6115
        %v6117 = vpop.f32.mrf.mxu0
        %v6118 = vadd.f32 %v6005, %v6117
        %v6119 = vpop.f32.mrf.mxu0
        %v6120 = vadd.f32 %v6007, %v6119
        %v6121 = vpop.f32.mrf.mxu0
        %v6122 = vadd.f32 %v6009, %v6121
        %6123 = vmatprep.mubr.bf16.mxu0 %v5621
        %6124 = vmatmul.mubr.bf16.gmra.mxu0 %v5620
        %v6125 = vpop.f32.mrf.mxu0
        %v6126 = vadd.f32 %v6013, %v6125
        %v6127 = vpop.f32.mrf.mxu0
        %v6128 = vadd.f32 %v6015, %v6127
        %v6129 = vpop.f32.mrf.mxu0
        %v6130 = vadd.f32 %v6017, %v6129
        %v6131 = vpop.f32.mrf.mxu0
        %v6132 = vadd.f32 %v6019, %v6131
        %6133 = vmatprep.mubr.bf16.mxu0 %v5629
        %6134 = vmatmul.mubr.bf16.gmra.mxu0 %v5628
        %v6135 = vpop.f32.mrf.mxu0
        %v6136 = vadd.f32 %v6023, %v6135
        %v6137 = vpop.f32.mrf.mxu0
        %v6138 = vadd.f32 %v6025, %v6137
        %v6139 = vpop.f32.mrf.mxu0
        %v6140 = vadd.f32 %v6027, %v6139
        %v6141 = vpop.f32.mrf.mxu0
        %v6142 = vadd.f32 %v6029, %v6141
        %6143 = vmatprep.mubr.bf16.mxu0 %v5637
        %6144 = vmatmul.mubr.bf16.gmra.mxu0 %v5636
        %v6145 = vpop.f32.mrf.mxu0
        %v6146 = vadd.f32 %v6033, %v6145
        %v6147 = vpop.f32.mrf.mxu0
        %v6148 = vadd.f32 %v6035, %v6147
        %v6149 = vpop.f32.mrf.mxu0
        %v6150 = vadd.f32 %v6037, %v6149
        %v6151 = vpop.f32.mrf.mxu0
        %v6152 = vadd.f32 %v6039, %v6151
        %6153 = vdwg.mxu0
        %6154 = vmatprep.subr.bf16.mxu0 %v4997
        %6155 = vmatpush1.bf16.msra.mxu0 %v4996
        %6156 = vmatprep.subr.bf16.mxu0 %v4993
        %6157 = vmatpush1.bf16.msra.mxu0 %v4992
        %6158 = vmatprep.subr.bf16.mxu0 %v4989
        %6159 = vmatpush1.bf16.msra.mxu0 %v4988
        %6160 = vmatprep.subr.bf16.mxu0 %v4985
        %6161 = vmatpush1.bf16.msra.mxu0 %v4984
        %6162 = vmatprep.subr.bf16.mxu0 %v4981
        %6163 = vmatpush1.bf16.msra.mxu0 %v4980
        %6164 = vmatprep.subr.bf16.mxu0 %v4977
        %6165 = vmatpush1.bf16.msra.mxu0 %v4976
        %6166 = vmatprep.subr.bf16.mxu0 %v4973
        %6167 = vmatpush1.bf16.msra.mxu0 %v4972
        %6168 = vmatprep.subr.bf16.mxu0 %v4969
        %6169 = vmatpush1.bf16.msra.mxu0 %v4968
        %6170 = vmatprep.subr.bf16.mxu0 %v5029
        %6171 = vmatpush2.bf16.msra.mxu0 %v5028
        %6172 = vmatprep.subr.bf16.mxu0 %v5025
        %6173 = vmatpush2.bf16.msra.mxu0 %v5024
        %6174 = vmatprep.subr.bf16.mxu0 %v5021
        %6175 = vmatpush2.bf16.msra.mxu0 %v5020
        %6176 = vmatprep.subr.bf16.mxu0 %v5017
        %6177 = vmatpush2.bf16.msra.mxu0 %v5016
        %6178 = vmatprep.subr.bf16.mxu0 %v5013
        %6179 = vmatpush2.bf16.msra.mxu0 %v5012
        %6180 = vmatprep.subr.bf16.mxu0 %v5009
        %6181 = vmatpush2.bf16.msra.mxu0 %v5008
        %6182 = vmatprep.subr.bf16.mxu0 %v5005
        %6183 = vmatpush2.bf16.msra.mxu0 %v5004
        %6184 = vmatprep.subr.bf16.mxu0 %v5001
        %6185 = vmatpush2.bf16.msra.mxu0 %v5000
        %6186 = vmatprep.mubr.bf16.mxu0 %v5575
        %6187 = vmatmul.mubr.bf16.gmra.mxu0 %v5574
        %v6188 = vpop.f32.mrf.mxu0
        %v6189 = vadd.f32 %v5305, %v6188
        %v6190 = vpop.f32.mrf.mxu0
        %v6191 = vadd.f32 %v5305, %v6190
        %v6192 = vpop.f32.mrf.mxu0
        %v6193 = vadd.f32 %v5310, %v6192
        %v6194 = vpop.f32.mrf.mxu0
        %v6195 = vadd.f32 %v5310, %v6194
        %6196 = vmatprep.mubr.bf16.mxu0 %v5583
        %6197 = vmatmul.mubr.bf16.gmra.mxu0 %v5582
        %v6198 = vpop.f32.mrf.mxu0
        %v6199 = vadd.f32 %v5315, %v6198
        %v6200 = vpop.f32.mrf.mxu0
        %v6201 = vadd.f32 %v5315, %v6200
        %v6202 = vpop.f32.mrf.mxu0
        %v6203 = vadd.f32 %v5320, %v6202
        %v6204 = vpop.f32.mrf.mxu0
        %v6205 = vadd.f32 %v5320, %v6204
        %6206 = vmatprep.mubr.bf16.mxu0 %v5591
        %6207 = vmatmul.mubr.bf16.gmra.mxu0 %v5590
        %v6208 = vpop.f32.mrf.mxu0
        %v6209 = vadd.f32 %v5325, %v6208
        %v6210 = vpop.f32.mrf.mxu0
        %v6211 = vadd.f32 %v5325, %v6210
        %v6212 = vpop.f32.mrf.mxu0
        %v6213 = vadd.f32 %v5330, %v6212
        %v6214 = vpop.f32.mrf.mxu0
        %v6215 = vadd.f32 %v5330, %v6214
        %6216 = vmatprep.mubr.bf16.mxu0 %v5599
        %6217 = vmatmul.mubr.bf16.gmra.mxu0 %v5598
        %v6218 = vpop.f32.mrf.mxu0
        %v6219 = vadd.f32 %v5335, %v6218
        %v6220 = vpop.f32.mrf.mxu0
        %v6221 = vadd.f32 %v5335, %v6220
        %v6222 = vpop.f32.mrf.mxu0
        %v6223 = vadd.f32 %v5340, %v6222
        %v6224 = vpop.f32.mrf.mxu0
        %v6225 = vadd.f32 %v5340, %v6224
        %6226 = vmatprep.mubr.bf16.mxu0 %v5607
        %6227 = vmatmul.mubr.bf16.gmra.mxu0 %v5606
        %v6228 = vpop.f32.mrf.mxu0
        %v6229 = vadd.f32 %v5345, %v6228
        %v6230 = vpop.f32.mrf.mxu0
        %v6231 = vadd.f32 %v5345, %v6230
        %v6232 = vpop.f32.mrf.mxu0
        %v6233 = vadd.f32 %v5350, %v6232
        %v6234 = vpop.f32.mrf.mxu0
        %v6235 = vadd.f32 %v5350, %v6234
        %6236 = vmatprep.mubr.bf16.mxu0 %v5615
        %6237 = vmatmul.mubr.bf16.gmra.mxu0 %v5614
        %v6238 = vpop.f32.mrf.mxu0
        %v6239 = vadd.f32 %v5355, %v6238
        %v6240 = vpop.f32.mrf.mxu0
        %v6241 = vadd.f32 %v5355, %v6240
        %v6242 = vpop.f32.mrf.mxu0
        %v6243 = vadd.f32 %v5360, %v6242
        %v6244 = vpop.f32.mrf.mxu0
        %v6245 = vadd.f32 %v5360, %v6244
        %6246 = vmatprep.mubr.bf16.mxu0 %v5623
        %6247 = vmatmul.mubr.bf16.gmra.mxu0 %v5622
        %v6248 = vpop.f32.mrf.mxu0
        %v6249 = vadd.f32 %v5365, %v6248
        %v6250 = vpop.f32.mrf.mxu0
        %v6251 = vadd.f32 %v5365, %v6250
        %v6252 = vpop.f32.mrf.mxu0
        %v6253 = vadd.f32 %v5370, %v6252
        %v6254 = vpop.f32.mrf.mxu0
        %v6255 = vadd.f32 %v5370, %v6254
        %6256 = vmatprep.mubr.bf16.mxu0 %v5631
        %6257 = vmatmul.mubr.bf16.gmra.mxu0 %v5630
        %v6258 = vpop.f32.mrf.mxu0
        %v6259 = vadd.f32 %v5375, %v6258
        %v6260 = vpop.f32.mrf.mxu0
        %v6261 = vadd.f32 %v5375, %v6260
        %v6262 = vpop.f32.mrf.mxu0
        %v6263 = vadd.f32 %v5380, %v6262
        %v6264 = vpop.f32.mrf.mxu0
        %v6265 = vadd.f32 %v5380, %v6264
        %6266 = vdwg.mxu0
        %6267 = vmatprep.subr.bf16.mxu0 %v5061
        %6268 = vmatpush1.bf16.msra.mxu0 %v5060
        %6269 = vmatprep.subr.bf16.mxu0 %v5057
        %6270 = vmatpush1.bf16.msra.mxu0 %v5056
        %6271 = vmatprep.subr.bf16.mxu0 %v5053
        %6272 = vmatpush1.bf16.msra.mxu0 %v5052
        %6273 = vmatprep.subr.bf16.mxu0 %v5049
        %6274 = vmatpush1.bf16.msra.mxu0 %v5048
        %6275 = vmatprep.subr.bf16.mxu0 %v5045
        %6276 = vmatpush1.bf16.msra.mxu0 %v5044
        %6277 = vmatprep.subr.bf16.mxu0 %v5041
        %6278 = vmatpush1.bf16.msra.mxu0 %v5040
        %6279 = vmatprep.subr.bf16.mxu0 %v5037
        %6280 = vmatpush1.bf16.msra.mxu0 %v5036
        %6281 = vmatprep.subr.bf16.mxu0 %v5033
        %6282 = vmatpush1.bf16.msra.mxu0 %v5032
        %6283 = vmatprep.subr.bf16.mxu0 %v5093
        %6284 = vmatpush2.bf16.msra.mxu0 %v5092
        %6285 = vmatprep.subr.bf16.mxu0 %v5089
        %6286 = vmatpush2.bf16.msra.mxu0 %v5088
        %6287 = vmatprep.subr.bf16.mxu0 %v5085
        %6288 = vmatpush2.bf16.msra.mxu0 %v5084
        %6289 = vmatprep.subr.bf16.mxu0 %v5081
        %6290 = vmatpush2.bf16.msra.mxu0 %v5080
        %6291 = vmatprep.subr.bf16.mxu0 %v5077
        %6292 = vmatpush2.bf16.msra.mxu0 %v5076
        %6293 = vmatprep.subr.bf16.mxu0 %v5073
        %6294 = vmatpush2.bf16.msra.mxu0 %v5072
        %6295 = vmatprep.subr.bf16.mxu0 %v5069
        %6296 = vmatpush2.bf16.msra.mxu0 %v5068
        %6297 = vmatprep.subr.bf16.mxu0 %v5065
        %6298 = vmatpush2.bf16.msra.mxu0 %v5064
        %6299 = vmatprep.mubr.bf16.mxu0 %v5577
        %6300 = vmatmul.mubr.bf16.gmra.mxu0 %v5576
        %v6301 = vpop.f32.mrf.mxu0
        %v6302 = vadd.f32 %v6189, %v6301
        %v6303 = vpop.f32.mrf.mxu0
        %v6304 = vadd.f32 %v6191, %v6303
        %v6305 = vpop.f32.mrf.mxu0
        %v6306 = vadd.f32 %v6193, %v6305
        %v6307 = vpop.f32.mrf.mxu0
        %v6308 = vadd.f32 %v6195, %v6307
        %6309 = vmatprep.mubr.bf16.mxu0 %v5585
        %6310 = vmatmul.mubr.bf16.gmra.mxu0 %v5584
        %v6311 = vpop.f32.mrf.mxu0
        %v6312 = vadd.f32 %v6199, %v6311
        %v6313 = vpop.f32.mrf.mxu0
        %v6314 = vadd.f32 %v6201, %v6313
        %v6315 = vpop.f32.mrf.mxu0
        %v6316 = vadd.f32 %v6203, %v6315
        %v6317 = vpop.f32.mrf.mxu0
        %v6318 = vadd.f32 %v6205, %v6317
        %6319 = vmatprep.mubr.bf16.mxu0 %v5593
        %6320 = vmatmul.mubr.bf16.gmra.mxu0 %v5592
        %v6321 = vpop.f32.mrf.mxu0
        %v6322 = vadd.f32 %v6209, %v6321
        %v6323 = vpop.f32.mrf.mxu0
        %v6324 = vadd.f32 %v6211, %v6323
        %v6325 = vpop.f32.mrf.mxu0
        %v6326 = vadd.f32 %v6213, %v6325
        %v6327 = vpop.f32.mrf.mxu0
        %v6328 = vadd.f32 %v6215, %v6327
        %6329 = vmatprep.mubr.bf16.mxu0 %v5601
        %6330 = vmatmul.mubr.bf16.gmra.mxu0 %v5600
        %v6331 = vpop.f32.mrf.mxu0
        %v6332 = vadd.f32 %v6219, %v6331
        %v6333 = vpop.f32.mrf.mxu0
        %v6334 = vadd.f32 %v6221, %v6333
        %v6335 = vpop.f32.mrf.mxu0
        %v6336 = vadd.f32 %v6223, %v6335
        %v6337 = vpop.f32.mrf.mxu0
        %v6338 = vadd.f32 %v6225, %v6337
        %6339 = vmatprep.mubr.bf16.mxu0 %v5609
        %6340 = vmatmul.mubr.bf16.gmra.mxu0 %v5608
        %v6341 = vpop.f32.mrf.mxu0
        %v6342 = vadd.f32 %v6229, %v6341
        %v6343 = vpop.f32.mrf.mxu0
        %v6344 = vadd.f32 %v6231, %v6343
        %v6345 = vpop.f32.mrf.mxu0
        %v6346 = vadd.f32 %v6233, %v6345
        %v6347 = vpop.f32.mrf.mxu0
        %v6348 = vadd.f32 %v6235, %v6347
        %6349 = vmatprep.mubr.bf16.mxu0 %v5617
        %6350 = vmatmul.mubr.bf16.gmra.mxu0 %v5616
        %v6351 = vpop.f32.mrf.mxu0
        %v6352 = vadd.f32 %v6239, %v6351
        %v6353 = vpop.f32.mrf.mxu0
        %v6354 = vadd.f32 %v6241, %v6353
        %v6355 = vpop.f32.mrf.mxu0
        %v6356 = vadd.f32 %v6243, %v6355
        %v6357 = vpop.f32.mrf.mxu0
        %v6358 = vadd.f32 %v6245, %v6357
        %6359 = vmatprep.mubr.bf16.mxu0 %v5625
        %6360 = vmatmul.mubr.bf16.gmra.mxu0 %v5624
        %v6361 = vpop.f32.mrf.mxu0
        %v6362 = vadd.f32 %v6249, %v6361
        %v6363 = vpop.f32.mrf.mxu0
        %v6364 = vadd.f32 %v6251, %v6363
        %v6365 = vpop.f32.mrf.mxu0
        %v6366 = vadd.f32 %v6253, %v6365
        %v6367 = vpop.f32.mrf.mxu0
        %v6368 = vadd.f32 %v6255, %v6367
        %6369 = vmatprep.mubr.bf16.mxu0 %v5633
        %6370 = vmatmul.mubr.bf16.gmra.mxu0 %v5632
        %v6371 = vpop.f32.mrf.mxu0
        %v6372 = vadd.f32 %v6259, %v6371
        %v6373 = vpop.f32.mrf.mxu0
        %v6374 = vadd.f32 %v6261, %v6373
        %v6375 = vpop.f32.mrf.mxu0
        %v6376 = vadd.f32 %v6263, %v6375
        %v6377 = vpop.f32.mrf.mxu0
        %v6378 = vadd.f32 %v6265, %v6377
        %6379 = vdwg.mxu0
        %6380 = vmatprep.subr.bf16.mxu0 %v5125
        %6381 = vmatpush1.bf16.msra.mxu0 %v5124
        %6382 = vmatprep.subr.bf16.mxu0 %v5121
        %6383 = vmatpush1.bf16.msra.mxu0 %v5120
        %6384 = vmatprep.subr.bf16.mxu0 %v5117
        %6385 = vmatpush1.bf16.msra.mxu0 %v5116
        %6386 = vmatprep.subr.bf16.mxu0 %v5113
        %6387 = vmatpush1.bf16.msra.mxu0 %v5112
        %6388 = vmatprep.subr.bf16.mxu0 %v5109
        %6389 = vmatpush1.bf16.msra.mxu0 %v5108
        %6390 = vmatprep.subr.bf16.mxu0 %v5105
        %6391 = vmatpush1.bf16.msra.mxu0 %v5104
        %6392 = vmatprep.subr.bf16.mxu0 %v5101
        %6393 = vmatpush1.bf16.msra.mxu0 %v5100
        %6394 = vmatprep.subr.bf16.mxu0 %v5097
        %6395 = vmatpush1.bf16.msra.mxu0 %v5096
        %6396 = vmatprep.subr.bf16.mxu0 %v5157
        %6397 = vmatpush2.bf16.msra.mxu0 %v5156
        %6398 = vmatprep.subr.bf16.mxu0 %v5153
        %6399 = vmatpush2.bf16.msra.mxu0 %v5152
        %6400 = vmatprep.subr.bf16.mxu0 %v5149
        %6401 = vmatpush2.bf16.msra.mxu0 %v5148
        %6402 = vmatprep.subr.bf16.mxu0 %v5145
        %6403 = vmatpush2.bf16.msra.mxu0 %v5144
        %6404 = vmatprep.subr.bf16.mxu0 %v5141
        %6405 = vmatpush2.bf16.msra.mxu0 %v5140
        %6406 = vmatprep.subr.bf16.mxu0 %v5137
        %6407 = vmatpush2.bf16.msra.mxu0 %v5136
        %6408 = vmatprep.subr.bf16.mxu0 %v5133
        %6409 = vmatpush2.bf16.msra.mxu0 %v5132
        %6410 = vmatprep.subr.bf16.mxu0 %v5129
        %6411 = vmatpush2.bf16.msra.mxu0 %v5128
        %6412 = vmatprep.mubr.bf16.mxu0 %v5579
        %6413 = vmatmul.mubr.bf16.gmra.mxu0 %v5578
        %v6414 = vpop.f32.mrf.mxu0
        %v6415 = vadd.f32 %v6302, %v6414
        %v6416 = vpop.f32.mrf.mxu0
        %v6417 = vadd.f32 %v6304, %v6416
        %v6418 = vpop.f32.mrf.mxu0
        %v6419 = vadd.f32 %v6306, %v6418
        %v6420 = vpop.f32.mrf.mxu0
        %v6421 = vadd.f32 %v6308, %v6420
        %6422 = vmatprep.mubr.bf16.mxu0 %v5587
        %6423 = vmatmul.mubr.bf16.gmra.mxu0 %v5586
        %v6424 = vpop.f32.mrf.mxu0
        %v6425 = vadd.f32 %v6312, %v6424
        %v6426 = vpop.f32.mrf.mxu0
        %v6427 = vadd.f32 %v6314, %v6426
        %v6428 = vpop.f32.mrf.mxu0
        %v6429 = vadd.f32 %v6316, %v6428
        %v6430 = vpop.f32.mrf.mxu0
        %v6431 = vadd.f32 %v6318, %v6430
        %6432 = vmatprep.mubr.bf16.mxu0 %v5595
        %6433 = vmatmul.mubr.bf16.gmra.mxu0 %v5594
        %v6434 = vpop.f32.mrf.mxu0
        %v6435 = vadd.f32 %v6322, %v6434
        %v6436 = vpop.f32.mrf.mxu0
        %v6437 = vadd.f32 %v6324, %v6436
        %v6438 = vpop.f32.mrf.mxu0
        %v6439 = vadd.f32 %v6326, %v6438
        %v6440 = vpop.f32.mrf.mxu0
        %v6441 = vadd.f32 %v6328, %v6440
        %6442 = vmatprep.mubr.bf16.mxu0 %v5603
        %6443 = vmatmul.mubr.bf16.gmra.mxu0 %v5602
        %v6444 = vpop.f32.mrf.mxu0
        %v6445 = vadd.f32 %v6332, %v6444
        %v6446 = vpop.f32.mrf.mxu0
        %v6447 = vadd.f32 %v6334, %v6446
        %v6448 = vpop.f32.mrf.mxu0
        %v6449 = vadd.f32 %v6336, %v6448
        %v6450 = vpop.f32.mrf.mxu0
        %v6451 = vadd.f32 %v6338, %v6450
        %6452 = vmatprep.mubr.bf16.mxu0 %v5611
        %6453 = vmatmul.mubr.bf16.gmra.mxu0 %v5610
        %v6454 = vpop.f32.mrf.mxu0
        %v6455 = vadd.f32 %v6342, %v6454
        %v6456 = vpop.f32.mrf.mxu0
        %v6457 = vadd.f32 %v6344, %v6456
        %v6458 = vpop.f32.mrf.mxu0
        %v6459 = vadd.f32 %v6346, %v6458
        %v6460 = vpop.f32.mrf.mxu0
        %v6461 = vadd.f32 %v6348, %v6460
        %6462 = vmatprep.mubr.bf16.mxu0 %v5619
        %6463 = vmatmul.mubr.bf16.gmra.mxu0 %v5618
        %v6464 = vpop.f32.mrf.mxu0
        %v6465 = vadd.f32 %v6352, %v6464
        %v6466 = vpop.f32.mrf.mxu0
        %v6467 = vadd.f32 %v6354, %v6466
        %v6468 = vpop.f32.mrf.mxu0
        %v6469 = vadd.f32 %v6356, %v6468
        %v6470 = vpop.f32.mrf.mxu0
        %v6471 = vadd.f32 %v6358, %v6470
        %6472 = vmatprep.mubr.bf16.mxu0 %v5627
        %6473 = vmatmul.mubr.bf16.gmra.mxu0 %v5626
        %v6474 = vpop.f32.mrf.mxu0
        %v6475 = vadd.f32 %v6362, %v6474
        %v6476 = vpop.f32.mrf.mxu0
        %v6477 = vadd.f32 %v6364, %v6476
        %v6478 = vpop.f32.mrf.mxu0
        %v6479 = vadd.f32 %v6366, %v6478
        %v6480 = vpop.f32.mrf.mxu0
        %v6481 = vadd.f32 %v6368, %v6480
        %6482 = vmatprep.mubr.bf16.mxu0 %v5635
        %6483 = vmatmul.mubr.bf16.gmra.mxu0 %v5634
        %v6484 = vpop.f32.mrf.mxu0
        %v6485 = vadd.f32 %v6372, %v6484
        %v6486 = vpop.f32.mrf.mxu0
        %v6487 = vadd.f32 %v6374, %v6486
        %v6488 = vpop.f32.mrf.mxu0
        %v6489 = vadd.f32 %v6376, %v6488
        %v6490 = vpop.f32.mrf.mxu0
        %v6491 = vadd.f32 %v6378, %v6490
        %6492 = vdwg.mxu0
        %6493 = vmatprep.subr.bf16.mxu0 %v5189
        %6494 = vmatpush1.bf16.msra.mxu0 %v5188
        %6495 = vmatprep.subr.bf16.mxu0 %v5185
        %6496 = vmatpush1.bf16.msra.mxu0 %v5184
        %6497 = vmatprep.subr.bf16.mxu0 %v5181
        %6498 = vmatpush1.bf16.msra.mxu0 %v5180
        %6499 = vmatprep.subr.bf16.mxu0 %v5177
        %6500 = vmatpush1.bf16.msra.mxu0 %v5176
        %6501 = vmatprep.subr.bf16.mxu0 %v5173
        %6502 = vmatpush1.bf16.msra.mxu0 %v5172
        %6503 = vmatprep.subr.bf16.mxu0 %v5169
        %6504 = vmatpush1.bf16.msra.mxu0 %v5168
        %6505 = vmatprep.subr.bf16.mxu0 %v5165
        %6506 = vmatpush1.bf16.msra.mxu0 %v5164
        %6507 = vmatprep.subr.bf16.mxu0 %v5161
        %6508 = vmatpush1.bf16.msra.mxu0 %v5160
        %6509 = vmatprep.subr.bf16.mxu0 %v5221
        %6510 = vmatpush2.bf16.msra.mxu0 %v5220
        %6511 = vmatprep.subr.bf16.mxu0 %v5217
        %6512 = vmatpush2.bf16.msra.mxu0 %v5216
        %6513 = vmatprep.subr.bf16.mxu0 %v5213
        %6514 = vmatpush2.bf16.msra.mxu0 %v5212
        %6515 = vmatprep.subr.bf16.mxu0 %v5209
        %6516 = vmatpush2.bf16.msra.mxu0 %v5208
        %6517 = vmatprep.subr.bf16.mxu0 %v5205
        %6518 = vmatpush2.bf16.msra.mxu0 %v5204
        %6519 = vmatprep.subr.bf16.mxu0 %v5201
        %6520 = vmatpush2.bf16.msra.mxu0 %v5200
        %6521 = vmatprep.subr.bf16.mxu0 %v5197
        %6522 = vmatpush2.bf16.msra.mxu0 %v5196
        %6523 = vmatprep.subr.bf16.mxu0 %v5193
        %6524 = vmatpush2.bf16.msra.mxu0 %v5192
        %6525 = vmatprep.mubr.bf16.mxu0 %v5581
        %6526 = vmatmul.mubr.bf16.gmra.mxu0 %v5580
        %v6527 = vpop.f32.mrf.mxu0
        %v6528 = vadd.f32 %v6415, %v6527
        %v6529 = vpop.f32.mrf.mxu0
        %v6530 = vadd.f32 %v6417, %v6529
        %v6531 = vpop.f32.mrf.mxu0
        %v6532 = vadd.f32 %v6419, %v6531
        %v6533 = vpop.f32.mrf.mxu0
        %v6534 = vadd.f32 %v6421, %v6533
        %6535 = vmatprep.mubr.bf16.mxu0 %v5589
        %6536 = vmatmul.mubr.bf16.gmra.mxu0 %v5588
        %v6537 = vpop.f32.mrf.mxu0
        %v6538 = vadd.f32 %v6425, %v6537
        %v6539 = vpop.f32.mrf.mxu0
        %v6540 = vadd.f32 %v6427, %v6539
        %v6541 = vpop.f32.mrf.mxu0
        %v6542 = vadd.f32 %v6429, %v6541
        %v6543 = vpop.f32.mrf.mxu0
        %v6544 = vadd.f32 %v6431, %v6543
        %6545 = vmatprep.mubr.bf16.mxu0 %v5597
        %6546 = vmatmul.mubr.bf16.gmra.mxu0 %v5596
        %v6547 = vpop.f32.mrf.mxu0
        %v6548 = vadd.f32 %v6435, %v6547
        %v6549 = vpop.f32.mrf.mxu0
        %v6550 = vadd.f32 %v6437, %v6549
        %v6551 = vpop.f32.mrf.mxu0
        %v6552 = vadd.f32 %v6439, %v6551
        %v6553 = vpop.f32.mrf.mxu0
        %v6554 = vadd.f32 %v6441, %v6553
        %6555 = vmatprep.mubr.bf16.mxu0 %v5605
        %6556 = vmatmul.mubr.bf16.gmra.mxu0 %v5604
        %v6557 = vpop.f32.mrf.mxu0
        %v6558 = vadd.f32 %v6445, %v6557
        %v6559 = vpop.f32.mrf.mxu0
        %v6560 = vadd.f32 %v6447, %v6559
        %v6561 = vpop.f32.mrf.mxu0
        %v6562 = vadd.f32 %v6449, %v6561
        %v6563 = vpop.f32.mrf.mxu0
        %v6564 = vadd.f32 %v6451, %v6563
        %6565 = vmatprep.mubr.bf16.mxu0 %v5613
        %6566 = vmatmul.mubr.bf16.gmra.mxu0 %v5612
        %v6567 = vpop.f32.mrf.mxu0
        %v6568 = vadd.f32 %v6455, %v6567
        %v6569 = vpop.f32.mrf.mxu0
        %v6570 = vadd.f32 %v6457, %v6569
        %v6571 = vpop.f32.mrf.mxu0
        %v6572 = vadd.f32 %v6459, %v6571
        %v6573 = vpop.f32.mrf.mxu0
        %v6574 = vadd.f32 %v6461, %v6573
        %6575 = vmatprep.mubr.bf16.mxu0 %v5621
        %6576 = vmatmul.mubr.bf16.gmra.mxu0 %v5620
        %v6577 = vpop.f32.mrf.mxu0
        %v6578 = vadd.f32 %v6465, %v6577
        %v6579 = vpop.f32.mrf.mxu0
        %v6580 = vadd.f32 %v6467, %v6579
        %v6581 = vpop.f32.mrf.mxu0
        %v6582 = vadd.f32 %v6469, %v6581
        %v6583 = vpop.f32.mrf.mxu0
        %v6584 = vadd.f32 %v6471, %v6583
        %6585 = vmatprep.mubr.bf16.mxu0 %v5629
        %6586 = vmatmul.mubr.bf16.gmra.mxu0 %v5628
        %v6587 = vpop.f32.mrf.mxu0
        %v6588 = vadd.f32 %v6475, %v6587
        %v6589 = vpop.f32.mrf.mxu0
        %v6590 = vadd.f32 %v6477, %v6589
        %v6591 = vpop.f32.mrf.mxu0
        %v6592 = vadd.f32 %v6479, %v6591
        %v6593 = vpop.f32.mrf.mxu0
        %v6594 = vadd.f32 %v6481, %v6593
        %6595 = vmatprep.mubr.bf16.mxu0 %v5637
        %6596 = vmatmul.mubr.bf16.gmra.mxu0 %v5636
        %v6597 = vpop.f32.mrf.mxu0
        %v6598 = vadd.f32 %v6485, %v6597
        %v6599 = vpop.f32.mrf.mxu0
        %v6600 = vadd.f32 %v6487, %v6599
        %v6601 = vpop.f32.mrf.mxu0
        %v6602 = vadd.f32 %v6489, %v6601
        %v6603 = vpop.f32.mrf.mxu0
        %v6604 = vadd.f32 %v6491, %v6603
        %6605 = vdwg.mxu0
        %v6606 = vmax.f32 %v6076, 0.0
        %v6607 = vmax.f32 %v6078, 0.0
        %v6608 = vmax.f32 %v6528, 0.0
        %v6609 = vmax.f32 %v6530, 0.0
        %v6610 = vmax.f32 %v6080, 0.0
        %v6611 = vmax.f32 %v6082, 0.0
        %v6612 = vmax.f32 %v6532, 0.0
        %v6613 = vmax.f32 %v6534, 0.0
        %v6614 = vmax.f32 %v6086, 0.0
        %v6615 = vmax.f32 %v6088, 0.0
        %v6616 = vmax.f32 %v6538, 0.0
        %v6617 = vmax.f32 %v6540, 0.0
        %v6618 = vmax.f32 %v6090, 0.0
        %v6619 = vmax.f32 %v6092, 0.0
        %v6620 = vmax.f32 %v6542, 0.0
        %v6621 = vmax.f32 %v6544, 0.0
        %v6622 = vmax.f32 %v6096, 0.0
        %v6623 = vmax.f32 %v6098, 0.0
        %v6624 = vmax.f32 %v6548, 0.0
        %v6625 = vmax.f32 %v6550, 0.0
        %v6626 = vmax.f32 %v6100, 0.0
        %v6627 = vmax.f32 %v6102, 0.0
        %v6628 = vmax.f32 %v6552, 0.0
        %v6629 = vmax.f32 %v6554, 0.0
        %v6630 = vmax.f32 %v6106, 0.0
        %v6631 = vmax.f32 %v6108, 0.0
        %v6632 = vmax.f32 %v6558, 0.0
        %v6633 = vmax.f32 %v6560, 0.0
        %v6634 = vmax.f32 %v6110, 0.0
        %v6635 = vmax.f32 %v6112, 0.0
        %v6636 = vmax.f32 %v6562, 0.0
        %v6637 = vmax.f32 %v6564, 0.0
        %v6638 = vmax.f32 %v6116, 0.0
        %v6639 = vmax.f32 %v6118, 0.0
        %v6640 = vmax.f32 %v6568, 0.0
        %v6641 = vmax.f32 %v6570, 0.0
        %v6642 = vmax.f32 %v6120, 0.0
        %v6643 = vmax.f32 %v6122, 0.0
        %v6644 = vmax.f32 %v6572, 0.0
        %v6645 = vmax.f32 %v6574, 0.0
        %v6646 = vmax.f32 %v6126, 0.0
        %v6647 = vmax.f32 %v6128, 0.0
        %v6648 = vmax.f32 %v6578, 0.0
        %v6649 = vmax.f32 %v6580, 0.0
        %v6650 = vmax.f32 %v6130, 0.0
        %v6651 = vmax.f32 %v6132, 0.0
        %v6652 = vmax.f32 %v6582, 0.0
        %v6653 = vmax.f32 %v6584, 0.0
        %v6654 = vmax.f32 %v6136, 0.0
        %v6655 = vmax.f32 %v6138, 0.0
        %v6656 = vmax.f32 %v6588, 0.0
        %v6657 = vmax.f32 %v6590, 0.0
        %v6658 = vmax.f32 %v6140, 0.0
        %v6659 = vmax.f32 %v6142, 0.0
        %v6660 = vmax.f32 %v6592, 0.0
        %v6661 = vmax.f32 %v6594, 0.0
        %v6662 = vmax.f32 %v6146, 0.0
        %v6663 = vmax.f32 %v6148, 0.0
        %v6664 = vmax.f32 %v6598, 0.0
        %v6665 = vmax.f32 %v6600, 0.0
        %v6666 = vmax.f32 %v6150, 0.0
        %v6667 = vmax.f32 %v6152, 0.0
        %v6668 = vmax.f32 %v6602, 0.0
        %v6669 = vmax.f32 %v6604, 0.0
        %v6670 = vpack.c.bf16 %v6610, %v6606
        %v6671 = vpack.c.bf16 %v6611, %v6607
        %v6672 = vpack.c.bf16 %v6612, %v6608
        %v6673 = vpack.c.bf16 %v6613, %v6609
        %v6674 = vpack.c.bf16 %v6618, %v6614
        %v6675 = vpack.c.bf16 %v6619, %v6615
        %v6676 = vpack.c.bf16 %v6620, %v6616
        %v6677 = vpack.c.bf16 %v6621, %v6617
        %v6678 = vpack.c.bf16 %v6626, %v6622
        %v6679 = vpack.c.bf16 %v6627, %v6623
        %v6680 = vpack.c.bf16 %v6628, %v6624
        %v6681 = vpack.c.bf16 %v6629, %v6625
        %v6682 = vpack.c.bf16 %v6634, %v6630
        %v6683 = vpack.c.bf16 %v6635, %v6631
        %v6684 = vpack.c.bf16 %v6636, %v6632
        %v6685 = vpack.c.bf16 %v6637, %v6633
        %v6686 = vpack.c.bf16 %v6642, %v6638
        %v6687 = vpack.c.bf16 %v6643, %v6639
        %v6688 = vpack.c.bf16 %v6644, %v6640
        %v6689 = vpack.c.bf16 %v6645, %v6641
        %v6690 = vpack.c.bf16 %v6650, %v6646
        %v6691 = vpack.c.bf16 %v6651, %v6647
        %v6692 = vpack.c.bf16 %v6652, %v6648
        %v6693 = vpack.c.bf16 %v6653, %v6649
        %v6694 = vpack.c.bf16 %v6658, %v6654
        %v6695 = vpack.c.bf16 %v6659, %v6655
        %v6696 = vpack.c.bf16 %v6660, %v6656
        %v6697 = vpack.c.bf16 %v6661, %v6657
        %v6698 = vpack.c.bf16 %v6666, %v6662
        %v6699 = vpack.c.bf16 %v6667, %v6663
        %v6700 = vpack.c.bf16 %v6668, %v6664
        %v6701 = vpack.c.bf16 %v6669, %v6665
        %v6702 = vld [vmem:[%s6] sm:$0xf]
        %v6703 = vld [vmem:[%s6 + $0x4] sm:$0xf]
        %v6704 = vld [vmem:[%s6 + $0x8] sm:$0xf]
        %v6705 = vld [vmem:[%s6 + $0xc] sm:$0xf]
        %v6706 = vld [vmem:[%s6 + $0x10] sm:$0xf]
        %v6707 = vld [vmem:[%s6 + $0x14] sm:$0xf]
        %v6708 = vld [vmem:[%s6 + $0x18] sm:$0xf]
        %v6709 = vld [vmem:[%s6 + $0x1c] sm:$0xf]
        %v6710 = vld [vmem:[%s6 + $0x20] sm:$0xf]
        %v6711 = vld [vmem:[%s6 + $0x24] sm:$0xf]
        %v6712 = vld [vmem:[%s6 + $0x28] sm:$0xf]
        %v6713 = vld [vmem:[%s6 + $0x2c] sm:$0xf]
        %v6714 = vld [vmem:[%s6 + $0x30] sm:$0xf]
        %v6715 = vld [vmem:[%s6 + $0x34] sm:$0xf]
        %v6716 = vld [vmem:[%s6 + $0x38] sm:$0xf]
        %v6717 = vld [vmem:[%s6 + $0x3c] sm:$0xf]
        %v6718 = vld [vmem:[%s6 + $0x40] sm:$0xf]
        %v6719 = vld [vmem:[%s6 + $0x44] sm:$0xf]
        %v6720 = vld [vmem:[%s6 + $0x48] sm:$0xf]
        %v6721 = vld [vmem:[%s6 + $0x4c] sm:$0xf]
        %v6722 = vld [vmem:[%s6 + $0x50] sm:$0xf]
        %v6723 = vld [vmem:[%s6 + $0x54] sm:$0xf]
        %v6724 = vld [vmem:[%s6 + $0x58] sm:$0xf]
        %v6725 = vld [vmem:[%s6 + $0x5c] sm:$0xf]
        %v6726 = vld [vmem:[%s6 + $0x60] sm:$0xf]
        %v6727 = vld [vmem:[%s6 + $0x64] sm:$0xf]
        %v6728 = vld [vmem:[%s6 + $0x68] sm:$0xf]
        %v6729 = vld [vmem:[%s6 + $0x6c] sm:$0xf]
        %v6730 = vld [vmem:[%s6 + $0x70] sm:$0xf]
        %v6731 = vld [vmem:[%s6 + $0x74] sm:$0xf]
        %v6732 = vld [vmem:[%s6 + $0x78] sm:$0xf]
        %v6733 = vld [vmem:[%s6 + $0x7c] sm:$0xf]
        %v6734 = vld [vmem:[%s6 + $0x80] sm:$0xf]
        %v6735 = vld [vmem:[%s6 + $0x84] sm:$0xf]
        %v6736 = vld [vmem:[%s6 + $0x88] sm:$0xf]
        %v6737 = vld [vmem:[%s6 + $0x8c] sm:$0xf]
        %v6738 = vld [vmem:[%s6 + $0x90] sm:$0xf]
        %v6739 = vld [vmem:[%s6 + $0x94] sm:$0xf]
        %v6740 = vld [vmem:[%s6 + $0x98] sm:$0xf]
        %v6741 = vld [vmem:[%s6 + $0x9c] sm:$0xf]
        %v6742 = vld [vmem:[%s6 + $0xa0] sm:$0xf]
        %v6743 = vld [vmem:[%s6 + $0xa4] sm:$0xf]
        %v6744 = vld [vmem:[%s6 + $0xa8] sm:$0xf]
        %v6745 = vld [vmem:[%s6 + $0xac] sm:$0xf]
        %v6746 = vld [vmem:[%s6 + $0xb0] sm:$0xf]
        %v6747 = vld [vmem:[%s6 + $0xb4] sm:$0xf]
        %v6748 = vld [vmem:[%s6 + $0xb8] sm:$0xf]
        %v6749 = vld [vmem:[%s6 + $0xbc] sm:$0xf]
        %v6750 = vld [vmem:[%s6 + $0xc0] sm:$0xf]
        %v6751 = vld [vmem:[%s6 + $0xc4] sm:$0xf]
        %v6752 = vld [vmem:[%s6 + $0xc8] sm:$0xf]
        %v6753 = vld [vmem:[%s6 + $0xcc] sm:$0xf]
        %v6754 = vld [vmem:[%s6 + $0xd0] sm:$0xf]
        %v6755 = vld [vmem:[%s6 + $0xd4] sm:$0xf]
        %v6756 = vld [vmem:[%s6 + $0xd8] sm:$0xf]
        %v6757 = vld [vmem:[%s6 + $0xdc] sm:$0xf]
        %v6758 = vld [vmem:[%s6 + $0xe0] sm:$0xf]
        %v6759 = vld [vmem:[%s6 + $0xe4] sm:$0xf]
        %v6760 = vld [vmem:[%s6 + $0xe8] sm:$0xf]
        %v6761 = vld [vmem:[%s6 + $0xec] sm:$0xf]
        %v6762 = vld [vmem:[%s6 + $0xf0] sm:$0xf]
        %v6763 = vld [vmem:[%s6 + $0xf4] sm:$0xf]
        %v6764 = vld [vmem:[%s6 + $0xf8] sm:$0xf]
        %v6765 = vld [vmem:[%s6 + $0xfc] sm:$0xf]
        %v6830 = vunpack.c.l.b16 %v6702
        %v6831 = vunpack.c.l.b16 %v6703
        %v6832 = vunpack.c.l.b16 %v6704
        %v6833 = vunpack.c.l.b16 %v6705
        %v6834 = vunpack.c.l.b16 %v6706
        %v6835 = vunpack.c.l.b16 %v6707
        %v6836 = vunpack.c.l.b16 %v6708
        %v6837 = vunpack.c.l.b16 %v6709
        %v6838 = vunpack.c.l.b16 %v6710
        %v6839 = vunpack.c.l.b16 %v6711
        %v6840 = vunpack.c.l.b16 %v6712
        %v6841 = vunpack.c.l.b16 %v6713
        %v6842 = vunpack.c.l.b16 %v6714
        %v6843 = vunpack.c.l.b16 %v6715
        %v6844 = vunpack.c.l.b16 %v6716
        %v6845 = vunpack.c.l.b16 %v6717
        %v6846 = vunpack.c.l.b16 %v6718
        %v6847 = vunpack.c.l.b16 %v6719
        %v6848 = vunpack.c.l.b16 %v6720
        %v6849 = vunpack.c.l.b16 %v6721
        %v6850 = vunpack.c.l.b16 %v6722
        %v6851 = vunpack.c.l.b16 %v6723
        %v6852 = vunpack.c.l.b16 %v6724
        %v6853 = vunpack.c.l.b16 %v6725
        %v6854 = vunpack.c.l.b16 %v6726
        %v6855 = vunpack.c.l.b16 %v6727
        %v6856 = vunpack.c.l.b16 %v6728
        %v6857 = vunpack.c.l.b16 %v6729
        %v6858 = vunpack.c.l.b16 %v6730
        %v6859 = vunpack.c.l.b16 %v6731
        %v6860 = vunpack.c.l.b16 %v6732
        %v6861 = vunpack.c.l.b16 %v6733
        %v6862 = vunpack.c.l.b16 %v6734
        %v6863 = vunpack.c.l.b16 %v6735
        %v6864 = vunpack.c.l.b16 %v6736
        %v6865 = vunpack.c.l.b16 %v6737
        %v6866 = vunpack.c.l.b16 %v6738
        %v6867 = vunpack.c.l.b16 %v6739
        %v6868 = vunpack.c.l.b16 %v6740
        %v6869 = vunpack.c.l.b16 %v6741
        %v6870 = vunpack.c.l.b16 %v6742
        %v6871 = vunpack.c.l.b16 %v6743
        %v6872 = vunpack.c.l.b16 %v6744
        %v6873 = vunpack.c.l.b16 %v6745
        %v6874 = vunpack.c.l.b16 %v6746
        %v6875 = vunpack.c.l.b16 %v6747
        %v6876 = vunpack.c.l.b16 %v6748
        %v6877 = vunpack.c.l.b16 %v6749
        %v6878 = vunpack.c.l.b16 %v6750
        %v6879 = vunpack.c.l.b16 %v6751
        %v6880 = vunpack.c.l.b16 %v6752
        %v6881 = vunpack.c.l.b16 %v6753
        %v6882 = vunpack.c.l.b16 %v6754
        %v6883 = vunpack.c.l.b16 %v6755
        %v6884 = vunpack.c.l.b16 %v6756
        %v6885 = vunpack.c.l.b16 %v6757
        %v6886 = vunpack.c.l.b16 %v6758
        %v6887 = vunpack.c.l.b16 %v6759
        %v6888 = vunpack.c.l.b16 %v6760
        %v6889 = vunpack.c.l.b16 %v6761
        %v6890 = vunpack.c.l.b16 %v6762
        %v6891 = vunpack.c.l.b16 %v6763
        %v6892 = vunpack.c.l.b16 %v6764
        %v6893 = vunpack.c.l.b16 %v6765
        %v6894 = vpack.c.b16 %v6831, %v6830
        %v6895 = vpack.c.b16 %v6833, %v6832
        %v6896 = vpack.c.b16 %v6835, %v6834
        %v6897 = vpack.c.b16 %v6837, %v6836
        %v6898 = vpack.c.b16 %v6839, %v6838
        %v6899 = vpack.c.b16 %v6841, %v6840
        %v6900 = vpack.c.b16 %v6843, %v6842
        %v6901 = vpack.c.b16 %v6845, %v6844
        %v6902 = vpack.c.b16 %v6847, %v6846
        %v6903 = vpack.c.b16 %v6849, %v6848
        %v6904 = vpack.c.b16 %v6851, %v6850
        %v6905 = vpack.c.b16 %v6853, %v6852
        %v6906 = vpack.c.b16 %v6855, %v6854
        %v6907 = vpack.c.b16 %v6857, %v6856
        %v6908 = vpack.c.b16 %v6859, %v6858
        %v6909 = vpack.c.b16 %v6861, %v6860
        %v6910 = vpack.c.b16 %v6863, %v6862
        %v6911 = vpack.c.b16 %v6865, %v6864
        %v6912 = vpack.c.b16 %v6867, %v6866
        %v6913 = vpack.c.b16 %v6869, %v6868
        %v6914 = vpack.c.b16 %v6871, %v6870
        %v6915 = vpack.c.b16 %v6873, %v6872
        %v6916 = vpack.c.b16 %v6875, %v6874
        %v6917 = vpack.c.b16 %v6877, %v6876
        %v6918 = vpack.c.b16 %v6879, %v6878
        %v6919 = vpack.c.b16 %v6881, %v6880
        %v6920 = vpack.c.b16 %v6883, %v6882
        %v6921 = vpack.c.b16 %v6885, %v6884
        %v6922 = vpack.c.b16 %v6887, %v6886
        %v6923 = vpack.c.b16 %v6889, %v6888
        %v6924 = vpack.c.b16 %v6891, %v6890
        %v6925 = vpack.c.b16 %v6893, %v6892
        %6958 = vmatprep.subr.bf16.mxu0 0
        %6959 = vmatpush1.bf16.msra.mxu0 %v6901
        %6960 = vmatprep.subr.bf16.mxu0 0
        %6961 = vmatpush1.bf16.msra.mxu0 %v6900
        %6962 = vmatprep.subr.bf16.mxu0 0
        %6963 = vmatpush1.bf16.msra.mxu0 %v6899
        %6964 = vmatprep.subr.bf16.mxu0 0
        %6965 = vmatpush1.bf16.msra.mxu0 %v6898
        %6966 = vmatprep.subr.bf16.mxu0 0
        %6967 = vmatpush1.bf16.msra.mxu0 %v6897
        %6968 = vmatprep.subr.bf16.mxu0 0
        %6969 = vmatpush1.bf16.msra.mxu0 %v6896
        %6970 = vmatprep.subr.bf16.mxu0 0
        %6971 = vmatpush1.bf16.msra.mxu0 %v6895
        %6972 = vmatprep.subr.bf16.mxu0 0
        %6973 = vmatpush1.bf16.msra.mxu0 %v6894
        %6974 = vmatprep.subr.bf16.mxu0 0
        %6975 = vmatpush2.bf16.msra.mxu0 %v6909
        %6976 = vmatprep.subr.bf16.mxu0 0
        %6977 = vmatpush2.bf16.msra.mxu0 %v6908
        %6978 = vmatprep.subr.bf16.mxu0 0
        %6979 = vmatpush2.bf16.msra.mxu0 %v6907
        %6980 = vmatprep.subr.bf16.mxu0 0
        %6981 = vmatpush2.bf16.msra.mxu0 %v6906
        %6982 = vmatprep.subr.bf16.mxu0 0
        %6983 = vmatpush2.bf16.msra.mxu0 %v6905
        %6984 = vmatprep.subr.bf16.mxu0 0
        %6985 = vmatpush2.bf16.msra.mxu0 %v6904
        %6986 = vmatprep.subr.bf16.mxu0 0
        %6987 = vmatpush2.bf16.msra.mxu0 %v6903
        %6988 = vmatprep.subr.bf16.mxu0 0
        %6989 = vmatpush2.bf16.msra.mxu0 %v6902
        %6990 = vmatprep.mubr.bf16.mxu0 %v6671
        %6991 = vmatmul.mubr.bf16.gmra.mxu0 %v6670
        %v6992 = vpop.f32.mrf.mxu0
        %v6993 = vadd.f32 0.0, %v6992
        %v6994 = vpop.f32.mrf.mxu0
        %v6995 = vpop.f32.mrf.mxu0
        %v6996 = vadd.f32 0.0, %v6995
        %v6997 = vpop.f32.mrf.mxu0
        %6998 = vmatprep.mubr.bf16.mxu0 %v6675
        %6999 = vmatmul.mubr.bf16.gmra.mxu0 %v6674
        %v7000 = vpop.f32.mrf.mxu0
        %v7001 = vadd.f32 0.0, %v7000
        %v7002 = vpop.f32.mrf.mxu0
        %v7003 = vpop.f32.mrf.mxu0
        %v7004 = vadd.f32 0.0, %v7003
        %v7005 = vpop.f32.mrf.mxu0
        %7006 = vmatprep.mubr.bf16.mxu0 %v6679
        %7007 = vmatmul.mubr.bf16.gmra.mxu0 %v6678
        %v7008 = vpop.f32.mrf.mxu0
        %v7009 = vadd.f32 0.0, %v7008
        %v7010 = vpop.f32.mrf.mxu0
        %v7011 = vpop.f32.mrf.mxu0
        %v7012 = vadd.f32 0.0, %v7011
        %v7013 = vpop.f32.mrf.mxu0
        %7014 = vmatprep.mubr.bf16.mxu0 %v6683
        %7015 = vmatmul.mubr.bf16.gmra.mxu0 %v6682
        %v7016 = vpop.f32.mrf.mxu0
        %v7017 = vadd.f32 0.0, %v7016
        %v7018 = vpop.f32.mrf.mxu0
        %v7019 = vpop.f32.mrf.mxu0
        %v7020 = vadd.f32 0.0, %v7019
        %v7021 = vpop.f32.mrf.mxu0
        %7022 = vmatprep.mubr.bf16.mxu0 %v6687
        %7023 = vmatmul.mubr.bf16.gmra.mxu0 %v6686
        %v7024 = vpop.f32.mrf.mxu0
        %v7025 = vadd.f32 0.0, %v7024
        %v7026 = vpop.f32.mrf.mxu0
        %v7027 = vpop.f32.mrf.mxu0
        %v7028 = vadd.f32 0.0, %v7027
        %v7029 = vpop.f32.mrf.mxu0
        %7030 = vmatprep.mubr.bf16.mxu0 %v6691
        %7031 = vmatmul.mubr.bf16.gmra.mxu0 %v6690
        %v7032 = vpop.f32.mrf.mxu0
        %v7033 = vadd.f32 0.0, %v7032
        %v7034 = vpop.f32.mrf.mxu0
        %v7035 = vpop.f32.mrf.mxu0
        %v7036 = vadd.f32 0.0, %v7035
        %v7037 = vpop.f32.mrf.mxu0
        %7038 = vmatprep.mubr.bf16.mxu0 %v6695
        %7039 = vmatmul.mubr.bf16.gmra.mxu0 %v6694
        %v7040 = vpop.f32.mrf.mxu0
        %v7041 = vadd.f32 0.0, %v7040
        %v7042 = vpop.f32.mrf.mxu0
        %v7043 = vpop.f32.mrf.mxu0
        %v7044 = vadd.f32 0.0, %v7043
        %v7045 = vpop.f32.mrf.mxu0
        %7046 = vmatprep.mubr.bf16.mxu0 %v6699
        %7047 = vmatmul.mubr.bf16.gmra.mxu0 %v6698
        %v7048 = vpop.f32.mrf.mxu0
        %v7049 = vadd.f32 0.0, %v7048
        %v7050 = vpop.f32.mrf.mxu0
        %v7051 = vpop.f32.mrf.mxu0
        %v7052 = vadd.f32 0.0, %v7051
        %v7053 = vpop.f32.mrf.mxu0
        %7054 = vdwg.mxu0
        %7055 = vmatprep.subr.bf16.mxu0 0
        %7056 = vmatpush1.bf16.msra.mxu0 %v6917
        %7057 = vmatprep.subr.bf16.mxu0 0
        %7058 = vmatpush1.bf16.msra.mxu0 %v6916
        %7059 = vmatprep.subr.bf16.mxu0 0
        %7060 = vmatpush1.bf16.msra.mxu0 %v6915
        %7061 = vmatprep.subr.bf16.mxu0 0
        %7062 = vmatpush1.bf16.msra.mxu0 %v6914
        %7063 = vmatprep.subr.bf16.mxu0 0
        %7064 = vmatpush1.bf16.msra.mxu0 %v6913
        %7065 = vmatprep.subr.bf16.mxu0 0
        %7066 = vmatpush1.bf16.msra.mxu0 %v6912
        %7067 = vmatprep.subr.bf16.mxu0 0
        %7068 = vmatpush1.bf16.msra.mxu0 %v6911
        %7069 = vmatprep.subr.bf16.mxu0 0
        %7070 = vmatpush1.bf16.msra.mxu0 %v6910
        %7071 = vmatprep.subr.bf16.mxu0 0
        %7072 = vmatpush2.bf16.msra.mxu0 %v6925
        %7073 = vmatprep.subr.bf16.mxu0 0
        %7074 = vmatpush2.bf16.msra.mxu0 %v6924
        %7075 = vmatprep.subr.bf16.mxu0 0
        %7076 = vmatpush2.bf16.msra.mxu0 %v6923
        %7077 = vmatprep.subr.bf16.mxu0 0
        %7078 = vmatpush2.bf16.msra.mxu0 %v6922
        %7079 = vmatprep.subr.bf16.mxu0 0
        %7080 = vmatpush2.bf16.msra.mxu0 %v6921
        %7081 = vmatprep.subr.bf16.mxu0 0
        %7082 = vmatpush2.bf16.msra.mxu0 %v6920
        %7083 = vmatprep.subr.bf16.mxu0 0
        %7084 = vmatpush2.bf16.msra.mxu0 %v6919
        %7085 = vmatprep.subr.bf16.mxu0 0
        %7086 = vmatpush2.bf16.msra.mxu0 %v6918
        %7087 = vmatprep.mubr.bf16.mxu0 %v6673
        %7088 = vmatmul.mubr.bf16.gmra.mxu0 %v6672
        %v7089 = vpop.f32.mrf.mxu0
        %v7090 = vadd.f32 %v6993, %v7089
        %v7091 = vpop.f32.mrf.mxu0
        %v7092 = vpop.f32.mrf.mxu0
        %v7093 = vadd.f32 %v6996, %v7092
        %v7094 = vpop.f32.mrf.mxu0
        %7095 = vmatprep.mubr.bf16.mxu0 %v6677
        %7096 = vmatmul.mubr.bf16.gmra.mxu0 %v6676
        %v7097 = vpop.f32.mrf.mxu0
        %v7098 = vadd.f32 %v7001, %v7097
        %v7099 = vpop.f32.mrf.mxu0
        %v7100 = vpop.f32.mrf.mxu0
        %v7101 = vadd.f32 %v7004, %v7100
        %v7102 = vpop.f32.mrf.mxu0
        %7103 = vmatprep.mubr.bf16.mxu0 %v6681
        %7104 = vmatmul.mubr.bf16.gmra.mxu0 %v6680
        %v7105 = vpop.f32.mrf.mxu0
        %v7106 = vadd.f32 %v7009, %v7105
        %v7107 = vpop.f32.mrf.mxu0
        %v7108 = vpop.f32.mrf.mxu0
        %v7109 = vadd.f32 %v7012, %v7108
        %v7110 = vpop.f32.mrf.mxu0
        %7111 = vmatprep.mubr.bf16.mxu0 %v6685
        %7112 = vmatmul.mubr.bf16.gmra.mxu0 %v6684
        %v7113 = vpop.f32.mrf.mxu0
        %v7114 = vadd.f32 %v7017, %v7113
        %v7115 = vpop.f32.mrf.mxu0
        %v7116 = vpop.f32.mrf.mxu0
        %v7117 = vadd.f32 %v7020, %v7116
        %v7118 = vpop.f32.mrf.mxu0
        %7119 = vmatprep.mubr.bf16.mxu0 %v6689
        %7120 = vmatmul.mubr.bf16.gmra.mxu0 %v6688
        %v7121 = vpop.f32.mrf.mxu0
        %v7122 = vadd.f32 %v7025, %v7121
        %v7123 = vpop.f32.mrf.mxu0
        %v7124 = vpop.f32.mrf.mxu0
        %v7125 = vadd.f32 %v7028, %v7124
        %v7126 = vpop.f32.mrf.mxu0
        %7127 = vmatprep.mubr.bf16.mxu0 %v6693
        %7128 = vmatmul.mubr.bf16.gmra.mxu0 %v6692
        %v7129 = vpop.f32.mrf.mxu0
        %v7130 = vadd.f32 %v7033, %v7129
        %v7131 = vpop.f32.mrf.mxu0
        %v7132 = vpop.f32.mrf.mxu0
        %v7133 = vadd.f32 %v7036, %v7132
        %v7134 = vpop.f32.mrf.mxu0
        %7135 = vmatprep.mubr.bf16.mxu0 %v6697
        %7136 = vmatmul.mubr.bf16.gmra.mxu0 %v6696
        %v7137 = vpop.f32.mrf.mxu0
        %v7138 = vadd.f32 %v7041, %v7137
        %v7139 = vpop.f32.mrf.mxu0
        %v7140 = vpop.f32.mrf.mxu0
        %v7141 = vadd.f32 %v7044, %v7140
        %v7142 = vpop.f32.mrf.mxu0
        %7143 = vmatprep.mubr.bf16.mxu0 %v6701
        %7144 = vmatmul.mubr.bf16.gmra.mxu0 %v6700
        %v7145 = vpop.f32.mrf.mxu0
        %v7146 = vadd.f32 %v7049, %v7145
        %v7147 = vpop.f32.mrf.mxu0
        %v7148 = vpop.f32.mrf.mxu0
        %v7149 = vadd.f32 %v7052, %v7148
        %v7150 = vpop.f32.mrf.mxu0
        %7151 = vdwg.mxu0
        %v7152 = vadd.f32 %v4438, %v7090
        %v7153 = vadd.f32 %v4439, %v7093
        %v7154 = vadd.f32 %v4440, %v7098
        %v7155 = vadd.f32 %v4441, %v7101
        %v7156 = vadd.f32 %v4442, %v7106
        %v7157 = vadd.f32 %v4443, %v7109
        %v7158 = vadd.f32 %v4444, %v7114
        %v7159 = vadd.f32 %v4445, %v7117
        %v7160 = vadd.f32 %v4446, %v7122
        %v7161 = vadd.f32 %v4447, %v7125
        %v7162 = vadd.f32 %v4448, %v7130
        %v7163 = vadd.f32 %v4449, %v7133
        %v7164 = vadd.f32 %v4450, %v7138
        %v7165 = vadd.f32 %v4451, %v7141
        %v7166 = vadd.f32 %v4452, %v7146
        %v7167 = vadd.f32 %v4453, %v7149
        %v7168 = vpack.c.bf16 %v7153, %v7152
        %v7169 = vpack.c.bf16 %v7155, %v7154
        %v7170 = vpack.c.bf16 %v7157, %v7156
        %v7171 = vpack.c.bf16 %v7159, %v7158
        %v7172 = vpack.c.bf16 %v7161, %v7160
        %v7173 = vpack.c.bf16 %v7163, %v7162
        %v7174 = vpack.c.bf16 %v7165, %v7164
        %v7175 = vpack.c.bf16 %v7167, %v7166
        %v7184 = vunpack.c.l.b16 %v7168
        %v7185 = vunpack.c.h.b16 %v7168
        %v7186 = vunpack.c.l.b16 %v7169
        %v7187 = vunpack.c.h.b16 %v7169
        %v7188 = vunpack.c.l.b16 %v7170
        %v7189 = vunpack.c.h.b16 %v7170
        %v7190 = vunpack.c.l.b16 %v7171
        %v7191 = vunpack.c.h.b16 %v7171
        %v7192 = vunpack.c.l.b16 %v7172
        %v7193 = vunpack.c.h.b16 %v7172
        %v7194 = vunpack.c.l.b16 %v7173
        %v7195 = vunpack.c.h.b16 %v7173
        %v7196 = vunpack.c.l.b16 %v7174
        %v7197 = vunpack.c.h.b16 %v7174
        %v7198 = vunpack.c.l.b16 %v7175
        %v7199 = vunpack.c.h.b16 %v7175
        %v7200 = vpack.c.b16 %v7184, %v7184
        %v7201 = vpack.c.b16 %v7185, %v7185
        %v7202 = vpack.c.b16 %v7186, %v7186
        %v7203 = vpack.c.b16 %v7187, %v7187
        %v7204 = vpack.c.b16 %v7188, %v7188
        %v7205 = vpack.c.b16 %v7189, %v7189
        %v7206 = vpack.c.b16 %v7190, %v7190
        %v7207 = vpack.c.b16 %v7191, %v7191
        %v7208 = vpack.c.b16 %v7192, %v7192
        %v7209 = vpack.c.b16 %v7193, %v7193
        %v7210 = vpack.c.b16 %v7194, %v7194
        %v7211 = vpack.c.b16 %v7195, %v7195
        %v7212 = vpack.c.b16 %v7196, %v7196
        %v7213 = vpack.c.b16 %v7197, %v7197
        %v7214 = vpack.c.b16 %v7198, %v7198
        %v7215 = vpack.c.b16 %v7199, %v7199
        %7232 = vst [vmem:[%s2411] sm:$0xf] %v7200
        %7233 = vst [vmem:[%s2411 + $0x4] sm:$0xf] %v7201
        %7234 = vst [vmem:[%s2411 + $0x8] sm:$0xf] %v7202
        %7235 = vst [vmem:[%s2411 + $0xc] sm:$0xf] %v7203
        %7236 = vst [vmem:[%s2411 + $0x10] sm:$0xf] %v7204
        %7237 = vst [vmem:[%s2411 + $0x14] sm:$0xf] %v7205
        %7238 = vst [vmem:[%s2411 + $0x18] sm:$0xf] %v7206
        %7239 = vst [vmem:[%s2411 + $0x1c] sm:$0xf] %v7207
        %7240 = vst [vmem:[%s2411 + $0x20] sm:$0xf] %v7208
        %7241 = vst [vmem:[%s2411 + $0x24] sm:$0xf] %v7209
        %7242 = vst [vmem:[%s2411 + $0x28] sm:$0xf] %v7210
        %7243 = vst [vmem:[%s2411 + $0x2c] sm:$0xf] %v7211
        %7244 = vst [vmem:[%s2411 + $0x30] sm:$0xf] %v7212
        %7245 = vst [vmem:[%s2411 + $0x34] sm:$0xf] %v7213
        %7246 = vst [vmem:[%s2411 + $0x38] sm:$0xf] %v7214
        %7247 = vst [vmem:[%s2411 + $0x3c] sm:$0xf] %v7215
        %s7248 = sand.u32 %s201, 1
        %s7249 = sand.u32 %s201, 1
        %s7250 = smul.addr %s7249, 64
        %s7251 = scalar_lea.vmem [#allocation4], %s7250
        // Predicated region
        $region110: #{multi_stage_attention.1} parent=100 // pred_check
          %p7252 = pneg %p211
        $region111: #{multi_stage_attention.1} parent=100 // pred_check_branch
          %7254 = sbr.rel (%p7252) target = $region113
        $region112: #{multi_stage_attention.1} parent=100 // pred_region
          %s7255 = smul.addr %s22, 32
          %s7256 = sadd.s32 %s23, %s7255
          %s7257 = smul.addr %s7256, 4
          %s7258 = scalar_lea.vmem %s7, %s7257
          // Predicated region
          $region114: #{multi_stage_attention.1} parent=112 // pred_check
            _
          $region115: #{multi_stage_attention.1} parent=112 // pred_check_branch
            %7260 = sbr.rel (0) target = $region117
          $region116: #{multi_stage_attention.1} parent=112 // pred_region
            // Predicated region
            $region118: #{multi_stage_attention.1} parent=116 // pred_check
              _
            $region119: #{multi_stage_attention.1} parent=116 // pred_check_branch
              %7262 = sbr.rel target = $region121
            $region120: #{multi_stage_attention.1} parent=116 // pred_region
              // Predicated region
              $region133: #{multi_stage_attention.1} parent=120 // pred_check
                _
              $region134: #{multi_stage_attention.1} parent=120 // pred_check_branch
                %7308 = sbr.rel (0) target = $region136
              $region135: #{multi_stage_attention.1} parent=120 // pred_region
                loop: start=0, step=1, limit=1
                $region137: #{multi_stage_attention.1} parent=135 // loop_pre_header
                  _
                $region138: #{multi_stage_attention.1} parent=135 // loop_header
                  %s7310 = sphi 0, %s7314
                  %p7311 = scmp.ge.s32.totalorder %s7310, 1
                  %s7315 = sphi %s7251, %s7251
                  %s7316 = sphi %s7258, %s7258
                $region139: #{multi_stage_attention.1} parent=135 // loop_header_branch
                  %7313 = sbr.rel (%p7311) target = $region143
                $region140: #{multi_stage_attention.1} parent=135 // loop_body
                  _
                $region141: #{multi_stage_attention.1} parent=135 // loop_footer
                  %s7314 = sadd.s32 1, %s7310
                $region142: #{multi_stage_attention.1} parent=135 // loop_footer_branch
                  %7309 = sbr.rel target = $region138
                $region143: #{multi_stage_attention.1} parent=135 // loop_exit
                  _
                %s7318 = ssub.s32 16, 1
                loop: start=0, step=1, limit=1
                $region144: #{multi_stage_attention.1} parent=135 // loop_pre_header
                  _
                $region145: #{multi_stage_attention.1} parent=135 // loop_header
                  %s7320 = sphi 0, %s7324
                  %p7321 = scmp.ge.s32.totalorder %s7320, 1
                  %s7325 = sphi %s7251, %s7251
                  %s7326 = sphi %s7258, %s7258
                $region146: #{multi_stage_attention.1} parent=135 // loop_header_branch
                  %7323 = sbr.rel (%p7321) target = $region150
                $region147: #{multi_stage_attention.1} parent=135 // loop_body
                  %v7327 = vld [vmem:[%s7325] sm:%s7318]
                  %7328 = vst [vmem:[%s7326] sm:%s7318] %v7327
                  %v7329 = vld [vmem:[%s7325 + $0x4] sm:%s7318]
                  %7330 = vst [vmem:[%s7326 + $0x8] sm:%s7318] %v7329
                  %v7331 = vld [vmem:[%s7325 + $0x8] sm:%s7318]
                  %7332 = vst [vmem:[%s7326 + $0x10] sm:%s7318] %v7331
                  %v7333 = vld [vmem:[%s7325 + $0xc] sm:%s7318]
                  %7334 = vst [vmem:[%s7326 + $0x18] sm:%s7318] %v7333
                  %v7335 = vld [vmem:[%s7325 + $0x10] sm:%s7318]
                  %7336 = vst [vmem:[%s7326 + $0x20] sm:%s7318] %v7335
                  %v7337 = vld [vmem:[%s7325 + $0x14] sm:%s7318]
                  %7338 = vst [vmem:[%s7326 + $0x28] sm:%s7318] %v7337
                  %v7339 = vld [vmem:[%s7325 + $0x18] sm:%s7318]
                  %7340 = vst [vmem:[%s7326 + $0x30] sm:%s7318] %v7339
                  %v7341 = vld [vmem:[%s7325 + $0x1c] sm:%s7318]
                  %7342 = vst [vmem:[%s7326 + $0x38] sm:%s7318] %v7341
                  %v7343 = vld [vmem:[%s7325 + $0x20] sm:%s7318]
                  %7344 = vst [vmem:[%s7326 + $0x40] sm:%s7318] %v7343
                  %v7345 = vld [vmem:[%s7325 + $0x24] sm:%s7318]
                  %7346 = vst [vmem:[%s7326 + $0x48] sm:%s7318] %v7345
                  %v7347 = vld [vmem:[%s7325 + $0x28] sm:%s7318]
                  %7348 = vst [vmem:[%s7326 + $0x50] sm:%s7318] %v7347
                  %v7349 = vld [vmem:[%s7325 + $0x2c] sm:%s7318]
                  %7350 = vst [vmem:[%s7326 + $0x58] sm:%s7318] %v7349
                  %v7351 = vld [vmem:[%s7325 + $0x30] sm:%s7318]
                  %7352 = vst [vmem:[%s7326 + $0x60] sm:%s7318] %v7351
                  %v7353 = vld [vmem:[%s7325 + $0x34] sm:%s7318]
                  %7354 = vst [vmem:[%s7326 + $0x68] sm:%s7318] %v7353
                  %v7355 = vld [vmem:[%s7325 + $0x38] sm:%s7318]
                  %7356 = vst [vmem:[%s7326 + $0x70] sm:%s7318] %v7355
                  %v7357 = vld [vmem:[%s7325 + $0x3c] sm:%s7318]
                  %7358 = vst [vmem:[%s7326 + $0x78] sm:%s7318] %v7357
                $region148: #{multi_stage_attention.1} parent=135 // loop_footer
                  %s7324 = sadd.s32 1, %s7320
                $region149: #{multi_stage_attention.1} parent=135 // loop_footer_branch
                  %7319 = sbr.rel target = $region145
                $region150: #{multi_stage_attention.1} parent=135 // loop_exit
                  _
              $region136: #{multi_stage_attention.1} parent=120 // pred_fallthru
                _
            $region121: #{multi_stage_attention.1} parent=116 // pred_fallthru
              _
            // Predicated region
            $region122: #{multi_stage_attention.1} parent=116 // pred_check
              _
            $region123: #{multi_stage_attention.1} parent=116 // pred_check_branch
              %7264 = sbr.rel (0) target = $region125
            $region124: #{multi_stage_attention.1} parent=116 // pred_region
              %s7266 = ssub.s32 16, 1
              loop: start=0, step=1, limit=1
              $region126: #{multi_stage_attention.1} parent=124 // loop_pre_header
                _
              $region127: #{multi_stage_attention.1} parent=124 // loop_header
                %s7268 = sphi 0, %s7272
                %p7269 = scmp.ge.s32.totalorder %s7268, 1
                %s7273 = sphi %s7251, %s7251
                %s7274 = sphi %s7258, %s7258
              $region128: #{multi_stage_attention.1} parent=124 // loop_header_branch
                %7271 = sbr.rel (%p7269) target = $region132
              $region129: #{multi_stage_attention.1} parent=124 // loop_body
                %v7275 = vld [vmem:[%s7273] sm:%s7266]
                %7276 = vst [vmem:[%s7274] sm:%s7266] %v7275
                %v7277 = vld [vmem:[%s7273 + $0x4] sm:%s7266]
                %7278 = vst [vmem:[%s7274 + $0x8] sm:%s7266] %v7277
                %v7279 = vld [vmem:[%s7273 + $0x8] sm:%s7266]
                %7280 = vst [vmem:[%s7274 + $0x10] sm:%s7266] %v7279
                %v7281 = vld [vmem:[%s7273 + $0xc] sm:%s7266]
                %7282 = vst [vmem:[%s7274 + $0x18] sm:%s7266] %v7281
                %v7283 = vld [vmem:[%s7273 + $0x10] sm:%s7266]
                %7284 = vst [vmem:[%s7274 + $0x20] sm:%s7266] %v7283
                %v7285 = vld [vmem:[%s7273 + $0x14] sm:%s7266]
                %7286 = vst [vmem:[%s7274 + $0x28] sm:%s7266] %v7285
                %v7287 = vld [vmem:[%s7273 + $0x18] sm:%s7266]
                %7288 = vst [vmem:[%s7274 + $0x30] sm:%s7266] %v7287
                %v7289 = vld [vmem:[%s7273 + $0x1c] sm:%s7266]
                %7290 = vst [vmem:[%s7274 + $0x38] sm:%s7266] %v7289
                %v7291 = vld [vmem:[%s7273 + $0x20] sm:%s7266]
                %7292 = vst [vmem:[%s7274 + $0x40] sm:%s7266] %v7291
                %v7293 = vld [vmem:[%s7273 + $0x24] sm:%s7266]
                %7294 = vst [vmem:[%s7274 + $0x48] sm:%s7266] %v7293
                %v7295 = vld [vmem:[%s7273 + $0x28] sm:%s7266]
                %7296 = vst [vmem:[%s7274 + $0x50] sm:%s7266] %v7295
                %v7297 = vld [vmem:[%s7273 + $0x2c] sm:%s7266]
                %7298 = vst [vmem:[%s7274 + $0x58] sm:%s7266] %v7297
                %v7299 = vld [vmem:[%s7273 + $0x30] sm:%s7266]
                %7300 = vst [vmem:[%s7274 + $0x60] sm:%s7266] %v7299
                %v7301 = vld [vmem:[%s7273 + $0x34] sm:%s7266]
                %7302 = vst [vmem:[%s7274 + $0x68] sm:%s7266] %v7301
                %v7303 = vld [vmem:[%s7273 + $0x38] sm:%s7266]
                %7304 = vst [vmem:[%s7274 + $0x70] sm:%s7266] %v7303
                %v7305 = vld [vmem:[%s7273 + $0x3c] sm:%s7266]
                %7306 = vst [vmem:[%s7274 + $0x78] sm:%s7266] %v7305
              $region130: #{multi_stage_attention.1} parent=124 // loop_footer
                %s7272 = sadd.s32 1, %s7268
              $region131: #{multi_stage_attention.1} parent=124 // loop_footer_branch
                %7267 = sbr.rel target = $region127
              $region132: #{multi_stage_attention.1} parent=124 // loop_exit
                _
            $region125: #{multi_stage_attention.1} parent=116 // pred_fallthru
              _
          $region117: #{multi_stage_attention.1} parent=112 // pred_fallthru
            _
          %7359 = vnop
        $region113: #{multi_stage_attention.1} parent=100 // pred_fallthru
          _
      $region101: #{multi_stage_attention.1} parent=5 // pred_fallthru
        _
      %p7360 = scmp.le.s32.totalorder 2, %s13
      // Predicated region
      $region151: #{multi_stage_attention.1} parent=5 // pred_check
        %p7361 = pneg %p7360
      $region152: #{multi_stage_attention.1} parent=5 // pred_check_branch
        %7363 = sbr.rel (%p7361) target = $region154
      $region153: #{multi_stage_attention.1} parent=5 // pred_region
        %s7364 = ssub.s32 %s13, 2
        // Predicated region
        $region155: #{multi_stage_attention.1} parent=153 // pred_check
          %p7365 = pneg %p217
        $region156: #{multi_stage_attention.1} parent=153 // pred_check_branch
          %7367 = sbr.rel (%p7365) target = $region158
        $region157: #{multi_stage_attention.1} parent=153 // pred_region
          %s7368 = sand.u32 %s202, 1
          %s7369 = sand.u32 %s202, 1
          %s7370 = smul.addr %s7369, 64
          %s7371 = scalar_lea.vmem [#allocation4], %s7370
        $region158: #{multi_stage_attention.1} parent=153 // pred_fallthru
          _
      $region154: #{multi_stage_attention.1} parent=5 // pred_fallthru
        _
    $region6: #{multi_stage_attention.1} parent=1 // loop_footer
      %s17 = sadd.s32 1, %s13
    $region7: #{multi_stage_attention.1} parent=1 // loop_footer_branch
      %12 = sbr.rel target = $region3
    $region8: #{multi_stage_attention.1} parent=1 // loop_exit
      _

</llo_original>
